<compile_context>
chip_gen: v7x
topology: tpu7x:2x2x1
jax: 0.10.0
libtpu: 0.0.40
codegen_flags: <defaults>
</compile_context>

<pallas_src>
import functools

import jax
import jax.numpy as jnp
from jax.experimental import pallas as pl
from jax.experimental.pallas import tpu as pltpu

CP = 8      # padded channel count (sublane multiple)
LANE = 128  # lane tile


def _round_up(x, m):
    return (x + m - 1) // m * m


# ----------------------------------------------------------------------------
# Fused whole-module kernel
# ----------------------------------------------------------------------------
def _hr_module_kernel(x0_ref, x1_ref, w3_ref, w11_ref, aff_ref, up_ref,
                      sel_ref, m0_ref, m1_ref, y0_ref, y1_ref,
                      *, wp0, wp1, nblk0, nblk1):
    x0 = x0_ref[0]                     # (CP, L0)  frame of branch 0 (one image)
    x1 = x1_ref[0]                     # (CP, L1)  frame of branch 1
    m0 = m0_ref[...]                   # (1, L0)   validity mask of frame 0
    m1 = m1_ref[...]                   # (1, L1)
    l0 = x0.shape[1]
    l1 = x1.shape[1]

    def shift(v, s, length):
        # out[:, i] = v[:, i + s]; wraparound only ever lands in masked slots.
        if s == 0:
            return v
        return pltpu.roll(v, shift=(-s) % length, axis=1)

    def conv3x3(v, widx, wp, length):
        # Full-frame stride-1 conv: 9 shifted-tap (CP,CP)@(CP,L) matmuls.
        acc = jnp.zeros((CP, length), jnp.float32)
        for dh in range(3):
            for dw in range(3):
                t = dh * 3 + dw
                s = (dh - 1) * wp + (dw - 1)
                acc = acc + jnp.dot(w3_ref[widx, t], shift(v, s, length),
                                    preferred_element_type=jnp.float32)
        return acc

    def affine(v, aidx):
        # folded BatchNorm: per-channel scale/bias broadcast along lanes
        return v * aff_ref[aidx, 0] + aff_ref[aidx, 1]

    def basic_block(v, mask, wp, length, widx, aidx):
        h = jnp.maximum(affine(conv3x3(v, widx, wp, length), aidx), 0.0) * mask
        o = affine(conv3x3(h, widx + 1, wp, length), aidx + 1) + v
        return jnp.maximum(o, 0.0) * mask

    # ---- branches (BasicBlock stacks) ----
    wi = ai = 0
    b0 = x0
    for _ in range(nblk0):
        b0 = basic_block(b0, m0, wp0, l0, wi, ai)
        wi += 2
        ai += 2
    b1 = x1
    for _ in range(nblk1):
        b1 = basic_block(b1, m1, wp1, l1, wi, ai)
        wi += 2
        ai += 2

    # ---- fuse i=0 : y0 = relu(b0 + upsample(BN(Conv1x1(b1)))) ----
    z = affine(jnp.dot(w11_ref[...], b1, preferred_element_type=jnp.float32), ai)
    up = jnp.dot(z, up_ref[...], preferred_element_type=jnp.float32)    # (CP, L0)
    y0_ref[0] = jnp.maximum(b0 + up, 0.0) * m0

    # ---- fuse i=1 : y1 = relu(BN(Conv3x3 stride2 (b0)) + b1) ----
    f_full = conv3x3(b0, wi, wp0, l0)                    # stride-1, full frame 0
    f_s2 = jnp.dot(f_full, sel_ref[...], preferred_element_type=jnp.float32)
    y1_ref[0] = jnp.maximum(affine(f_s2, ai + 1) + b1, 0.0) * m1


# ----------------------------------------------------------------------------
# Wrapper-side packing (layout plumbing only — all compute is in the kernel)
# ----------------------------------------------------------------------------
def _pack_frames(x, lr):
    # NCHW -> (N, CP, L): channel-pad to CP, zero-pad H/W by 1, flatten, lane-pad.
    n, c, h, w = x.shape
    xp = jnp.pad(x, ((0, 0), (0, CP - c), (1, 1), (1, 1)))
    flat = xp.reshape(n, CP, (h + 2) * (w + 2))
    return jnp.pad(flat, ((0, 0), (0, 0), (0, lr - flat.shape[2]))).astype(jnp.float32)


def _unpack_frames(yf, c, h, w):
    n = yf.shape[0]
    hp, wp = h + 2, w + 2
    fr = yf[:, :c, :hp * wp].reshape(n, c, hp, wp)
    return fr[:, :, 1:1 + h, 1:1 + w]                    # -> NCHW


def _pack_conv3(wt):
    # (Cout, Cin, 3, 3) -> (9, CP, CP), tap t = dh*3 + dw
    co, ci = wt.shape[:2]
    w9 = jnp.transpose(wt, (2, 3, 0, 1)).reshape(9, co, ci)
    return jnp.pad(w9, ((0, 0), (0, CP - co), (0, CP - ci)))


def _pack_conv1(wt):
    co, ci = wt.shape[0], wt.shape[1]
    return jnp.pad(wt[:, :, 0, 0], ((0, CP - co), (0, CP - ci)))


def _pack_affine(scale, bias):
    s = jnp.pad(scale, (0, CP - scale.shape[0])).reshape(CP, 1)
    b = jnp.pad(bias, (0, CP - bias.shape[0])).reshape(CP, 1)
    return jnp.stack([s, b])                             # (2, CP, 1)


def _build_mask(h, w, lr):
    hp, wp = h + 2, w + 2
    m = jnp.zeros((hp, wp), jnp.float32).at[1:1 + h, 1:1 + w].set(1.0)
    return jnp.pad(m.reshape(1, hp * wp), ((0, 0), (0, lr - hp * wp)))


def bilinear_matrix(out_size, in_size):
    # align_corners=False, PyTorch semantics
    scale = in_size / out_size
    o = jnp.arange(out_size, dtype=jnp.float32)
    src = jnp.clip((o + 0.5) * scale - 0.5, 0.0, None)
    i0 = jnp.clip(jnp.floor(src).astype(jnp.int32), 0, in_size - 1)
    i1 = jnp.clip(i0 + 1, 0, in_size - 1)
    w1 = src - i0.astype(jnp.float32)
    w0 = 1.0 - w1
    rows = jnp.arange(out_size)
    a = jnp.zeros((out_size, in_size), jnp.float32)
    a = a.at[rows, i0].add(w0)
    a = a.at[rows, i1].add(w1)
    return a


def _build_upsample(h_out, w_out, h_in, w_in, lr_in, lr_out):
    # Single (L_in, L_out) matrix: up_flat = z_flat @ U
    ah = bilinear_matrix(h_out, h_in)                    # (Ho, Hi)
    aw = bilinear_matrix(w_out, w_in)                    # (Wo, Wi)
    wp_in, wp_out = w_in + 2, w_out + 2
    t = jnp.einsum('ab,cd->bdac', ah, aw)                # (Hi, Wi, Ho, Wo)
    t = t.reshape(h_in * w_in, h_out * w_out)
    hi = jnp.arange(h_in); wi = jnp.arange(w_in)
    ho = jnp.arange(h_out); wo = jnp.arange(w_out)
    p_in = ((hi[:, None] + 1) * wp_in + (wi[None, :] + 1)).reshape(-1)
    p_out = ((ho[:, None] + 1) * wp_out + (wo[None, :] + 1)).reshape(-1)
    u = jnp.zeros((lr_in, lr_out), jnp.float32)
    return u.at[p_in[:, None], p_out[None, :]].set(t)


def _build_select_s2(h_out, w_out, wp_in, wp_out, lr_in, lr_out):
    # 0/1 matrix subsampling the full stride-1 conv output into frame-1 slots.
    ho = jnp.arange(h_out); wo = jnp.arange(w_out)
    p = ((2 * ho[:, None] + 1) * wp_in + (2 * wo[None, :] + 1)).reshape(-1)
    q = ((ho[:, None] + 1) * wp_out + (wo[None, :] + 1)).reshape(-1)
    return jnp.zeros((lr_in, lr_out), jnp.float32).at[p, q].set(1.0)


# ----------------------------------------------------------------------------
# HighResolutionModule forward (2 branches, BasicBlocks, SUM fuse)
# ----------------------------------------------------------------------------
def hr_module_forward(x_list_nchw, params):
    x0, x1 = x_list_nchw
    n, c0, h0, w0 = x0.shape
    _, c1, h1, w1 = x1.shape
    wp0, wp1 = w0 + 2, w1 + 2
    l0 = _round_up((h0 + 2) * wp0, LANE)
    l1 = _round_up((h1 + 2) * wp1, LANE)

    x0f = _pack_frames(x0, l0)
    x1f = _pack_frames(x1, l1)

    br = params['branches']
    pf = params['fuse']
    w3_list, aff_list = [], []
    for blocks in br:
        for blk in blocks:
            w3_list += [_pack_conv3(blk['conv1_w']), _pack_conv3(blk['conv2_w'])]
            aff_list += [_pack_affine(blk['bn1_scale'], blk['bn1_bias']),
                         _pack_affine(blk['bn2_scale'], blk['bn2_bias'])]
    w3_list.append(_pack_conv3(pf['w_1_0']))
    aff_list += [_pack_affine(pf['s_0_1'], pf['b_0_1']),
                 _pack_affine(pf['s_1_0'], pf['b_1_0'])]
    w3 = jnp.stack(w3_list)             # (n_conv3, 9, CP, CP)
    aff = jnp.stack(aff_list)           # (n_bn, 2, CP, 1)
    w11 = _pack_conv1(pf['w_0_1'])      # (CP, CP)

    upm = _build_upsample(h0, w0, h1, w1, l1, l0)        # (l1, l0)
    sel = _build_select_s2(h1, w1, wp0, wp1, l0, l1)     # (l0, l1)
    m0 = _build_mask(h0, w0, l0)
    m1 = _build_mask(h1, w1, l1)

    kernel = functools.partial(_hr_module_kernel, wp0=wp0, wp1=wp1,
                               nblk0=len(br[0]), nblk1=len(br[1]))

    y0f, y1f = pl.pallas_call(
        kernel,
        out_shape=(jax.ShapeDtypeStruct((n, CP, l0), jnp.float32),
                   jax.ShapeDtypeStruct((n, CP, l1), jnp.float32)),
        grid=(n,),
        in_specs=[
            pl.BlockSpec((1, CP, l0), lambda i: (i, 0, 0)),
            pl.BlockSpec((1, CP, l1), lambda i: (i, 0, 0)),
            pl.BlockSpec(w3.shape, lambda i: (0, 0, 0, 0)),
            pl.BlockSpec(w11.shape, lambda i: (0, 0)),
            pl.BlockSpec(aff.shape, lambda i: (0, 0, 0, 0)),
            pl.BlockSpec(upm.shape, lambda i: (0, 0)),
            pl.BlockSpec(sel.shape, lambda i: (0, 0)),
            pl.BlockSpec(m0.shape, lambda i: (0, 0)),
            pl.BlockSpec(m1.shape, lambda i: (0, 0)),
        ],
        out_specs=(pl.BlockSpec((1, CP, l0), lambda i: (i, 0, 0)),
                   pl.BlockSpec((1, CP, l1), lambda i: (i, 0, 0))),
        compiler_params=pltpu.CompilerParams(
            dimension_semantics=("parallel",)),
    )(x0f, x1f, w3, w11, aff, upm, sel, m0, m1)

    y0 = _unpack_frames(y0f, c0, h0, w0)
    y1 = _unpack_frames(y1f, c1, h1, w1)
    return [y0, y1]


# ----------------------------------------------------------------------------
# Deterministic parameter init (same synthetic config as before)
# ----------------------------------------------------------------------------
def _conv_w(key, cout, cin, k):
    return jax.random.normal(key, (cout, cin, k, k), jnp.float32) / jnp.sqrt(
        float(cin * k * k))


def _bn_params(key, c, eps=1e-5):
    k1, k2 = jax.random.split(key)
    gamma = 1.0 + 0.1 * jax.random.normal(k1, (c,), jnp.float32)
    beta = 0.1 * jax.random.normal(k2, (c,), jnp.float32)
    scale = gamma / jnp.sqrt(1.0 + eps)       # folded inference-mode BN
    bias = beta
    return scale, bias


def init_params(key, num_inchannels=(4, 8), num_blocks=(1, 1)):
    keys = iter(jax.random.split(key, 64))
    params = {'branches': [], 'fuse': {}}
    for b, c in enumerate(num_inchannels):
        blocks = []
        for _ in range(num_blocks[b]):
            w1 = _conv_w(next(keys), c, c, 3)
            s1, b1 = _bn_params(next(keys), c)
            w2 = _conv_w(next(keys), c, c, 3)
            s2, b2 = _bn_params(next(keys), c)
            blocks.append(dict(conv1_w=w1, bn1_scale=s1, bn1_bias=b1,
                               conv2_w=w2, bn2_scale=s2, bn2_bias=b2))
        params['branches'].append(blocks)
    c0, c1 = num_inchannels
    params['fuse']['w_0_1'] = _conv_w(next(keys), c0, c1, 1)
    params['fuse']['s_0_1'], params['fuse']['b_0_1'] = _bn_params(next(keys), c0)
    params['fuse']['w_1_0'] = _conv_w(next(keys), c1, c0, 3)
    params['fuse']['s_1_0'], params['fuse']['b_1_0'] = _bn_params(next(keys), c1)
    return params


# ----------------------------------------------------------------------------
# Pure-JAX reference (for correctness check)
# ----------------------------------------------------------------------------
def _ref_conv_bn(x, w, scale, bias, stride, pad, relu=False, residual=None):
    out = jax.lax.conv_general_dilated(
        x, w, window_strides=(stride, stride),
        padding=[(pad, pad), (pad, pad)],
        dimension_numbers=('NHWC', 'OIHW', 'NHWC'),
        precision=jax.lax.Precision.HIGHEST)
    out = out * scale + bias
    if residual is not None:
        out = out + residual
    if relu:
        out = jnp.maximum(out, 0.0)
    return out


def ref_forward(x_list_nchw, params):
    xs = [jnp.transpose(x, (0, 2, 3, 1)) for x in x_list_nchw]
    feats = []
    for b, x in enumerate(xs):
        out = x
        for blk in params['branches'][b]:
            residual = out
            h = _ref_conv_bn(out, blk['conv1_w'], blk['bn1_scale'], blk['bn1_bias'],
                             1, 1, relu=True)
            out = _ref_conv_bn(h, blk['conv2_w'], blk['bn2_scale'], blk['bn2_bias'],
                               1, 1, relu=True, residual=residual)
        feats.append(out)
    pf = params['fuse']
    z = _ref_conv_bn(feats[1], pf['w_0_1'], pf['s_0_1'], pf['b_0_1'], 1, 0)
    ah = bilinear_matrix(feats[0].shape[1], feats[1].shape[1])
    aw = bilinear_matrix(feats[0].shape[2], feats[1].shape[2])
    up = jnp.einsum('ph,qw,nhwc->npqc', ah, aw, z)
    y0 = jnp.maximum(feats[0] + up, 0.0)
    y1 = _ref_conv_bn(feats[0], pf['w_1_0'], pf['s_1_0'], pf['b_1_0'], 2, 1,
                      relu=True, residual=feats[1])
    return [jnp.transpose(y0, (0, 3, 1, 2)), jnp.transpose(y1, (0, 3, 1, 2))]


if __name__ == "__main__":
    key = jax.random.PRNGKey(0)
    kx0, kx1, kp = jax.random.split(key, 3)
    # branch 0: full resolution, branch 1: half resolution (NCHW like PyTorch)
    x0 = jax.random.normal(kx0, (2, 4, 16, 16), jnp.float32)
    x1 = jax.random.normal(kx1, (2, 8, 8, 8), jnp.float32)
    params = init_params(kp)

    outs = hr_module_forward([x0, x1], params)
    outs = [jax.block_until_ready(o) for o in outs]

    refs = ref_forward([x0, x1], params)
    for o, r in zip(outs, refs):
        assert o.shape == r.shape, (o.shape, r.shape)
        max_err = float(jnp.max(jnp.abs(o - r)))
        assert jnp.allclose(o, r, rtol=2e-2, atol=2e-2), max_err

    print("KERNEL_OK")
</pallas_src>

<mosaic_0001>
module attributes {stable_mosaic.version = 11 : i64} {
  func.func @_hr_module_kernel(%arg0: i32, %arg1: memref<1x8x384xf32, #tpu.memory_space<vmem>>, %arg2: memref<1x8x128xf32, #tpu.memory_space<vmem>>, %arg3: memref<5x9x8x8xf32, #tpu.memory_space<vmem>>, %arg4: memref<8x8xf32, #tpu.memory_space<vmem>>, %arg5: memref<6x2x8x1xf32, #tpu.memory_space<vmem>>, %arg6: memref<128x384xf32, #tpu.memory_space<vmem>>, %arg7: memref<384x128xf32, #tpu.memory_space<vmem>>, %arg8: memref<1x384xf32, #tpu.memory_space<vmem>>, %arg9: memref<1x128xf32, #tpu.memory_space<vmem>>, %arg10: memref<1x8x384xf32, #tpu.memory_space<vmem>>, %arg11: memref<1x8x128xf32, #tpu.memory_space<vmem>>) attributes {dimension_semantics = [#tpu.dimension_semantics<parallel>], iteration_bounds = array<i64: 2>, scalar_prefetch = 0 : i64, scratch_operands = 0 : i64, tpu.core_type = #tpu.core_type<tc>, window_params = [{transform_indices = @transform_0, window_bounds = array<i64: 1, 8, 384>}, {transform_indices = @transform_1, window_bounds = array<i64: 1, 8, 128>}, {pipeline_mode = #tpu.pipeline_mode<synchronous>, transform_indices = @transform_2, window_bounds = array<i64: 5, 9, 8, 8>}, {pipeline_mode = #tpu.pipeline_mode<synchronous>, transform_indices = @transform_3, window_bounds = array<i64: 8, 8>}, {pipeline_mode = #tpu.pipeline_mode<synchronous>, transform_indices = @transform_4, window_bounds = array<i64: 6, 2, 8, 1>}, {pipeline_mode = #tpu.pipeline_mode<synchronous>, transform_indices = @transform_5, window_bounds = array<i64: 128, 384>}, {pipeline_mode = #tpu.pipeline_mode<synchronous>, transform_indices = @transform_6, window_bounds = array<i64: 384, 128>}, {pipeline_mode = #tpu.pipeline_mode<synchronous>, transform_indices = @transform_7, window_bounds = array<i64: 1, 384>}, {pipeline_mode = #tpu.pipeline_mode<synchronous>, transform_indices = @transform_8, window_bounds = array<i64: 1, 128>}, {transform_indices = @transform_9, window_bounds = array<i64: 1, 8, 384>}, {transform_indices = @transform_10, window_bounds = array<i64: 1, 8, 128>}]} {
    %c0 = arith.constant 0 : index
    %c0_0 = arith.constant 0 : index
    %c0_1 = arith.constant 0 : index
    %0 = vector.load %arg1[%c0, %c0_0, %c0_1] : memref<1x8x384xf32, #tpu.memory_space<vmem>>, vector<1x8x384xf32>
    %1 = vector.shape_cast %0 : vector<1x8x384xf32> to vector<8x384xf32>
    %c0_2 = arith.constant 0 : index
    %c0_3 = arith.constant 0 : index
    %c0_4 = arith.constant 0 : index
    %2 = vector.load %arg2[%c0_2, %c0_3, %c0_4] : memref<1x8x128xf32, #tpu.memory_space<vmem>>, vector<1x8x128xf32>
    %3 = vector.shape_cast %2 : vector<1x8x128xf32> to vector<8x128xf32>
    %c0_5 = arith.constant 0 : index
    %c0_6 = arith.constant 0 : index
    %4 = vector.load %arg8[%c0_5, %c0_6] : memref<1x384xf32, #tpu.memory_space<vmem>>, vector<1x384xf32>
    %c0_7 = arith.constant 0 : index
    %c0_8 = arith.constant 0 : index
    %5 = vector.load %arg9[%c0_7, %c0_8] : memref<1x128xf32, #tpu.memory_space<vmem>>, vector<1x128xf32>
    %cst = arith.constant 0.000000e+00 : f32
    %6 = vector.broadcast %cst : f32 to vector<8x384xf32>
    %c0_9 = arith.constant 0 : index
    %c0_10 = arith.constant 0 : index
    %c0_11 = arith.constant 0 : index
    %c0_12 = arith.constant 0 : index
    %7 = vector.load %arg3[%c0_9, %c0_10, %c0_11, %c0_12] : memref<5x9x8x8xf32, #tpu.memory_space<vmem>>, vector<1x1x8x8xf32>
    %8 = vector.shape_cast %7 : vector<1x1x8x8xf32> to vector<8x8xf32>
    %c19_i32 = arith.constant 19 : i32
    %9 = tpu.dynamic_rotate %1 by %c19_i32 dim 1 : vector<8x384xf32>, i32 -> vector<8x384xf32>
    %cst_13 = arith.constant dense<0.000000e+00> : vector<8x384xf32>
    %10 = tpu.matmul %8, %9, %cst_13 {dimension_numbers = #tpu.dot_dimension_numbers<[1], [0], [0], [1], [0, 0, 1, 1], [], []>} : vector<8x8xf32>, vector<8x384xf32>, vector<8x384xf32> -> vector<8x384xf32>
    %11 = arith.addf %6, %10 : vector<8x384xf32>
    %c0_14 = arith.constant 0 : index
    %c1 = arith.constant 1 : index
    %c0_15 = arith.constant 0 : index
    %c0_16 = arith.constant 0 : index
    %12 = vector.load %arg3[%c0_14, %c1, %c0_15, %c0_16] : memref<5x9x8x8xf32, #tpu.memory_space<vmem>>, vector<1x1x8x8xf32>
    %13 = vector.shape_cast %12 : vector<1x1x8x8xf32> to vector<8x8xf32>
    %c18_i32 = arith.constant 18 : i32
    %14 = tpu.dynamic_rotate %1 by %c18_i32 dim 1 : vector<8x384xf32>, i32 -> vector<8x384xf32>
    %cst_17 = arith.constant dense<0.000000e+00> : vector<8x384xf32>
    %15 = tpu.matmul %13, %14, %cst_17 {dimension_numbers = #tpu.dot_dimension_numbers<[1], [0], [0], [1], [0, 0, 1, 1], [], []>} : vector<8x8xf32>, vector<8x384xf32>, vector<8x384xf32> -> vector<8x384xf32>
    %16 = arith.addf %11, %15 : vector<8x384xf32>
    %c0_18 = arith.constant 0 : index
    %c2 = arith.constant 2 : index
    %c0_19 = arith.constant 0 : index
    %c0_20 = arith.constant 0 : index
    %17 = vector.load %arg3[%c0_18, %c2, %c0_19, %c0_20] : memref<5x9x8x8xf32, #tpu.memory_space<vmem>>, vector<1x1x8x8xf32>
    %18 = vector.shape_cast %17 : vector<1x1x8x8xf32> to vector<8x8xf32>
    %c17_i32 = arith.constant 17 : i32
    %19 = tpu.dynamic_rotate %1 by %c17_i32 dim 1 : vector<8x384xf32>, i32 -> vector<8x384xf32>
    %cst_21 = arith.constant dense<0.000000e+00> : vector<8x384xf32>
    %20 = tpu.matmul %18, %19, %cst_21 {dimension_numbers = #tpu.dot_dimension_numbers<[1], [0], [0], [1], [0, 0, 1, 1], [], []>} : vector<8x8xf32>, vector<8x384xf32>, vector<8x384xf32> -> vector<8x384xf32>
    %21 = arith.addf %16, %20 : vector<8x384xf32>
    %c0_22 = arith.constant 0 : index
    %c3 = arith.constant 3 : index
    %c0_23 = arith.constant 0 : index
    %c0_24 = arith.constant 0 : index
    %22 = vector.load %arg3[%c0_22, %c3, %c0_23, %c0_24] : memref<5x9x8x8xf32, #tpu.memory_space<vmem>>, vector<1x1x8x8xf32>
    %23 = vector.shape_cast %22 : vector<1x1x8x8xf32> to vector<8x8xf32>
    %c1_i32 = arith.constant 1 : i32
    %24 = tpu.dynamic_rotate %1 by %c1_i32 dim 1 : vector<8x384xf32>, i32 -> vector<8x384xf32>
    %cst_25 = arith.constant dense<0.000000e+00> : vector<8x384xf32>
    %25 = tpu.matmul %23, %24, %cst_25 {dimension_numbers = #tpu.dot_dimension_numbers<[1], [0], [0], [1], [0, 0, 1, 1], [], []>} : vector<8x8xf32>, vector<8x384xf32>, vector<8x384xf32> -> vector<8x384xf32>
    %26 = arith.addf %21, %25 : vector<8x384xf32>
    %c0_26 = arith.constant 0 : index
    %c4 = arith.constant 4 : index
    %c0_27 = arith.constant 0 : index
    %c0_28 = arith.constant 0 : index
    %27 = vector.load %arg3[%c0_26, %c4, %c0_27, %c0_28] : memref<5x9x8x8xf32, #tpu.memory_space<vmem>>, vector<1x1x8x8xf32>
    %28 = vector.shape_cast %27 : vector<1x1x8x8xf32> to vector<8x8xf32>
    %cst_29 = arith.constant dense<0.000000e+00> : vector<8x384xf32>
    %29 = tpu.matmul %28, %1, %cst_29 {dimension_numbers = #tpu.dot_dimension_numbers<[1], [0], [0], [1], [0, 0, 1, 1], [], []>} : vector<8x8xf32>, vector<8x384xf32>, vector<8x384xf32> -> vector<8x384xf32>
    %30 = arith.addf %26, %29 : vector<8x384xf32>
    %c0_30 = arith.constant 0 : index
    %c5 = arith.constant 5 : index
    %c0_31 = arith.constant 0 : index
    %c0_32 = arith.constant 0 : index
    %31 = vector.load %arg3[%c0_30, %c5, %c0_31, %c0_32] : memref<5x9x8x8xf32, #tpu.memory_space<vmem>>, vector<1x1x8x8xf32>
    %32 = vector.shape_cast %31 : vector<1x1x8x8xf32> to vector<8x8xf32>
    %c383_i32 = arith.constant 383 : i32
    %33 = tpu.dynamic_rotate %1 by %c383_i32 dim 1 : vector<8x384xf32>, i32 -> vector<8x384xf32>
    %cst_33 = arith.constant dense<0.000000e+00> : vector<8x384xf32>
    %34 = tpu.matmul %32, %33, %cst_33 {dimension_numbers = #tpu.dot_dimension_numbers<[1], [0], [0], [1], [0, 0, 1, 1], [], []>} : vector<8x8xf32>, vector<8x384xf32>, vector<8x384xf32> -> vector<8x384xf32>
    %35 = arith.addf %30, %34 : vector<8x384xf32>
    %c0_34 = arith.constant 0 : index
    %c6 = arith.constant 6 : index
    %c0_35 = arith.constant 0 : index
    %c0_36 = arith.constant 0 : index
    %36 = vector.load %arg3[%c0_34, %c6, %c0_35, %c0_36] : memref<5x9x8x8xf32, #tpu.memory_space<vmem>>, vector<1x1x8x8xf32>
    %37 = vector.shape_cast %36 : vector<1x1x8x8xf32> to vector<8x8xf32>
    %c367_i32 = arith.constant 367 : i32
    %38 = tpu.dynamic_rotate %1 by %c367_i32 dim 1 : vector<8x384xf32>, i32 -> vector<8x384xf32>
    %cst_37 = arith.constant dense<0.000000e+00> : vector<8x384xf32>
    %39 = tpu.matmul %37, %38, %cst_37 {dimension_numbers = #tpu.dot_dimension_numbers<[1], [0], [0], [1], [0, 0, 1, 1], [], []>} : vector<8x8xf32>, vector<8x384xf32>, vector<8x384xf32> -> vector<8x384xf32>
    %40 = arith.addf %35, %39 : vector<8x384xf32>
    %c0_38 = arith.constant 0 : index
    %c7 = arith.constant 7 : index
    %c0_39 = arith.constant 0 : index
    %c0_40 = arith.constant 0 : index
    %41 = vector.load %arg3[%c0_38, %c7, %c0_39, %c0_40] : memref<5x9x8x8xf32, #tpu.memory_space<vmem>>, vector<1x1x8x8xf32>
    %42 = vector.shape_cast %41 : vector<1x1x8x8xf32> to vector<8x8xf32>
    %c366_i32 = arith.constant 366 : i32
    %43 = tpu.dynamic_rotate %1 by %c366_i32 dim 1 : vector<8x384xf32>, i32 -> vector<8x384xf32>
    %cst_41 = arith.constant dense<0.000000e+00> : vector<8x384xf32>
    %44 = tpu.matmul %42, %43, %cst_41 {dimension_numbers = #tpu.dot_dimension_numbers<[1], [0], [0], [1], [0, 0, 1, 1], [], []>} : vector<8x8xf32>, vector<8x384xf32>, vector<8x384xf32> -> vector<8x384xf32>
    %45 = arith.addf %40, %44 : vector<8x384xf32>
    %c0_42 = arith.constant 0 : index
    %c8 = arith.constant 8 : index
    %c0_43 = arith.constant 0 : index
    %c0_44 = arith.constant 0 : index
    %46 = vector.load %arg3[%c0_42, %c8, %c0_43, %c0_44] : memref<5x9x8x8xf32, #tpu.memory_space<vmem>>, vector<1x1x8x8xf32>
    %47 = vector.shape_cast %46 : vector<1x1x8x8xf32> to vector<8x8xf32>
    %c365_i32 = arith.constant 365 : i32
    %48 = tpu.dynamic_rotate %1 by %c365_i32 dim 1 : vector<8x384xf32>, i32 -> vector<8x384xf32>
    %cst_45 = arith.constant dense<0.000000e+00> : vector<8x384xf32>
    %49 = tpu.matmul %47, %48, %cst_45 {dimension_numbers = #tpu.dot_dimension_numbers<[1], [0], [0], [1], [0, 0, 1, 1], [], []>} : vector<8x8xf32>, vector<8x384xf32>, vector<8x384xf32> -> vector<8x384xf32>
    %50 = arith.addf %45, %49 : vector<8x384xf32>
    %c0_46 = arith.constant 0 : index
    %c0_47 = arith.constant 0 : index
    %c0_48 = arith.constant 0 : index
    %c0_49 = arith.constant 0 : index
    %51 = vector.load %arg5[%c0_46, %c0_47, %c0_48, %c0_49] : memref<6x2x8x1xf32, #tpu.memory_space<vmem>>, vector<1x1x8x1xf32>
    %52 = vector.shape_cast %51 : vector<1x1x8x1xf32> to vector<8x1xf32>
    %53 = vector.broadcast %52 : vector<8x1xf32> to vector<8x384xf32>
    %54 = arith.mulf %50, %53 : vector<8x384xf32>
    %c0_50 = arith.constant 0 : index
    %c1_51 = arith.constant 1 : index
    %c0_52 = arith.constant 0 : index
    %c0_53 = arith.constant 0 : index
    %55 = vector.load %arg5[%c0_50, %c1_51, %c0_52, %c0_53] : memref<6x2x8x1xf32, #tpu.memory_space<vmem>>, vector<1x1x8x1xf32>
    %56 = vector.shape_cast %55 : vector<1x1x8x1xf32> to vector<8x1xf32>
    %57 = vector.broadcast %56 : vector<8x1xf32> to vector<8x384xf32>
    %58 = arith.addf %54, %57 : vector<8x384xf32>
    %cst_54 = arith.constant 0.000000e+00 : f32
    %59 = vector.broadcast %cst_54 : f32 to vector<8x384xf32>
    %60 = arith.maximumf %58, %59 : vector<8x384xf32>
    %61 = vector.broadcast %4 : vector<1x384xf32> to vector<8x384xf32>
    %62 = arith.mulf %60, %61 : vector<8x384xf32>
    %cst_55 = arith.constant 0.000000e+00 : f32
    %63 = vector.broadcast %cst_55 : f32 to vector<8x384xf32>
    %c1_56 = arith.constant 1 : index
    %c0_57 = arith.constant 0 : index
    %c0_58 = arith.constant 0 : index
    %c0_59 = arith.constant 0 : index
    %64 = vector.load %arg3[%c1_56, %c0_57, %c0_58, %c0_59] : memref<5x9x8x8xf32, #tpu.memory_space<vmem>>, vector<1x1x8x8xf32>
    %65 = vector.shape_cast %64 : vector<1x1x8x8xf32> to vector<8x8xf32>
    %c19_i32_60 = arith.constant 19 : i32
    %66 = tpu.dynamic_rotate %62 by %c19_i32_60 dim 1 : vector<8x384xf32>, i32 -> vector<8x384xf32>
    %cst_61 = arith.constant dense<0.000000e+00> : vector<8x384xf32>
    %67 = tpu.matmul %65, %66, %cst_61 {dimension_numbers = #tpu.dot_dimension_numbers<[1], [0], [0], [1], [0, 0, 1, 1], [], []>} : vector<8x8xf32>, vector<8x384xf32>, vector<8x384xf32> -> vector<8x384xf32>
    %68 = arith.addf %63, %67 : vector<8x384xf32>
    %c1_62 = arith.constant 1 : index
    %c1_63 = arith.constant 1 : index
    %c0_64 = arith.constant 0 : index
    %c0_65 = arith.constant 0 : index
    %69 = vector.load %arg3[%c1_62, %c1_63, %c0_64, %c0_65] : memref<5x9x8x8xf32, #tpu.memory_space<vmem>>, vector<1x1x8x8xf32>
    %70 = vector.shape_cast %69 : vector<1x1x8x8xf32> to vector<8x8xf32>
    %c18_i32_66 = arith.constant 18 : i32
    %71 = tpu.dynamic_rotate %62 by %c18_i32_66 dim 1 : vector<8x384xf32>, i32 -> vector<8x384xf32>
    %cst_67 = arith.constant dense<0.000000e+00> : vector<8x384xf32>
    %72 = tpu.matmul %70, %71, %cst_67 {dimension_numbers = #tpu.dot_dimension_numbers<[1], [0], [0], [1], [0, 0, 1, 1], [], []>} : vector<8x8xf32>, vector<8x384xf32>, vector<8x384xf32> -> vector<8x384xf32>
    %73 = arith.addf %68, %72 : vector<8x384xf32>
    %c1_68 = arith.constant 1 : index
    %c2_69 = arith.constant 2 : index
    %c0_70 = arith.constant 0 : index
    %c0_71 = arith.constant 0 : index
    %74 = vector.load %arg3[%c1_68, %c2_69, %c0_70, %c0_71] : memref<5x9x8x8xf32, #tpu.memory_space<vmem>>, vector<1x1x8x8xf32>
    %75 = vector.shape_cast %74 : vector<1x1x8x8xf32> to vector<8x8xf32>
    %c17_i32_72 = arith.constant 17 : i32
    %76 = tpu.dynamic_rotate %62 by %c17_i32_72 dim 1 : vector<8x384xf32>, i32 -> vector<8x384xf32>
    %cst_73 = arith.constant dense<0.000000e+00> : vector<8x384xf32>
    %77 = tpu.matmul %75, %76, %cst_73 {dimension_numbers = #tpu.dot_dimension_numbers<[1], [0], [0], [1], [0, 0, 1, 1], [], []>} : vector<8x8xf32>, vector<8x384xf32>, vector<8x384xf32> -> vector<8x384xf32>
    %78 = arith.addf %73, %77 : vector<8x384xf32>
    %c1_74 = arith.constant 1 : index
    %c3_75 = arith.constant 3 : index
    %c0_76 = arith.constant 0 : index
    %c0_77 = arith.constant 0 : index
    %79 = vector.load %arg3[%c1_74, %c3_75, %c0_76, %c0_77] : memref<5x9x8x8xf32, #tpu.memory_space<vmem>>, vector<1x1x8x8xf32>
    %80 = vector.shape_cast %79 : vector<1x1x8x8xf32> to vector<8x8xf32>
    %c1_i32_78 = arith.constant 1 : i32
    %81 = tpu.dynamic_rotate %62 by %c1_i32_78 dim 1 : vector<8x384xf32>, i32 -> vector<8x384xf32>
    %cst_79 = arith.constant dense<0.000000e+00> : vector<8x384xf32>
    %82 = tpu.matmul %80, %81, %cst_79 {dimension_numbers = #tpu.dot_dimension_numbers<[1], [0], [0], [1], [0, 0, 1, 1], [], []>} : vector<8x8xf32>, vector<8x384xf32>, vector<8x384xf32> -> vector<8x384xf32>
    %83 = arith.addf %78, %82 : vector<8x384xf32>
    %c1_80 = arith.constant 1 : index
    %c4_81 = arith.constant 4 : index
    %c0_82 = arith.constant 0 : index
    %c0_83 = arith.constant 0 : index
    %84 = vector.load %arg3[%c1_80, %c4_81, %c0_82, %c0_83] : memref<5x9x8x8xf32, #tpu.memory_space<vmem>>, vector<1x1x8x8xf32>
    %85 = vector.shape_cast %84 : vector<1x1x8x8xf32> to vector<8x8xf32>
    %cst_84 = arith.constant dense<0.000000e+00> : vector<8x384xf32>
    %86 = tpu.matmul %85, %62, %cst_84 {dimension_numbers = #tpu.dot_dimension_numbers<[1], [0], [0], [1], [0, 0, 1, 1], [], []>} : vector<8x8xf32>, vector<8x384xf32>, vector<8x384xf32> -> vector<8x384xf32>
    %87 = arith.addf %83, %86 : vector<8x384xf32>
    %c1_85 = arith.constant 1 : index
    %c5_86 = arith.constant 5 : index
    %c0_87 = arith.constant 0 : index
    %c0_88 = arith.constant 0 : index
    %88 = vector.load %arg3[%c1_85, %c5_86, %c0_87, %c0_88] : memref<5x9x8x8xf32, #tpu.memory_space<vmem>>, vector<1x1x8x8xf32>
    %89 = vector.shape_cast %88 : vector<1x1x8x8xf32> to vector<8x8xf32>
    %c383_i32_89 = arith.constant 383 : i32
    %90 = tpu.dynamic_rotate %62 by %c383_i32_89 dim 1 : vector<8x384xf32>, i32 -> vector<8x384xf32>
    %cst_90 = arith.constant dense<0.000000e+00> : vector<8x384xf32>
    %91 = tpu.matmul %89, %90, %cst_90 {dimension_numbers = #tpu.dot_dimension_numbers<[1], [0], [0], [1], [0, 0, 1, 1], [], []>} : vector<8x8xf32>, vector<8x384xf32>, vector<8x384xf32> -> vector<8x384xf32>
    %92 = arith.addf %87, %91 : vector<8x384xf32>
    %c1_91 = arith.constant 1 : index
    %c6_92 = arith.constant 6 : index
    %c0_93 = arith.constant 0 : index
    %c0_94 = arith.constant 0 : index
    %93 = vector.load %arg3[%c1_91, %c6_92, %c0_93, %c0_94] : memref<5x9x8x8xf32, #tpu.memory_space<vmem>>, vector<1x1x8x8xf32>
    %94 = vector.shape_cast %93 : vector<1x1x8x8xf32> to vector<8x8xf32>
    %c367_i32_95 = arith.constant 367 : i32
    %95 = tpu.dynamic_rotate %62 by %c367_i32_95 dim 1 : vector<8x384xf32>, i32 -> vector<8x384xf32>
    %cst_96 = arith.constant dense<0.000000e+00> : vector<8x384xf32>
    %96 = tpu.matmul %94, %95, %cst_96 {dimension_numbers = #tpu.dot_dimension_numbers<[1], [0], [0], [1], [0, 0, 1, 1], [], []>} : vector<8x8xf32>, vector<8x384xf32>, vector<8x384xf32> -> vector<8x384xf32>
    %97 = arith.addf %92, %96 : vector<8x384xf32>
    %c1_97 = arith.constant 1 : index
    %c7_98 = arith.constant 7 : index
    %c0_99 = arith.constant 0 : index
    %c0_100 = arith.constant 0 : index
    %98 = vector.load %arg3[%c1_97, %c7_98, %c0_99, %c0_100] : memref<5x9x8x8xf32, #tpu.memory_space<vmem>>, vector<1x1x8x8xf32>
    %99 = vector.shape_cast %98 : vector<1x1x8x8xf32> to vector<8x8xf32>
    %c366_i32_101 = arith.constant 366 : i32
    %100 = tpu.dynamic_rotate %62 by %c366_i32_101 dim 1 : vector<8x384xf32>, i32 -> vector<8x384xf32>
    %cst_102 = arith.constant dense<0.000000e+00> : vector<8x384xf32>
    %101 = tpu.matmul %99, %100, %cst_102 {dimension_numbers = #tpu.dot_dimension_numbers<[1], [0], [0], [1], [0, 0, 1, 1], [], []>} : vector<8x8xf32>, vector<8x384xf32>, vector<8x384xf32> -> vector<8x384xf32>
    %102 = arith.addf %97, %101 : vector<8x384xf32>
    %c1_103 = arith.constant 1 : index
    %c8_104 = arith.constant 8 : index
    %c0_105 = arith.constant 0 : index
    %c0_106 = arith.constant 0 : index
    %103 = vector.load %arg3[%c1_103, %c8_104, %c0_105, %c0_106] : memref<5x9x8x8xf32, #tpu.memory_space<vmem>>, vector<1x1x8x8xf32>
    %104 = vector.shape_cast %103 : vector<1x1x8x8xf32> to vector<8x8xf32>
    %c365_i32_107 = arith.constant 365 : i32
    %105 = tpu.dynamic_rotate %62 by %c365_i32_107 dim 1 : vector<8x384xf32>, i32 -> vector<8x384xf32>
    %cst_108 = arith.constant dense<0.000000e+00> : vector<8x384xf32>
    %106 = tpu.matmul %104, %105, %cst_108 {dimension_numbers = #tpu.dot_dimension_numbers<[1], [0], [0], [1], [0, 0, 1, 1], [], []>} : vector<8x8xf32>, vector<8x384xf32>, vector<8x384xf32> -> vector<8x384xf32>
    %107 = arith.addf %102, %106 : vector<8x384xf32>
    %c1_109 = arith.constant 1 : index
    %c0_110 = arith.constant 0 : index
    %c0_111 = arith.constant 0 : index
    %c0_112 = arith.constant 0 : index
    %108 = vector.load %arg5[%c1_109, %c0_110, %c0_111, %c0_112] : memref<6x2x8x1xf32, #tpu.memory_space<vmem>>, vector<1x1x8x1xf32>
    %109 = vector.shape_cast %108 : vector<1x1x8x1xf32> to vector<8x1xf32>
    %110 = vector.broadcast %109 : vector<8x1xf32> to vector<8x384xf32>
    %111 = arith.mulf %107, %110 : vector<8x384xf32>
    %c1_113 = arith.constant 1 : index
    %c1_114 = arith.constant 1 : index
    %c0_115 = arith.constant 0 : index
    %c0_116 = arith.constant 0 : index
    %112 = vector.load %arg5[%c1_113, %c1_114, %c0_115, %c0_116] : memref<6x2x8x1xf32, #tpu.memory_space<vmem>>, vector<1x1x8x1xf32>
    %113 = vector.shape_cast %112 : vector<1x1x8x1xf32> to vector<8x1xf32>
    %114 = vector.broadcast %113 : vector<8x1xf32> to vector<8x384xf32>
    %115 = arith.addf %111, %114 : vector<8x384xf32>
    %116 = arith.addf %115, %1 : vector<8x384xf32>
    %cst_117 = arith.constant 0.000000e+00 : f32
    %117 = vector.broadcast %cst_117 : f32 to vector<8x384xf32>
    %118 = arith.maximumf %116, %117 : vector<8x384xf32>
    %119 = vector.broadcast %4 : vector<1x384xf32> to vector<8x384xf32>
    %120 = arith.mulf %118, %119 : vector<8x384xf32>
    %cst_118 = arith.constant 0.000000e+00 : f32
    %121 = vector.broadcast %cst_118 : f32 to vector<8x128xf32>
    %c2_119 = arith.constant 2 : index
    %c0_120 = arith.constant 0 : index
    %c0_121 = arith.constant 0 : index
    %c0_122 = arith.constant 0 : index
    %122 = vector.load %arg3[%c2_119, %c0_120, %c0_121, %c0_122] : memref<5x9x8x8xf32, #tpu.memory_space<vmem>>, vector<1x1x8x8xf32>
    %123 = vector.shape_cast %122 : vector<1x1x8x8xf32> to vector<8x8xf32>
    %c11_i32 = arith.constant 11 : i32
    %124 = tpu.dynamic_rotate %3 by %c11_i32 dim 1 : vector<8x128xf32>, i32 -> vector<8x128xf32>
    %cst_123 = arith.constant dense<0.000000e+00> : vector<8x128xf32>
    %125 = tpu.matmul %123, %124, %cst_123 {dimension_numbers = #tpu.dot_dimension_numbers<[1], [0], [0], [1], [0, 0, 1, 1], [], []>} : vector<8x8xf32>, vector<8x128xf32>, vector<8x128xf32> -> vector<8x128xf32>
    %126 = arith.addf %121, %125 : vector<8x128xf32>
    %c2_124 = arith.constant 2 : index
    %c1_125 = arith.constant 1 : index
    %c0_126 = arith.constant 0 : index
    %c0_127 = arith.constant 0 : index
    %127 = vector.load %arg3[%c2_124, %c1_125, %c0_126, %c0_127] : memref<5x9x8x8xf32, #tpu.memory_space<vmem>>, vector<1x1x8x8xf32>
    %128 = vector.shape_cast %127 : vector<1x1x8x8xf32> to vector<8x8xf32>
    %c10_i32 = arith.constant 10 : i32
    %129 = tpu.dynamic_rotate %3 by %c10_i32 dim 1 : vector<8x128xf32>, i32 -> vector<8x128xf32>
    %cst_128 = arith.constant dense<0.000000e+00> : vector<8x128xf32>
    %130 = tpu.matmul %128, %129, %cst_128 {dimension_numbers = #tpu.dot_dimension_numbers<[1], [0], [0], [1], [0, 0, 1, 1], [], []>} : vector<8x8xf32>, vector<8x128xf32>, vector<8x128xf32> -> vector<8x128xf32>
    %131 = arith.addf %126, %130 : vector<8x128xf32>
    %c2_129 = arith.constant 2 : index
    %c2_130 = arith.constant 2 : index
    %c0_131 = arith.constant 0 : index
    %c0_132 = arith.constant 0 : index
    %132 = vector.load %arg3[%c2_129, %c2_130, %c0_131, %c0_132] : memref<5x9x8x8xf32, #tpu.memory_space<vmem>>, vector<1x1x8x8xf32>
    %133 = vector.shape_cast %132 : vector<1x1x8x8xf32> to vector<8x8xf32>
    %c9_i32 = arith.constant 9 : i32
    %134 = tpu.dynamic_rotate %3 by %c9_i32 dim 1 : vector<8x128xf32>, i32 -> vector<8x128xf32>
    %cst_133 = arith.constant dense<0.000000e+00> : vector<8x128xf32>
    %135 = tpu.matmul %133, %134, %cst_133 {dimension_numbers = #tpu.dot_dimension_numbers<[1], [0], [0], [1], [0, 0, 1, 1], [], []>} : vector<8x8xf32>, vector<8x128xf32>, vector<8x128xf32> -> vector<8x128xf32>
    %136 = arith.addf %131, %135 : vector<8x128xf32>
    %c2_134 = arith.constant 2 : index
    %c3_135 = arith.constant 3 : index
    %c0_136 = arith.constant 0 : index
    %c0_137 = arith.constant 0 : index
    %137 = vector.load %arg3[%c2_134, %c3_135, %c0_136, %c0_137] : memref<5x9x8x8xf32, #tpu.memory_space<vmem>>, vector<1x1x8x8xf32>
    %138 = vector.shape_cast %137 : vector<1x1x8x8xf32> to vector<8x8xf32>
    %c1_i32_138 = arith.constant 1 : i32
    %139 = tpu.dynamic_rotate %3 by %c1_i32_138 dim 1 : vector<8x128xf32>, i32 -> vector<8x128xf32>
    %cst_139 = arith.constant dense<0.000000e+00> : vector<8x128xf32>
    %140 = tpu.matmul %138, %139, %cst_139 {dimension_numbers = #tpu.dot_dimension_numbers<[1], [0], [0], [1], [0, 0, 1, 1], [], []>} : vector<8x8xf32>, vector<8x128xf32>, vector<8x128xf32> -> vector<8x128xf32>
    %141 = arith.addf %136, %140 : vector<8x128xf32>
    %c2_140 = arith.constant 2 : index
    %c4_141 = arith.constant 4 : index
    %c0_142 = arith.constant 0 : index
    %c0_143 = arith.constant 0 : index
    %142 = vector.load %arg3[%c2_140, %c4_141, %c0_142, %c0_143] : memref<5x9x8x8xf32, #tpu.memory_space<vmem>>, vector<1x1x8x8xf32>
    %143 = vector.shape_cast %142 : vector<1x1x8x8xf32> to vector<8x8xf32>
    %cst_144 = arith.constant dense<0.000000e+00> : vector<8x128xf32>
    %144 = tpu.matmul %143, %3, %cst_144 {dimension_numbers = #tpu.dot_dimension_numbers<[1], [0], [0], [1], [0, 0, 1, 1], [], []>} : vector<8x8xf32>, vector<8x128xf32>, vector<8x128xf32> -> vector<8x128xf32>
    %145 = arith.addf %141, %144 : vector<8x128xf32>
    %c2_145 = arith.constant 2 : index
    %c5_146 = arith.constant 5 : index
    %c0_147 = arith.constant 0 : index
    %c0_148 = arith.constant 0 : index
    %146 = vector.load %arg3[%c2_145, %c5_146, %c0_147, %c0_148] : memref<5x9x8x8xf32, #tpu.memory_space<vmem>>, vector<1x1x8x8xf32>
    %147 = vector.shape_cast %146 : vector<1x1x8x8xf32> to vector<8x8xf32>
    %c127_i32 = arith.constant 127 : i32
    %148 = tpu.dynamic_rotate %3 by %c127_i32 dim 1 : vector<8x128xf32>, i32 -> vector<8x128xf32>
    %cst_149 = arith.constant dense<0.000000e+00> : vector<8x128xf32>
    %149 = tpu.matmul %147, %148, %cst_149 {dimension_numbers = #tpu.dot_dimension_numbers<[1], [0], [0], [1], [0, 0, 1, 1], [], []>} : vector<8x8xf32>, vector<8x128xf32>, vector<8x128xf32> -> vector<8x128xf32>
    %150 = arith.addf %145, %149 : vector<8x128xf32>
    %c2_150 = arith.constant 2 : index
    %c6_151 = arith.constant 6 : index
    %c0_152 = arith.constant 0 : index
    %c0_153 = arith.constant 0 : index
    %151 = vector.load %arg3[%c2_150, %c6_151, %c0_152, %c0_153] : memref<5x9x8x8xf32, #tpu.memory_space<vmem>>, vector<1x1x8x8xf32>
    %152 = vector.shape_cast %151 : vector<1x1x8x8xf32> to vector<8x8xf32>
    %c119_i32 = arith.constant 119 : i32
    %153 = tpu.dynamic_rotate %3 by %c119_i32 dim 1 : vector<8x128xf32>, i32 -> vector<8x128xf32>
    %cst_154 = arith.constant dense<0.000000e+00> : vector<8x128xf32>
    %154 = tpu.matmul %152, %153, %cst_154 {dimension_numbers = #tpu.dot_dimension_numbers<[1], [0], [0], [1], [0, 0, 1, 1], [], []>} : vector<8x8xf32>, vector<8x128xf32>, vector<8x128xf32> -> vector<8x128xf32>
    %155 = arith.addf %150, %154 : vector<8x128xf32>
    %c2_155 = arith.constant 2 : index
    %c7_156 = arith.constant 7 : index
    %c0_157 = arith.constant 0 : index
    %c0_158 = arith.constant 0 : index
    %156 = vector.load %arg3[%c2_155, %c7_156, %c0_157, %c0_158] : memref<5x9x8x8xf32, #tpu.memory_space<vmem>>, vector<1x1x8x8xf32>
    %157 = vector.shape_cast %156 : vector<1x1x8x8xf32> to vector<8x8xf32>
    %c118_i32 = arith.constant 118 : i32
    %158 = tpu.dynamic_rotate %3 by %c118_i32 dim 1 : vector<8x128xf32>, i32 -> vector<8x128xf32>
    %cst_159 = arith.constant dense<0.000000e+00> : vector<8x128xf32>
    %159 = tpu.matmul %157, %158, %cst_159 {dimension_numbers = #tpu.dot_dimension_numbers<[1], [0], [0], [1], [0, 0, 1, 1], [], []>} : vector<8x8xf32>, vector<8x128xf32>, vector<8x128xf32> -> vector<8x128xf32>
    %160 = arith.addf %155, %159 : vector<8x128xf32>
    %c2_160 = arith.constant 2 : index
    %c8_161 = arith.constant 8 : index
    %c0_162 = arith.constant 0 : index
    %c0_163 = arith.constant 0 : index
    %161 = vector.load %arg3[%c2_160, %c8_161, %c0_162, %c0_163] : memref<5x9x8x8xf32, #tpu.memory_space<vmem>>, vector<1x1x8x8xf32>
    %162 = vector.shape_cast %161 : vector<1x1x8x8xf32> to vector<8x8xf32>
    %c117_i32 = arith.constant 117 : i32
    %163 = tpu.dynamic_rotate %3 by %c117_i32 dim 1 : vector<8x128xf32>, i32 -> vector<8x128xf32>
    %cst_164 = arith.constant dense<0.000000e+00> : vector<8x128xf32>
    %164 = tpu.matmul %162, %163, %cst_164 {dimension_numbers = #tpu.dot_dimension_numbers<[1], [0], [0], [1], [0, 0, 1, 1], [], []>} : vector<8x8xf32>, vector<8x128xf32>, vector<8x128xf32> -> vector<8x128xf32>
    %165 = arith.addf %160, %164 : vector<8x128xf32>
    %c2_165 = arith.constant 2 : index
    %c0_166 = arith.constant 0 : index
    %c0_167 = arith.constant 0 : index
    %c0_168 = arith.constant 0 : index
    %166 = vector.load %arg5[%c2_165, %c0_166, %c0_167, %c0_168] : memref<6x2x8x1xf32, #tpu.memory_space<vmem>>, vector<1x1x8x1xf32>
    %167 = vector.shape_cast %166 : vector<1x1x8x1xf32> to vector<8x1xf32>
    %168 = vector.broadcast %167 : vector<8x1xf32> to vector<8x128xf32>
    %169 = arith.mulf %165, %168 : vector<8x128xf32>
    %c2_169 = arith.constant 2 : index
    %c1_170 = arith.constant 1 : index
    %c0_171 = arith.constant 0 : index
    %c0_172 = arith.constant 0 : index
    %170 = vector.load %arg5[%c2_169, %c1_170, %c0_171, %c0_172] : memref<6x2x8x1xf32, #tpu.memory_space<vmem>>, vector<1x1x8x1xf32>
    %171 = vector.shape_cast %170 : vector<1x1x8x1xf32> to vector<8x1xf32>
    %172 = vector.broadcast %171 : vector<8x1xf32> to vector<8x128xf32>
    %173 = arith.addf %169, %172 : vector<8x128xf32>
    %cst_173 = arith.constant 0.000000e+00 : f32
    %174 = vector.broadcast %cst_173 : f32 to vector<8x128xf32>
    %175 = arith.maximumf %173, %174 : vector<8x128xf32>
    %176 = vector.broadcast %5 : vector<1x128xf32> to vector<8x128xf32>
    %177 = arith.mulf %175, %176 : vector<8x128xf32>
    %cst_174 = arith.constant 0.000000e+00 : f32
    %178 = vector.broadcast %cst_174 : f32 to vector<8x128xf32>
    %c3_175 = arith.constant 3 : index
    %c0_176 = arith.constant 0 : index
    %c0_177 = arith.constant 0 : index
    %c0_178 = arith.constant 0 : index
    %179 = vector.load %arg3[%c3_175, %c0_176, %c0_177, %c0_178] : memref<5x9x8x8xf32, #tpu.memory_space<vmem>>, vector<1x1x8x8xf32>
    %180 = vector.shape_cast %179 : vector<1x1x8x8xf32> to vector<8x8xf32>
    %c11_i32_179 = arith.constant 11 : i32
    %181 = tpu.dynamic_rotate %177 by %c11_i32_179 dim 1 : vector<8x128xf32>, i32 -> vector<8x128xf32>
    %cst_180 = arith.constant dense<0.000000e+00> : vector<8x128xf32>
    %182 = tpu.matmul %180, %181, %cst_180 {dimension_numbers = #tpu.dot_dimension_numbers<[1], [0], [0], [1], [0, 0, 1, 1], [], []>} : vector<8x8xf32>, vector<8x128xf32>, vector<8x128xf32> -> vector<8x128xf32>
    %183 = arith.addf %178, %182 : vector<8x128xf32>
    %c3_181 = arith.constant 3 : index
    %c1_182 = arith.constant 1 : index
    %c0_183 = arith.constant 0 : index
    %c0_184 = arith.constant 0 : index
    %184 = vector.load %arg3[%c3_181, %c1_182, %c0_183, %c0_184] : memref<5x9x8x8xf32, #tpu.memory_space<vmem>>, vector<1x1x8x8xf32>
    %185 = vector.shape_cast %184 : vector<1x1x8x8xf32> to vector<8x8xf32>
    %c10_i32_185 = arith.constant 10 : i32
    %186 = tpu.dynamic_rotate %177 by %c10_i32_185 dim 1 : vector<8x128xf32>, i32 -> vector<8x128xf32>
    %cst_186 = arith.constant dense<0.000000e+00> : vector<8x128xf32>
    %187 = tpu.matmul %185, %186, %cst_186 {dimension_numbers = #tpu.dot_dimension_numbers<[1], [0], [0], [1], [0, 0, 1, 1], [], []>} : vector<8x8xf32>, vector<8x128xf32>, vector<8x128xf32> -> vector<8x128xf32>
    %188 = arith.addf %183, %187 : vector<8x128xf32>
    %c3_187 = arith.constant 3 : index
    %c2_188 = arith.constant 2 : index
    %c0_189 = arith.constant 0 : index
    %c0_190 = arith.constant 0 : index
    %189 = vector.load %arg3[%c3_187, %c2_188, %c0_189, %c0_190] : memref<5x9x8x8xf32, #tpu.memory_space<vmem>>, vector<1x1x8x8xf32>
    %190 = vector.shape_cast %189 : vector<1x1x8x8xf32> to vector<8x8xf32>
    %c9_i32_191 = arith.constant 9 : i32
    %191 = tpu.dynamic_rotate %177 by %c9_i32_191 dim 1 : vector<8x128xf32>, i32 -> vector<8x128xf32>
    %cst_192 = arith.constant dense<0.000000e+00> : vector<8x128xf32>
    %192 = tpu.matmul %190, %191, %cst_192 {dimension_numbers = #tpu.dot_dimension_numbers<[1], [0], [0], [1], [0, 0, 1, 1], [], []>} : vector<8x8xf32>, vector<8x128xf32>, vector<8x128xf32> -> vector<8x128xf32>
    %193 = arith.addf %188, %192 : vector<8x128xf32>
    %c3_193 = arith.constant 3 : index
    %c3_194 = arith.constant 3 : index
    %c0_195 = arith.constant 0 : index
    %c0_196 = arith.constant 0 : index
    %194 = vector.load %arg3[%c3_193, %c3_194, %c0_195, %c0_196] : memref<5x9x8x8xf32, #tpu.memory_space<vmem>>, vector<1x1x8x8xf32>
    %195 = vector.shape_cast %194 : vector<1x1x8x8xf32> to vector<8x8xf32>
    %c1_i32_197 = arith.constant 1 : i32
    %196 = tpu.dynamic_rotate %177 by %c1_i32_197 dim 1 : vector<8x128xf32>, i32 -> vector<8x128xf32>
    %cst_198 = arith.constant dense<0.000000e+00> : vector<8x128xf32>
    %197 = tpu.matmul %195, %196, %cst_198 {dimension_numbers = #tpu.dot_dimension_numbers<[1], [0], [0], [1], [0, 0, 1, 1], [], []>} : vector<8x8xf32>, vector<8x128xf32>, vector<8x128xf32> -> vector<8x128xf32>
    %198 = arith.addf %193, %197 : vector<8x128xf32>
    %c3_199 = arith.constant 3 : index
    %c4_200 = arith.constant 4 : index
    %c0_201 = arith.constant 0 : index
    %c0_202 = arith.constant 0 : index
    %199 = vector.load %arg3[%c3_199, %c4_200, %c0_201, %c0_202] : memref<5x9x8x8xf32, #tpu.memory_space<vmem>>, vector<1x1x8x8xf32>
    %200 = vector.shape_cast %199 : vector<1x1x8x8xf32> to vector<8x8xf32>
    %cst_203 = arith.constant dense<0.000000e+00> : vector<8x128xf32>
    %201 = tpu.matmul %200, %177, %cst_203 {dimension_numbers = #tpu.dot_dimension_numbers<[1], [0], [0], [1], [0, 0, 1, 1], [], []>} : vector<8x8xf32>, vector<8x128xf32>, vector<8x128xf32> -> vector<8x128xf32>
    %202 = arith.addf %198, %201 : vector<8x128xf32>
    %c3_204 = arith.constant 3 : index
    %c5_205 = arith.constant 5 : index
    %c0_206 = arith.constant 0 : index
    %c0_207 = arith.constant 0 : index
    %203 = vector.load %arg3[%c3_204, %c5_205, %c0_206, %c0_207] : memref<5x9x8x8xf32, #tpu.memory_space<vmem>>, vector<1x1x8x8xf32>
    %204 = vector.shape_cast %203 : vector<1x1x8x8xf32> to vector<8x8xf32>
    %c127_i32_208 = arith.constant 127 : i32
    %205 = tpu.dynamic_rotate %177 by %c127_i32_208 dim 1 : vector<8x128xf32>, i32 -> vector<8x128xf32>
    %cst_209 = arith.constant dense<0.000000e+00> : vector<8x128xf32>
    %206 = tpu.matmul %204, %205, %cst_209 {dimension_numbers = #tpu.dot_dimension_numbers<[1], [0], [0], [1], [0, 0, 1, 1], [], []>} : vector<8x8xf32>, vector<8x128xf32>, vector<8x128xf32> -> vector<8x128xf32>
    %207 = arith.addf %202, %206 : vector<8x128xf32>
    %c3_210 = arith.constant 3 : index
    %c6_211 = arith.constant 6 : index
    %c0_212 = arith.constant 0 : index
    %c0_213 = arith.constant 0 : index
    %208 = vector.load %arg3[%c3_210, %c6_211, %c0_212, %c0_213] : memref<5x9x8x8xf32, #tpu.memory_space<vmem>>, vector<1x1x8x8xf32>
    %209 = vector.shape_cast %208 : vector<1x1x8x8xf32> to vector<8x8xf32>
    %c119_i32_214 = arith.constant 119 : i32
    %210 = tpu.dynamic_rotate %177 by %c119_i32_214 dim 1 : vector<8x128xf32>, i32 -> vector<8x128xf32>
    %cst_215 = arith.constant dense<0.000000e+00> : vector<8x128xf32>
    %211 = tpu.matmul %209, %210, %cst_215 {dimension_numbers = #tpu.dot_dimension_numbers<[1], [0], [0], [1], [0, 0, 1, 1], [], []>} : vector<8x8xf32>, vector<8x128xf32>, vector<8x128xf32> -> vector<8x128xf32>
    %212 = arith.addf %207, %211 : vector<8x128xf32>
    %c3_216 = arith.constant 3 : index
    %c7_217 = arith.constant 7 : index
    %c0_218 = arith.constant 0 : index
    %c0_219 = arith.constant 0 : index
    %213 = vector.load %arg3[%c3_216, %c7_217, %c0_218, %c0_219] : memref<5x9x8x8xf32, #tpu.memory_space<vmem>>, vector<1x1x8x8xf32>
    %214 = vector.shape_cast %213 : vector<1x1x8x8xf32> to vector<8x8xf32>
    %c118_i32_220 = arith.constant 118 : i32
    %215 = tpu.dynamic_rotate %177 by %c118_i32_220 dim 1 : vector<8x128xf32>, i32 -> vector<8x128xf32>
    %cst_221 = arith.constant dense<0.000000e+00> : vector<8x128xf32>
    %216 = tpu.matmul %214, %215, %cst_221 {dimension_numbers = #tpu.dot_dimension_numbers<[1], [0], [0], [1], [0, 0, 1, 1], [], []>} : vector<8x8xf32>, vector<8x128xf32>, vector<8x128xf32> -> vector<8x128xf32>
    %217 = arith.addf %212, %216 : vector<8x128xf32>
    %c3_222 = arith.constant 3 : index
    %c8_223 = arith.constant 8 : index
    %c0_224 = arith.constant 0 : index
    %c0_225 = arith.constant 0 : index
    %218 = vector.load %arg3[%c3_222, %c8_223, %c0_224, %c0_225] : memref<5x9x8x8xf32, #tpu.memory_space<vmem>>, vector<1x1x8x8xf32>
    %219 = vector.shape_cast %218 : vector<1x1x8x8xf32> to vector<8x8xf32>
    %c117_i32_226 = arith.constant 117 : i32
    %220 = tpu.dynamic_rotate %177 by %c117_i32_226 dim 1 : vector<8x128xf32>, i32 -> vector<8x128xf32>
    %cst_227 = arith.constant dense<0.000000e+00> : vector<8x128xf32>
    %221 = tpu.matmul %219, %220, %cst_227 {dimension_numbers = #tpu.dot_dimension_numbers<[1], [0], [0], [1], [0, 0, 1, 1], [], []>} : vector<8x8xf32>, vector<8x128xf32>, vector<8x128xf32> -> vector<8x128xf32>
    %222 = arith.addf %217, %221 : vector<8x128xf32>
    %c3_228 = arith.constant 3 : index
    %c0_229 = arith.constant 0 : index
    %c0_230 = arith.constant 0 : index
    %c0_231 = arith.constant 0 : index
    %223 = vector.load %arg5[%c3_228, %c0_229, %c0_230, %c0_231] : memref<6x2x8x1xf32, #tpu.memory_space<vmem>>, vector<1x1x8x1xf32>
    %224 = vector.shape_cast %223 : vector<1x1x8x1xf32> to vector<8x1xf32>
    %225 = vector.broadcast %224 : vector<8x1xf32> to vector<8x128xf32>
    %226 = arith.mulf %222, %225 : vector<8x128xf32>
    %c3_232 = arith.constant 3 : index
    %c1_233 = arith.constant 1 : index
    %c0_234 = arith.constant 0 : index
    %c0_235 = arith.constant 0 : index
    %227 = vector.load %arg5[%c3_232, %c1_233, %c0_234, %c0_235] : memref<6x2x8x1xf32, #tpu.memory_space<vmem>>, vector<1x1x8x1xf32>
    %228 = vector.shape_cast %227 : vector<1x1x8x1xf32> to vector<8x1xf32>
    %229 = vector.broadcast %228 : vector<8x1xf32> to vector<8x128xf32>
    %230 = arith.addf %226, %229 : vector<8x128xf32>
    %231 = arith.addf %230, %3 : vector<8x128xf32>
    %cst_236 = arith.constant 0.000000e+00 : f32
    %232 = vector.broadcast %cst_236 : f32 to vector<8x128xf32>
    %233 = arith.maximumf %231, %232 : vector<8x128xf32>
    %234 = vector.broadcast %5 : vector<1x128xf32> to vector<8x128xf32>
    %235 = arith.mulf %233, %234 : vector<8x128xf32>
    %c0_237 = arith.constant 0 : index
    %c0_238 = arith.constant 0 : index
    %236 = vector.load %arg4[%c0_237, %c0_238] : memref<8x8xf32, #tpu.memory_space<vmem>>, vector<8x8xf32>
    %cst_239 = arith.constant dense<0.000000e+00> : vector<8x128xf32>
    %237 = tpu.matmul %236, %235, %cst_239 {dimension_numbers = #tpu.dot_dimension_numbers<[1], [0], [0], [1], [0, 0, 1, 1], [], []>} : vector<8x8xf32>, vector<8x128xf32>, vector<8x128xf32> -> vector<8x128xf32>
    %c4_240 = arith.constant 4 : index
    %c0_241 = arith.constant 0 : index
    %c0_242 = arith.constant 0 : index
    %c0_243 = arith.constant 0 : index
    %238 = vector.load %arg5[%c4_240, %c0_241, %c0_242, %c0_243] : memref<6x2x8x1xf32, #tpu.memory_space<vmem>>, vector<1x1x8x1xf32>
    %239 = vector.shape_cast %238 : vector<1x1x8x1xf32> to vector<8x1xf32>
    %240 = vector.broadcast %239 : vector<8x1xf32> to vector<8x128xf32>
    %241 = arith.mulf %237, %240 : vector<8x128xf32>
    %c4_244 = arith.constant 4 : index
    %c1_245 = arith.constant 1 : index
    %c0_246 = arith.constant 0 : index
    %c0_247 = arith.constant 0 : index
    %242 = vector.load %arg5[%c4_244, %c1_245, %c0_246, %c0_247] : memref<6x2x8x1xf32, #tpu.memory_space<vmem>>, vector<1x1x8x1xf32>
    %243 = vector.shape_cast %242 : vector<1x1x8x1xf32> to vector<8x1xf32>
    %244 = vector.broadcast %243 : vector<8x1xf32> to vector<8x128xf32>
    %245 = arith.addf %241, %244 : vector<8x128xf32>
    %c0_248 = arith.constant 0 : index
    %c0_249 = arith.constant 0 : index
    %246 = vector.load %arg6[%c0_248, %c0_249] : memref<128x384xf32, #tpu.memory_space<vmem>>, vector<128x384xf32>
    %cst_250 = arith.constant dense<0.000000e+00> : vector<8x384xf32>
    %247 = tpu.matmul %245, %246, %cst_250 {dimension_numbers = #tpu.dot_dimension_numbers<[1], [0], [0], [1], [0, 0, 1, 1], [], []>} : vector<8x128xf32>, vector<128x384xf32>, vector<8x384xf32> -> vector<8x384xf32>
    %248 = arith.addf %120, %247 : vector<8x384xf32>
    %cst_251 = arith.constant 0.000000e+00 : f32
    %249 = vector.broadcast %cst_251 : f32 to vector<8x384xf32>
    %250 = arith.maximumf %248, %249 : vector<8x384xf32>
    %251 = vector.broadcast %4 : vector<1x384xf32> to vector<8x384xf32>
    %252 = arith.mulf %250, %251 : vector<8x384xf32>
    %c0_252 = arith.constant 0 : index
    %c0_253 = arith.constant 0 : index
    %c0_254 = arith.constant 0 : index
    %253 = vector.load %arg10[%c0_252, %c0_253, %c0_254] : memref<1x8x384xf32, #tpu.memory_space<vmem>>, vector<1x8x384xf32>
    %254 = vector.shape_cast %253 : vector<1x8x384xf32> to vector<8x384xf32>
    %255 = vector.shape_cast %252 : vector<8x384xf32> to vector<1x8x384xf32>
    tpu.vector_store %arg10[%c0_252, %c0_253, %c0_254], %255 {strides = array<i32>} : memref<1x8x384xf32, #tpu.memory_space<vmem>>, vector<1x8x384xf32>,
    %cst_255 = arith.constant 0.000000e+00 : f32
    %256 = vector.broadcast %cst_255 : f32 to vector<8x384xf32>
    %c4_256 = arith.constant 4 : index
    %c0_257 = arith.constant 0 : index
    %c0_258 = arith.constant 0 : index
    %c0_259 = arith.constant 0 : index
    %257 = vector.load %arg3[%c4_256, %c0_257, %c0_258, %c0_259] : memref<5x9x8x8xf32, #tpu.memory_space<vmem>>, vector<1x1x8x8xf32>
    %258 = vector.shape_cast %257 : vector<1x1x8x8xf32> to vector<8x8xf32>
    %c19_i32_260 = arith.constant 19 : i32
    %259 = tpu.dynamic_rotate %120 by %c19_i32_260 dim 1 : vector<8x384xf32>, i32 -> vector<8x384xf32>
    %cst_261 = arith.constant dense<0.000000e+00> : vector<8x384xf32>
    %260 = tpu.matmul %258, %259, %cst_261 {dimension_numbers = #tpu.dot_dimension_numbers<[1], [0], [0], [1], [0, 0, 1, 1], [], []>} : vector<8x8xf32>, vector<8x384xf32>, vector<8x384xf32> -> vector<8x384xf32>
    %261 = arith.addf %256, %260 : vector<8x384xf32>
    %c4_262 = arith.constant 4 : index
    %c1_263 = arith.constant 1 : index
    %c0_264 = arith.constant 0 : index
    %c0_265 = arith.constant 0 : index
    %262 = vector.load %arg3[%c4_262, %c1_263, %c0_264, %c0_265] : memref<5x9x8x8xf32, #tpu.memory_space<vmem>>, vector<1x1x8x8xf32>
    %263 = vector.shape_cast %262 : vector<1x1x8x8xf32> to vector<8x8xf32>
    %c18_i32_266 = arith.constant 18 : i32
    %264 = tpu.dynamic_rotate %120 by %c18_i32_266 dim 1 : vector<8x384xf32>, i32 -> vector<8x384xf32>
    %cst_267 = arith.constant dense<0.000000e+00> : vector<8x384xf32>
    %265 = tpu.matmul %263, %264, %cst_267 {dimension_numbers = #tpu.dot_dimension_numbers<[1], [0], [0], [1], [0, 0, 1, 1], [], []>} : vector<8x8xf32>, vector<8x384xf32>, vector<8x384xf32> -> vector<8x384xf32>
    %266 = arith.addf %261, %265 : vector<8x384xf32>
    %c4_268 = arith.constant 4 : index
    %c2_269 = arith.constant 2 : index
    %c0_270 = arith.constant 0 : index
    %c0_271 = arith.constant 0 : index
    %267 = vector.load %arg3[%c4_268, %c2_269, %c0_270, %c0_271] : memref<5x9x8x8xf32, #tpu.memory_space<vmem>>, vector<1x1x8x8xf32>
    %268 = vector.shape_cast %267 : vector<1x1x8x8xf32> to vector<8x8xf32>
    %c17_i32_272 = arith.constant 17 : i32
    %269 = tpu.dynamic_rotate %120 by %c17_i32_272 dim 1 : vector<8x384xf32>, i32 -> vector<8x384xf32>
    %cst_273 = arith.constant dense<0.000000e+00> : vector<8x384xf32>
    %270 = tpu.matmul %268, %269, %cst_273 {dimension_numbers = #tpu.dot_dimension_numbers<[1], [0], [0], [1], [0, 0, 1, 1], [], []>} : vector<8x8xf32>, vector<8x384xf32>, vector<8x384xf32> -> vector<8x384xf32>
    %271 = arith.addf %266, %270 : vector<8x384xf32>
    %c4_274 = arith.constant 4 : index
    %c3_275 = arith.constant 3 : index
    %c0_276 = arith.constant 0 : index
    %c0_277 = arith.constant 0 : index
    %272 = vector.load %arg3[%c4_274, %c3_275, %c0_276, %c0_277] : memref<5x9x8x8xf32, #tpu.memory_space<vmem>>, vector<1x1x8x8xf32>
    %273 = vector.shape_cast %272 : vector<1x1x8x8xf32> to vector<8x8xf32>
    %c1_i32_278 = arith.constant 1 : i32
    %274 = tpu.dynamic_rotate %120 by %c1_i32_278 dim 1 : vector<8x384xf32>, i32 -> vector<8x384xf32>
    %cst_279 = arith.constant dense<0.000000e+00> : vector<8x384xf32>
    %275 = tpu.matmul %273, %274, %cst_279 {dimension_numbers = #tpu.dot_dimension_numbers<[1], [0], [0], [1], [0, 0, 1, 1], [], []>} : vector<8x8xf32>, vector<8x384xf32>, vector<8x384xf32> -> vector<8x384xf32>
    %276 = arith.addf %271, %275 : vector<8x384xf32>
    %c4_280 = arith.constant 4 : index
    %c4_281 = arith.constant 4 : index
    %c0_282 = arith.constant 0 : index
    %c0_283 = arith.constant 0 : index
    %277 = vector.load %arg3[%c4_280, %c4_281, %c0_282, %c0_283] : memref<5x9x8x8xf32, #tpu.memory_space<vmem>>, vector<1x1x8x8xf32>
    %278 = vector.shape_cast %277 : vector<1x1x8x8xf32> to vector<8x8xf32>
    %cst_284 = arith.constant dense<0.000000e+00> : vector<8x384xf32>
    %279 = tpu.matmul %278, %120, %cst_284 {dimension_numbers = #tpu.dot_dimension_numbers<[1], [0], [0], [1], [0, 0, 1, 1], [], []>} : vector<8x8xf32>, vector<8x384xf32>, vector<8x384xf32> -> vector<8x384xf32>
    %280 = arith.addf %276, %279 : vector<8x384xf32>
    %c4_285 = arith.constant 4 : index
    %c5_286 = arith.constant 5 : index
    %c0_287 = arith.constant 0 : index
    %c0_288 = arith.constant 0 : index
    %281 = vector.load %arg3[%c4_285, %c5_286, %c0_287, %c0_288] : memref<5x9x8x8xf32, #tpu.memory_space<vmem>>, vector<1x1x8x8xf32>
    %282 = vector.shape_cast %281 : vector<1x1x8x8xf32> to vector<8x8xf32>
    %c383_i32_289 = arith.constant 383 : i32
    %283 = tpu.dynamic_rotate %120 by %c383_i32_289 dim 1 : vector<8x384xf32>, i32 -> vector<8x384xf32>
    %cst_290 = arith.constant dense<0.000000e+00> : vector<8x384xf32>
    %284 = tpu.matmul %282, %283, %cst_290 {dimension_numbers = #tpu.dot_dimension_numbers<[1], [0], [0], [1], [0, 0, 1, 1], [], []>} : vector<8x8xf32>, vector<8x384xf32>, vector<8x384xf32> -> vector<8x384xf32>
    %285 = arith.addf %280, %284 : vector<8x384xf32>
    %c4_291 = arith.constant 4 : index
    %c6_292 = arith.constant 6 : index
    %c0_293 = arith.constant 0 : index
    %c0_294 = arith.constant 0 : index
    %286 = vector.load %arg3[%c4_291, %c6_292, %c0_293, %c0_294] : memref<5x9x8x8xf32, #tpu.memory_space<vmem>>, vector<1x1x8x8xf32>
    %287 = vector.shape_cast %286 : vector<1x1x8x8xf32> to vector<8x8xf32>
    %c367_i32_295 = arith.constant 367 : i32
    %288 = tpu.dynamic_rotate %120 by %c367_i32_295 dim 1 : vector<8x384xf32>, i32 -> vector<8x384xf32>
    %cst_296 = arith.constant dense<0.000000e+00> : vector<8x384xf32>
    %289 = tpu.matmul %287, %288, %cst_296 {dimension_numbers = #tpu.dot_dimension_numbers<[1], [0], [0], [1], [0, 0, 1, 1], [], []>} : vector<8x8xf32>, vector<8x384xf32>, vector<8x384xf32> -> vector<8x384xf32>
    %290 = arith.addf %285, %289 : vector<8x384xf32>
    %c4_297 = arith.constant 4 : index
    %c7_298 = arith.constant 7 : index
    %c0_299 = arith.constant 0 : index
    %c0_300 = arith.constant 0 : index
    %291 = vector.load %arg3[%c4_297, %c7_298, %c0_299, %c0_300] : memref<5x9x8x8xf32, #tpu.memory_space<vmem>>, vector<1x1x8x8xf32>
    %292 = vector.shape_cast %291 : vector<1x1x8x8xf32> to vector<8x8xf32>
    %c366_i32_301 = arith.constant 366 : i32
    %293 = tpu.dynamic_rotate %120 by %c366_i32_301 dim 1 : vector<8x384xf32>, i32 -> vector<8x384xf32>
    %cst_302 = arith.constant dense<0.000000e+00> : vector<8x384xf32>
    %294 = tpu.matmul %292, %293, %cst_302 {dimension_numbers = #tpu.dot_dimension_numbers<[1], [0], [0], [1], [0, 0, 1, 1], [], []>} : vector<8x8xf32>, vector<8x384xf32>, vector<8x384xf32> -> vector<8x384xf32>
    %295 = arith.addf %290, %294 : vector<8x384xf32>
    %c4_303 = arith.constant 4 : index
    %c8_304 = arith.constant 8 : index
    %c0_305 = arith.constant 0 : index
    %c0_306 = arith.constant 0 : index
    %296 = vector.load %arg3[%c4_303, %c8_304, %c0_305, %c0_306] : memref<5x9x8x8xf32, #tpu.memory_space<vmem>>, vector<1x1x8x8xf32>
    %297 = vector.shape_cast %296 : vector<1x1x8x8xf32> to vector<8x8xf32>
    %c365_i32_307 = arith.constant 365 : i32
    %298 = tpu.dynamic_rotate %120 by %c365_i32_307 dim 1 : vector<8x384xf32>, i32 -> vector<8x384xf32>
    %cst_308 = arith.constant dense<0.000000e+00> : vector<8x384xf32>
    %299 = tpu.matmul %297, %298, %cst_308 {dimension_numbers = #tpu.dot_dimension_numbers<[1], [0], [0], [1], [0, 0, 1, 1], [], []>} : vector<8x8xf32>, vector<8x384xf32>, vector<8x384xf32> -> vector<8x384xf32>
    %300 = arith.addf %295, %299 : vector<8x384xf32>
    %c0_309 = arith.constant 0 : index
    %c0_310 = arith.constant 0 : index
    %301 = vector.load %arg7[%c0_309, %c0_310] : memref<384x128xf32, #tpu.memory_space<vmem>>, vector<384x128xf32>
    %cst_311 = arith.constant dense<0.000000e+00> : vector<8x128xf32>
    %302 = tpu.matmul %300, %301, %cst_311 {dimension_numbers = #tpu.dot_dimension_numbers<[1], [0], [0], [1], [0, 0, 1, 1], [], []>} : vector<8x384xf32>, vector<384x128xf32>, vector<8x128xf32> -> vector<8x128xf32>
    %c5_312 = arith.constant 5 : index
    %c0_313 = arith.constant 0 : index
    %c0_314 = arith.constant 0 : index
    %c0_315 = arith.constant 0 : index
    %303 = vector.load %arg5[%c5_312, %c0_313, %c0_314, %c0_315] : memref<6x2x8x1xf32, #tpu.memory_space<vmem>>, vector<1x1x8x1xf32>
    %304 = vector.shape_cast %303 : vector<1x1x8x1xf32> to vector<8x1xf32>
    %305 = vector.broadcast %304 : vector<8x1xf32> to vector<8x128xf32>
    %306 = arith.mulf %302, %305 : vector<8x128xf32>
    %c5_316 = arith.constant 5 : index
    %c1_317 = arith.constant 1 : index
    %c0_318 = arith.constant 0 : index
    %c0_319 = arith.constant 0 : index
    %307 = vector.load %arg5[%c5_316, %c1_317, %c0_318, %c0_319] : memref<6x2x8x1xf32, #tpu.memory_space<vmem>>, vector<1x1x8x1xf32>
    %308 = vector.shape_cast %307 : vector<1x1x8x1xf32> to vector<8x1xf32>
    %309 = vector.broadcast %308 : vector<8x1xf32> to vector<8x128xf32>
    %310 = arith.addf %306, %309 : vector<8x128xf32>
    %311 = arith.addf %310, %235 : vector<8x128xf32>
    %cst_320 = arith.constant 0.000000e+00 : f32
    %312 = vector.broadcast %cst_320 : f32 to vector<8x128xf32>
    %313 = arith.maximumf %311, %312 : vector<8x128xf32>
    %314 = vector.broadcast %5 : vector<1x128xf32> to vector<8x128xf32>
    %315 = arith.mulf %313, %314 : vector<8x128xf32>
    %c0_321 = arith.constant 0 : index
    %c0_322 = arith.constant 0 : index
    %c0_323 = arith.constant 0 : index
    %316 = vector.load %arg11[%c0_321, %c0_322, %c0_323] : memref<1x8x128xf32, #tpu.memory_space<vmem>>, vector<1x8x128xf32>
    %317 = vector.shape_cast %316 : vector<1x8x128xf32> to vector<8x128xf32>
    %318 = vector.shape_cast %315 : vector<8x128xf32> to vector<1x8x128xf32>
    tpu.vector_store %arg11[%c0_321, %c0_322, %c0_323], %318 {strides = array<i32>} : memref<1x8x128xf32, #tpu.memory_space<vmem>>, vector<1x8x128xf32>,
    return
  }
  func.func @transform_0(%arg0: i32) -> (i32, i32, i32) {
    %c0_i32 = arith.constant 0 : i32
    %c0_i32_0 = arith.constant 0 : i32
    %c0_i32_1 = arith.constant 0 : i32
    return %arg0, %c0_i32, %c0_i32_0 : i32, i32, i32
  }
  func.func @transform_1(%arg0: i32) -> (i32, i32, i32) {
    %c0_i32 = arith.constant 0 : i32
    %c0_i32_0 = arith.constant 0 : i32
    %c0_i32_1 = arith.constant 0 : i32
    return %arg0, %c0_i32, %c0_i32_0 : i32, i32, i32
  }
  func.func @transform_2(%arg0: i32) -> (i32, i32, i32, i32) {
    %c0_i32 = arith.constant 0 : i32
    %c0_i32_0 = arith.constant 0 : i32
    %c0_i32_1 = arith.constant 0 : i32
    %c0_i32_2 = arith.constant 0 : i32
    %c0_i32_3 = arith.constant 0 : i32
    return %c0_i32, %c0_i32_0, %c0_i32_1, %c0_i32_2 : i32, i32, i32, i32
  }
  func.func @transform_3(%arg0: i32) -> (i32, i32) {
    %c0_i32 = arith.constant 0 : i32
    %c0_i32_0 = arith.constant 0 : i32
    %c0_i32_1 = arith.constant 0 : i32
    return %c0_i32, %c0_i32_0 : i32, i32
  }
  func.func @transform_4(%arg0: i32) -> (i32, i32, i32, i32) {
    %c0_i32 = arith.constant 0 : i32
    %c0_i32_0 = arith.constant 0 : i32
    %c0_i32_1 = arith.constant 0 : i32
    %c0_i32_2 = arith.constant 0 : i32
    %c0_i32_3 = arith.constant 0 : i32
    return %c0_i32, %c0_i32_0, %c0_i32_1, %c0_i32_2 : i32, i32, i32, i32
  }
  func.func @transform_5(%arg0: i32) -> (i32, i32) {
    %c0_i32 = arith.constant 0 : i32
    %c0_i32_0 = arith.constant 0 : i32
    %c0_i32_1 = arith.constant 0 : i32
    return %c0_i32, %c0_i32_0 : i32, i32
  }
  func.func @transform_6(%arg0: i32) -> (i32, i32) {
    %c0_i32 = arith.constant 0 : i32
    %c0_i32_0 = arith.constant 0 : i32
    %c0_i32_1 = arith.constant 0 : i32
    return %c0_i32, %c0_i32_0 : i32, i32
  }
  func.func @transform_7(%arg0: i32) -> (i32, i32) {
    %c0_i32 = arith.constant 0 : i32
    %c0_i32_0 = arith.constant 0 : i32
    %c0_i32_1 = arith.constant 0 : i32
    return %c0_i32, %c0_i32_0 : i32, i32
  }
  func.func @transform_8(%arg0: i32) -> (i32, i32) {
    %c0_i32 = arith.constant 0 : i32
    %c0_i32_0 = arith.constant 0 : i32
    %c0_i32_1 = arith.constant 0 : i32
    return %c0_i32, %c0_i32_0 : i32, i32
  }
  func.func @transform_9(%arg0: i32) -> (i32, i32, i32) {
    %c0_i32 = arith.constant 0 : i32
    %c0_i32_0 = arith.constant 0 : i32
    %c0_i32_1 = arith.constant 0 : i32
    return %arg0, %c0_i32, %c0_i32_0 : i32, i32, i32
  }
  func.func @transform_10(%arg0: i32) -> (i32, i32, i32) {
    %c0_i32 = arith.constant 0 : i32
    %c0_i32_0 = arith.constant 0 : i32
    %c0_i32_1 = arith.constant 0 : i32
    return %arg0, %c0_i32, %c0_i32_0 : i32, i32, i32
  }
}

</mosaic_0001>

<llo_original>
// kernel: tpu_custom_call.1
$region0: #{tpu_custom_call.1}
  #allocation0 [shape = 'u32[]', space=smem, size = 0x4, offset = 0x4, fixed_abs, tag = 'smem constant byte address 0x4 - core index']
  #allocation1 [shape = 'u32[144,128]{1,0:T(1,128)}', space=vmem, size = 0x12000, scoped, tag = 'internal scratch']
  %s0 = inlined_call_operand.hbm [shape: f32[2,8,384], index: 0, kind: input, shape index: {}]
  %s1 = inlined_call_operand.vmem [shape: f32[2,8,128], index: 1, kind: input, shape index: {}]
  %s2 = inlined_call_operand.vmem [shape: f32[5,9,8,8], index: 2, kind: input, shape index: {}]
  %s3 = inlined_call_operand.hbm [shape: f32[8,8], index: 3, kind: input, shape index: {}]
  %s4 = inlined_call_operand.vmem [shape: f32[6,2,8,1], index: 4, kind: input, shape index: {}]
  %s5 = inlined_call_operand.vmem [shape: f32[128,384], index: 5, kind: input, shape index: {}]
  %s6 = inlined_call_operand.vmem [shape: f32[384,128], index: 6, kind: input, shape index: {}]
  %s7 = inlined_call_operand.vmem [shape: f32[1,384], index: 7, kind: input, shape index: {}]
  %s8 = inlined_call_operand.vmem [shape: f32[1,128], index: 8, kind: input, shape index: {}]
  %s9 = inlined_call_operand.hbm [shape: f32[2,8,384], index: 9, kind: output, shape index: {0}]
  %s10 = inlined_call_operand.hbm [shape: f32[2,8,128], index: 10, kind: output, shape index: {1}]
  %11 = xla_tuple %s9, %s10
  %s12 = sld [smem:[#allocation0]]
  $region85: #{tpu_custom_call.1} parent=0
    _
  %s14 = ssub.s32 1, %s12
  %s15 = scalar_select 0, %s14, %s12
  $region1: #{tpu_custom_call.1} parent=0
    #allocation2 [shape = 'u8[24576]{0}', space=vmem, size = 0x6000, scoped, tag = 'input window, operand 0']
    #allocation3 [shape = 's32[2]{0}', space=sflag, size = 0x8, scoped, tag = 'scoped memory for tpu_custom_call.1']
    #allocation4 [shape = 's32[2]{0}', space=sflag, size = 0x8, scoped, tag = 'scoped memory for tpu_custom_call.1']
    #allocation5 [shape = 'u8[4096]{0}', space=vmem, size = 0x1000, scoped, tag = 'input window, operand 3, single buffered']
    #allocation6 [shape = 's32[1]{0}', space=sflag, size = 0x4, scoped, tag = 'scoped memory for tpu_custom_call.1']
    #allocation7 [shape = 'u8[24576]{0}', space=vmem, size = 0x6000, scoped, tag = 'output window, operand 0']
    #allocation8 [shape = 'u8[8192]{0}', space=vmem, size = 0x2000, scoped, tag = 'output window, operand 1']
    #allocation9 [shape = 's32[2]{0}', space=sflag, size = 0x8, scoped, tag = 'scoped memory for tpu_custom_call.1']
    %16 = vsyncpa [#allocation3], 0
    %s17 = scalar_lea.sflag [#allocation3], 1
    %18 = vsyncpa %s17, 0
    %19 = vsyncpa [#allocation6], 0
    %20 = vsyncpa [#allocation4], 0
    %s21 = scalar_lea.sflag [#allocation4], 1
    %22 = vsyncpa %s21, 0
    %23 = vsyncpa [#allocation9], 0
    %s24 = scalar_lea.sflag [#allocation9], 1
    %25 = vsyncpa %s24, 0
    loop: start=0, step=1, limit=4
    $region2: #{tpu_custom_call.1} parent=1 // loop_pre_header
      _
    $region3: #{tpu_custom_call.1} parent=1 // loop_header
      %s27 = sphi 0, %s31
      %p28 = scmp.ge.s32.totalorder %s27, 4
      %s37 = sphi 0, %s39
      %s40 = sphi 0, %s37
      %s41 = sphi 0, %s40
      %s57 = sphi 0, %s41
      %s63 = sphi 0, %s65
      %s66 = sphi 0, %s63
      %s67 = sphi 0, %s66
      %s83 = sphi 0, %s67
      %s87 = sphi 0, %s87
      %s89 = sphi 0, %s87
      %s90 = sphi 0, %s89
      %s104 = sphi 0, %s90
      %s108 = sphi 0, %s108
      %s110 = sphi 0, %s108
      %s111 = sphi 0, %s110
      %s125 = sphi 0, %s111
      %s129 = sphi 0, %s129
      %s131 = sphi 0, %s129
      %s132 = sphi 0, %s131
      %s146 = sphi 0, %s132
      %s150 = sphi 0, %s150
      %s152 = sphi 0, %s150
      %s153 = sphi 0, %s152
      %s167 = sphi 0, %s153
      %s171 = sphi 0, %s171
      %s173 = sphi 0, %s171
      %s174 = sphi 0, %s173
      %s188 = sphi 0, %s174
      %s192 = sphi 0, %s192
      %s194 = sphi 0, %s192
      %s195 = sphi 0, %s194
      %s209 = sphi 0, %s195
      %s213 = sphi 0, %s213
      %s215 = sphi 0, %s213
      %s216 = sphi 0, %s215
      %s230 = sphi 0, %s216
      %s236 = sphi 0, %s238
      %s239 = sphi 0, %s236
      %s240 = sphi 0, %s239
      %s256 = sphi 0, %s240
      %s262 = sphi 0, %s264
      %s265 = sphi 0, %s262
      %s266 = sphi 0, %s265
      %s282 = sphi 0, %s266
    $region4: #{tpu_custom_call.1} parent=1 // loop_header_branch
      %30 = sbr.rel (%p28) target = $region8
    $region5: #{tpu_custom_call.1} parent=1 // loop_body
      %s32 = ssub.s32 %s27, 1
      %s33 = ssub.s32 %s27, 2
      %s34 = sadd.s32 %s27, 1
      %s35 = ssub.s32 %s27, %s34
      %p36 = scmp.eq.s32.totalorder %s35, 0
      %s38 = sadd.s32 %s37, 1
      %s39 = scalar_select %p36, %s37, %s38
      %p42 = pneg %p36
      %p43 = scmp.eq.s32.totalorder %s27, 1
      %p44 = por %p42, %p43
      %p45 = scmp.ne.s32.totalorder %s37, %s40
      %p46 = scmp.eq.s32.totalorder %s27, 0
      %p47 = por %p45, %p46
      %p48 = scmp.ne.s32.totalorder %s37, %s40
      %p49 = scmp.eq.s32.totalorder %s32, 1
      %p50 = por %p48, %p49
      %p51 = scmp.ne.s32.totalorder %s40, %s41
      %p52 = scmp.eq.s32.totalorder %s32, 0
      %p53 = por %p51, %p52
      %p54 = scmp.ne.s32.totalorder %s40, %s41
      %p55 = scmp.eq.s32.totalorder %s33, 1
      %p56 = por %p54, %p55
      %p58 = scmp.ne.s32.totalorder %s41, %s57
      %p59 = scmp.eq.s32.totalorder %s33, 0
      %p60 = por %p58, %p59
      %s61 = ssub.s32 %s27, %s34
      %p62 = scmp.eq.s32.totalorder %s61, 0
      %s64 = sadd.s32 %s63, 1
      %s65 = scalar_select %p62, %s63, %s64
      %p68 = pneg %p62
      %p69 = scmp.eq.s32.totalorder %s27, 1
      %p70 = por %p68, %p69
      %p71 = scmp.ne.s32.totalorder %s63, %s66
      %p72 = scmp.eq.s32.totalorder %s27, 0
      %p73 = por %p71, %p72
      %p74 = scmp.ne.s32.totalorder %s63, %s66
      %p75 = scmp.eq.s32.totalorder %s32, 1
      %p76 = por %p74, %p75
      %p77 = scmp.ne.s32.totalorder %s66, %s67
      %p78 = scmp.eq.s32.totalorder %s32, 0
      %p79 = por %p77, %p78
      %p80 = scmp.ne.s32.totalorder %s66, %s67
      %p81 = scmp.eq.s32.totalorder %s33, 1
      %p82 = por %p80, %p81
      %p84 = scmp.ne.s32.totalorder %s67, %s83
      %p85 = scmp.eq.s32.totalorder %s33, 0
      %p86 = por %p84, %p85
      %s88 = sadd.s32 %s87, 1
      %p91 = scmp.eq.s32.totalorder %s27, 1
      %p92 = scmp.ne.s32.totalorder %s87, %s89
      %p93 = scmp.eq.s32.totalorder %s27, 0
      %p94 = por %p92, %p93
      %p95 = scmp.ne.s32.totalorder %s87, %s89
      %p96 = scmp.eq.s32.totalorder %s32, 1
      %p97 = por %p95, %p96
      %p98 = scmp.ne.s32.totalorder %s89, %s90
      %p99 = scmp.eq.s32.totalorder %s32, 0
      %p100 = por %p98, %p99
      %p101 = scmp.ne.s32.totalorder %s89, %s90
      %p102 = scmp.eq.s32.totalorder %s33, 1
      %p103 = por %p101, %p102
      %p105 = scmp.ne.s32.totalorder %s90, %s104
      %p106 = scmp.eq.s32.totalorder %s33, 0
      %p107 = por %p105, %p106
      %s109 = sadd.s32 %s108, 1
      %p112 = scmp.eq.s32.totalorder %s27, 1
      %p113 = scmp.ne.s32.totalorder %s108, %s110
      %p114 = scmp.eq.s32.totalorder %s27, 0
      %p115 = por %p113, %p114
      %p116 = scmp.ne.s32.totalorder %s108, %s110
      %p117 = scmp.eq.s32.totalorder %s32, 1
      %p118 = por %p116, %p117
      %p119 = scmp.ne.s32.totalorder %s110, %s111
      %p120 = scmp.eq.s32.totalorder %s32, 0
      %p121 = por %p119, %p120
      %p122 = scmp.ne.s32.totalorder %s110, %s111
      %p123 = scmp.eq.s32.totalorder %s33, 1
      %p124 = por %p122, %p123
      %p126 = scmp.ne.s32.totalorder %s111, %s125
      %p127 = scmp.eq.s32.totalorder %s33, 0
      %p128 = por %p126, %p127
      %s130 = sadd.s32 %s129, 1
      %p133 = scmp.eq.s32.totalorder %s27, 1
      %p134 = scmp.ne.s32.totalorder %s129, %s131
      %p135 = scmp.eq.s32.totalorder %s27, 0
      %p136 = por %p134, %p135
      %p137 = scmp.ne.s32.totalorder %s129, %s131
      %p138 = scmp.eq.s32.totalorder %s32, 1
      %p139 = por %p137, %p138
      %p140 = scmp.ne.s32.totalorder %s131, %s132
      %p141 = scmp.eq.s32.totalorder %s32, 0
      %p142 = por %p140, %p141
      %p143 = scmp.ne.s32.totalorder %s131, %s132
      %p144 = scmp.eq.s32.totalorder %s33, 1
      %p145 = por %p143, %p144
      %p147 = scmp.ne.s32.totalorder %s132, %s146
      %p148 = scmp.eq.s32.totalorder %s33, 0
      %p149 = por %p147, %p148
      %s151 = sadd.s32 %s150, 1
      %p154 = scmp.eq.s32.totalorder %s27, 1
      %p155 = scmp.ne.s32.totalorder %s150, %s152
      %p156 = scmp.eq.s32.totalorder %s27, 0
      %p157 = por %p155, %p156
      %p158 = scmp.ne.s32.totalorder %s150, %s152
      %p159 = scmp.eq.s32.totalorder %s32, 1
      %p160 = por %p158, %p159
      %p161 = scmp.ne.s32.totalorder %s152, %s153
      %p162 = scmp.eq.s32.totalorder %s32, 0
      %p163 = por %p161, %p162
      %p164 = scmp.ne.s32.totalorder %s152, %s153
      %p165 = scmp.eq.s32.totalorder %s33, 1
      %p166 = por %p164, %p165
      %p168 = scmp.ne.s32.totalorder %s153, %s167
      %p169 = scmp.eq.s32.totalorder %s33, 0
      %p170 = por %p168, %p169
      %s172 = sadd.s32 %s171, 1
      %p175 = scmp.eq.s32.totalorder %s27, 1
      %p176 = scmp.ne.s32.totalorder %s171, %s173
      %p177 = scmp.eq.s32.totalorder %s27, 0
      %p178 = por %p176, %p177
      %p179 = scmp.ne.s32.totalorder %s171, %s173
      %p180 = scmp.eq.s32.totalorder %s32, 1
      %p181 = por %p179, %p180
      %p182 = scmp.ne.s32.totalorder %s173, %s174
      %p183 = scmp.eq.s32.totalorder %s32, 0
      %p184 = por %p182, %p183
      %p185 = scmp.ne.s32.totalorder %s173, %s174
      %p186 = scmp.eq.s32.totalorder %s33, 1
      %p187 = por %p185, %p186
      %p189 = scmp.ne.s32.totalorder %s174, %s188
      %p190 = scmp.eq.s32.totalorder %s33, 0
      %p191 = por %p189, %p190
      %s193 = sadd.s32 %s192, 1
      %p196 = scmp.eq.s32.totalorder %s27, 1
      %p197 = scmp.ne.s32.totalorder %s192, %s194
      %p198 = scmp.eq.s32.totalorder %s27, 0
      %p199 = por %p197, %p198
      %p200 = scmp.ne.s32.totalorder %s192, %s194
      %p201 = scmp.eq.s32.totalorder %s32, 1
      %p202 = por %p200, %p201
      %p203 = scmp.ne.s32.totalorder %s194, %s195
      %p204 = scmp.eq.s32.totalorder %s32, 0
      %p205 = por %p203, %p204
      %p206 = scmp.ne.s32.totalorder %s194, %s195
      %p207 = scmp.eq.s32.totalorder %s33, 1
      %p208 = por %p206, %p207
      %p210 = scmp.ne.s32.totalorder %s195, %s209
      %p211 = scmp.eq.s32.totalorder %s33, 0
      %p212 = por %p210, %p211
      %s214 = sadd.s32 %s213, 1
      %p217 = scmp.eq.s32.totalorder %s27, 1
      %p218 = scmp.ne.s32.totalorder %s213, %s215
      %p219 = scmp.eq.s32.totalorder %s27, 0
      %p220 = por %p218, %p219
      %p221 = scmp.ne.s32.totalorder %s213, %s215
      %p222 = scmp.eq.s32.totalorder %s32, 1
      %p223 = por %p221, %p222
      %p224 = scmp.ne.s32.totalorder %s215, %s216
      %p225 = scmp.eq.s32.totalorder %s32, 0
      %p226 = por %p224, %p225
      %p227 = scmp.ne.s32.totalorder %s215, %s216
      %p228 = scmp.eq.s32.totalorder %s33, 1
      %p229 = por %p227, %p228
      %p231 = scmp.ne.s32.totalorder %s216, %s230
      %p232 = scmp.eq.s32.totalorder %s33, 0
      %p233 = por %p231, %p232
      %s234 = ssub.s32 %s27, %s34
      %p235 = scmp.eq.s32.totalorder %s234, 0
      %s237 = sadd.s32 %s236, 1
      %s238 = scalar_select %p235, %s236, %s237
      %p241 = pneg %p235
      %p242 = scmp.eq.s32.totalorder %s27, 1
      %p243 = por %p241, %p242
      %p244 = scmp.ne.s32.totalorder %s236, %s239
      %p245 = scmp.eq.s32.totalorder %s27, 0
      %p246 = por %p244, %p245
      %p247 = scmp.ne.s32.totalorder %s236, %s239
      %p248 = scmp.eq.s32.totalorder %s32, 1
      %p249 = por %p247, %p248
      %p250 = scmp.ne.s32.totalorder %s239, %s240
      %p251 = scmp.eq.s32.totalorder %s32, 0
      %p252 = por %p250, %p251
      %p253 = scmp.ne.s32.totalorder %s239, %s240
      %p254 = scmp.eq.s32.totalorder %s33, 1
      %p255 = por %p253, %p254
      %p257 = scmp.ne.s32.totalorder %s240, %s256
      %p258 = scmp.eq.s32.totalorder %s33, 0
      %p259 = por %p257, %p258
      %s260 = ssub.s32 %s27, %s34
      %p261 = scmp.eq.s32.totalorder %s260, 0
      %s263 = sadd.s32 %s262, 1
      %s264 = scalar_select %p261, %s262, %s263
      %p267 = pneg %p261
      %p268 = scmp.eq.s32.totalorder %s27, 1
      %p269 = por %p267, %p268
      %p270 = scmp.ne.s32.totalorder %s262, %s265
      %p271 = scmp.eq.s32.totalorder %s27, 0
      %p272 = por %p270, %p271
      %p273 = scmp.ne.s32.totalorder %s262, %s265
      %p274 = scmp.eq.s32.totalorder %s32, 1
      %p275 = por %p273, %p274
      %p276 = scmp.ne.s32.totalorder %s265, %s266
      %p277 = scmp.eq.s32.totalorder %s32, 0
      %p278 = por %p276, %p277
      %p279 = scmp.ne.s32.totalorder %s265, %s266
      %p280 = scmp.eq.s32.totalorder %s33, 1
      %p281 = por %p279, %p280
      %p283 = scmp.ne.s32.totalorder %s266, %s282
      %p284 = scmp.eq.s32.totalorder %s33, 0
      %p285 = por %p283, %p284
      %p286 = scmp.le.s32.totalorder 1, %s27
      %p287 = scmp.lt.s32.totalorder %s27, 3
      %p288 = pnand %p286, %p287
      %p289 = pneg %p288
      // Predicated region
      $region9: #{tpu_custom_call.1} parent=5 // pred_check
        _
      $region10: #{tpu_custom_call.1} parent=5 // pred_check_branch
        %291 = sbr.rel (%p288) target = $region12
      $region11: #{tpu_custom_call.1} parent=5 // pred_region
        %s292 = ssub.s32 %s27, 1
        // Predicated region
        $region13: #{tpu_custom_call.1} parent=11 // pred_check
          %p293 = pneg %p100
        $region14: #{tpu_custom_call.1} parent=11 // pred_check_branch
          %295 = sbr.rel (%p293) target = $region16
        $region15: #{tpu_custom_call.1} parent=11 // pred_region
          _
        $region16: #{tpu_custom_call.1} parent=11 // pred_fallthru
          _
        // Predicated region
        $region17: #{tpu_custom_call.1} parent=11 // pred_check
          %p296 = pneg %p121
        $region18: #{tpu_custom_call.1} parent=11 // pred_check_branch
          %298 = sbr.rel (%p296) target = $region20
        $region19: #{tpu_custom_call.1} parent=11 // pred_region
          %s300 = ssub.s32 128, 128
          %301 = vsyncadd [#allocation6], %s300
          %s303 = sshll.u32 [#allocation5], 4
          %s304 = int_to_ptr.vmem [resolvable:$true] %s303
          %306 = dma.hbm_to_vmem [thread:$0]  %s3, 128, %s304, [#allocation6]
        $region20: #{tpu_custom_call.1} parent=11 // pred_fallthru
          _
        // Predicated region
        $region21: #{tpu_custom_call.1} parent=11 // pred_check
          %p307 = pneg %p142
        $region22: #{tpu_custom_call.1} parent=11 // pred_check_branch
          %309 = sbr.rel (%p307) target = $region24
        $region23: #{tpu_custom_call.1} parent=11 // pred_region
          _
        $region24: #{tpu_custom_call.1} parent=11 // pred_fallthru
          _
        // Predicated region
        $region25: #{tpu_custom_call.1} parent=11 // pred_check
          %p310 = pneg %p163
        $region26: #{tpu_custom_call.1} parent=11 // pred_check_branch
          %312 = sbr.rel (%p310) target = $region28
        $region27: #{tpu_custom_call.1} parent=11 // pred_region
          _
        $region28: #{tpu_custom_call.1} parent=11 // pred_fallthru
          _
        // Predicated region
        $region29: #{tpu_custom_call.1} parent=11 // pred_check
          %p313 = pneg %p184
        $region30: #{tpu_custom_call.1} parent=11 // pred_check_branch
          %315 = sbr.rel (%p313) target = $region32
        $region31: #{tpu_custom_call.1} parent=11 // pred_region
          _
        $region32: #{tpu_custom_call.1} parent=11 // pred_fallthru
          _
        // Predicated region
        $region33: #{tpu_custom_call.1} parent=11 // pred_check
          %p316 = pneg %p205
        $region34: #{tpu_custom_call.1} parent=11 // pred_check_branch
          %318 = sbr.rel (%p316) target = $region36
        $region35: #{tpu_custom_call.1} parent=11 // pred_region
          _
        $region36: #{tpu_custom_call.1} parent=11 // pred_fallthru
          _
        // Predicated region
        $region37: #{tpu_custom_call.1} parent=11 // pred_check
          %p319 = pneg %p226
        $region38: #{tpu_custom_call.1} parent=11 // pred_check_branch
          %321 = sbr.rel (%p319) target = $region40
        $region39: #{tpu_custom_call.1} parent=11 // pred_region
          _
        $region40: #{tpu_custom_call.1} parent=11 // pred_fallthru
          _
      $region12: #{tpu_custom_call.1} parent=5 // pred_fallthru
        _
      %p322 = scmp.lt.s32.totalorder %s27, 2
      // Predicated region
      $region41: #{tpu_custom_call.1} parent=5 // pred_check
        %p323 = pneg %p322
      $region42: #{tpu_custom_call.1} parent=5 // pred_check_branch
        %325 = sbr.rel (%p323) target = $region44
      $region43: #{tpu_custom_call.1} parent=5 // pred_region
        // Predicated region
        $region45: #{tpu_custom_call.1} parent=43 // pred_check
          %p326 = pneg %p47
        $region46: #{tpu_custom_call.1} parent=43 // pred_check_branch
          %328 = sbr.rel (%p326) target = $region48
        $region47: #{tpu_custom_call.1} parent=43 // pred_region
          %s329 = sand.u32 %s37, 1
          %s330 = scalar_lea.sflag [#allocation3], %s329
          %s331 = sand.u32 %s37, 1
          %s332 = smul.addr %s331, 24
          %s333 = scalar_lea.vmem [#allocation2], %s332
          %s335 = ssub.s32 384, 384
          %336 = vsyncadd %s330, %s335
          %s337 = smul.addr %s27, 3
          %s338 = smul.addr %s337, 128
          %s339 = scalar_lea.hbm %s0, %s338
          %s341 = sshll.u32 %s333, 4
          %s342 = int_to_ptr.vmem [resolvable:$true] %s341
          %344 = dma.hbm_to_vmem [thread:$0]  %s339, 384, %s342, %s330
        $region48: #{tpu_custom_call.1} parent=43 // pred_fallthru
          _
        // Predicated region
        $region49: #{tpu_custom_call.1} parent=43 // pred_check
          %p345 = pneg %p73
        $region50: #{tpu_custom_call.1} parent=43 // pred_check_branch
          %347 = sbr.rel (%p345) target = $region52
        $region51: #{tpu_custom_call.1} parent=43 // pred_region
          %p348 = scmp.lt.s32.totalorder %s27, 1
          %s349 = scalar_select %p348, %s27, 1
          %s350 = smul.addr %s349, 8
          %s351 = scalar_lea.vmem %s1, %s350
        $region52: #{tpu_custom_call.1} parent=43 // pred_fallthru
          _
      $region44: #{tpu_custom_call.1} parent=5 // pred_fallthru
        _
      %p352 = scmp.le.s32.totalorder 1, %s27
      %p353 = scmp.lt.s32.totalorder %s27, 3
      %p354 = pnand %p352, %p353
      %p355 = pneg %p354
      // Predicated region
      $region53: #{tpu_custom_call.1} parent=5 // pred_check
        _
      $region54: #{tpu_custom_call.1} parent=5 // pred_check_branch
        %357 = sbr.rel (%p354) target = $region56
      $region55: #{tpu_custom_call.1} parent=5 // pred_region
        %s358 = ssub.s32 %s27, 1
        %s359 = sand.u32 %s40, 1
        %s360 = scalar_lea.sflag [#allocation3], %s359
        %s361 = sand.u32 %s40, 1
        %s362 = smul.addr %s361, 24
        %s363 = scalar_lea.vmem [#allocation2], %s362
        // Predicated region
        $region57: #{tpu_custom_call.1} parent=55 // pred_check
          %p364 = pneg %p53
        $region58: #{tpu_custom_call.1} parent=55 // pred_check_branch
          %366 = sbr.rel (%p364) target = $region60
        $region59: #{tpu_custom_call.1} parent=55 // pred_region
          %367 = dma.done %s360, 384
        $region60: #{tpu_custom_call.1} parent=55 // pred_fallthru
          _
        // Predicated region
        $region61: #{tpu_custom_call.1} parent=55 // pred_check
          %p368 = pneg %p121
        $region62: #{tpu_custom_call.1} parent=55 // pred_check_branch
          %370 = sbr.rel (%p368) target = $region64
        $region63: #{tpu_custom_call.1} parent=55 // pred_region
          %371 = dma.done [#allocation6], 128
        $region64: #{tpu_custom_call.1} parent=55 // pred_fallthru
          _
        %s372 = sand.u32 %s40, 1
        %s373 = scalar_lea.sflag [#allocation3], %s372
        %s374 = sand.u32 %s40, 1
        %s375 = smul.addr %s374, 24
        %s376 = scalar_lea.vmem [#allocation2], %s375
        %p377 = pneg %p53
        %p378 = pneg %p50
        %p379 = scmp.lt.s32.totalorder %s32, 1
        %s380 = scalar_select %p379, %s32, 1
        %s381 = smul.addr %s380, 8
        %s382 = scalar_lea.vmem %s1, %s381
        %p383 = pneg %p79
        %p384 = pneg %p76
        %p385 = pneg %p100
        %p386 = pneg %p97
        %p387 = pneg %p121
        %p388 = pneg %p118
        %p389 = pneg %p142
        %p390 = pneg %p139
        %p391 = pneg %p163
        %p392 = pneg %p160
        %p393 = pneg %p184
        %p394 = pneg %p181
        %p395 = pneg %p205
        %p396 = pneg %p202
        %p397 = pneg %p226
        %p398 = pneg %p223
        %p399 = pneg %p252
        %p400 = pneg %p249
        %s401 = sand.u32 %s239, 1
        %s402 = scalar_lea.sflag [#allocation4], %s401
        %s403 = sand.u32 %s239, 1
        %s404 = smul.addr %s403, 24
        %s405 = scalar_lea.vmem [#allocation7], %s404
        %p406 = pneg %p278
        %p407 = pneg %p275
        %s408 = sand.u32 %s265, 1
        %s409 = scalar_lea.sflag [#allocation9], %s408
        %s410 = sand.u32 %s265, 1
        %s411 = smul.addr %s410, 8
        %s412 = scalar_lea.vmem [#allocation8], %s411
        %p413 = scmp.lt.s32.totalorder %s32, 1
        %s414 = scalar_select %p413, %s32, 1
        %s415 = smul.addr %s414, 8
        %s416 = scalar_lea.vmem %s1, %s415
        %v417 = vld [vmem:[%s363] sm:$0xff]
        %v418 = vld [vmem:[%s363 + $0x8] sm:$0xff]
        %v419 = vld [vmem:[%s363 + $0x10] sm:$0xff]
        %v420 = vld [vmem:[%s416] sm:$0xff]
        %v421 = vld [vmem:[%s7] sm:$0x7]
        %v422 = vld [vmem:[%s8] sm:$0x1]
        %v423 = vld [vmem:[%s2] sm:$0xff]
        %424 = vrot.lane.b32.xlu0 %v417, 19
        %v425 = vpop.permute.xlu0 %424
        %426 = vrot.lane.b32.xlu0 %v418, 19
        %v427 = vpop.permute.xlu0 %426
        %428 = vrot.lane.b32.xlu0 %v419, 19
        %v429 = vpop.permute.xlu0 %428
        %v430 = vlaneseq
        %v431 = vand.u32 %v430, 127
        %vm432 = vcmp.lt.s32.totalorder %v431, 19
        %v433 = vsel %vm432, %v427, %v429
        %v434 = vsel %vm432, %v425, %v427
        %v435 = vsel %vm432, %v429, %v425
        %s436 = scalar_lea.vmem %s2, 8
        %v437 = vld [vmem:[%s436] sm:$0xff]
        %438 = vrot.lane.b32.xlu0 %v417, 18
        %v439 = vpop.permute.xlu0 %438
        %440 = vrot.lane.b32.xlu0 %v418, 18
        %v441 = vpop.permute.xlu0 %440
        %442 = vrot.lane.b32.xlu0 %v419, 18
        %v443 = vpop.permute.xlu0 %442
        %vm444 = vcmp.lt.s32.totalorder %v431, 18
        %v445 = vsel %vm444, %v441, %v443
        %v446 = vsel %vm444, %v439, %v441
        %v447 = vsel %vm444, %v443, %v439
        %vm448 = vcmask 64512
        %v450 = vsel %vm448, %v437, 0
        %452 = vmatprep.subr.mxu0 %v446
        %453 = vmatpush1.msra.mxu0 %v447
        %454 = vmatprep.subr.mxu0 0.0
        %455 = vmatpush1.msra.mxu0 0.0
        %456 = vmatprep.subr.mxu0 0.0
        %457 = vmatpush1.msra.mxu0 0.0
        %458 = vmatprep.subr.mxu0 0.0
        %459 = vmatpush1.msra.mxu0 0.0
        %460 = vmatprep.subr.mxu0 0.0
        %461 = vmatpush1.msra.mxu0 0.0
        %462 = vmatprep.subr.mxu0 0.0
        %463 = vmatpush1.msra.mxu0 0.0
        %464 = vmatprep.subr.mxu0 0.0
        %465 = vmatpush1.msra.mxu0 0.0
        %466 = vmatprep.subr.mxu0 0.0
        %467 = vmatpush1.msra.mxu0 0.0
        %468 = vmatprep.subr.mxu0 0.0
        %469 = vmatpush1.msra.mxu0 0.0
        %470 = vmatprep.subr.mxu0 0.0
        %471 = vmatpush1.msra.mxu0 0.0
        %472 = vmatprep.subr.mxu0 0.0
        %473 = vmatpush1.msra.mxu0 0.0
        %474 = vmatprep.subr.mxu0 0.0
        %475 = vmatpush1.msra.mxu0 0.0
        %476 = vmatprep.subr.mxu0 0.0
        %477 = vmatpush1.msra.mxu0 0.0
        %478 = vmatprep.subr.mxu0 0.0
        %479 = vmatpush1.msra.mxu0 0.0
        %480 = vmatprep.subr.mxu0 0.0
        %481 = vmatpush1.msra.mxu0 0.0
        %482 = vmatprep.subr.mxu0 0.0
        %483 = vmatpush1.msra.mxu0 0.0
        %484 = vmatprep.subr.mxu0 0.0
        %485 = vmatpush1.msra.mxu0 0.0
        %486 = vmatprep.subr.mxu0 0.0
        %487 = vmatpush1.msra.mxu0 0.0
        %488 = vmatprep.subr.mxu0 0.0
        %489 = vmatpush1.msra.mxu0 0.0
        %490 = vmatprep.subr.mxu0 0.0
        %491 = vmatpush1.msra.mxu0 0.0
        %492 = vmatprep.subr.mxu0 0.0
        %493 = vmatpush1.msra.mxu0 0.0
        %494 = vmatprep.subr.mxu0 0.0
        %495 = vmatpush1.msra.mxu0 0.0
        %496 = vmatprep.subr.mxu0 0.0
        %497 = vmatpush1.msra.mxu0 0.0
        %498 = vmatprep.subr.mxu0 0.0
        %499 = vmatpush1.msra.mxu0 0.0
        %500 = vmatprep.subr.mxu0 0.0
        %501 = vmatpush1.msra.mxu0 0.0
        %502 = vmatprep.subr.mxu0 0.0
        %503 = vmatpush1.msra.mxu0 0.0
        %504 = vmatprep.subr.mxu0 0.0
        %505 = vmatpush1.msra.mxu0 0.0
        %506 = vmatprep.subr.mxu0 0.0
        %507 = vmatpush1.msra.mxu0 0.0
        %508 = vmatprep.subr.mxu0 0.0
        %509 = vmatpush1.msra.mxu0 0.0
        %510 = vmatprep.subr.mxu0 0.0
        %511 = vmatpush1.msra.mxu0 0.0
        %512 = vmatprep.subr.mxu0 0.0
        %513 = vmatpush1.msra.mxu0 0.0
        %514 = vmatprep.subr.mxu0 0.0
        %515 = vmatpush1.msra.mxu0 0.0
        %516 = vmatprep.mubr.f32.mxu0 0.0
        %517 = vmatmul.mubr.f32.gmra.mrb[0].mxu0 %v450
        %v518 = vpop.f32.mrb[0].mxu0
        %v519 = vadd.f32 0.0, %v518
        %v520 = vpop.f32.mrb[0].mxu0
        %v521 = vadd.f32 0.0, %v520
        %522 = vdwg.mxu0
        %523 = vmatprep.subr.mxu0 0.0
        %524 = vmatpush1.msra.mxu0 %v445
        %525 = vmatprep.subr.mxu0 0.0
        %526 = vmatpush1.msra.mxu0 0.0
        %527 = vmatprep.subr.mxu0 0.0
        %528 = vmatpush1.msra.mxu0 0.0
        %529 = vmatprep.subr.mxu0 0.0
        %530 = vmatpush1.msra.mxu0 0.0
        %531 = vmatprep.subr.mxu0 0.0
        %532 = vmatpush1.msra.mxu0 0.0
        %533 = vmatprep.subr.mxu0 0.0
        %534 = vmatpush1.msra.mxu0 0.0
        %535 = vmatprep.subr.mxu0 0.0
        %536 = vmatpush1.msra.mxu0 0.0
        %537 = vmatprep.subr.mxu0 0.0
        %538 = vmatpush1.msra.mxu0 0.0
        %539 = vmatprep.subr.mxu0 0.0
        %540 = vmatpush1.msra.mxu0 0.0
        %541 = vmatprep.subr.mxu0 0.0
        %542 = vmatpush1.msra.mxu0 0.0
        %543 = vmatprep.subr.mxu0 0.0
        %544 = vmatpush1.msra.mxu0 0.0
        %545 = vmatprep.subr.mxu0 0.0
        %546 = vmatpush1.msra.mxu0 0.0
        %547 = vmatprep.subr.mxu0 0.0
        %548 = vmatpush1.msra.mxu0 0.0
        %549 = vmatprep.subr.mxu0 0.0
        %550 = vmatpush1.msra.mxu0 0.0
        %551 = vmatprep.subr.mxu0 0.0
        %552 = vmatpush1.msra.mxu0 0.0
        %553 = vmatprep.subr.mxu0 0.0
        %554 = vmatpush1.msra.mxu0 0.0
        %555 = vmatprep.subr.mxu0 0.0
        %556 = vmatpush1.msra.mxu0 0.0
        %557 = vmatprep.subr.mxu0 0.0
        %558 = vmatpush1.msra.mxu0 0.0
        %559 = vmatprep.subr.mxu0 0.0
        %560 = vmatpush1.msra.mxu0 0.0
        %561 = vmatprep.subr.mxu0 0.0
        %562 = vmatpush1.msra.mxu0 0.0
        %563 = vmatprep.subr.mxu0 0.0
        %564 = vmatpush1.msra.mxu0 0.0
        %565 = vmatprep.subr.mxu0 0.0
        %566 = vmatpush1.msra.mxu0 0.0
        %567 = vmatprep.subr.mxu0 0.0
        %568 = vmatpush1.msra.mxu0 0.0
        %569 = vmatprep.subr.mxu0 0.0
        %570 = vmatpush1.msra.mxu0 0.0
        %571 = vmatprep.subr.mxu0 0.0
        %572 = vmatpush1.msra.mxu0 0.0
        %573 = vmatprep.subr.mxu0 0.0
        %574 = vmatpush1.msra.mxu0 0.0
        %575 = vmatprep.subr.mxu0 0.0
        %576 = vmatpush1.msra.mxu0 0.0
        %577 = vmatprep.subr.mxu0 0.0
        %578 = vmatpush1.msra.mxu0 0.0
        %579 = vmatprep.subr.mxu0 0.0
        %580 = vmatpush1.msra.mxu0 0.0
        %581 = vmatprep.subr.mxu0 0.0
        %582 = vmatpush1.msra.mxu0 0.0
        %583 = vmatprep.subr.mxu0 0.0
        %584 = vmatpush1.msra.mxu0 0.0
        %585 = vmatprep.subr.mxu0 0.0
        %586 = vmatpush1.msra.mxu0 0.0
        %587 = vmatprep.mubr.f32.mxu0 0.0
        %588 = vmatmul.mubr.f32.gmra.mrb[0].mxu0 %v450
        %v589 = vpop.f32.mrb[0].mxu0
        %v590 = vadd.f32 0.0, %v589
        %v591 = vpop.f32.mrb[0].mxu0
        %592 = vdwg.mxu0
        %v594 = vsel %vm448, %v423, 0
        %596 = vmatprep.subr.mxu0 %v434
        %597 = vmatpush1.msra.mxu0 %v435
        %598 = vmatprep.subr.mxu0 0.0
        %599 = vmatpush1.msra.mxu0 0.0
        %600 = vmatprep.subr.mxu0 0.0
        %601 = vmatpush1.msra.mxu0 0.0
        %602 = vmatprep.subr.mxu0 0.0
        %603 = vmatpush1.msra.mxu0 0.0
        %604 = vmatprep.subr.mxu0 0.0
        %605 = vmatpush1.msra.mxu0 0.0
        %606 = vmatprep.subr.mxu0 0.0
        %607 = vmatpush1.msra.mxu0 0.0
        %608 = vmatprep.subr.mxu0 0.0
        %609 = vmatpush1.msra.mxu0 0.0
        %610 = vmatprep.subr.mxu0 0.0
        %611 = vmatpush1.msra.mxu0 0.0
        %612 = vmatprep.subr.mxu0 0.0
        %613 = vmatpush1.msra.mxu0 0.0
        %614 = vmatprep.subr.mxu0 0.0
        %615 = vmatpush1.msra.mxu0 0.0
        %616 = vmatprep.subr.mxu0 0.0
        %617 = vmatpush1.msra.mxu0 0.0
        %618 = vmatprep.subr.mxu0 0.0
        %619 = vmatpush1.msra.mxu0 0.0
        %620 = vmatprep.subr.mxu0 0.0
        %621 = vmatpush1.msra.mxu0 0.0
        %622 = vmatprep.subr.mxu0 0.0
        %623 = vmatpush1.msra.mxu0 0.0
        %624 = vmatprep.subr.mxu0 0.0
        %625 = vmatpush1.msra.mxu0 0.0
        %626 = vmatprep.subr.mxu0 0.0
        %627 = vmatpush1.msra.mxu0 0.0
        %628 = vmatprep.subr.mxu0 0.0
        %629 = vmatpush1.msra.mxu0 0.0
        %630 = vmatprep.subr.mxu0 0.0
        %631 = vmatpush1.msra.mxu0 0.0
        %632 = vmatprep.subr.mxu0 0.0
        %633 = vmatpush1.msra.mxu0 0.0
        %634 = vmatprep.subr.mxu0 0.0
        %635 = vmatpush1.msra.mxu0 0.0
        %636 = vmatprep.subr.mxu0 0.0
        %637 = vmatpush1.msra.mxu0 0.0
        %638 = vmatprep.subr.mxu0 0.0
        %639 = vmatpush1.msra.mxu0 0.0
        %640 = vmatprep.subr.mxu0 0.0
        %641 = vmatpush1.msra.mxu0 0.0
        %642 = vmatprep.subr.mxu0 0.0
        %643 = vmatpush1.msra.mxu0 0.0
        %644 = vmatprep.subr.mxu0 0.0
        %645 = vmatpush1.msra.mxu0 0.0
        %646 = vmatprep.subr.mxu0 0.0
        %647 = vmatpush1.msra.mxu0 0.0
        %648 = vmatprep.subr.mxu0 0.0
        %649 = vmatpush1.msra.mxu0 0.0
        %650 = vmatprep.subr.mxu0 0.0
        %651 = vmatpush1.msra.mxu0 0.0
        %652 = vmatprep.subr.mxu0 0.0
        %653 = vmatpush1.msra.mxu0 0.0
        %654 = vmatprep.subr.mxu0 0.0
        %655 = vmatpush1.msra.mxu0 0.0
        %656 = vmatprep.subr.mxu0 0.0
        %657 = vmatpush1.msra.mxu0 0.0
        %658 = vmatprep.subr.mxu0 0.0
        %659 = vmatpush1.msra.mxu0 0.0
        %660 = vmatprep.mubr.f32.mxu0 0.0
        %661 = vmatmul.mubr.f32.gmra.mrb[0].mxu0 %v594
        %v662 = vpop.f32.mrb[0].mxu0
        %v663 = vadd.f32 %v519, %v662
        %v664 = vpop.f32.mrb[0].mxu0
        %v665 = vadd.f32 %v521, %v664
        %666 = vdwg.mxu0
        %667 = vmatprep.subr.mxu0 0.0
        %668 = vmatpush1.msra.mxu0 %v433
        %669 = vmatprep.subr.mxu0 0.0
        %670 = vmatpush1.msra.mxu0 0.0
        %671 = vmatprep.subr.mxu0 0.0
        %672 = vmatpush1.msra.mxu0 0.0
        %673 = vmatprep.subr.mxu0 0.0
        %674 = vmatpush1.msra.mxu0 0.0
        %675 = vmatprep.subr.mxu0 0.0
        %676 = vmatpush1.msra.mxu0 0.0
        %677 = vmatprep.subr.mxu0 0.0
        %678 = vmatpush1.msra.mxu0 0.0
        %679 = vmatprep.subr.mxu0 0.0
        %680 = vmatpush1.msra.mxu0 0.0
        %681 = vmatprep.subr.mxu0 0.0
        %682 = vmatpush1.msra.mxu0 0.0
        %683 = vmatprep.subr.mxu0 0.0
        %684 = vmatpush1.msra.mxu0 0.0
        %685 = vmatprep.subr.mxu0 0.0
        %686 = vmatpush1.msra.mxu0 0.0
        %687 = vmatprep.subr.mxu0 0.0
        %688 = vmatpush1.msra.mxu0 0.0
        %689 = vmatprep.subr.mxu0 0.0
        %690 = vmatpush1.msra.mxu0 0.0
        %691 = vmatprep.subr.mxu0 0.0
        %692 = vmatpush1.msra.mxu0 0.0
        %693 = vmatprep.subr.mxu0 0.0
        %694 = vmatpush1.msra.mxu0 0.0
        %695 = vmatprep.subr.mxu0 0.0
        %696 = vmatpush1.msra.mxu0 0.0
        %697 = vmatprep.subr.mxu0 0.0
        %698 = vmatpush1.msra.mxu0 0.0
        %699 = vmatprep.subr.mxu0 0.0
        %700 = vmatpush1.msra.mxu0 0.0
        %701 = vmatprep.subr.mxu0 0.0
        %702 = vmatpush1.msra.mxu0 0.0
        %703 = vmatprep.subr.mxu0 0.0
        %704 = vmatpush1.msra.mxu0 0.0
        %705 = vmatprep.subr.mxu0 0.0
        %706 = vmatpush1.msra.mxu0 0.0
        %707 = vmatprep.subr.mxu0 0.0
        %708 = vmatpush1.msra.mxu0 0.0
        %709 = vmatprep.subr.mxu0 0.0
        %710 = vmatpush1.msra.mxu0 0.0
        %711 = vmatprep.subr.mxu0 0.0
        %712 = vmatpush1.msra.mxu0 0.0
        %713 = vmatprep.subr.mxu0 0.0
        %714 = vmatpush1.msra.mxu0 0.0
        %715 = vmatprep.subr.mxu0 0.0
        %716 = vmatpush1.msra.mxu0 0.0
        %717 = vmatprep.subr.mxu0 0.0
        %718 = vmatpush1.msra.mxu0 0.0
        %719 = vmatprep.subr.mxu0 0.0
        %720 = vmatpush1.msra.mxu0 0.0
        %721 = vmatprep.subr.mxu0 0.0
        %722 = vmatpush1.msra.mxu0 0.0
        %723 = vmatprep.subr.mxu0 0.0
        %724 = vmatpush1.msra.mxu0 0.0
        %725 = vmatprep.subr.mxu0 0.0
        %726 = vmatpush1.msra.mxu0 0.0
        %727 = vmatprep.subr.mxu0 0.0
        %728 = vmatpush1.msra.mxu0 0.0
        %729 = vmatprep.subr.mxu0 0.0
        %730 = vmatpush1.msra.mxu0 0.0
        %731 = vmatprep.mubr.f32.mxu0 0.0
        %732 = vmatmul.mubr.f32.gmra.mrb[0].mxu0 %v594
        %v733 = vpop.f32.mrb[0].mxu0
        %v734 = vadd.f32 %v590, %v733
        %v735 = vpop.f32.mrb[0].mxu0
        %736 = vdwg.mxu0
        %s737 = scalar_lea.vmem %s2, 16
        %v738 = vld [vmem:[%s737] sm:$0xff]
        %739 = vrot.lane.b32.xlu0 %v417, 17
        %v740 = vpop.permute.xlu0 %739
        %741 = vrot.lane.b32.xlu0 %v418, 17
        %v742 = vpop.permute.xlu0 %741
        %743 = vrot.lane.b32.xlu0 %v419, 17
        %v744 = vpop.permute.xlu0 %743
        %vm745 = vcmp.lt.s32.totalorder %v431, 17
        %v746 = vsel %vm745, %v742, %v744
        %v747 = vsel %vm745, %v740, %v742
        %v748 = vsel %vm745, %v744, %v740
        %v750 = vsel %vm448, %v738, 0
        %752 = vmatprep.subr.mxu0 %v747
        %753 = vmatpush1.msra.mxu0 %v748
        %754 = vmatprep.subr.mxu0 0.0
        %755 = vmatpush1.msra.mxu0 0.0
        %756 = vmatprep.subr.mxu0 0.0
        %757 = vmatpush1.msra.mxu0 0.0
        %758 = vmatprep.subr.mxu0 0.0
        %759 = vmatpush1.msra.mxu0 0.0
        %760 = vmatprep.subr.mxu0 0.0
        %761 = vmatpush1.msra.mxu0 0.0
        %762 = vmatprep.subr.mxu0 0.0
        %763 = vmatpush1.msra.mxu0 0.0
        %764 = vmatprep.subr.mxu0 0.0
        %765 = vmatpush1.msra.mxu0 0.0
        %766 = vmatprep.subr.mxu0 0.0
        %767 = vmatpush1.msra.mxu0 0.0
        %768 = vmatprep.subr.mxu0 0.0
        %769 = vmatpush1.msra.mxu0 0.0
        %770 = vmatprep.subr.mxu0 0.0
        %771 = vmatpush1.msra.mxu0 0.0
        %772 = vmatprep.subr.mxu0 0.0
        %773 = vmatpush1.msra.mxu0 0.0
        %774 = vmatprep.subr.mxu0 0.0
        %775 = vmatpush1.msra.mxu0 0.0
        %776 = vmatprep.subr.mxu0 0.0
        %777 = vmatpush1.msra.mxu0 0.0
        %778 = vmatprep.subr.mxu0 0.0
        %779 = vmatpush1.msra.mxu0 0.0
        %780 = vmatprep.subr.mxu0 0.0
        %781 = vmatpush1.msra.mxu0 0.0
        %782 = vmatprep.subr.mxu0 0.0
        %783 = vmatpush1.msra.mxu0 0.0
        %784 = vmatprep.subr.mxu0 0.0
        %785 = vmatpush1.msra.mxu0 0.0
        %786 = vmatprep.subr.mxu0 0.0
        %787 = vmatpush1.msra.mxu0 0.0
        %788 = vmatprep.subr.mxu0 0.0
        %789 = vmatpush1.msra.mxu0 0.0
        %790 = vmatprep.subr.mxu0 0.0
        %791 = vmatpush1.msra.mxu0 0.0
        %792 = vmatprep.subr.mxu0 0.0
        %793 = vmatpush1.msra.mxu0 0.0
        %794 = vmatprep.subr.mxu0 0.0
        %795 = vmatpush1.msra.mxu0 0.0
        %796 = vmatprep.subr.mxu0 0.0
        %797 = vmatpush1.msra.mxu0 0.0
        %798 = vmatprep.subr.mxu0 0.0
        %799 = vmatpush1.msra.mxu0 0.0
        %800 = vmatprep.subr.mxu0 0.0
        %801 = vmatpush1.msra.mxu0 0.0
        %802 = vmatprep.subr.mxu0 0.0
        %803 = vmatpush1.msra.mxu0 0.0
        %804 = vmatprep.subr.mxu0 0.0
        %805 = vmatpush1.msra.mxu0 0.0
        %806 = vmatprep.subr.mxu0 0.0
        %807 = vmatpush1.msra.mxu0 0.0
        %808 = vmatprep.subr.mxu0 0.0
        %809 = vmatpush1.msra.mxu0 0.0
        %810 = vmatprep.subr.mxu0 0.0
        %811 = vmatpush1.msra.mxu0 0.0
        %812 = vmatprep.subr.mxu0 0.0
        %813 = vmatpush1.msra.mxu0 0.0
        %814 = vmatprep.subr.mxu0 0.0
        %815 = vmatpush1.msra.mxu0 0.0
        %816 = vmatprep.mubr.f32.mxu0 0.0
        %817 = vmatmul.mubr.f32.gmra.mrb[0].mxu0 %v750
        %v818 = vpop.f32.mrb[0].mxu0
        %v819 = vadd.f32 0.0, %v818
        %v820 = vpop.f32.mrb[0].mxu0
        %v821 = vadd.f32 0.0, %v820
        %822 = vdwg.mxu0
        %823 = vmatprep.subr.mxu0 0.0
        %824 = vmatpush1.msra.mxu0 %v746
        %825 = vmatprep.subr.mxu0 0.0
        %826 = vmatpush1.msra.mxu0 0.0
        %827 = vmatprep.subr.mxu0 0.0
        %828 = vmatpush1.msra.mxu0 0.0
        %829 = vmatprep.subr.mxu0 0.0
        %830 = vmatpush1.msra.mxu0 0.0
        %831 = vmatprep.subr.mxu0 0.0
        %832 = vmatpush1.msra.mxu0 0.0
        %833 = vmatprep.subr.mxu0 0.0
        %834 = vmatpush1.msra.mxu0 0.0
        %835 = vmatprep.subr.mxu0 0.0
        %836 = vmatpush1.msra.mxu0 0.0
        %837 = vmatprep.subr.mxu0 0.0
        %838 = vmatpush1.msra.mxu0 0.0
        %839 = vmatprep.subr.mxu0 0.0
        %840 = vmatpush1.msra.mxu0 0.0
        %841 = vmatprep.subr.mxu0 0.0
        %842 = vmatpush1.msra.mxu0 0.0
        %843 = vmatprep.subr.mxu0 0.0
        %844 = vmatpush1.msra.mxu0 0.0
        %845 = vmatprep.subr.mxu0 0.0
        %846 = vmatpush1.msra.mxu0 0.0
        %847 = vmatprep.subr.mxu0 0.0
        %848 = vmatpush1.msra.mxu0 0.0
        %849 = vmatprep.subr.mxu0 0.0
        %850 = vmatpush1.msra.mxu0 0.0
        %851 = vmatprep.subr.mxu0 0.0
        %852 = vmatpush1.msra.mxu0 0.0
        %853 = vmatprep.subr.mxu0 0.0
        %854 = vmatpush1.msra.mxu0 0.0
        %855 = vmatprep.subr.mxu0 0.0
        %856 = vmatpush1.msra.mxu0 0.0
        %857 = vmatprep.subr.mxu0 0.0
        %858 = vmatpush1.msra.mxu0 0.0
        %859 = vmatprep.subr.mxu0 0.0
        %860 = vmatpush1.msra.mxu0 0.0
        %861 = vmatprep.subr.mxu0 0.0
        %862 = vmatpush1.msra.mxu0 0.0
        %863 = vmatprep.subr.mxu0 0.0
        %864 = vmatpush1.msra.mxu0 0.0
        %865 = vmatprep.subr.mxu0 0.0
        %866 = vmatpush1.msra.mxu0 0.0
        %867 = vmatprep.subr.mxu0 0.0
        %868 = vmatpush1.msra.mxu0 0.0
        %869 = vmatprep.subr.mxu0 0.0
        %870 = vmatpush1.msra.mxu0 0.0
        %871 = vmatprep.subr.mxu0 0.0
        %872 = vmatpush1.msra.mxu0 0.0
        %873 = vmatprep.subr.mxu0 0.0
        %874 = vmatpush1.msra.mxu0 0.0
        %875 = vmatprep.subr.mxu0 0.0
        %876 = vmatpush1.msra.mxu0 0.0
        %877 = vmatprep.subr.mxu0 0.0
        %878 = vmatpush1.msra.mxu0 0.0
        %879 = vmatprep.subr.mxu0 0.0
        %880 = vmatpush1.msra.mxu0 0.0
        %881 = vmatprep.subr.mxu0 0.0
        %882 = vmatpush1.msra.mxu0 0.0
        %883 = vmatprep.subr.mxu0 0.0
        %884 = vmatpush1.msra.mxu0 0.0
        %885 = vmatprep.subr.mxu0 0.0
        %886 = vmatpush1.msra.mxu0 0.0
        %887 = vmatprep.mubr.f32.mxu0 0.0
        %888 = vmatmul.mubr.f32.gmra.mrb[0].mxu0 %v750
        %v889 = vpop.f32.mrb[0].mxu0
        %v890 = vadd.f32 0.0, %v889
        %v891 = vpop.f32.mrb[0].mxu0
        %892 = vdwg.mxu0
        %v893 = vadd.f32 %v663, %v819
        %v894 = vadd.f32 %v665, %v821
        %v895 = vadd.f32 %v734, %v890
        %s896 = scalar_lea.vmem %s2, 24
        %v897 = vld [vmem:[%s896] sm:$0xff]
        %898 = vrot.lane.b32.xlu0 %v417, 1
        %v899 = vpop.permute.xlu0 %898
        %900 = vrot.lane.b32.xlu0 %v418, 1
        %v901 = vpop.permute.xlu0 %900
        %902 = vrot.lane.b32.xlu0 %v419, 1
        %v903 = vpop.permute.xlu0 %902
        %vm904 = vcmp.lt.s32.totalorder %v431, 1
        %v905 = vsel %vm904, %v901, %v903
        %v906 = vsel %vm904, %v899, %v901
        %v907 = vsel %vm904, %v903, %v899
        %v909 = vsel %vm448, %v897, 0
        %911 = vmatprep.subr.mxu0 %v906
        %912 = vmatpush1.msra.mxu0 %v907
        %913 = vmatprep.subr.mxu0 0.0
        %914 = vmatpush1.msra.mxu0 0.0
        %915 = vmatprep.subr.mxu0 0.0
        %916 = vmatpush1.msra.mxu0 0.0
        %917 = vmatprep.subr.mxu0 0.0
        %918 = vmatpush1.msra.mxu0 0.0
        %919 = vmatprep.subr.mxu0 0.0
        %920 = vmatpush1.msra.mxu0 0.0
        %921 = vmatprep.subr.mxu0 0.0
        %922 = vmatpush1.msra.mxu0 0.0
        %923 = vmatprep.subr.mxu0 0.0
        %924 = vmatpush1.msra.mxu0 0.0
        %925 = vmatprep.subr.mxu0 0.0
        %926 = vmatpush1.msra.mxu0 0.0
        %927 = vmatprep.subr.mxu0 0.0
        %928 = vmatpush1.msra.mxu0 0.0
        %929 = vmatprep.subr.mxu0 0.0
        %930 = vmatpush1.msra.mxu0 0.0
        %931 = vmatprep.subr.mxu0 0.0
        %932 = vmatpush1.msra.mxu0 0.0
        %933 = vmatprep.subr.mxu0 0.0
        %934 = vmatpush1.msra.mxu0 0.0
        %935 = vmatprep.subr.mxu0 0.0
        %936 = vmatpush1.msra.mxu0 0.0
        %937 = vmatprep.subr.mxu0 0.0
        %938 = vmatpush1.msra.mxu0 0.0
        %939 = vmatprep.subr.mxu0 0.0
        %940 = vmatpush1.msra.mxu0 0.0
        %941 = vmatprep.subr.mxu0 0.0
        %942 = vmatpush1.msra.mxu0 0.0
        %943 = vmatprep.subr.mxu0 0.0
        %944 = vmatpush1.msra.mxu0 0.0
        %945 = vmatprep.subr.mxu0 0.0
        %946 = vmatpush1.msra.mxu0 0.0
        %947 = vmatprep.subr.mxu0 0.0
        %948 = vmatpush1.msra.mxu0 0.0
        %949 = vmatprep.subr.mxu0 0.0
        %950 = vmatpush1.msra.mxu0 0.0
        %951 = vmatprep.subr.mxu0 0.0
        %952 = vmatpush1.msra.mxu0 0.0
        %953 = vmatprep.subr.mxu0 0.0
        %954 = vmatpush1.msra.mxu0 0.0
        %955 = vmatprep.subr.mxu0 0.0
        %956 = vmatpush1.msra.mxu0 0.0
        %957 = vmatprep.subr.mxu0 0.0
        %958 = vmatpush1.msra.mxu0 0.0
        %959 = vmatprep.subr.mxu0 0.0
        %960 = vmatpush1.msra.mxu0 0.0
        %961 = vmatprep.subr.mxu0 0.0
        %962 = vmatpush1.msra.mxu0 0.0
        %963 = vmatprep.subr.mxu0 0.0
        %964 = vmatpush1.msra.mxu0 0.0
        %965 = vmatprep.subr.mxu0 0.0
        %966 = vmatpush1.msra.mxu0 0.0
        %967 = vmatprep.subr.mxu0 0.0
        %968 = vmatpush1.msra.mxu0 0.0
        %969 = vmatprep.subr.mxu0 0.0
        %970 = vmatpush1.msra.mxu0 0.0
        %971 = vmatprep.subr.mxu0 0.0
        %972 = vmatpush1.msra.mxu0 0.0
        %973 = vmatprep.subr.mxu0 0.0
        %974 = vmatpush1.msra.mxu0 0.0
        %975 = vmatprep.mubr.f32.mxu0 0.0
        %976 = vmatmul.mubr.f32.gmra.mrb[0].mxu0 %v909
        %v977 = vpop.f32.mrb[0].mxu0
        %v978 = vadd.f32 0.0, %v977
        %v979 = vpop.f32.mrb[0].mxu0
        %v980 = vadd.f32 0.0, %v979
        %981 = vdwg.mxu0
        %982 = vmatprep.subr.mxu0 0.0
        %983 = vmatpush1.msra.mxu0 %v905
        %984 = vmatprep.subr.mxu0 0.0
        %985 = vmatpush1.msra.mxu0 0.0
        %986 = vmatprep.subr.mxu0 0.0
        %987 = vmatpush1.msra.mxu0 0.0
        %988 = vmatprep.subr.mxu0 0.0
        %989 = vmatpush1.msra.mxu0 0.0
        %990 = vmatprep.subr.mxu0 0.0
        %991 = vmatpush1.msra.mxu0 0.0
        %992 = vmatprep.subr.mxu0 0.0
        %993 = vmatpush1.msra.mxu0 0.0
        %994 = vmatprep.subr.mxu0 0.0
        %995 = vmatpush1.msra.mxu0 0.0
        %996 = vmatprep.subr.mxu0 0.0
        %997 = vmatpush1.msra.mxu0 0.0
        %998 = vmatprep.subr.mxu0 0.0
        %999 = vmatpush1.msra.mxu0 0.0
        %1000 = vmatprep.subr.mxu0 0.0
        %1001 = vmatpush1.msra.mxu0 0.0
        %1002 = vmatprep.subr.mxu0 0.0
        %1003 = vmatpush1.msra.mxu0 0.0
        %1004 = vmatprep.subr.mxu0 0.0
        %1005 = vmatpush1.msra.mxu0 0.0
        %1006 = vmatprep.subr.mxu0 0.0
        %1007 = vmatpush1.msra.mxu0 0.0
        %1008 = vmatprep.subr.mxu0 0.0
        %1009 = vmatpush1.msra.mxu0 0.0
        %1010 = vmatprep.subr.mxu0 0.0
        %1011 = vmatpush1.msra.mxu0 0.0
        %1012 = vmatprep.subr.mxu0 0.0
        %1013 = vmatpush1.msra.mxu0 0.0
        %1014 = vmatprep.subr.mxu0 0.0
        %1015 = vmatpush1.msra.mxu0 0.0
        %1016 = vmatprep.subr.mxu0 0.0
        %1017 = vmatpush1.msra.mxu0 0.0
        %1018 = vmatprep.subr.mxu0 0.0
        %1019 = vmatpush1.msra.mxu0 0.0
        %1020 = vmatprep.subr.mxu0 0.0
        %1021 = vmatpush1.msra.mxu0 0.0
        %1022 = vmatprep.subr.mxu0 0.0
        %1023 = vmatpush1.msra.mxu0 0.0
        %1024 = vmatprep.subr.mxu0 0.0
        %1025 = vmatpush1.msra.mxu0 0.0
        %1026 = vmatprep.subr.mxu0 0.0
        %1027 = vmatpush1.msra.mxu0 0.0
        %1028 = vmatprep.subr.mxu0 0.0
        %1029 = vmatpush1.msra.mxu0 0.0
        %1030 = vmatprep.subr.mxu0 0.0
        %1031 = vmatpush1.msra.mxu0 0.0
        %1032 = vmatprep.subr.mxu0 0.0
        %1033 = vmatpush1.msra.mxu0 0.0
        %1034 = vmatprep.subr.mxu0 0.0
        %1035 = vmatpush1.msra.mxu0 0.0
        %1036 = vmatprep.subr.mxu0 0.0
        %1037 = vmatpush1.msra.mxu0 0.0
        %1038 = vmatprep.subr.mxu0 0.0
        %1039 = vmatpush1.msra.mxu0 0.0
        %1040 = vmatprep.subr.mxu0 0.0
        %1041 = vmatpush1.msra.mxu0 0.0
        %1042 = vmatprep.subr.mxu0 0.0
        %1043 = vmatpush1.msra.mxu0 0.0
        %1044 = vmatprep.subr.mxu0 0.0
        %1045 = vmatpush1.msra.mxu0 0.0
        %1046 = vmatprep.mubr.f32.mxu0 0.0
        %1047 = vmatmul.mubr.f32.gmra.mrb[0].mxu0 %v909
        %v1048 = vpop.f32.mrb[0].mxu0
        %v1049 = vadd.f32 0.0, %v1048
        %v1050 = vpop.f32.mrb[0].mxu0
        %1051 = vdwg.mxu0
        %v1052 = vadd.f32 %v893, %v978
        %v1053 = vadd.f32 %v894, %v980
        %v1054 = vadd.f32 %v895, %v1049
        %s1055 = scalar_lea.vmem %s2, 32
        %v1056 = vld [vmem:[%s1055] sm:$0xff]
        %v1058 = vsel %vm448, %v1056, 0
        %1060 = vmatprep.subr.mxu0 %v418
        %1061 = vmatpush1.msra.mxu0 %v417
        %1062 = vmatprep.subr.mxu0 0.0
        %1063 = vmatpush1.msra.mxu0 0.0
        %1064 = vmatprep.subr.mxu0 0.0
        %1065 = vmatpush1.msra.mxu0 0.0
        %1066 = vmatprep.subr.mxu0 0.0
        %1067 = vmatpush1.msra.mxu0 0.0
        %1068 = vmatprep.subr.mxu0 0.0
        %1069 = vmatpush1.msra.mxu0 0.0
        %1070 = vmatprep.subr.mxu0 0.0
        %1071 = vmatpush1.msra.mxu0 0.0
        %1072 = vmatprep.subr.mxu0 0.0
        %1073 = vmatpush1.msra.mxu0 0.0
        %1074 = vmatprep.subr.mxu0 0.0
        %1075 = vmatpush1.msra.mxu0 0.0
        %1076 = vmatprep.subr.mxu0 0.0
        %1077 = vmatpush1.msra.mxu0 0.0
        %1078 = vmatprep.subr.mxu0 0.0
        %1079 = vmatpush1.msra.mxu0 0.0
        %1080 = vmatprep.subr.mxu0 0.0
        %1081 = vmatpush1.msra.mxu0 0.0
        %1082 = vmatprep.subr.mxu0 0.0
        %1083 = vmatpush1.msra.mxu0 0.0
        %1084 = vmatprep.subr.mxu0 0.0
        %1085 = vmatpush1.msra.mxu0 0.0
        %1086 = vmatprep.subr.mxu0 0.0
        %1087 = vmatpush1.msra.mxu0 0.0
        %1088 = vmatprep.subr.mxu0 0.0
        %1089 = vmatpush1.msra.mxu0 0.0
        %1090 = vmatprep.subr.mxu0 0.0
        %1091 = vmatpush1.msra.mxu0 0.0
        %1092 = vmatprep.subr.mxu0 0.0
        %1093 = vmatpush1.msra.mxu0 0.0
        %1094 = vmatprep.subr.mxu0 0.0
        %1095 = vmatpush1.msra.mxu0 0.0
        %1096 = vmatprep.subr.mxu0 0.0
        %1097 = vmatpush1.msra.mxu0 0.0
        %1098 = vmatprep.subr.mxu0 0.0
        %1099 = vmatpush1.msra.mxu0 0.0
        %1100 = vmatprep.subr.mxu0 0.0
        %1101 = vmatpush1.msra.mxu0 0.0
        %1102 = vmatprep.subr.mxu0 0.0
        %1103 = vmatpush1.msra.mxu0 0.0
        %1104 = vmatprep.subr.mxu0 0.0
        %1105 = vmatpush1.msra.mxu0 0.0
        %1106 = vmatprep.subr.mxu0 0.0
        %1107 = vmatpush1.msra.mxu0 0.0
        %1108 = vmatprep.subr.mxu0 0.0
        %1109 = vmatpush1.msra.mxu0 0.0
        %1110 = vmatprep.subr.mxu0 0.0
        %1111 = vmatpush1.msra.mxu0 0.0
        %1112 = vmatprep.subr.mxu0 0.0
        %1113 = vmatpush1.msra.mxu0 0.0
        %1114 = vmatprep.subr.mxu0 0.0
        %1115 = vmatpush1.msra.mxu0 0.0
        %1116 = vmatprep.subr.mxu0 0.0
        %1117 = vmatpush1.msra.mxu0 0.0
        %1118 = vmatprep.subr.mxu0 0.0
        %1119 = vmatpush1.msra.mxu0 0.0
        %1120 = vmatprep.subr.mxu0 0.0
        %1121 = vmatpush1.msra.mxu0 0.0
        %1122 = vmatprep.subr.mxu0 0.0
        %1123 = vmatpush1.msra.mxu0 0.0
        %1124 = vmatprep.mubr.f32.mxu0 0.0
        %1125 = vmatmul.mubr.f32.gmra.mrb[0].mxu0 %v1058
        %v1126 = vpop.f32.mrb[0].mxu0
        %v1127 = vadd.f32 0.0, %v1126
        %v1128 = vpop.f32.mrb[0].mxu0
        %v1129 = vadd.f32 0.0, %v1128
        %1130 = vdwg.mxu0
        %1131 = vmatprep.subr.mxu0 0.0
        %1132 = vmatpush1.msra.mxu0 %v419
        %1133 = vmatprep.subr.mxu0 0.0
        %1134 = vmatpush1.msra.mxu0 0.0
        %1135 = vmatprep.subr.mxu0 0.0
        %1136 = vmatpush1.msra.mxu0 0.0
        %1137 = vmatprep.subr.mxu0 0.0
        %1138 = vmatpush1.msra.mxu0 0.0
        %1139 = vmatprep.subr.mxu0 0.0
        %1140 = vmatpush1.msra.mxu0 0.0
        %1141 = vmatprep.subr.mxu0 0.0
        %1142 = vmatpush1.msra.mxu0 0.0
        %1143 = vmatprep.subr.mxu0 0.0
        %1144 = vmatpush1.msra.mxu0 0.0
        %1145 = vmatprep.subr.mxu0 0.0
        %1146 = vmatpush1.msra.mxu0 0.0
        %1147 = vmatprep.subr.mxu0 0.0
        %1148 = vmatpush1.msra.mxu0 0.0
        %1149 = vmatprep.subr.mxu0 0.0
        %1150 = vmatpush1.msra.mxu0 0.0
        %1151 = vmatprep.subr.mxu0 0.0
        %1152 = vmatpush1.msra.mxu0 0.0
        %1153 = vmatprep.subr.mxu0 0.0
        %1154 = vmatpush1.msra.mxu0 0.0
        %1155 = vmatprep.subr.mxu0 0.0
        %1156 = vmatpush1.msra.mxu0 0.0
        %1157 = vmatprep.subr.mxu0 0.0
        %1158 = vmatpush1.msra.mxu0 0.0
        %1159 = vmatprep.subr.mxu0 0.0
        %1160 = vmatpush1.msra.mxu0 0.0
        %1161 = vmatprep.subr.mxu0 0.0
        %1162 = vmatpush1.msra.mxu0 0.0
        %1163 = vmatprep.subr.mxu0 0.0
        %1164 = vmatpush1.msra.mxu0 0.0
        %1165 = vmatprep.subr.mxu0 0.0
        %1166 = vmatpush1.msra.mxu0 0.0
        %1167 = vmatprep.subr.mxu0 0.0
        %1168 = vmatpush1.msra.mxu0 0.0
        %1169 = vmatprep.subr.mxu0 0.0
        %1170 = vmatpush1.msra.mxu0 0.0
        %1171 = vmatprep.subr.mxu0 0.0
        %1172 = vmatpush1.msra.mxu0 0.0
        %1173 = vmatprep.subr.mxu0 0.0
        %1174 = vmatpush1.msra.mxu0 0.0
        %1175 = vmatprep.subr.mxu0 0.0
        %1176 = vmatpush1.msra.mxu0 0.0
        %1177 = vmatprep.subr.mxu0 0.0
        %1178 = vmatpush1.msra.mxu0 0.0
        %1179 = vmatprep.subr.mxu0 0.0
        %1180 = vmatpush1.msra.mxu0 0.0
        %1181 = vmatprep.subr.mxu0 0.0
        %1182 = vmatpush1.msra.mxu0 0.0
        %1183 = vmatprep.subr.mxu0 0.0
        %1184 = vmatpush1.msra.mxu0 0.0
        %1185 = vmatprep.subr.mxu0 0.0
        %1186 = vmatpush1.msra.mxu0 0.0
        %1187 = vmatprep.subr.mxu0 0.0
        %1188 = vmatpush1.msra.mxu0 0.0
        %1189 = vmatprep.subr.mxu0 0.0
        %1190 = vmatpush1.msra.mxu0 0.0
        %1191 = vmatprep.subr.mxu0 0.0
        %1192 = vmatpush1.msra.mxu0 0.0
        %1193 = vmatprep.subr.mxu0 0.0
        %1194 = vmatpush1.msra.mxu0 0.0
        %1195 = vmatprep.mubr.f32.mxu0 0.0
        %1196 = vmatmul.mubr.f32.gmra.mrb[0].mxu0 %v1058
        %v1197 = vpop.f32.mrb[0].mxu0
        %v1198 = vadd.f32 0.0, %v1197
        %v1199 = vpop.f32.mrb[0].mxu0
        %1200 = vdwg.mxu0
        %v1201 = vadd.f32 %v1052, %v1127
        %v1202 = vadd.f32 %v1053, %v1129
        %v1203 = vadd.f32 %v1054, %v1198
        %s1204 = scalar_lea.vmem %s2, 40
        %v1205 = vld [vmem:[%s1204] sm:$0xff]
        %1206 = vrot.lane.b32.xlu0 %v417, 127
        %v1207 = vpop.permute.xlu0 %1206
        %1208 = vrot.lane.b32.xlu0 %v418, 127
        %v1209 = vpop.permute.xlu0 %1208
        %1210 = vrot.lane.b32.xlu0 %v419, 127
        %v1211 = vpop.permute.xlu0 %1210
        %vm1212 = vcmp.lt.s32.totalorder %v431, 127
        %v1213 = vsel %vm1212, %v1209, %v1211
        %v1214 = vsel %vm1212, %v1207, %v1209
        %v1215 = vsel %vm1212, %v1211, %v1207
        %v1217 = vsel %vm448, %v1205, 0
        %1219 = vmatprep.subr.mxu0 %v1213
        %1220 = vmatpush1.msra.mxu0 %v1214
        %1221 = vmatprep.subr.mxu0 0.0
        %1222 = vmatpush1.msra.mxu0 0.0
        %1223 = vmatprep.subr.mxu0 0.0
        %1224 = vmatpush1.msra.mxu0 0.0
        %1225 = vmatprep.subr.mxu0 0.0
        %1226 = vmatpush1.msra.mxu0 0.0
        %1227 = vmatprep.subr.mxu0 0.0
        %1228 = vmatpush1.msra.mxu0 0.0
        %1229 = vmatprep.subr.mxu0 0.0
        %1230 = vmatpush1.msra.mxu0 0.0
        %1231 = vmatprep.subr.mxu0 0.0
        %1232 = vmatpush1.msra.mxu0 0.0
        %1233 = vmatprep.subr.mxu0 0.0
        %1234 = vmatpush1.msra.mxu0 0.0
        %1235 = vmatprep.subr.mxu0 0.0
        %1236 = vmatpush1.msra.mxu0 0.0
        %1237 = vmatprep.subr.mxu0 0.0
        %1238 = vmatpush1.msra.mxu0 0.0
        %1239 = vmatprep.subr.mxu0 0.0
        %1240 = vmatpush1.msra.mxu0 0.0
        %1241 = vmatprep.subr.mxu0 0.0
        %1242 = vmatpush1.msra.mxu0 0.0
        %1243 = vmatprep.subr.mxu0 0.0
        %1244 = vmatpush1.msra.mxu0 0.0
        %1245 = vmatprep.subr.mxu0 0.0
        %1246 = vmatpush1.msra.mxu0 0.0
        %1247 = vmatprep.subr.mxu0 0.0
        %1248 = vmatpush1.msra.mxu0 0.0
        %1249 = vmatprep.subr.mxu0 0.0
        %1250 = vmatpush1.msra.mxu0 0.0
        %1251 = vmatprep.subr.mxu0 0.0
        %1252 = vmatpush1.msra.mxu0 0.0
        %1253 = vmatprep.subr.mxu0 0.0
        %1254 = vmatpush1.msra.mxu0 0.0
        %1255 = vmatprep.subr.mxu0 0.0
        %1256 = vmatpush1.msra.mxu0 0.0
        %1257 = vmatprep.subr.mxu0 0.0
        %1258 = vmatpush1.msra.mxu0 0.0
        %1259 = vmatprep.subr.mxu0 0.0
        %1260 = vmatpush1.msra.mxu0 0.0
        %1261 = vmatprep.subr.mxu0 0.0
        %1262 = vmatpush1.msra.mxu0 0.0
        %1263 = vmatprep.subr.mxu0 0.0
        %1264 = vmatpush1.msra.mxu0 0.0
        %1265 = vmatprep.subr.mxu0 0.0
        %1266 = vmatpush1.msra.mxu0 0.0
        %1267 = vmatprep.subr.mxu0 0.0
        %1268 = vmatpush1.msra.mxu0 0.0
        %1269 = vmatprep.subr.mxu0 0.0
        %1270 = vmatpush1.msra.mxu0 0.0
        %1271 = vmatprep.subr.mxu0 0.0
        %1272 = vmatpush1.msra.mxu0 0.0
        %1273 = vmatprep.subr.mxu0 0.0
        %1274 = vmatpush1.msra.mxu0 0.0
        %1275 = vmatprep.subr.mxu0 0.0
        %1276 = vmatpush1.msra.mxu0 0.0
        %1277 = vmatprep.subr.mxu0 0.0
        %1278 = vmatpush1.msra.mxu0 0.0
        %1279 = vmatprep.subr.mxu0 0.0
        %1280 = vmatpush1.msra.mxu0 0.0
        %1281 = vmatprep.subr.mxu0 0.0
        %1282 = vmatpush1.msra.mxu0 0.0
        %1283 = vmatprep.mubr.f32.mxu0 0.0
        %1284 = vmatmul.mubr.f32.gmra.mrb[0].mxu0 %v1217
        %v1285 = vpop.f32.mrb[0].mxu0
        %v1286 = vadd.f32 0.0, %v1285
        %v1287 = vpop.f32.mrb[0].mxu0
        %v1288 = vadd.f32 0.0, %v1287
        %1289 = vdwg.mxu0
        %1290 = vmatprep.subr.mxu0 0.0
        %1291 = vmatpush1.msra.mxu0 %v1215
        %1292 = vmatprep.subr.mxu0 0.0
        %1293 = vmatpush1.msra.mxu0 0.0
        %1294 = vmatprep.subr.mxu0 0.0
        %1295 = vmatpush1.msra.mxu0 0.0
        %1296 = vmatprep.subr.mxu0 0.0
        %1297 = vmatpush1.msra.mxu0 0.0
        %1298 = vmatprep.subr.mxu0 0.0
        %1299 = vmatpush1.msra.mxu0 0.0
        %1300 = vmatprep.subr.mxu0 0.0
        %1301 = vmatpush1.msra.mxu0 0.0
        %1302 = vmatprep.subr.mxu0 0.0
        %1303 = vmatpush1.msra.mxu0 0.0
        %1304 = vmatprep.subr.mxu0 0.0
        %1305 = vmatpush1.msra.mxu0 0.0
        %1306 = vmatprep.subr.mxu0 0.0
        %1307 = vmatpush1.msra.mxu0 0.0
        %1308 = vmatprep.subr.mxu0 0.0
        %1309 = vmatpush1.msra.mxu0 0.0
        %1310 = vmatprep.subr.mxu0 0.0
        %1311 = vmatpush1.msra.mxu0 0.0
        %1312 = vmatprep.subr.mxu0 0.0
        %1313 = vmatpush1.msra.mxu0 0.0
        %1314 = vmatprep.subr.mxu0 0.0
        %1315 = vmatpush1.msra.mxu0 0.0
        %1316 = vmatprep.subr.mxu0 0.0
        %1317 = vmatpush1.msra.mxu0 0.0
        %1318 = vmatprep.subr.mxu0 0.0
        %1319 = vmatpush1.msra.mxu0 0.0
        %1320 = vmatprep.subr.mxu0 0.0
        %1321 = vmatpush1.msra.mxu0 0.0
        %1322 = vmatprep.subr.mxu0 0.0
        %1323 = vmatpush1.msra.mxu0 0.0
        %1324 = vmatprep.subr.mxu0 0.0
        %1325 = vmatpush1.msra.mxu0 0.0
        %1326 = vmatprep.subr.mxu0 0.0
        %1327 = vmatpush1.msra.mxu0 0.0
        %1328 = vmatprep.subr.mxu0 0.0
        %1329 = vmatpush1.msra.mxu0 0.0
        %1330 = vmatprep.subr.mxu0 0.0
        %1331 = vmatpush1.msra.mxu0 0.0
        %1332 = vmatprep.subr.mxu0 0.0
        %1333 = vmatpush1.msra.mxu0 0.0
        %1334 = vmatprep.subr.mxu0 0.0
        %1335 = vmatpush1.msra.mxu0 0.0
        %1336 = vmatprep.subr.mxu0 0.0
        %1337 = vmatpush1.msra.mxu0 0.0
        %1338 = vmatprep.subr.mxu0 0.0
        %1339 = vmatpush1.msra.mxu0 0.0
        %1340 = vmatprep.subr.mxu0 0.0
        %1341 = vmatpush1.msra.mxu0 0.0
        %1342 = vmatprep.subr.mxu0 0.0
        %1343 = vmatpush1.msra.mxu0 0.0
        %1344 = vmatprep.subr.mxu0 0.0
        %1345 = vmatpush1.msra.mxu0 0.0
        %1346 = vmatprep.subr.mxu0 0.0
        %1347 = vmatpush1.msra.mxu0 0.0
        %1348 = vmatprep.subr.mxu0 0.0
        %1349 = vmatpush1.msra.mxu0 0.0
        %1350 = vmatprep.subr.mxu0 0.0
        %1351 = vmatpush1.msra.mxu0 0.0
        %1352 = vmatprep.subr.mxu0 0.0
        %1353 = vmatpush1.msra.mxu0 0.0
        %1354 = vmatprep.mubr.f32.mxu0 0.0
        %1355 = vmatmul.mubr.f32.gmra.mrb[0].mxu0 %v1217
        %v1356 = vpop.f32.mrb[0].mxu0
        %v1357 = vadd.f32 0.0, %v1356
        %v1358 = vpop.f32.mrb[0].mxu0
        %1359 = vdwg.mxu0
        %v1360 = vadd.f32 %v1201, %v1286
        %v1361 = vadd.f32 %v1202, %v1288
        %v1362 = vadd.f32 %v1203, %v1357
        %s1363 = scalar_lea.vmem %s2, 48
        %v1364 = vld [vmem:[%s1363] sm:$0xff]
        %1365 = vrot.lane.b32.xlu0 %v417, 111
        %v1366 = vpop.permute.xlu0 %1365
        %1367 = vrot.lane.b32.xlu0 %v418, 111
        %v1368 = vpop.permute.xlu0 %1367
        %1369 = vrot.lane.b32.xlu0 %v419, 111
        %v1370 = vpop.permute.xlu0 %1369
        %vm1371 = vcmp.lt.s32.totalorder %v431, 111
        %v1372 = vsel %vm1371, %v1368, %v1370
        %v1373 = vsel %vm1371, %v1366, %v1368
        %v1374 = vsel %vm1371, %v1370, %v1366
        %v1376 = vsel %vm448, %v1364, 0
        %1378 = vmatprep.subr.mxu0 %v1372
        %1379 = vmatpush1.msra.mxu0 %v1373
        %1380 = vmatprep.subr.mxu0 0.0
        %1381 = vmatpush1.msra.mxu0 0.0
        %1382 = vmatprep.subr.mxu0 0.0
        %1383 = vmatpush1.msra.mxu0 0.0
        %1384 = vmatprep.subr.mxu0 0.0
        %1385 = vmatpush1.msra.mxu0 0.0
        %1386 = vmatprep.subr.mxu0 0.0
        %1387 = vmatpush1.msra.mxu0 0.0
        %1388 = vmatprep.subr.mxu0 0.0
        %1389 = vmatpush1.msra.mxu0 0.0
        %1390 = vmatprep.subr.mxu0 0.0
        %1391 = vmatpush1.msra.mxu0 0.0
        %1392 = vmatprep.subr.mxu0 0.0
        %1393 = vmatpush1.msra.mxu0 0.0
        %1394 = vmatprep.subr.mxu0 0.0
        %1395 = vmatpush1.msra.mxu0 0.0
        %1396 = vmatprep.subr.mxu0 0.0
        %1397 = vmatpush1.msra.mxu0 0.0
        %1398 = vmatprep.subr.mxu0 0.0
        %1399 = vmatpush1.msra.mxu0 0.0
        %1400 = vmatprep.subr.mxu0 0.0
        %1401 = vmatpush1.msra.mxu0 0.0
        %1402 = vmatprep.subr.mxu0 0.0
        %1403 = vmatpush1.msra.mxu0 0.0
        %1404 = vmatprep.subr.mxu0 0.0
        %1405 = vmatpush1.msra.mxu0 0.0
        %1406 = vmatprep.subr.mxu0 0.0
        %1407 = vmatpush1.msra.mxu0 0.0
        %1408 = vmatprep.subr.mxu0 0.0
        %1409 = vmatpush1.msra.mxu0 0.0
        %1410 = vmatprep.subr.mxu0 0.0
        %1411 = vmatpush1.msra.mxu0 0.0
        %1412 = vmatprep.subr.mxu0 0.0
        %1413 = vmatpush1.msra.mxu0 0.0
        %1414 = vmatprep.subr.mxu0 0.0
        %1415 = vmatpush1.msra.mxu0 0.0
        %1416 = vmatprep.subr.mxu0 0.0
        %1417 = vmatpush1.msra.mxu0 0.0
        %1418 = vmatprep.subr.mxu0 0.0
        %1419 = vmatpush1.msra.mxu0 0.0
        %1420 = vmatprep.subr.mxu0 0.0
        %1421 = vmatpush1.msra.mxu0 0.0
        %1422 = vmatprep.subr.mxu0 0.0
        %1423 = vmatpush1.msra.mxu0 0.0
        %1424 = vmatprep.subr.mxu0 0.0
        %1425 = vmatpush1.msra.mxu0 0.0
        %1426 = vmatprep.subr.mxu0 0.0
        %1427 = vmatpush1.msra.mxu0 0.0
        %1428 = vmatprep.subr.mxu0 0.0
        %1429 = vmatpush1.msra.mxu0 0.0
        %1430 = vmatprep.subr.mxu0 0.0
        %1431 = vmatpush1.msra.mxu0 0.0
        %1432 = vmatprep.subr.mxu0 0.0
        %1433 = vmatpush1.msra.mxu0 0.0
        %1434 = vmatprep.subr.mxu0 0.0
        %1435 = vmatpush1.msra.mxu0 0.0
        %1436 = vmatprep.subr.mxu0 0.0
        %1437 = vmatpush1.msra.mxu0 0.0
        %1438 = vmatprep.subr.mxu0 0.0
        %1439 = vmatpush1.msra.mxu0 0.0
        %1440 = vmatprep.subr.mxu0 0.0
        %1441 = vmatpush1.msra.mxu0 0.0
        %1442 = vmatprep.mubr.f32.mxu0 0.0
        %1443 = vmatmul.mubr.f32.gmra.mrb[0].mxu0 %v1376
        %v1444 = vpop.f32.mrb[0].mxu0
        %v1445 = vadd.f32 0.0, %v1444
        %v1446 = vpop.f32.mrb[0].mxu0
        %v1447 = vadd.f32 0.0, %v1446
        %1448 = vdwg.mxu0
        %1449 = vmatprep.subr.mxu0 0.0
        %1450 = vmatpush1.msra.mxu0 %v1374
        %1451 = vmatprep.subr.mxu0 0.0
        %1452 = vmatpush1.msra.mxu0 0.0
        %1453 = vmatprep.subr.mxu0 0.0
        %1454 = vmatpush1.msra.mxu0 0.0
        %1455 = vmatprep.subr.mxu0 0.0
        %1456 = vmatpush1.msra.mxu0 0.0
        %1457 = vmatprep.subr.mxu0 0.0
        %1458 = vmatpush1.msra.mxu0 0.0
        %1459 = vmatprep.subr.mxu0 0.0
        %1460 = vmatpush1.msra.mxu0 0.0
        %1461 = vmatprep.subr.mxu0 0.0
        %1462 = vmatpush1.msra.mxu0 0.0
        %1463 = vmatprep.subr.mxu0 0.0
        %1464 = vmatpush1.msra.mxu0 0.0
        %1465 = vmatprep.subr.mxu0 0.0
        %1466 = vmatpush1.msra.mxu0 0.0
        %1467 = vmatprep.subr.mxu0 0.0
        %1468 = vmatpush1.msra.mxu0 0.0
        %1469 = vmatprep.subr.mxu0 0.0
        %1470 = vmatpush1.msra.mxu0 0.0
        %1471 = vmatprep.subr.mxu0 0.0
        %1472 = vmatpush1.msra.mxu0 0.0
        %1473 = vmatprep.subr.mxu0 0.0
        %1474 = vmatpush1.msra.mxu0 0.0
        %1475 = vmatprep.subr.mxu0 0.0
        %1476 = vmatpush1.msra.mxu0 0.0
        %1477 = vmatprep.subr.mxu0 0.0
        %1478 = vmatpush1.msra.mxu0 0.0
        %1479 = vmatprep.subr.mxu0 0.0
        %1480 = vmatpush1.msra.mxu0 0.0
        %1481 = vmatprep.subr.mxu0 0.0
        %1482 = vmatpush1.msra.mxu0 0.0
        %1483 = vmatprep.subr.mxu0 0.0
        %1484 = vmatpush1.msra.mxu0 0.0
        %1485 = vmatprep.subr.mxu0 0.0
        %1486 = vmatpush1.msra.mxu0 0.0
        %1487 = vmatprep.subr.mxu0 0.0
        %1488 = vmatpush1.msra.mxu0 0.0
        %1489 = vmatprep.subr.mxu0 0.0
        %1490 = vmatpush1.msra.mxu0 0.0
        %1491 = vmatprep.subr.mxu0 0.0
        %1492 = vmatpush1.msra.mxu0 0.0
        %1493 = vmatprep.subr.mxu0 0.0
        %1494 = vmatpush1.msra.mxu0 0.0
        %1495 = vmatprep.subr.mxu0 0.0
        %1496 = vmatpush1.msra.mxu0 0.0
        %1497 = vmatprep.subr.mxu0 0.0
        %1498 = vmatpush1.msra.mxu0 0.0
        %1499 = vmatprep.subr.mxu0 0.0
        %1500 = vmatpush1.msra.mxu0 0.0
        %1501 = vmatprep.subr.mxu0 0.0
        %1502 = vmatpush1.msra.mxu0 0.0
        %1503 = vmatprep.subr.mxu0 0.0
        %1504 = vmatpush1.msra.mxu0 0.0
        %1505 = vmatprep.subr.mxu0 0.0
        %1506 = vmatpush1.msra.mxu0 0.0
        %1507 = vmatprep.subr.mxu0 0.0
        %1508 = vmatpush1.msra.mxu0 0.0
        %1509 = vmatprep.subr.mxu0 0.0
        %1510 = vmatpush1.msra.mxu0 0.0
        %1511 = vmatprep.subr.mxu0 0.0
        %1512 = vmatpush1.msra.mxu0 0.0
        %1513 = vmatprep.mubr.f32.mxu0 0.0
        %1514 = vmatmul.mubr.f32.gmra.mrb[0].mxu0 %v1376
        %v1515 = vpop.f32.mrb[0].mxu0
        %v1516 = vadd.f32 0.0, %v1515
        %v1517 = vpop.f32.mrb[0].mxu0
        %1518 = vdwg.mxu0
        %v1519 = vadd.f32 %v1360, %v1445
        %v1520 = vadd.f32 %v1361, %v1447
        %v1521 = vadd.f32 %v1362, %v1516
        %s1522 = scalar_lea.vmem %s2, 56
        %v1523 = vld [vmem:[%s1522] sm:$0xff]
        %1524 = vrot.lane.b32.xlu0 %v417, 110
        %v1525 = vpop.permute.xlu0 %1524
        %1526 = vrot.lane.b32.xlu0 %v418, 110
        %v1527 = vpop.permute.xlu0 %1526
        %1528 = vrot.lane.b32.xlu0 %v419, 110
        %v1529 = vpop.permute.xlu0 %1528
        %vm1530 = vcmp.lt.s32.totalorder %v431, 110
        %v1531 = vsel %vm1530, %v1527, %v1529
        %v1532 = vsel %vm1530, %v1525, %v1527
        %v1533 = vsel %vm1530, %v1529, %v1525
        %v1535 = vsel %vm448, %v1523, 0
        %1537 = vmatprep.subr.mxu0 %v1531
        %1538 = vmatpush1.msra.mxu0 %v1532
        %1539 = vmatprep.subr.mxu0 0.0
        %1540 = vmatpush1.msra.mxu0 0.0
        %1541 = vmatprep.subr.mxu0 0.0
        %1542 = vmatpush1.msra.mxu0 0.0
        %1543 = vmatprep.subr.mxu0 0.0
        %1544 = vmatpush1.msra.mxu0 0.0
        %1545 = vmatprep.subr.mxu0 0.0
        %1546 = vmatpush1.msra.mxu0 0.0
        %1547 = vmatprep.subr.mxu0 0.0
        %1548 = vmatpush1.msra.mxu0 0.0
        %1549 = vmatprep.subr.mxu0 0.0
        %1550 = vmatpush1.msra.mxu0 0.0
        %1551 = vmatprep.subr.mxu0 0.0
        %1552 = vmatpush1.msra.mxu0 0.0
        %1553 = vmatprep.subr.mxu0 0.0
        %1554 = vmatpush1.msra.mxu0 0.0
        %1555 = vmatprep.subr.mxu0 0.0
        %1556 = vmatpush1.msra.mxu0 0.0
        %1557 = vmatprep.subr.mxu0 0.0
        %1558 = vmatpush1.msra.mxu0 0.0
        %1559 = vmatprep.subr.mxu0 0.0
        %1560 = vmatpush1.msra.mxu0 0.0
        %1561 = vmatprep.subr.mxu0 0.0
        %1562 = vmatpush1.msra.mxu0 0.0
        %1563 = vmatprep.subr.mxu0 0.0
        %1564 = vmatpush1.msra.mxu0 0.0
        %1565 = vmatprep.subr.mxu0 0.0
        %1566 = vmatpush1.msra.mxu0 0.0
        %1567 = vmatprep.subr.mxu0 0.0
        %1568 = vmatpush1.msra.mxu0 0.0
        %1569 = vmatprep.subr.mxu0 0.0
        %1570 = vmatpush1.msra.mxu0 0.0
        %1571 = vmatprep.subr.mxu0 0.0
        %1572 = vmatpush1.msra.mxu0 0.0
        %1573 = vmatprep.subr.mxu0 0.0
        %1574 = vmatpush1.msra.mxu0 0.0
        %1575 = vmatprep.subr.mxu0 0.0
        %1576 = vmatpush1.msra.mxu0 0.0
        %1577 = vmatprep.subr.mxu0 0.0
        %1578 = vmatpush1.msra.mxu0 0.0
        %1579 = vmatprep.subr.mxu0 0.0
        %1580 = vmatpush1.msra.mxu0 0.0
        %1581 = vmatprep.subr.mxu0 0.0
        %1582 = vmatpush1.msra.mxu0 0.0
        %1583 = vmatprep.subr.mxu0 0.0
        %1584 = vmatpush1.msra.mxu0 0.0
        %1585 = vmatprep.subr.mxu0 0.0
        %1586 = vmatpush1.msra.mxu0 0.0
        %1587 = vmatprep.subr.mxu0 0.0
        %1588 = vmatpush1.msra.mxu0 0.0
        %1589 = vmatprep.subr.mxu0 0.0
        %1590 = vmatpush1.msra.mxu0 0.0
        %1591 = vmatprep.subr.mxu0 0.0
        %1592 = vmatpush1.msra.mxu0 0.0
        %1593 = vmatprep.subr.mxu0 0.0
        %1594 = vmatpush1.msra.mxu0 0.0
        %1595 = vmatprep.subr.mxu0 0.0
        %1596 = vmatpush1.msra.mxu0 0.0
        %1597 = vmatprep.subr.mxu0 0.0
        %1598 = vmatpush1.msra.mxu0 0.0
        %1599 = vmatprep.subr.mxu0 0.0
        %1600 = vmatpush1.msra.mxu0 0.0
        %1601 = vmatprep.mubr.f32.mxu0 0.0
        %1602 = vmatmul.mubr.f32.gmra.mrb[0].mxu0 %v1535
        %v1603 = vpop.f32.mrb[0].mxu0
        %v1604 = vadd.f32 0.0, %v1603
        %v1605 = vpop.f32.mrb[0].mxu0
        %v1606 = vadd.f32 0.0, %v1605
        %1607 = vdwg.mxu0
        %1608 = vmatprep.subr.mxu0 0.0
        %1609 = vmatpush1.msra.mxu0 %v1533
        %1610 = vmatprep.subr.mxu0 0.0
        %1611 = vmatpush1.msra.mxu0 0.0
        %1612 = vmatprep.subr.mxu0 0.0
        %1613 = vmatpush1.msra.mxu0 0.0
        %1614 = vmatprep.subr.mxu0 0.0
        %1615 = vmatpush1.msra.mxu0 0.0
        %1616 = vmatprep.subr.mxu0 0.0
        %1617 = vmatpush1.msra.mxu0 0.0
        %1618 = vmatprep.subr.mxu0 0.0
        %1619 = vmatpush1.msra.mxu0 0.0
        %1620 = vmatprep.subr.mxu0 0.0
        %1621 = vmatpush1.msra.mxu0 0.0
        %1622 = vmatprep.subr.mxu0 0.0
        %1623 = vmatpush1.msra.mxu0 0.0
        %1624 = vmatprep.subr.mxu0 0.0
        %1625 = vmatpush1.msra.mxu0 0.0
        %1626 = vmatprep.subr.mxu0 0.0
        %1627 = vmatpush1.msra.mxu0 0.0
        %1628 = vmatprep.subr.mxu0 0.0
        %1629 = vmatpush1.msra.mxu0 0.0
        %1630 = vmatprep.subr.mxu0 0.0
        %1631 = vmatpush1.msra.mxu0 0.0
        %1632 = vmatprep.subr.mxu0 0.0
        %1633 = vmatpush1.msra.mxu0 0.0
        %1634 = vmatprep.subr.mxu0 0.0
        %1635 = vmatpush1.msra.mxu0 0.0
        %1636 = vmatprep.subr.mxu0 0.0
        %1637 = vmatpush1.msra.mxu0 0.0
        %1638 = vmatprep.subr.mxu0 0.0
        %1639 = vmatpush1.msra.mxu0 0.0
        %1640 = vmatprep.subr.mxu0 0.0
        %1641 = vmatpush1.msra.mxu0 0.0
        %1642 = vmatprep.subr.mxu0 0.0
        %1643 = vmatpush1.msra.mxu0 0.0
        %1644 = vmatprep.subr.mxu0 0.0
        %1645 = vmatpush1.msra.mxu0 0.0
        %1646 = vmatprep.subr.mxu0 0.0
        %1647 = vmatpush1.msra.mxu0 0.0
        %1648 = vmatprep.subr.mxu0 0.0
        %1649 = vmatpush1.msra.mxu0 0.0
        %1650 = vmatprep.subr.mxu0 0.0
        %1651 = vmatpush1.msra.mxu0 0.0
        %1652 = vmatprep.subr.mxu0 0.0
        %1653 = vmatpush1.msra.mxu0 0.0
        %1654 = vmatprep.subr.mxu0 0.0
        %1655 = vmatpush1.msra.mxu0 0.0
        %1656 = vmatprep.subr.mxu0 0.0
        %1657 = vmatpush1.msra.mxu0 0.0
        %1658 = vmatprep.subr.mxu0 0.0
        %1659 = vmatpush1.msra.mxu0 0.0
        %1660 = vmatprep.subr.mxu0 0.0
        %1661 = vmatpush1.msra.mxu0 0.0
        %1662 = vmatprep.subr.mxu0 0.0
        %1663 = vmatpush1.msra.mxu0 0.0
        %1664 = vmatprep.subr.mxu0 0.0
        %1665 = vmatpush1.msra.mxu0 0.0
        %1666 = vmatprep.subr.mxu0 0.0
        %1667 = vmatpush1.msra.mxu0 0.0
        %1668 = vmatprep.subr.mxu0 0.0
        %1669 = vmatpush1.msra.mxu0 0.0
        %1670 = vmatprep.subr.mxu0 0.0
        %1671 = vmatpush1.msra.mxu0 0.0
        %1672 = vmatprep.mubr.f32.mxu0 0.0
        %1673 = vmatmul.mubr.f32.gmra.mrb[0].mxu0 %v1535
        %v1674 = vpop.f32.mrb[0].mxu0
        %v1675 = vadd.f32 0.0, %v1674
        %v1676 = vpop.f32.mrb[0].mxu0
        %1677 = vdwg.mxu0
        %v1678 = vadd.f32 %v1519, %v1604
        %v1679 = vadd.f32 %v1520, %v1606
        %v1680 = vadd.f32 %v1521, %v1675
        %s1681 = scalar_lea.vmem %s2, 64
        %v1682 = vld [vmem:[%s1681] sm:$0xff]
        %1683 = vrot.lane.b32.xlu0 %v417, 109
        %v1684 = vpop.permute.xlu0 %1683
        %1685 = vrot.lane.b32.xlu0 %v418, 109
        %v1686 = vpop.permute.xlu0 %1685
        %1687 = vrot.lane.b32.xlu0 %v419, 109
        %v1688 = vpop.permute.xlu0 %1687
        %vm1689 = vcmp.lt.s32.totalorder %v431, 109
        %v1690 = vsel %vm1689, %v1686, %v1688
        %v1691 = vsel %vm1689, %v1684, %v1686
        %v1692 = vsel %vm1689, %v1688, %v1684
        %v1694 = vsel %vm448, %v1682, 0
        %1696 = vmatprep.subr.mxu0 %v1690
        %1697 = vmatpush1.msra.mxu0 %v1691
        %1698 = vmatprep.subr.mxu0 0.0
        %1699 = vmatpush1.msra.mxu0 0.0
        %1700 = vmatprep.subr.mxu0 0.0
        %1701 = vmatpush1.msra.mxu0 0.0
        %1702 = vmatprep.subr.mxu0 0.0
        %1703 = vmatpush1.msra.mxu0 0.0
        %1704 = vmatprep.subr.mxu0 0.0
        %1705 = vmatpush1.msra.mxu0 0.0
        %1706 = vmatprep.subr.mxu0 0.0
        %1707 = vmatpush1.msra.mxu0 0.0
        %1708 = vmatprep.subr.mxu0 0.0
        %1709 = vmatpush1.msra.mxu0 0.0
        %1710 = vmatprep.subr.mxu0 0.0
        %1711 = vmatpush1.msra.mxu0 0.0
        %1712 = vmatprep.subr.mxu0 0.0
        %1713 = vmatpush1.msra.mxu0 0.0
        %1714 = vmatprep.subr.mxu0 0.0
        %1715 = vmatpush1.msra.mxu0 0.0
        %1716 = vmatprep.subr.mxu0 0.0
        %1717 = vmatpush1.msra.mxu0 0.0
        %1718 = vmatprep.subr.mxu0 0.0
        %1719 = vmatpush1.msra.mxu0 0.0
        %1720 = vmatprep.subr.mxu0 0.0
        %1721 = vmatpush1.msra.mxu0 0.0
        %1722 = vmatprep.subr.mxu0 0.0
        %1723 = vmatpush1.msra.mxu0 0.0
        %1724 = vmatprep.subr.mxu0 0.0
        %1725 = vmatpush1.msra.mxu0 0.0
        %1726 = vmatprep.subr.mxu0 0.0
        %1727 = vmatpush1.msra.mxu0 0.0
        %1728 = vmatprep.subr.mxu0 0.0
        %1729 = vmatpush1.msra.mxu0 0.0
        %1730 = vmatprep.subr.mxu0 0.0
        %1731 = vmatpush1.msra.mxu0 0.0
        %1732 = vmatprep.subr.mxu0 0.0
        %1733 = vmatpush1.msra.mxu0 0.0
        %1734 = vmatprep.subr.mxu0 0.0
        %1735 = vmatpush1.msra.mxu0 0.0
        %1736 = vmatprep.subr.mxu0 0.0
        %1737 = vmatpush1.msra.mxu0 0.0
        %1738 = vmatprep.subr.mxu0 0.0
        %1739 = vmatpush1.msra.mxu0 0.0
        %1740 = vmatprep.subr.mxu0 0.0
        %1741 = vmatpush1.msra.mxu0 0.0
        %1742 = vmatprep.subr.mxu0 0.0
        %1743 = vmatpush1.msra.mxu0 0.0
        %1744 = vmatprep.subr.mxu0 0.0
        %1745 = vmatpush1.msra.mxu0 0.0
        %1746 = vmatprep.subr.mxu0 0.0
        %1747 = vmatpush1.msra.mxu0 0.0
        %1748 = vmatprep.subr.mxu0 0.0
        %1749 = vmatpush1.msra.mxu0 0.0
        %1750 = vmatprep.subr.mxu0 0.0
        %1751 = vmatpush1.msra.mxu0 0.0
        %1752 = vmatprep.subr.mxu0 0.0
        %1753 = vmatpush1.msra.mxu0 0.0
        %1754 = vmatprep.subr.mxu0 0.0
        %1755 = vmatpush1.msra.mxu0 0.0
        %1756 = vmatprep.subr.mxu0 0.0
        %1757 = vmatpush1.msra.mxu0 0.0
        %1758 = vmatprep.subr.mxu0 0.0
        %1759 = vmatpush1.msra.mxu0 0.0
        %1760 = vmatprep.mubr.f32.mxu0 0.0
        %1761 = vmatmul.mubr.f32.gmra.mrb[0].mxu0 %v1694
        %v1762 = vpop.f32.mrb[0].mxu0
        %v1763 = vadd.f32 0.0, %v1762
        %v1764 = vpop.f32.mrb[0].mxu0
        %v1765 = vadd.f32 0.0, %v1764
        %1766 = vdwg.mxu0
        %1767 = vmatprep.subr.mxu0 0.0
        %1768 = vmatpush1.msra.mxu0 %v1692
        %1769 = vmatprep.subr.mxu0 0.0
        %1770 = vmatpush1.msra.mxu0 0.0
        %1771 = vmatprep.subr.mxu0 0.0
        %1772 = vmatpush1.msra.mxu0 0.0
        %1773 = vmatprep.subr.mxu0 0.0
        %1774 = vmatpush1.msra.mxu0 0.0
        %1775 = vmatprep.subr.mxu0 0.0
        %1776 = vmatpush1.msra.mxu0 0.0
        %1777 = vmatprep.subr.mxu0 0.0
        %1778 = vmatpush1.msra.mxu0 0.0
        %1779 = vmatprep.subr.mxu0 0.0
        %1780 = vmatpush1.msra.mxu0 0.0
        %1781 = vmatprep.subr.mxu0 0.0
        %1782 = vmatpush1.msra.mxu0 0.0
        %1783 = vmatprep.subr.mxu0 0.0
        %1784 = vmatpush1.msra.mxu0 0.0
        %1785 = vmatprep.subr.mxu0 0.0
        %1786 = vmatpush1.msra.mxu0 0.0
        %1787 = vmatprep.subr.mxu0 0.0
        %1788 = vmatpush1.msra.mxu0 0.0
        %1789 = vmatprep.subr.mxu0 0.0
        %1790 = vmatpush1.msra.mxu0 0.0
        %1791 = vmatprep.subr.mxu0 0.0
        %1792 = vmatpush1.msra.mxu0 0.0
        %1793 = vmatprep.subr.mxu0 0.0
        %1794 = vmatpush1.msra.mxu0 0.0
        %1795 = vmatprep.subr.mxu0 0.0
        %1796 = vmatpush1.msra.mxu0 0.0
        %1797 = vmatprep.subr.mxu0 0.0
        %1798 = vmatpush1.msra.mxu0 0.0
        %1799 = vmatprep.subr.mxu0 0.0
        %1800 = vmatpush1.msra.mxu0 0.0
        %1801 = vmatprep.subr.mxu0 0.0
        %1802 = vmatpush1.msra.mxu0 0.0
        %1803 = vmatprep.subr.mxu0 0.0
        %1804 = vmatpush1.msra.mxu0 0.0
        %1805 = vmatprep.subr.mxu0 0.0
        %1806 = vmatpush1.msra.mxu0 0.0
        %1807 = vmatprep.subr.mxu0 0.0
        %1808 = vmatpush1.msra.mxu0 0.0
        %1809 = vmatprep.subr.mxu0 0.0
        %1810 = vmatpush1.msra.mxu0 0.0
        %1811 = vmatprep.subr.mxu0 0.0
        %1812 = vmatpush1.msra.mxu0 0.0
        %1813 = vmatprep.subr.mxu0 0.0
        %1814 = vmatpush1.msra.mxu0 0.0
        %1815 = vmatprep.subr.mxu0 0.0
        %1816 = vmatpush1.msra.mxu0 0.0
        %1817 = vmatprep.subr.mxu0 0.0
        %1818 = vmatpush1.msra.mxu0 0.0
        %1819 = vmatprep.subr.mxu0 0.0
        %1820 = vmatpush1.msra.mxu0 0.0
        %1821 = vmatprep.subr.mxu0 0.0
        %1822 = vmatpush1.msra.mxu0 0.0
        %1823 = vmatprep.subr.mxu0 0.0
        %1824 = vmatpush1.msra.mxu0 0.0
        %1825 = vmatprep.subr.mxu0 0.0
        %1826 = vmatpush1.msra.mxu0 0.0
        %1827 = vmatprep.subr.mxu0 0.0
        %1828 = vmatpush1.msra.mxu0 0.0
        %1829 = vmatprep.subr.mxu0 0.0
        %1830 = vmatpush1.msra.mxu0 0.0
        %1831 = vmatprep.mubr.f32.mxu0 0.0
        %1832 = vmatmul.mubr.f32.gmra.mrb[0].mxu0 %v1694
        %v1833 = vpop.f32.mrb[0].mxu0
        %v1834 = vadd.f32 0.0, %v1833
        %v1835 = vpop.f32.mrb[0].mxu0
        %1836 = vdwg.mxu0
        %v1837 = vadd.f32 %v1678, %v1763
        %v1838 = vadd.f32 %v1679, %v1765
        %v1839 = vadd.f32 %v1680, %v1834
        %v1840 = vld [vmem:[%s4] sm:$0xff]
        %1842 = vset.pattern.permute.xlu0 0
        %1843 = vperm.xlu0 %1842, %v1840
        %v1844 = vpop.permute.xlu0 %1843
        %v1846 = vmul.f32 %v1837, %v1844
        %v1847 = vmul.f32 %v1838, %v1844
        %v1848 = vmul.f32 %v1839, %v1844
        %s1849 = scalar_lea.vmem %s4, 8
        %v1850 = vld [vmem:[%s1849] sm:$0xff]
        %1852 = vset.pattern.permute.xlu0 0
        %1853 = vperm.xlu0 %1852, %v1850
        %v1854 = vpop.permute.xlu0 %1853
        %v1856 = vadd.f32 %v1846, %v1854
        %v1857 = vadd.f32 %v1847, %v1854
        %v1858 = vadd.f32 %v1848, %v1854
        %v1859 = vmax.f32 %v1856, 0.0
        %v1860 = vmax.f32 %v1857, 0.0
        %v1861 = vmax.f32 %v1858, 0.0
        %v1863 = vlaneseq
        %v1864 = vshrl.u32 %v1863, 7
        %v1865 = vsub.s32 0, %v1864
        %v1866 = vrot.slane %v421, %v1865
        %v1867 = vlaneseq
        %v1868 = vshrl.u32 %v1867, 7
        %v1869 = vsub.s32 1, %v1868
        %v1870 = vrot.slane %v421, %v1869
        %v1871 = vlaneseq
        %v1872 = vshrl.u32 %v1871, 7
        %v1873 = vsub.s32 2, %v1872
        %v1874 = vrot.slane %v421, %v1873
        %v1878 = vmul.f32 %v1859, %v1866
        %v1879 = vmul.f32 %v1860, %v1870
        %v1880 = vmul.f32 %v1861, %v1874
        %s1881 = scalar_lea.vmem %s2, 72
        %v1882 = vld [vmem:[%s1881] sm:$0xff]
        %1883 = vrot.lane.b32.xlu0 %v1878, 19
        %v1884 = vpop.permute.xlu0 %1883
        %1885 = vrot.lane.b32.xlu0 %v1879, 19
        %v1886 = vpop.permute.xlu0 %1885
        %1887 = vrot.lane.b32.xlu0 %v1880, 19
        %v1888 = vpop.permute.xlu0 %1887
        %v1889 = vsel %vm432, %v1886, %v1888
        %v1890 = vsel %vm432, %v1884, %v1886
        %v1891 = vsel %vm432, %v1888, %v1884
        %s1892 = scalar_lea.vmem %s2, 80
        %v1893 = vld [vmem:[%s1892] sm:$0xff]
        %1894 = vrot.lane.b32.xlu0 %v1878, 18
        %v1895 = vpop.permute.xlu0 %1894
        %1896 = vrot.lane.b32.xlu0 %v1879, 18
        %v1897 = vpop.permute.xlu0 %1896
        %1898 = vrot.lane.b32.xlu0 %v1880, 18
        %v1899 = vpop.permute.xlu0 %1898
        %v1900 = vsel %vm444, %v1897, %v1899
        %v1901 = vsel %vm444, %v1895, %v1897
        %v1902 = vsel %vm444, %v1899, %v1895
        %v1904 = vsel %vm448, %v1893, 0
        %1906 = vmatprep.subr.mxu0 %v1901
        %1907 = vmatpush1.msra.mxu0 %v1902
        %1908 = vmatprep.subr.mxu0 0.0
        %1909 = vmatpush1.msra.mxu0 0.0
        %1910 = vmatprep.subr.mxu0 0.0
        %1911 = vmatpush1.msra.mxu0 0.0
        %1912 = vmatprep.subr.mxu0 0.0
        %1913 = vmatpush1.msra.mxu0 0.0
        %1914 = vmatprep.subr.mxu0 0.0
        %1915 = vmatpush1.msra.mxu0 0.0
        %1916 = vmatprep.subr.mxu0 0.0
        %1917 = vmatpush1.msra.mxu0 0.0
        %1918 = vmatprep.subr.mxu0 0.0
        %1919 = vmatpush1.msra.mxu0 0.0
        %1920 = vmatprep.subr.mxu0 0.0
        %1921 = vmatpush1.msra.mxu0 0.0
        %1922 = vmatprep.subr.mxu0 0.0
        %1923 = vmatpush1.msra.mxu0 0.0
        %1924 = vmatprep.subr.mxu0 0.0
        %1925 = vmatpush1.msra.mxu0 0.0
        %1926 = vmatprep.subr.mxu0 0.0
        %1927 = vmatpush1.msra.mxu0 0.0
        %1928 = vmatprep.subr.mxu0 0.0
        %1929 = vmatpush1.msra.mxu0 0.0
        %1930 = vmatprep.subr.mxu0 0.0
        %1931 = vmatpush1.msra.mxu0 0.0
        %1932 = vmatprep.subr.mxu0 0.0
        %1933 = vmatpush1.msra.mxu0 0.0
        %1934 = vmatprep.subr.mxu0 0.0
        %1935 = vmatpush1.msra.mxu0 0.0
        %1936 = vmatprep.subr.mxu0 0.0
        %1937 = vmatpush1.msra.mxu0 0.0
        %1938 = vmatprep.subr.mxu0 0.0
        %1939 = vmatpush1.msra.mxu0 0.0
        %1940 = vmatprep.subr.mxu0 0.0
        %1941 = vmatpush1.msra.mxu0 0.0
        %1942 = vmatprep.subr.mxu0 0.0
        %1943 = vmatpush1.msra.mxu0 0.0
        %1944 = vmatprep.subr.mxu0 0.0
        %1945 = vmatpush1.msra.mxu0 0.0
        %1946 = vmatprep.subr.mxu0 0.0
        %1947 = vmatpush1.msra.mxu0 0.0
        %1948 = vmatprep.subr.mxu0 0.0
        %1949 = vmatpush1.msra.mxu0 0.0
        %1950 = vmatprep.subr.mxu0 0.0
        %1951 = vmatpush1.msra.mxu0 0.0
        %1952 = vmatprep.subr.mxu0 0.0
        %1953 = vmatpush1.msra.mxu0 0.0
        %1954 = vmatprep.subr.mxu0 0.0
        %1955 = vmatpush1.msra.mxu0 0.0
        %1956 = vmatprep.subr.mxu0 0.0
        %1957 = vmatpush1.msra.mxu0 0.0
        %1958 = vmatprep.subr.mxu0 0.0
        %1959 = vmatpush1.msra.mxu0 0.0
        %1960 = vmatprep.subr.mxu0 0.0
        %1961 = vmatpush1.msra.mxu0 0.0
        %1962 = vmatprep.subr.mxu0 0.0
        %1963 = vmatpush1.msra.mxu0 0.0
        %1964 = vmatprep.subr.mxu0 0.0
        %1965 = vmatpush1.msra.mxu0 0.0
        %1966 = vmatprep.subr.mxu0 0.0
        %1967 = vmatpush1.msra.mxu0 0.0
        %1968 = vmatprep.subr.mxu0 0.0
        %1969 = vmatpush1.msra.mxu0 0.0
        %1970 = vmatprep.mubr.f32.mxu0 0.0
        %1971 = vmatmul.mubr.f32.gmra.mrb[0].mxu0 %v1904
        %v1972 = vpop.f32.mrb[0].mxu0
        %v1973 = vadd.f32 0.0, %v1972
        %v1974 = vpop.f32.mrb[0].mxu0
        %v1975 = vadd.f32 0.0, %v1974
        %1976 = vdwg.mxu0
        %1977 = vmatprep.subr.mxu0 0.0
        %1978 = vmatpush1.msra.mxu0 %v1900
        %1979 = vmatprep.subr.mxu0 0.0
        %1980 = vmatpush1.msra.mxu0 0.0
        %1981 = vmatprep.subr.mxu0 0.0
        %1982 = vmatpush1.msra.mxu0 0.0
        %1983 = vmatprep.subr.mxu0 0.0
        %1984 = vmatpush1.msra.mxu0 0.0
        %1985 = vmatprep.subr.mxu0 0.0
        %1986 = vmatpush1.msra.mxu0 0.0
        %1987 = vmatprep.subr.mxu0 0.0
        %1988 = vmatpush1.msra.mxu0 0.0
        %1989 = vmatprep.subr.mxu0 0.0
        %1990 = vmatpush1.msra.mxu0 0.0
        %1991 = vmatprep.subr.mxu0 0.0
        %1992 = vmatpush1.msra.mxu0 0.0
        %1993 = vmatprep.subr.mxu0 0.0
        %1994 = vmatpush1.msra.mxu0 0.0
        %1995 = vmatprep.subr.mxu0 0.0
        %1996 = vmatpush1.msra.mxu0 0.0
        %1997 = vmatprep.subr.mxu0 0.0
        %1998 = vmatpush1.msra.mxu0 0.0
        %1999 = vmatprep.subr.mxu0 0.0
        %2000 = vmatpush1.msra.mxu0 0.0
        %2001 = vmatprep.subr.mxu0 0.0
        %2002 = vmatpush1.msra.mxu0 0.0
        %2003 = vmatprep.subr.mxu0 0.0
        %2004 = vmatpush1.msra.mxu0 0.0
        %2005 = vmatprep.subr.mxu0 0.0
        %2006 = vmatpush1.msra.mxu0 0.0
        %2007 = vmatprep.subr.mxu0 0.0
        %2008 = vmatpush1.msra.mxu0 0.0
        %2009 = vmatprep.subr.mxu0 0.0
        %2010 = vmatpush1.msra.mxu0 0.0
        %2011 = vmatprep.subr.mxu0 0.0
        %2012 = vmatpush1.msra.mxu0 0.0
        %2013 = vmatprep.subr.mxu0 0.0
        %2014 = vmatpush1.msra.mxu0 0.0
        %2015 = vmatprep.subr.mxu0 0.0
        %2016 = vmatpush1.msra.mxu0 0.0
        %2017 = vmatprep.subr.mxu0 0.0
        %2018 = vmatpush1.msra.mxu0 0.0
        %2019 = vmatprep.subr.mxu0 0.0
        %2020 = vmatpush1.msra.mxu0 0.0
        %2021 = vmatprep.subr.mxu0 0.0
        %2022 = vmatpush1.msra.mxu0 0.0
        %2023 = vmatprep.subr.mxu0 0.0
        %2024 = vmatpush1.msra.mxu0 0.0
        %2025 = vmatprep.subr.mxu0 0.0
        %2026 = vmatpush1.msra.mxu0 0.0
        %2027 = vmatprep.subr.mxu0 0.0
        %2028 = vmatpush1.msra.mxu0 0.0
        %2029 = vmatprep.subr.mxu0 0.0
        %2030 = vmatpush1.msra.mxu0 0.0
        %2031 = vmatprep.subr.mxu0 0.0
        %2032 = vmatpush1.msra.mxu0 0.0
        %2033 = vmatprep.subr.mxu0 0.0
        %2034 = vmatpush1.msra.mxu0 0.0
        %2035 = vmatprep.subr.mxu0 0.0
        %2036 = vmatpush1.msra.mxu0 0.0
        %2037 = vmatprep.subr.mxu0 0.0
        %2038 = vmatpush1.msra.mxu0 0.0
        %2039 = vmatprep.subr.mxu0 0.0
        %2040 = vmatpush1.msra.mxu0 0.0
        %2041 = vmatprep.mubr.f32.mxu0 0.0
        %2042 = vmatmul.mubr.f32.gmra.mrb[0].mxu0 %v1904
        %v2043 = vpop.f32.mrb[0].mxu0
        %v2044 = vadd.f32 0.0, %v2043
        %v2045 = vpop.f32.mrb[0].mxu0
        %2046 = vdwg.mxu0
        %v2048 = vsel %vm448, %v1882, 0
        %2050 = vmatprep.subr.mxu0 %v1890
        %2051 = vmatpush1.msra.mxu0 %v1891
        %2052 = vmatprep.subr.mxu0 0.0
        %2053 = vmatpush1.msra.mxu0 0.0
        %2054 = vmatprep.subr.mxu0 0.0
        %2055 = vmatpush1.msra.mxu0 0.0
        %2056 = vmatprep.subr.mxu0 0.0
        %2057 = vmatpush1.msra.mxu0 0.0
        %2058 = vmatprep.subr.mxu0 0.0
        %2059 = vmatpush1.msra.mxu0 0.0
        %2060 = vmatprep.subr.mxu0 0.0
        %2061 = vmatpush1.msra.mxu0 0.0
        %2062 = vmatprep.subr.mxu0 0.0
        %2063 = vmatpush1.msra.mxu0 0.0
        %2064 = vmatprep.subr.mxu0 0.0
        %2065 = vmatpush1.msra.mxu0 0.0
        %2066 = vmatprep.subr.mxu0 0.0
        %2067 = vmatpush1.msra.mxu0 0.0
        %2068 = vmatprep.subr.mxu0 0.0
        %2069 = vmatpush1.msra.mxu0 0.0
        %2070 = vmatprep.subr.mxu0 0.0
        %2071 = vmatpush1.msra.mxu0 0.0
        %2072 = vmatprep.subr.mxu0 0.0
        %2073 = vmatpush1.msra.mxu0 0.0
        %2074 = vmatprep.subr.mxu0 0.0
        %2075 = vmatpush1.msra.mxu0 0.0
        %2076 = vmatprep.subr.mxu0 0.0
        %2077 = vmatpush1.msra.mxu0 0.0
        %2078 = vmatprep.subr.mxu0 0.0
        %2079 = vmatpush1.msra.mxu0 0.0
        %2080 = vmatprep.subr.mxu0 0.0
        %2081 = vmatpush1.msra.mxu0 0.0
        %2082 = vmatprep.subr.mxu0 0.0
        %2083 = vmatpush1.msra.mxu0 0.0
        %2084 = vmatprep.subr.mxu0 0.0
        %2085 = vmatpush1.msra.mxu0 0.0
        %2086 = vmatprep.subr.mxu0 0.0
        %2087 = vmatpush1.msra.mxu0 0.0
        %2088 = vmatprep.subr.mxu0 0.0
        %2089 = vmatpush1.msra.mxu0 0.0
        %2090 = vmatprep.subr.mxu0 0.0
        %2091 = vmatpush1.msra.mxu0 0.0
        %2092 = vmatprep.subr.mxu0 0.0
        %2093 = vmatpush1.msra.mxu0 0.0
        %2094 = vmatprep.subr.mxu0 0.0
        %2095 = vmatpush1.msra.mxu0 0.0
        %2096 = vmatprep.subr.mxu0 0.0
        %2097 = vmatpush1.msra.mxu0 0.0
        %2098 = vmatprep.subr.mxu0 0.0
        %2099 = vmatpush1.msra.mxu0 0.0
        %2100 = vmatprep.subr.mxu0 0.0
        %2101 = vmatpush1.msra.mxu0 0.0
        %2102 = vmatprep.subr.mxu0 0.0
        %2103 = vmatpush1.msra.mxu0 0.0
        %2104 = vmatprep.subr.mxu0 0.0
        %2105 = vmatpush1.msra.mxu0 0.0
        %2106 = vmatprep.subr.mxu0 0.0
        %2107 = vmatpush1.msra.mxu0 0.0
        %2108 = vmatprep.subr.mxu0 0.0
        %2109 = vmatpush1.msra.mxu0 0.0
        %2110 = vmatprep.subr.mxu0 0.0
        %2111 = vmatpush1.msra.mxu0 0.0
        %2112 = vmatprep.subr.mxu0 0.0
        %2113 = vmatpush1.msra.mxu0 0.0
        %2114 = vmatprep.mubr.f32.mxu0 0.0
        %2115 = vmatmul.mubr.f32.gmra.mrb[0].mxu0 %v2048
        %v2116 = vpop.f32.mrb[0].mxu0
        %v2117 = vadd.f32 %v1973, %v2116
        %v2118 = vpop.f32.mrb[0].mxu0
        %v2119 = vadd.f32 %v1975, %v2118
        %2120 = vdwg.mxu0
        %2121 = vmatprep.subr.mxu0 0.0
        %2122 = vmatpush1.msra.mxu0 %v1889
        %2123 = vmatprep.subr.mxu0 0.0
        %2124 = vmatpush1.msra.mxu0 0.0
        %2125 = vmatprep.subr.mxu0 0.0
        %2126 = vmatpush1.msra.mxu0 0.0
        %2127 = vmatprep.subr.mxu0 0.0
        %2128 = vmatpush1.msra.mxu0 0.0
        %2129 = vmatprep.subr.mxu0 0.0
        %2130 = vmatpush1.msra.mxu0 0.0
        %2131 = vmatprep.subr.mxu0 0.0
        %2132 = vmatpush1.msra.mxu0 0.0
        %2133 = vmatprep.subr.mxu0 0.0
        %2134 = vmatpush1.msra.mxu0 0.0
        %2135 = vmatprep.subr.mxu0 0.0
        %2136 = vmatpush1.msra.mxu0 0.0
        %2137 = vmatprep.subr.mxu0 0.0
        %2138 = vmatpush1.msra.mxu0 0.0
        %2139 = vmatprep.subr.mxu0 0.0
        %2140 = vmatpush1.msra.mxu0 0.0
        %2141 = vmatprep.subr.mxu0 0.0
        %2142 = vmatpush1.msra.mxu0 0.0
        %2143 = vmatprep.subr.mxu0 0.0
        %2144 = vmatpush1.msra.mxu0 0.0
        %2145 = vmatprep.subr.mxu0 0.0
        %2146 = vmatpush1.msra.mxu0 0.0
        %2147 = vmatprep.subr.mxu0 0.0
        %2148 = vmatpush1.msra.mxu0 0.0
        %2149 = vmatprep.subr.mxu0 0.0
        %2150 = vmatpush1.msra.mxu0 0.0
        %2151 = vmatprep.subr.mxu0 0.0
        %2152 = vmatpush1.msra.mxu0 0.0
        %2153 = vmatprep.subr.mxu0 0.0
        %2154 = vmatpush1.msra.mxu0 0.0
        %2155 = vmatprep.subr.mxu0 0.0
        %2156 = vmatpush1.msra.mxu0 0.0
        %2157 = vmatprep.subr.mxu0 0.0
        %2158 = vmatpush1.msra.mxu0 0.0
        %2159 = vmatprep.subr.mxu0 0.0
        %2160 = vmatpush1.msra.mxu0 0.0
        %2161 = vmatprep.subr.mxu0 0.0
        %2162 = vmatpush1.msra.mxu0 0.0
        %2163 = vmatprep.subr.mxu0 0.0
        %2164 = vmatpush1.msra.mxu0 0.0
        %2165 = vmatprep.subr.mxu0 0.0
        %2166 = vmatpush1.msra.mxu0 0.0
        %2167 = vmatprep.subr.mxu0 0.0
        %2168 = vmatpush1.msra.mxu0 0.0
        %2169 = vmatprep.subr.mxu0 0.0
        %2170 = vmatpush1.msra.mxu0 0.0
        %2171 = vmatprep.subr.mxu0 0.0
        %2172 = vmatpush1.msra.mxu0 0.0
        %2173 = vmatprep.subr.mxu0 0.0
        %2174 = vmatpush1.msra.mxu0 0.0
        %2175 = vmatprep.subr.mxu0 0.0
        %2176 = vmatpush1.msra.mxu0 0.0
        %2177 = vmatprep.subr.mxu0 0.0
        %2178 = vmatpush1.msra.mxu0 0.0
        %2179 = vmatprep.subr.mxu0 0.0
        %2180 = vmatpush1.msra.mxu0 0.0
        %2181 = vmatprep.subr.mxu0 0.0
        %2182 = vmatpush1.msra.mxu0 0.0
        %2183 = vmatprep.subr.mxu0 0.0
        %2184 = vmatpush1.msra.mxu0 0.0
        %2185 = vmatprep.mubr.f32.mxu0 0.0
        %2186 = vmatmul.mubr.f32.gmra.mrb[0].mxu0 %v2048
        %v2187 = vpop.f32.mrb[0].mxu0
        %v2188 = vadd.f32 %v2044, %v2187
        %v2189 = vpop.f32.mrb[0].mxu0
        %2190 = vdwg.mxu0
        %s2191 = scalar_lea.vmem %s2, 88
        %v2192 = vld [vmem:[%s2191] sm:$0xff]
        %2193 = vrot.lane.b32.xlu0 %v1878, 17
        %v2194 = vpop.permute.xlu0 %2193
        %2195 = vrot.lane.b32.xlu0 %v1879, 17
        %v2196 = vpop.permute.xlu0 %2195
        %2197 = vrot.lane.b32.xlu0 %v1880, 17
        %v2198 = vpop.permute.xlu0 %2197
        %v2199 = vsel %vm745, %v2196, %v2198
        %v2200 = vsel %vm745, %v2194, %v2196
        %v2201 = vsel %vm745, %v2198, %v2194
        %v2203 = vsel %vm448, %v2192, 0
        %2205 = vmatprep.subr.mxu0 %v2200
        %2206 = vmatpush1.msra.mxu0 %v2201
        %2207 = vmatprep.subr.mxu0 0.0
        %2208 = vmatpush1.msra.mxu0 0.0
        %2209 = vmatprep.subr.mxu0 0.0
        %2210 = vmatpush1.msra.mxu0 0.0
        %2211 = vmatprep.subr.mxu0 0.0
        %2212 = vmatpush1.msra.mxu0 0.0
        %2213 = vmatprep.subr.mxu0 0.0
        %2214 = vmatpush1.msra.mxu0 0.0
        %2215 = vmatprep.subr.mxu0 0.0
        %2216 = vmatpush1.msra.mxu0 0.0
        %2217 = vmatprep.subr.mxu0 0.0
        %2218 = vmatpush1.msra.mxu0 0.0
        %2219 = vmatprep.subr.mxu0 0.0
        %2220 = vmatpush1.msra.mxu0 0.0
        %2221 = vmatprep.subr.mxu0 0.0
        %2222 = vmatpush1.msra.mxu0 0.0
        %2223 = vmatprep.subr.mxu0 0.0
        %2224 = vmatpush1.msra.mxu0 0.0
        %2225 = vmatprep.subr.mxu0 0.0
        %2226 = vmatpush1.msra.mxu0 0.0
        %2227 = vmatprep.subr.mxu0 0.0
        %2228 = vmatpush1.msra.mxu0 0.0
        %2229 = vmatprep.subr.mxu0 0.0
        %2230 = vmatpush1.msra.mxu0 0.0
        %2231 = vmatprep.subr.mxu0 0.0
        %2232 = vmatpush1.msra.mxu0 0.0
        %2233 = vmatprep.subr.mxu0 0.0
        %2234 = vmatpush1.msra.mxu0 0.0
        %2235 = vmatprep.subr.mxu0 0.0
        %2236 = vmatpush1.msra.mxu0 0.0
        %2237 = vmatprep.subr.mxu0 0.0
        %2238 = vmatpush1.msra.mxu0 0.0
        %2239 = vmatprep.subr.mxu0 0.0
        %2240 = vmatpush1.msra.mxu0 0.0
        %2241 = vmatprep.subr.mxu0 0.0
        %2242 = vmatpush1.msra.mxu0 0.0
        %2243 = vmatprep.subr.mxu0 0.0
        %2244 = vmatpush1.msra.mxu0 0.0
        %2245 = vmatprep.subr.mxu0 0.0
        %2246 = vmatpush1.msra.mxu0 0.0
        %2247 = vmatprep.subr.mxu0 0.0
        %2248 = vmatpush1.msra.mxu0 0.0
        %2249 = vmatprep.subr.mxu0 0.0
        %2250 = vmatpush1.msra.mxu0 0.0
        %2251 = vmatprep.subr.mxu0 0.0
        %2252 = vmatpush1.msra.mxu0 0.0
        %2253 = vmatprep.subr.mxu0 0.0
        %2254 = vmatpush1.msra.mxu0 0.0
        %2255 = vmatprep.subr.mxu0 0.0
        %2256 = vmatpush1.msra.mxu0 0.0
        %2257 = vmatprep.subr.mxu0 0.0
        %2258 = vmatpush1.msra.mxu0 0.0
        %2259 = vmatprep.subr.mxu0 0.0
        %2260 = vmatpush1.msra.mxu0 0.0
        %2261 = vmatprep.subr.mxu0 0.0
        %2262 = vmatpush1.msra.mxu0 0.0
        %2263 = vmatprep.subr.mxu0 0.0
        %2264 = vmatpush1.msra.mxu0 0.0
        %2265 = vmatprep.subr.mxu0 0.0
        %2266 = vmatpush1.msra.mxu0 0.0
        %2267 = vmatprep.subr.mxu0 0.0
        %2268 = vmatpush1.msra.mxu0 0.0
        %2269 = vmatprep.mubr.f32.mxu0 0.0
        %2270 = vmatmul.mubr.f32.gmra.mrb[0].mxu0 %v2203
        %v2271 = vpop.f32.mrb[0].mxu0
        %v2272 = vadd.f32 0.0, %v2271
        %v2273 = vpop.f32.mrb[0].mxu0
        %v2274 = vadd.f32 0.0, %v2273
        %2275 = vdwg.mxu0
        %2276 = vmatprep.subr.mxu0 0.0
        %2277 = vmatpush1.msra.mxu0 %v2199
        %2278 = vmatprep.subr.mxu0 0.0
        %2279 = vmatpush1.msra.mxu0 0.0
        %2280 = vmatprep.subr.mxu0 0.0
        %2281 = vmatpush1.msra.mxu0 0.0
        %2282 = vmatprep.subr.mxu0 0.0
        %2283 = vmatpush1.msra.mxu0 0.0
        %2284 = vmatprep.subr.mxu0 0.0
        %2285 = vmatpush1.msra.mxu0 0.0
        %2286 = vmatprep.subr.mxu0 0.0
        %2287 = vmatpush1.msra.mxu0 0.0
        %2288 = vmatprep.subr.mxu0 0.0
        %2289 = vmatpush1.msra.mxu0 0.0
        %2290 = vmatprep.subr.mxu0 0.0
        %2291 = vmatpush1.msra.mxu0 0.0
        %2292 = vmatprep.subr.mxu0 0.0
        %2293 = vmatpush1.msra.mxu0 0.0
        %2294 = vmatprep.subr.mxu0 0.0
        %2295 = vmatpush1.msra.mxu0 0.0
        %2296 = vmatprep.subr.mxu0 0.0
        %2297 = vmatpush1.msra.mxu0 0.0
        %2298 = vmatprep.subr.mxu0 0.0
        %2299 = vmatpush1.msra.mxu0 0.0
        %2300 = vmatprep.subr.mxu0 0.0
        %2301 = vmatpush1.msra.mxu0 0.0
        %2302 = vmatprep.subr.mxu0 0.0
        %2303 = vmatpush1.msra.mxu0 0.0
        %2304 = vmatprep.subr.mxu0 0.0
        %2305 = vmatpush1.msra.mxu0 0.0
        %2306 = vmatprep.subr.mxu0 0.0
        %2307 = vmatpush1.msra.mxu0 0.0
        %2308 = vmatprep.subr.mxu0 0.0
        %2309 = vmatpush1.msra.mxu0 0.0
        %2310 = vmatprep.subr.mxu0 0.0
        %2311 = vmatpush1.msra.mxu0 0.0
        %2312 = vmatprep.subr.mxu0 0.0
        %2313 = vmatpush1.msra.mxu0 0.0
        %2314 = vmatprep.subr.mxu0 0.0
        %2315 = vmatpush1.msra.mxu0 0.0
        %2316 = vmatprep.subr.mxu0 0.0
        %2317 = vmatpush1.msra.mxu0 0.0
        %2318 = vmatprep.subr.mxu0 0.0
        %2319 = vmatpush1.msra.mxu0 0.0
        %2320 = vmatprep.subr.mxu0 0.0
        %2321 = vmatpush1.msra.mxu0 0.0
        %2322 = vmatprep.subr.mxu0 0.0
        %2323 = vmatpush1.msra.mxu0 0.0
        %2324 = vmatprep.subr.mxu0 0.0
        %2325 = vmatpush1.msra.mxu0 0.0
        %2326 = vmatprep.subr.mxu0 0.0
        %2327 = vmatpush1.msra.mxu0 0.0
        %2328 = vmatprep.subr.mxu0 0.0
        %2329 = vmatpush1.msra.mxu0 0.0
        %2330 = vmatprep.subr.mxu0 0.0
        %2331 = vmatpush1.msra.mxu0 0.0
        %2332 = vmatprep.subr.mxu0 0.0
        %2333 = vmatpush1.msra.mxu0 0.0
        %2334 = vmatprep.subr.mxu0 0.0
        %2335 = vmatpush1.msra.mxu0 0.0
        %2336 = vmatprep.subr.mxu0 0.0
        %2337 = vmatpush1.msra.mxu0 0.0
        %2338 = vmatprep.subr.mxu0 0.0
        %2339 = vmatpush1.msra.mxu0 0.0
        %2340 = vmatprep.mubr.f32.mxu0 0.0
        %2341 = vmatmul.mubr.f32.gmra.mrb[0].mxu0 %v2203
        %v2342 = vpop.f32.mrb[0].mxu0
        %v2343 = vadd.f32 0.0, %v2342
        %v2344 = vpop.f32.mrb[0].mxu0
        %2345 = vdwg.mxu0
        %v2346 = vadd.f32 %v2117, %v2272
        %v2347 = vadd.f32 %v2119, %v2274
        %v2348 = vadd.f32 %v2188, %v2343
        %s2349 = scalar_lea.vmem %s2, 96
        %v2350 = vld [vmem:[%s2349] sm:$0xff]
        %2351 = vrot.lane.b32.xlu0 %v1878, 1
        %v2352 = vpop.permute.xlu0 %2351
        %2353 = vrot.lane.b32.xlu0 %v1879, 1
        %v2354 = vpop.permute.xlu0 %2353
        %2355 = vrot.lane.b32.xlu0 %v1880, 1
        %v2356 = vpop.permute.xlu0 %2355
        %v2357 = vsel %vm904, %v2354, %v2356
        %v2358 = vsel %vm904, %v2352, %v2354
        %v2359 = vsel %vm904, %v2356, %v2352
        %v2361 = vsel %vm448, %v2350, 0
        %2363 = vmatprep.subr.mxu0 %v2358
        %2364 = vmatpush1.msra.mxu0 %v2359
        %2365 = vmatprep.subr.mxu0 0.0
        %2366 = vmatpush1.msra.mxu0 0.0
        %2367 = vmatprep.subr.mxu0 0.0
        %2368 = vmatpush1.msra.mxu0 0.0
        %2369 = vmatprep.subr.mxu0 0.0
        %2370 = vmatpush1.msra.mxu0 0.0
        %2371 = vmatprep.subr.mxu0 0.0
        %2372 = vmatpush1.msra.mxu0 0.0
        %2373 = vmatprep.subr.mxu0 0.0
        %2374 = vmatpush1.msra.mxu0 0.0
        %2375 = vmatprep.subr.mxu0 0.0
        %2376 = vmatpush1.msra.mxu0 0.0
        %2377 = vmatprep.subr.mxu0 0.0
        %2378 = vmatpush1.msra.mxu0 0.0
        %2379 = vmatprep.subr.mxu0 0.0
        %2380 = vmatpush1.msra.mxu0 0.0
        %2381 = vmatprep.subr.mxu0 0.0
        %2382 = vmatpush1.msra.mxu0 0.0
        %2383 = vmatprep.subr.mxu0 0.0
        %2384 = vmatpush1.msra.mxu0 0.0
        %2385 = vmatprep.subr.mxu0 0.0
        %2386 = vmatpush1.msra.mxu0 0.0
        %2387 = vmatprep.subr.mxu0 0.0
        %2388 = vmatpush1.msra.mxu0 0.0
        %2389 = vmatprep.subr.mxu0 0.0
        %2390 = vmatpush1.msra.mxu0 0.0
        %2391 = vmatprep.subr.mxu0 0.0
        %2392 = vmatpush1.msra.mxu0 0.0
        %2393 = vmatprep.subr.mxu0 0.0
        %2394 = vmatpush1.msra.mxu0 0.0
        %2395 = vmatprep.subr.mxu0 0.0
        %2396 = vmatpush1.msra.mxu0 0.0
        %2397 = vmatprep.subr.mxu0 0.0
        %2398 = vmatpush1.msra.mxu0 0.0
        %2399 = vmatprep.subr.mxu0 0.0
        %2400 = vmatpush1.msra.mxu0 0.0
        %2401 = vmatprep.subr.mxu0 0.0
        %2402 = vmatpush1.msra.mxu0 0.0
        %2403 = vmatprep.subr.mxu0 0.0
        %2404 = vmatpush1.msra.mxu0 0.0
        %2405 = vmatprep.subr.mxu0 0.0
        %2406 = vmatpush1.msra.mxu0 0.0
        %2407 = vmatprep.subr.mxu0 0.0
        %2408 = vmatpush1.msra.mxu0 0.0
        %2409 = vmatprep.subr.mxu0 0.0
        %2410 = vmatpush1.msra.mxu0 0.0
        %2411 = vmatprep.subr.mxu0 0.0
        %2412 = vmatpush1.msra.mxu0 0.0
        %2413 = vmatprep.subr.mxu0 0.0
        %2414 = vmatpush1.msra.mxu0 0.0
        %2415 = vmatprep.subr.mxu0 0.0
        %2416 = vmatpush1.msra.mxu0 0.0
        %2417 = vmatprep.subr.mxu0 0.0
        %2418 = vmatpush1.msra.mxu0 0.0
        %2419 = vmatprep.subr.mxu0 0.0
        %2420 = vmatpush1.msra.mxu0 0.0
        %2421 = vmatprep.subr.mxu0 0.0
        %2422 = vmatpush1.msra.mxu0 0.0
        %2423 = vmatprep.subr.mxu0 0.0
        %2424 = vmatpush1.msra.mxu0 0.0
        %2425 = vmatprep.subr.mxu0 0.0
        %2426 = vmatpush1.msra.mxu0 0.0
        %2427 = vmatprep.mubr.f32.mxu0 0.0
        %2428 = vmatmul.mubr.f32.gmra.mrb[0].mxu0 %v2361
        %v2429 = vpop.f32.mrb[0].mxu0
        %v2430 = vadd.f32 0.0, %v2429
        %v2431 = vpop.f32.mrb[0].mxu0
        %v2432 = vadd.f32 0.0, %v2431
        %2433 = vdwg.mxu0
        %2434 = vmatprep.subr.mxu0 0.0
        %2435 = vmatpush1.msra.mxu0 %v2357
        %2436 = vmatprep.subr.mxu0 0.0
        %2437 = vmatpush1.msra.mxu0 0.0
        %2438 = vmatprep.subr.mxu0 0.0
        %2439 = vmatpush1.msra.mxu0 0.0
        %2440 = vmatprep.subr.mxu0 0.0
        %2441 = vmatpush1.msra.mxu0 0.0
        %2442 = vmatprep.subr.mxu0 0.0
        %2443 = vmatpush1.msra.mxu0 0.0
        %2444 = vmatprep.subr.mxu0 0.0
        %2445 = vmatpush1.msra.mxu0 0.0
        %2446 = vmatprep.subr.mxu0 0.0
        %2447 = vmatpush1.msra.mxu0 0.0
        %2448 = vmatprep.subr.mxu0 0.0
        %2449 = vmatpush1.msra.mxu0 0.0
        %2450 = vmatprep.subr.mxu0 0.0
        %2451 = vmatpush1.msra.mxu0 0.0
        %2452 = vmatprep.subr.mxu0 0.0
        %2453 = vmatpush1.msra.mxu0 0.0
        %2454 = vmatprep.subr.mxu0 0.0
        %2455 = vmatpush1.msra.mxu0 0.0
        %2456 = vmatprep.subr.mxu0 0.0
        %2457 = vmatpush1.msra.mxu0 0.0
        %2458 = vmatprep.subr.mxu0 0.0
        %2459 = vmatpush1.msra.mxu0 0.0
        %2460 = vmatprep.subr.mxu0 0.0
        %2461 = vmatpush1.msra.mxu0 0.0
        %2462 = vmatprep.subr.mxu0 0.0
        %2463 = vmatpush1.msra.mxu0 0.0
        %2464 = vmatprep.subr.mxu0 0.0
        %2465 = vmatpush1.msra.mxu0 0.0
        %2466 = vmatprep.subr.mxu0 0.0
        %2467 = vmatpush1.msra.mxu0 0.0
        %2468 = vmatprep.subr.mxu0 0.0
        %2469 = vmatpush1.msra.mxu0 0.0
        %2470 = vmatprep.subr.mxu0 0.0
        %2471 = vmatpush1.msra.mxu0 0.0
        %2472 = vmatprep.subr.mxu0 0.0
        %2473 = vmatpush1.msra.mxu0 0.0
        %2474 = vmatprep.subr.mxu0 0.0
        %2475 = vmatpush1.msra.mxu0 0.0
        %2476 = vmatprep.subr.mxu0 0.0
        %2477 = vmatpush1.msra.mxu0 0.0
        %2478 = vmatprep.subr.mxu0 0.0
        %2479 = vmatpush1.msra.mxu0 0.0
        %2480 = vmatprep.subr.mxu0 0.0
        %2481 = vmatpush1.msra.mxu0 0.0
        %2482 = vmatprep.subr.mxu0 0.0
        %2483 = vmatpush1.msra.mxu0 0.0
        %2484 = vmatprep.subr.mxu0 0.0
        %2485 = vmatpush1.msra.mxu0 0.0
        %2486 = vmatprep.subr.mxu0 0.0
        %2487 = vmatpush1.msra.mxu0 0.0
        %2488 = vmatprep.subr.mxu0 0.0
        %2489 = vmatpush1.msra.mxu0 0.0
        %2490 = vmatprep.subr.mxu0 0.0
        %2491 = vmatpush1.msra.mxu0 0.0
        %2492 = vmatprep.subr.mxu0 0.0
        %2493 = vmatpush1.msra.mxu0 0.0
        %2494 = vmatprep.subr.mxu0 0.0
        %2495 = vmatpush1.msra.mxu0 0.0
        %2496 = vmatprep.subr.mxu0 0.0
        %2497 = vmatpush1.msra.mxu0 0.0
        %2498 = vmatprep.mubr.f32.mxu0 0.0
        %2499 = vmatmul.mubr.f32.gmra.mrb[0].mxu0 %v2361
        %v2500 = vpop.f32.mrb[0].mxu0
        %v2501 = vadd.f32 0.0, %v2500
        %v2502 = vpop.f32.mrb[0].mxu0
        %2503 = vdwg.mxu0
        %v2504 = vadd.f32 %v2346, %v2430
        %v2505 = vadd.f32 %v2347, %v2432
        %v2506 = vadd.f32 %v2348, %v2501
        %s2507 = scalar_lea.vmem %s2, 104
        %v2508 = vld [vmem:[%s2507] sm:$0xff]
        %v2510 = vsel %vm448, %v2508, 0
        %2512 = vmatprep.subr.mxu0 %v1879
        %2513 = vmatpush1.msra.mxu0 %v1878
        %2514 = vmatprep.subr.mxu0 0.0
        %2515 = vmatpush1.msra.mxu0 0.0
        %2516 = vmatprep.subr.mxu0 0.0
        %2517 = vmatpush1.msra.mxu0 0.0
        %2518 = vmatprep.subr.mxu0 0.0
        %2519 = vmatpush1.msra.mxu0 0.0
        %2520 = vmatprep.subr.mxu0 0.0
        %2521 = vmatpush1.msra.mxu0 0.0
        %2522 = vmatprep.subr.mxu0 0.0
        %2523 = vmatpush1.msra.mxu0 0.0
        %2524 = vmatprep.subr.mxu0 0.0
        %2525 = vmatpush1.msra.mxu0 0.0
        %2526 = vmatprep.subr.mxu0 0.0
        %2527 = vmatpush1.msra.mxu0 0.0
        %2528 = vmatprep.subr.mxu0 0.0
        %2529 = vmatpush1.msra.mxu0 0.0
        %2530 = vmatprep.subr.mxu0 0.0
        %2531 = vmatpush1.msra.mxu0 0.0
        %2532 = vmatprep.subr.mxu0 0.0
        %2533 = vmatpush1.msra.mxu0 0.0
        %2534 = vmatprep.subr.mxu0 0.0
        %2535 = vmatpush1.msra.mxu0 0.0
        %2536 = vmatprep.subr.mxu0 0.0
        %2537 = vmatpush1.msra.mxu0 0.0
        %2538 = vmatprep.subr.mxu0 0.0
        %2539 = vmatpush1.msra.mxu0 0.0
        %2540 = vmatprep.subr.mxu0 0.0
        %2541 = vmatpush1.msra.mxu0 0.0
        %2542 = vmatprep.subr.mxu0 0.0
        %2543 = vmatpush1.msra.mxu0 0.0
        %2544 = vmatprep.subr.mxu0 0.0
        %2545 = vmatpush1.msra.mxu0 0.0
        %2546 = vmatprep.subr.mxu0 0.0
        %2547 = vmatpush1.msra.mxu0 0.0
        %2548 = vmatprep.subr.mxu0 0.0
        %2549 = vmatpush1.msra.mxu0 0.0
        %2550 = vmatprep.subr.mxu0 0.0
        %2551 = vmatpush1.msra.mxu0 0.0
        %2552 = vmatprep.subr.mxu0 0.0
        %2553 = vmatpush1.msra.mxu0 0.0
        %2554 = vmatprep.subr.mxu0 0.0
        %2555 = vmatpush1.msra.mxu0 0.0
        %2556 = vmatprep.subr.mxu0 0.0
        %2557 = vmatpush1.msra.mxu0 0.0
        %2558 = vmatprep.subr.mxu0 0.0
        %2559 = vmatpush1.msra.mxu0 0.0
        %2560 = vmatprep.subr.mxu0 0.0
        %2561 = vmatpush1.msra.mxu0 0.0
        %2562 = vmatprep.subr.mxu0 0.0
        %2563 = vmatpush1.msra.mxu0 0.0
        %2564 = vmatprep.subr.mxu0 0.0
        %2565 = vmatpush1.msra.mxu0 0.0
        %2566 = vmatprep.subr.mxu0 0.0
        %2567 = vmatpush1.msra.mxu0 0.0
        %2568 = vmatprep.subr.mxu0 0.0
        %2569 = vmatpush1.msra.mxu0 0.0
        %2570 = vmatprep.subr.mxu0 0.0
        %2571 = vmatpush1.msra.mxu0 0.0
        %2572 = vmatprep.subr.mxu0 0.0
        %2573 = vmatpush1.msra.mxu0 0.0
        %2574 = vmatprep.subr.mxu0 0.0
        %2575 = vmatpush1.msra.mxu0 0.0
        %2576 = vmatprep.mubr.f32.mxu0 0.0
        %2577 = vmatmul.mubr.f32.gmra.mrb[0].mxu0 %v2510
        %v2578 = vpop.f32.mrb[0].mxu0
        %v2579 = vadd.f32 0.0, %v2578
        %v2580 = vpop.f32.mrb[0].mxu0
        %v2581 = vadd.f32 0.0, %v2580
        %2582 = vdwg.mxu0
        %2583 = vmatprep.subr.mxu0 0.0
        %2584 = vmatpush1.msra.mxu0 %v1880
        %2585 = vmatprep.subr.mxu0 0.0
        %2586 = vmatpush1.msra.mxu0 0.0
        %2587 = vmatprep.subr.mxu0 0.0
        %2588 = vmatpush1.msra.mxu0 0.0
        %2589 = vmatprep.subr.mxu0 0.0
        %2590 = vmatpush1.msra.mxu0 0.0
        %2591 = vmatprep.subr.mxu0 0.0
        %2592 = vmatpush1.msra.mxu0 0.0
        %2593 = vmatprep.subr.mxu0 0.0
        %2594 = vmatpush1.msra.mxu0 0.0
        %2595 = vmatprep.subr.mxu0 0.0
        %2596 = vmatpush1.msra.mxu0 0.0
        %2597 = vmatprep.subr.mxu0 0.0
        %2598 = vmatpush1.msra.mxu0 0.0
        %2599 = vmatprep.subr.mxu0 0.0
        %2600 = vmatpush1.msra.mxu0 0.0
        %2601 = vmatprep.subr.mxu0 0.0
        %2602 = vmatpush1.msra.mxu0 0.0
        %2603 = vmatprep.subr.mxu0 0.0
        %2604 = vmatpush1.msra.mxu0 0.0
        %2605 = vmatprep.subr.mxu0 0.0
        %2606 = vmatpush1.msra.mxu0 0.0
        %2607 = vmatprep.subr.mxu0 0.0
        %2608 = vmatpush1.msra.mxu0 0.0
        %2609 = vmatprep.subr.mxu0 0.0
        %2610 = vmatpush1.msra.mxu0 0.0
        %2611 = vmatprep.subr.mxu0 0.0
        %2612 = vmatpush1.msra.mxu0 0.0
        %2613 = vmatprep.subr.mxu0 0.0
        %2614 = vmatpush1.msra.mxu0 0.0
        %2615 = vmatprep.subr.mxu0 0.0
        %2616 = vmatpush1.msra.mxu0 0.0
        %2617 = vmatprep.subr.mxu0 0.0
        %2618 = vmatpush1.msra.mxu0 0.0
        %2619 = vmatprep.subr.mxu0 0.0
        %2620 = vmatpush1.msra.mxu0 0.0
        %2621 = vmatprep.subr.mxu0 0.0
        %2622 = vmatpush1.msra.mxu0 0.0
        %2623 = vmatprep.subr.mxu0 0.0
        %2624 = vmatpush1.msra.mxu0 0.0
        %2625 = vmatprep.subr.mxu0 0.0
        %2626 = vmatpush1.msra.mxu0 0.0
        %2627 = vmatprep.subr.mxu0 0.0
        %2628 = vmatpush1.msra.mxu0 0.0
        %2629 = vmatprep.subr.mxu0 0.0
        %2630 = vmatpush1.msra.mxu0 0.0
        %2631 = vmatprep.subr.mxu0 0.0
        %2632 = vmatpush1.msra.mxu0 0.0
        %2633 = vmatprep.subr.mxu0 0.0
        %2634 = vmatpush1.msra.mxu0 0.0
        %2635 = vmatprep.subr.mxu0 0.0
        %2636 = vmatpush1.msra.mxu0 0.0
        %2637 = vmatprep.subr.mxu0 0.0
        %2638 = vmatpush1.msra.mxu0 0.0
        %2639 = vmatprep.subr.mxu0 0.0
        %2640 = vmatpush1.msra.mxu0 0.0
        %2641 = vmatprep.subr.mxu0 0.0
        %2642 = vmatpush1.msra.mxu0 0.0
        %2643 = vmatprep.subr.mxu0 0.0
        %2644 = vmatpush1.msra.mxu0 0.0
        %2645 = vmatprep.subr.mxu0 0.0
        %2646 = vmatpush1.msra.mxu0 0.0
        %2647 = vmatprep.mubr.f32.mxu0 0.0
        %2648 = vmatmul.mubr.f32.gmra.mrb[0].mxu0 %v2510
        %v2649 = vpop.f32.mrb[0].mxu0
        %v2650 = vadd.f32 0.0, %v2649
        %v2651 = vpop.f32.mrb[0].mxu0
        %2652 = vdwg.mxu0
        %v2653 = vadd.f32 %v2504, %v2579
        %v2654 = vadd.f32 %v2505, %v2581
        %v2655 = vadd.f32 %v2506, %v2650
        %s2656 = scalar_lea.vmem %s2, 112
        %v2657 = vld [vmem:[%s2656] sm:$0xff]
        %2658 = vrot.lane.b32.xlu0 %v1878, 127
        %v2659 = vpop.permute.xlu0 %2658
        %2660 = vrot.lane.b32.xlu0 %v1879, 127
        %v2661 = vpop.permute.xlu0 %2660
        %2662 = vrot.lane.b32.xlu0 %v1880, 127
        %v2663 = vpop.permute.xlu0 %2662
        %v2664 = vsel %vm1212, %v2661, %v2663
        %v2665 = vsel %vm1212, %v2659, %v2661
        %v2666 = vsel %vm1212, %v2663, %v2659
        %v2668 = vsel %vm448, %v2657, 0
        %2670 = vmatprep.subr.mxu0 %v2664
        %2671 = vmatpush1.msra.mxu0 %v2665
        %2672 = vmatprep.subr.mxu0 0.0
        %2673 = vmatpush1.msra.mxu0 0.0
        %2674 = vmatprep.subr.mxu0 0.0
        %2675 = vmatpush1.msra.mxu0 0.0
        %2676 = vmatprep.subr.mxu0 0.0
        %2677 = vmatpush1.msra.mxu0 0.0
        %2678 = vmatprep.subr.mxu0 0.0
        %2679 = vmatpush1.msra.mxu0 0.0
        %2680 = vmatprep.subr.mxu0 0.0
        %2681 = vmatpush1.msra.mxu0 0.0
        %2682 = vmatprep.subr.mxu0 0.0
        %2683 = vmatpush1.msra.mxu0 0.0
        %2684 = vmatprep.subr.mxu0 0.0
        %2685 = vmatpush1.msra.mxu0 0.0
        %2686 = vmatprep.subr.mxu0 0.0
        %2687 = vmatpush1.msra.mxu0 0.0
        %2688 = vmatprep.subr.mxu0 0.0
        %2689 = vmatpush1.msra.mxu0 0.0
        %2690 = vmatprep.subr.mxu0 0.0
        %2691 = vmatpush1.msra.mxu0 0.0
        %2692 = vmatprep.subr.mxu0 0.0
        %2693 = vmatpush1.msra.mxu0 0.0
        %2694 = vmatprep.subr.mxu0 0.0
        %2695 = vmatpush1.msra.mxu0 0.0
        %2696 = vmatprep.subr.mxu0 0.0
        %2697 = vmatpush1.msra.mxu0 0.0
        %2698 = vmatprep.subr.mxu0 0.0
        %2699 = vmatpush1.msra.mxu0 0.0
        %2700 = vmatprep.subr.mxu0 0.0
        %2701 = vmatpush1.msra.mxu0 0.0
        %2702 = vmatprep.subr.mxu0 0.0
        %2703 = vmatpush1.msra.mxu0 0.0
        %2704 = vmatprep.subr.mxu0 0.0
        %2705 = vmatpush1.msra.mxu0 0.0
        %2706 = vmatprep.subr.mxu0 0.0
        %2707 = vmatpush1.msra.mxu0 0.0
        %2708 = vmatprep.subr.mxu0 0.0
        %2709 = vmatpush1.msra.mxu0 0.0
        %2710 = vmatprep.subr.mxu0 0.0
        %2711 = vmatpush1.msra.mxu0 0.0
        %2712 = vmatprep.subr.mxu0 0.0
        %2713 = vmatpush1.msra.mxu0 0.0
        %2714 = vmatprep.subr.mxu0 0.0
        %2715 = vmatpush1.msra.mxu0 0.0
        %2716 = vmatprep.subr.mxu0 0.0
        %2717 = vmatpush1.msra.mxu0 0.0
        %2718 = vmatprep.subr.mxu0 0.0
        %2719 = vmatpush1.msra.mxu0 0.0
        %2720 = vmatprep.subr.mxu0 0.0
        %2721 = vmatpush1.msra.mxu0 0.0
        %2722 = vmatprep.subr.mxu0 0.0
        %2723 = vmatpush1.msra.mxu0 0.0
        %2724 = vmatprep.subr.mxu0 0.0
        %2725 = vmatpush1.msra.mxu0 0.0
        %2726 = vmatprep.subr.mxu0 0.0
        %2727 = vmatpush1.msra.mxu0 0.0
        %2728 = vmatprep.subr.mxu0 0.0
        %2729 = vmatpush1.msra.mxu0 0.0
        %2730 = vmatprep.subr.mxu0 0.0
        %2731 = vmatpush1.msra.mxu0 0.0
        %2732 = vmatprep.subr.mxu0 0.0
        %2733 = vmatpush1.msra.mxu0 0.0
        %2734 = vmatprep.mubr.f32.mxu0 0.0
        %2735 = vmatmul.mubr.f32.gmra.mrb[0].mxu0 %v2668
        %v2736 = vpop.f32.mrb[0].mxu0
        %v2737 = vadd.f32 0.0, %v2736
        %v2738 = vpop.f32.mrb[0].mxu0
        %v2739 = vadd.f32 0.0, %v2738
        %2740 = vdwg.mxu0
        %2741 = vmatprep.subr.mxu0 0.0
        %2742 = vmatpush1.msra.mxu0 %v2666
        %2743 = vmatprep.subr.mxu0 0.0
        %2744 = vmatpush1.msra.mxu0 0.0
        %2745 = vmatprep.subr.mxu0 0.0
        %2746 = vmatpush1.msra.mxu0 0.0
        %2747 = vmatprep.subr.mxu0 0.0
        %2748 = vmatpush1.msra.mxu0 0.0
        %2749 = vmatprep.subr.mxu0 0.0
        %2750 = vmatpush1.msra.mxu0 0.0
        %2751 = vmatprep.subr.mxu0 0.0
        %2752 = vmatpush1.msra.mxu0 0.0
        %2753 = vmatprep.subr.mxu0 0.0
        %2754 = vmatpush1.msra.mxu0 0.0
        %2755 = vmatprep.subr.mxu0 0.0
        %2756 = vmatpush1.msra.mxu0 0.0
        %2757 = vmatprep.subr.mxu0 0.0
        %2758 = vmatpush1.msra.mxu0 0.0
        %2759 = vmatprep.subr.mxu0 0.0
        %2760 = vmatpush1.msra.mxu0 0.0
        %2761 = vmatprep.subr.mxu0 0.0
        %2762 = vmatpush1.msra.mxu0 0.0
        %2763 = vmatprep.subr.mxu0 0.0
        %2764 = vmatpush1.msra.mxu0 0.0
        %2765 = vmatprep.subr.mxu0 0.0
        %2766 = vmatpush1.msra.mxu0 0.0
        %2767 = vmatprep.subr.mxu0 0.0
        %2768 = vmatpush1.msra.mxu0 0.0
        %2769 = vmatprep.subr.mxu0 0.0
        %2770 = vmatpush1.msra.mxu0 0.0
        %2771 = vmatprep.subr.mxu0 0.0
        %2772 = vmatpush1.msra.mxu0 0.0
        %2773 = vmatprep.subr.mxu0 0.0
        %2774 = vmatpush1.msra.mxu0 0.0
        %2775 = vmatprep.subr.mxu0 0.0
        %2776 = vmatpush1.msra.mxu0 0.0
        %2777 = vmatprep.subr.mxu0 0.0
        %2778 = vmatpush1.msra.mxu0 0.0
        %2779 = vmatprep.subr.mxu0 0.0
        %2780 = vmatpush1.msra.mxu0 0.0
        %2781 = vmatprep.subr.mxu0 0.0
        %2782 = vmatpush1.msra.mxu0 0.0
        %2783 = vmatprep.subr.mxu0 0.0
        %2784 = vmatpush1.msra.mxu0 0.0
        %2785 = vmatprep.subr.mxu0 0.0
        %2786 = vmatpush1.msra.mxu0 0.0
        %2787 = vmatprep.subr.mxu0 0.0
        %2788 = vmatpush1.msra.mxu0 0.0
        %2789 = vmatprep.subr.mxu0 0.0
        %2790 = vmatpush1.msra.mxu0 0.0
        %2791 = vmatprep.subr.mxu0 0.0
        %2792 = vmatpush1.msra.mxu0 0.0
        %2793 = vmatprep.subr.mxu0 0.0
        %2794 = vmatpush1.msra.mxu0 0.0
        %2795 = vmatprep.subr.mxu0 0.0
        %2796 = vmatpush1.msra.mxu0 0.0
        %2797 = vmatprep.subr.mxu0 0.0
        %2798 = vmatpush1.msra.mxu0 0.0
        %2799 = vmatprep.subr.mxu0 0.0
        %2800 = vmatpush1.msra.mxu0 0.0
        %2801 = vmatprep.subr.mxu0 0.0
        %2802 = vmatpush1.msra.mxu0 0.0
        %2803 = vmatprep.subr.mxu0 0.0
        %2804 = vmatpush1.msra.mxu0 0.0
        %2805 = vmatprep.mubr.f32.mxu0 0.0
        %2806 = vmatmul.mubr.f32.gmra.mrb[0].mxu0 %v2668
        %v2807 = vpop.f32.mrb[0].mxu0
        %v2808 = vadd.f32 0.0, %v2807
        %v2809 = vpop.f32.mrb[0].mxu0
        %2810 = vdwg.mxu0
        %v2811 = vadd.f32 %v2653, %v2737
        %v2812 = vadd.f32 %v2654, %v2739
        %v2813 = vadd.f32 %v2655, %v2808
        %s2814 = scalar_lea.vmem %s2, 120
        %v2815 = vld [vmem:[%s2814] sm:$0xff]
        %2816 = vrot.lane.b32.xlu0 %v1878, 111
        %v2817 = vpop.permute.xlu0 %2816
        %2818 = vrot.lane.b32.xlu0 %v1879, 111
        %v2819 = vpop.permute.xlu0 %2818
        %2820 = vrot.lane.b32.xlu0 %v1880, 111
        %v2821 = vpop.permute.xlu0 %2820
        %v2822 = vsel %vm1371, %v2819, %v2821
        %v2823 = vsel %vm1371, %v2817, %v2819
        %v2824 = vsel %vm1371, %v2821, %v2817
        %v2826 = vsel %vm448, %v2815, 0
        %2828 = vmatprep.subr.mxu0 %v2822
        %2829 = vmatpush1.msra.mxu0 %v2823
        %2830 = vmatprep.subr.mxu0 0.0
        %2831 = vmatpush1.msra.mxu0 0.0
        %2832 = vmatprep.subr.mxu0 0.0
        %2833 = vmatpush1.msra.mxu0 0.0
        %2834 = vmatprep.subr.mxu0 0.0
        %2835 = vmatpush1.msra.mxu0 0.0
        %2836 = vmatprep.subr.mxu0 0.0
        %2837 = vmatpush1.msra.mxu0 0.0
        %2838 = vmatprep.subr.mxu0 0.0
        %2839 = vmatpush1.msra.mxu0 0.0
        %2840 = vmatprep.subr.mxu0 0.0
        %2841 = vmatpush1.msra.mxu0 0.0
        %2842 = vmatprep.subr.mxu0 0.0
        %2843 = vmatpush1.msra.mxu0 0.0
        %2844 = vmatprep.subr.mxu0 0.0
        %2845 = vmatpush1.msra.mxu0 0.0
        %2846 = vmatprep.subr.mxu0 0.0
        %2847 = vmatpush1.msra.mxu0 0.0
        %2848 = vmatprep.subr.mxu0 0.0
        %2849 = vmatpush1.msra.mxu0 0.0
        %2850 = vmatprep.subr.mxu0 0.0
        %2851 = vmatpush1.msra.mxu0 0.0
        %2852 = vmatprep.subr.mxu0 0.0
        %2853 = vmatpush1.msra.mxu0 0.0
        %2854 = vmatprep.subr.mxu0 0.0
        %2855 = vmatpush1.msra.mxu0 0.0
        %2856 = vmatprep.subr.mxu0 0.0
        %2857 = vmatpush1.msra.mxu0 0.0
        %2858 = vmatprep.subr.mxu0 0.0
        %2859 = vmatpush1.msra.mxu0 0.0
        %2860 = vmatprep.subr.mxu0 0.0
        %2861 = vmatpush1.msra.mxu0 0.0
        %2862 = vmatprep.subr.mxu0 0.0
        %2863 = vmatpush1.msra.mxu0 0.0
        %2864 = vmatprep.subr.mxu0 0.0
        %2865 = vmatpush1.msra.mxu0 0.0
        %2866 = vmatprep.subr.mxu0 0.0
        %2867 = vmatpush1.msra.mxu0 0.0
        %2868 = vmatprep.subr.mxu0 0.0
        %2869 = vmatpush1.msra.mxu0 0.0
        %2870 = vmatprep.subr.mxu0 0.0
        %2871 = vmatpush1.msra.mxu0 0.0
        %2872 = vmatprep.subr.mxu0 0.0
        %2873 = vmatpush1.msra.mxu0 0.0
        %2874 = vmatprep.subr.mxu0 0.0
        %2875 = vmatpush1.msra.mxu0 0.0
        %2876 = vmatprep.subr.mxu0 0.0
        %2877 = vmatpush1.msra.mxu0 0.0
        %2878 = vmatprep.subr.mxu0 0.0
        %2879 = vmatpush1.msra.mxu0 0.0
        %2880 = vmatprep.subr.mxu0 0.0
        %2881 = vmatpush1.msra.mxu0 0.0
        %2882 = vmatprep.subr.mxu0 0.0
        %2883 = vmatpush1.msra.mxu0 0.0
        %2884 = vmatprep.subr.mxu0 0.0
        %2885 = vmatpush1.msra.mxu0 0.0
        %2886 = vmatprep.subr.mxu0 0.0
        %2887 = vmatpush1.msra.mxu0 0.0
        %2888 = vmatprep.subr.mxu0 0.0
        %2889 = vmatpush1.msra.mxu0 0.0
        %2890 = vmatprep.subr.mxu0 0.0
        %2891 = vmatpush1.msra.mxu0 0.0
        %2892 = vmatprep.mubr.f32.mxu0 0.0
        %2893 = vmatmul.mubr.f32.gmra.mrb[0].mxu0 %v2826
        %v2894 = vpop.f32.mrb[0].mxu0
        %v2895 = vadd.f32 0.0, %v2894
        %v2896 = vpop.f32.mrb[0].mxu0
        %v2897 = vadd.f32 0.0, %v2896
        %2898 = vdwg.mxu0
        %2899 = vmatprep.subr.mxu0 0.0
        %2900 = vmatpush1.msra.mxu0 %v2824
        %2901 = vmatprep.subr.mxu0 0.0
        %2902 = vmatpush1.msra.mxu0 0.0
        %2903 = vmatprep.subr.mxu0 0.0
        %2904 = vmatpush1.msra.mxu0 0.0
        %2905 = vmatprep.subr.mxu0 0.0
        %2906 = vmatpush1.msra.mxu0 0.0
        %2907 = vmatprep.subr.mxu0 0.0
        %2908 = vmatpush1.msra.mxu0 0.0
        %2909 = vmatprep.subr.mxu0 0.0
        %2910 = vmatpush1.msra.mxu0 0.0
        %2911 = vmatprep.subr.mxu0 0.0
        %2912 = vmatpush1.msra.mxu0 0.0
        %2913 = vmatprep.subr.mxu0 0.0
        %2914 = vmatpush1.msra.mxu0 0.0
        %2915 = vmatprep.subr.mxu0 0.0
        %2916 = vmatpush1.msra.mxu0 0.0
        %2917 = vmatprep.subr.mxu0 0.0
        %2918 = vmatpush1.msra.mxu0 0.0
        %2919 = vmatprep.subr.mxu0 0.0
        %2920 = vmatpush1.msra.mxu0 0.0
        %2921 = vmatprep.subr.mxu0 0.0
        %2922 = vmatpush1.msra.mxu0 0.0
        %2923 = vmatprep.subr.mxu0 0.0
        %2924 = vmatpush1.msra.mxu0 0.0
        %2925 = vmatprep.subr.mxu0 0.0
        %2926 = vmatpush1.msra.mxu0 0.0
        %2927 = vmatprep.subr.mxu0 0.0
        %2928 = vmatpush1.msra.mxu0 0.0
        %2929 = vmatprep.subr.mxu0 0.0
        %2930 = vmatpush1.msra.mxu0 0.0
        %2931 = vmatprep.subr.mxu0 0.0
        %2932 = vmatpush1.msra.mxu0 0.0
        %2933 = vmatprep.subr.mxu0 0.0
        %2934 = vmatpush1.msra.mxu0 0.0
        %2935 = vmatprep.subr.mxu0 0.0
        %2936 = vmatpush1.msra.mxu0 0.0
        %2937 = vmatprep.subr.mxu0 0.0
        %2938 = vmatpush1.msra.mxu0 0.0
        %2939 = vmatprep.subr.mxu0 0.0
        %2940 = vmatpush1.msra.mxu0 0.0
        %2941 = vmatprep.subr.mxu0 0.0
        %2942 = vmatpush1.msra.mxu0 0.0
        %2943 = vmatprep.subr.mxu0 0.0
        %2944 = vmatpush1.msra.mxu0 0.0
        %2945 = vmatprep.subr.mxu0 0.0
        %2946 = vmatpush1.msra.mxu0 0.0
        %2947 = vmatprep.subr.mxu0 0.0
        %2948 = vmatpush1.msra.mxu0 0.0
        %2949 = vmatprep.subr.mxu0 0.0
        %2950 = vmatpush1.msra.mxu0 0.0
        %2951 = vmatprep.subr.mxu0 0.0
        %2952 = vmatpush1.msra.mxu0 0.0
        %2953 = vmatprep.subr.mxu0 0.0
        %2954 = vmatpush1.msra.mxu0 0.0
        %2955 = vmatprep.subr.mxu0 0.0
        %2956 = vmatpush1.msra.mxu0 0.0
        %2957 = vmatprep.subr.mxu0 0.0
        %2958 = vmatpush1.msra.mxu0 0.0
        %2959 = vmatprep.subr.mxu0 0.0
        %2960 = vmatpush1.msra.mxu0 0.0
        %2961 = vmatprep.subr.mxu0 0.0
        %2962 = vmatpush1.msra.mxu0 0.0
        %2963 = vmatprep.mubr.f32.mxu0 0.0
        %2964 = vmatmul.mubr.f32.gmra.mrb[0].mxu0 %v2826
        %v2965 = vpop.f32.mrb[0].mxu0
        %v2966 = vadd.f32 0.0, %v2965
        %v2967 = vpop.f32.mrb[0].mxu0
        %2968 = vdwg.mxu0
        %v2969 = vadd.f32 %v2811, %v2895
        %v2970 = vadd.f32 %v2812, %v2897
        %v2971 = vadd.f32 %v2813, %v2966
        %s2972 = scalar_lea.vmem %s2, 128
        %v2973 = vld [vmem:[%s2972] sm:$0xff]
        %2974 = vrot.lane.b32.xlu0 %v1878, 110
        %v2975 = vpop.permute.xlu0 %2974
        %2976 = vrot.lane.b32.xlu0 %v1879, 110
        %v2977 = vpop.permute.xlu0 %2976
        %2978 = vrot.lane.b32.xlu0 %v1880, 110
        %v2979 = vpop.permute.xlu0 %2978
        %v2980 = vsel %vm1530, %v2977, %v2979
        %v2981 = vsel %vm1530, %v2975, %v2977
        %v2982 = vsel %vm1530, %v2979, %v2975
        %v2984 = vsel %vm448, %v2973, 0
        %2986 = vmatprep.subr.mxu0 %v2980
        %2987 = vmatpush1.msra.mxu0 %v2981
        %2988 = vmatprep.subr.mxu0 0.0
        %2989 = vmatpush1.msra.mxu0 0.0
        %2990 = vmatprep.subr.mxu0 0.0
        %2991 = vmatpush1.msra.mxu0 0.0
        %2992 = vmatprep.subr.mxu0 0.0
        %2993 = vmatpush1.msra.mxu0 0.0
        %2994 = vmatprep.subr.mxu0 0.0
        %2995 = vmatpush1.msra.mxu0 0.0
        %2996 = vmatprep.subr.mxu0 0.0
        %2997 = vmatpush1.msra.mxu0 0.0
        %2998 = vmatprep.subr.mxu0 0.0
        %2999 = vmatpush1.msra.mxu0 0.0
        %3000 = vmatprep.subr.mxu0 0.0
        %3001 = vmatpush1.msra.mxu0 0.0
        %3002 = vmatprep.subr.mxu0 0.0
        %3003 = vmatpush1.msra.mxu0 0.0
        %3004 = vmatprep.subr.mxu0 0.0
        %3005 = vmatpush1.msra.mxu0 0.0
        %3006 = vmatprep.subr.mxu0 0.0
        %3007 = vmatpush1.msra.mxu0 0.0
        %3008 = vmatprep.subr.mxu0 0.0
        %3009 = vmatpush1.msra.mxu0 0.0
        %3010 = vmatprep.subr.mxu0 0.0
        %3011 = vmatpush1.msra.mxu0 0.0
        %3012 = vmatprep.subr.mxu0 0.0
        %3013 = vmatpush1.msra.mxu0 0.0
        %3014 = vmatprep.subr.mxu0 0.0
        %3015 = vmatpush1.msra.mxu0 0.0
        %3016 = vmatprep.subr.mxu0 0.0
        %3017 = vmatpush1.msra.mxu0 0.0
        %3018 = vmatprep.subr.mxu0 0.0
        %3019 = vmatpush1.msra.mxu0 0.0
        %3020 = vmatprep.subr.mxu0 0.0
        %3021 = vmatpush1.msra.mxu0 0.0
        %3022 = vmatprep.subr.mxu0 0.0
        %3023 = vmatpush1.msra.mxu0 0.0
        %3024 = vmatprep.subr.mxu0 0.0
        %3025 = vmatpush1.msra.mxu0 0.0
        %3026 = vmatprep.subr.mxu0 0.0
        %3027 = vmatpush1.msra.mxu0 0.0
        %3028 = vmatprep.subr.mxu0 0.0
        %3029 = vmatpush1.msra.mxu0 0.0
        %3030 = vmatprep.subr.mxu0 0.0
        %3031 = vmatpush1.msra.mxu0 0.0
        %3032 = vmatprep.subr.mxu0 0.0
        %3033 = vmatpush1.msra.mxu0 0.0
        %3034 = vmatprep.subr.mxu0 0.0
        %3035 = vmatpush1.msra.mxu0 0.0
        %3036 = vmatprep.subr.mxu0 0.0
        %3037 = vmatpush1.msra.mxu0 0.0
        %3038 = vmatprep.subr.mxu0 0.0
        %3039 = vmatpush1.msra.mxu0 0.0
        %3040 = vmatprep.subr.mxu0 0.0
        %3041 = vmatpush1.msra.mxu0 0.0
        %3042 = vmatprep.subr.mxu0 0.0
        %3043 = vmatpush1.msra.mxu0 0.0
        %3044 = vmatprep.subr.mxu0 0.0
        %3045 = vmatpush1.msra.mxu0 0.0
        %3046 = vmatprep.subr.mxu0 0.0
        %3047 = vmatpush1.msra.mxu0 0.0
        %3048 = vmatprep.subr.mxu0 0.0
        %3049 = vmatpush1.msra.mxu0 0.0
        %3050 = vmatprep.mubr.f32.mxu0 0.0
        %3051 = vmatmul.mubr.f32.gmra.mrb[0].mxu0 %v2984
        %v3052 = vpop.f32.mrb[0].mxu0
        %v3053 = vadd.f32 0.0, %v3052
        %v3054 = vpop.f32.mrb[0].mxu0
        %v3055 = vadd.f32 0.0, %v3054
        %3056 = vdwg.mxu0
        %3057 = vmatprep.subr.mxu0 0.0
        %3058 = vmatpush1.msra.mxu0 %v2982
        %3059 = vmatprep.subr.mxu0 0.0
        %3060 = vmatpush1.msra.mxu0 0.0
        %3061 = vmatprep.subr.mxu0 0.0
        %3062 = vmatpush1.msra.mxu0 0.0
        %3063 = vmatprep.subr.mxu0 0.0
        %3064 = vmatpush1.msra.mxu0 0.0
        %3065 = vmatprep.subr.mxu0 0.0
        %3066 = vmatpush1.msra.mxu0 0.0
        %3067 = vmatprep.subr.mxu0 0.0
        %3068 = vmatpush1.msra.mxu0 0.0
        %3069 = vmatprep.subr.mxu0 0.0
        %3070 = vmatpush1.msra.mxu0 0.0
        %3071 = vmatprep.subr.mxu0 0.0
        %3072 = vmatpush1.msra.mxu0 0.0
        %3073 = vmatprep.subr.mxu0 0.0
        %3074 = vmatpush1.msra.mxu0 0.0
        %3075 = vmatprep.subr.mxu0 0.0
        %3076 = vmatpush1.msra.mxu0 0.0
        %3077 = vmatprep.subr.mxu0 0.0
        %3078 = vmatpush1.msra.mxu0 0.0
        %3079 = vmatprep.subr.mxu0 0.0
        %3080 = vmatpush1.msra.mxu0 0.0
        %3081 = vmatprep.subr.mxu0 0.0
        %3082 = vmatpush1.msra.mxu0 0.0
        %3083 = vmatprep.subr.mxu0 0.0
        %3084 = vmatpush1.msra.mxu0 0.0
        %3085 = vmatprep.subr.mxu0 0.0
        %3086 = vmatpush1.msra.mxu0 0.0
        %3087 = vmatprep.subr.mxu0 0.0
        %3088 = vmatpush1.msra.mxu0 0.0
        %3089 = vmatprep.subr.mxu0 0.0
        %3090 = vmatpush1.msra.mxu0 0.0
        %3091 = vmatprep.subr.mxu0 0.0
        %3092 = vmatpush1.msra.mxu0 0.0
        %3093 = vmatprep.subr.mxu0 0.0
        %3094 = vmatpush1.msra.mxu0 0.0
        %3095 = vmatprep.subr.mxu0 0.0
        %3096 = vmatpush1.msra.mxu0 0.0
        %3097 = vmatprep.subr.mxu0 0.0
        %3098 = vmatpush1.msra.mxu0 0.0
        %3099 = vmatprep.subr.mxu0 0.0
        %3100 = vmatpush1.msra.mxu0 0.0
        %3101 = vmatprep.subr.mxu0 0.0
        %3102 = vmatpush1.msra.mxu0 0.0
        %3103 = vmatprep.subr.mxu0 0.0
        %3104 = vmatpush1.msra.mxu0 0.0
        %3105 = vmatprep.subr.mxu0 0.0
        %3106 = vmatpush1.msra.mxu0 0.0
        %3107 = vmatprep.subr.mxu0 0.0
        %3108 = vmatpush1.msra.mxu0 0.0
        %3109 = vmatprep.subr.mxu0 0.0
        %3110 = vmatpush1.msra.mxu0 0.0
        %3111 = vmatprep.subr.mxu0 0.0
        %3112 = vmatpush1.msra.mxu0 0.0
        %3113 = vmatprep.subr.mxu0 0.0
        %3114 = vmatpush1.msra.mxu0 0.0
        %3115 = vmatprep.subr.mxu0 0.0
        %3116 = vmatpush1.msra.mxu0 0.0
        %3117 = vmatprep.subr.mxu0 0.0
        %3118 = vmatpush1.msra.mxu0 0.0
        %3119 = vmatprep.subr.mxu0 0.0
        %3120 = vmatpush1.msra.mxu0 0.0
        %3121 = vmatprep.mubr.f32.mxu0 0.0
        %3122 = vmatmul.mubr.f32.gmra.mrb[0].mxu0 %v2984
        %v3123 = vpop.f32.mrb[0].mxu0
        %v3124 = vadd.f32 0.0, %v3123
        %v3125 = vpop.f32.mrb[0].mxu0
        %3126 = vdwg.mxu0
        %v3127 = vadd.f32 %v2969, %v3053
        %v3128 = vadd.f32 %v2970, %v3055
        %v3129 = vadd.f32 %v2971, %v3124
        %s3130 = scalar_lea.vmem %s2, 136
        %v3131 = vld [vmem:[%s3130] sm:$0xff]
        %3132 = vrot.lane.b32.xlu0 %v1878, 109
        %v3133 = vpop.permute.xlu0 %3132
        %3134 = vrot.lane.b32.xlu0 %v1879, 109
        %v3135 = vpop.permute.xlu0 %3134
        %3136 = vrot.lane.b32.xlu0 %v1880, 109
        %v3137 = vpop.permute.xlu0 %3136
        %v3138 = vsel %vm1689, %v3135, %v3137
        %v3139 = vsel %vm1689, %v3133, %v3135
        %v3140 = vsel %vm1689, %v3137, %v3133
        %v3142 = vsel %vm448, %v3131, 0
        %3144 = vmatprep.subr.mxu0 %v3138
        %3145 = vmatpush1.msra.mxu0 %v3139
        %3146 = vmatprep.subr.mxu0 0.0
        %3147 = vmatpush1.msra.mxu0 0.0
        %3148 = vmatprep.subr.mxu0 0.0
        %3149 = vmatpush1.msra.mxu0 0.0
        %3150 = vmatprep.subr.mxu0 0.0
        %3151 = vmatpush1.msra.mxu0 0.0
        %3152 = vmatprep.subr.mxu0 0.0
        %3153 = vmatpush1.msra.mxu0 0.0
        %3154 = vmatprep.subr.mxu0 0.0
        %3155 = vmatpush1.msra.mxu0 0.0
        %3156 = vmatprep.subr.mxu0 0.0
        %3157 = vmatpush1.msra.mxu0 0.0
        %3158 = vmatprep.subr.mxu0 0.0
        %3159 = vmatpush1.msra.mxu0 0.0
        %3160 = vmatprep.subr.mxu0 0.0
        %3161 = vmatpush1.msra.mxu0 0.0
        %3162 = vmatprep.subr.mxu0 0.0
        %3163 = vmatpush1.msra.mxu0 0.0
        %3164 = vmatprep.subr.mxu0 0.0
        %3165 = vmatpush1.msra.mxu0 0.0
        %3166 = vmatprep.subr.mxu0 0.0
        %3167 = vmatpush1.msra.mxu0 0.0
        %3168 = vmatprep.subr.mxu0 0.0
        %3169 = vmatpush1.msra.mxu0 0.0
        %3170 = vmatprep.subr.mxu0 0.0
        %3171 = vmatpush1.msra.mxu0 0.0
        %3172 = vmatprep.subr.mxu0 0.0
        %3173 = vmatpush1.msra.mxu0 0.0
        %3174 = vmatprep.subr.mxu0 0.0
        %3175 = vmatpush1.msra.mxu0 0.0
        %3176 = vmatprep.subr.mxu0 0.0
        %3177 = vmatpush1.msra.mxu0 0.0
        %3178 = vmatprep.subr.mxu0 0.0
        %3179 = vmatpush1.msra.mxu0 0.0
        %3180 = vmatprep.subr.mxu0 0.0
        %3181 = vmatpush1.msra.mxu0 0.0
        %3182 = vmatprep.subr.mxu0 0.0
        %3183 = vmatpush1.msra.mxu0 0.0
        %3184 = vmatprep.subr.mxu0 0.0
        %3185 = vmatpush1.msra.mxu0 0.0
        %3186 = vmatprep.subr.mxu0 0.0
        %3187 = vmatpush1.msra.mxu0 0.0
        %3188 = vmatprep.subr.mxu0 0.0
        %3189 = vmatpush1.msra.mxu0 0.0
        %3190 = vmatprep.subr.mxu0 0.0
        %3191 = vmatpush1.msra.mxu0 0.0
        %3192 = vmatprep.subr.mxu0 0.0
        %3193 = vmatpush1.msra.mxu0 0.0
        %3194 = vmatprep.subr.mxu0 0.0
        %3195 = vmatpush1.msra.mxu0 0.0
        %3196 = vmatprep.subr.mxu0 0.0
        %3197 = vmatpush1.msra.mxu0 0.0
        %3198 = vmatprep.subr.mxu0 0.0
        %3199 = vmatpush1.msra.mxu0 0.0
        %3200 = vmatprep.subr.mxu0 0.0
        %3201 = vmatpush1.msra.mxu0 0.0
        %3202 = vmatprep.subr.mxu0 0.0
        %3203 = vmatpush1.msra.mxu0 0.0
        %3204 = vmatprep.subr.mxu0 0.0
        %3205 = vmatpush1.msra.mxu0 0.0
        %3206 = vmatprep.subr.mxu0 0.0
        %3207 = vmatpush1.msra.mxu0 0.0
        %3208 = vmatprep.mubr.f32.mxu0 0.0
        %3209 = vmatmul.mubr.f32.gmra.mrb[0].mxu0 %v3142
        %v3210 = vpop.f32.mrb[0].mxu0
        %v3211 = vadd.f32 0.0, %v3210
        %v3212 = vpop.f32.mrb[0].mxu0
        %v3213 = vadd.f32 0.0, %v3212
        %3214 = vdwg.mxu0
        %3215 = vmatprep.subr.mxu0 0.0
        %3216 = vmatpush1.msra.mxu0 %v3140
        %3217 = vmatprep.subr.mxu0 0.0
        %3218 = vmatpush1.msra.mxu0 0.0
        %3219 = vmatprep.subr.mxu0 0.0
        %3220 = vmatpush1.msra.mxu0 0.0
        %3221 = vmatprep.subr.mxu0 0.0
        %3222 = vmatpush1.msra.mxu0 0.0
        %3223 = vmatprep.subr.mxu0 0.0
        %3224 = vmatpush1.msra.mxu0 0.0
        %3225 = vmatprep.subr.mxu0 0.0
        %3226 = vmatpush1.msra.mxu0 0.0
        %3227 = vmatprep.subr.mxu0 0.0
        %3228 = vmatpush1.msra.mxu0 0.0
        %3229 = vmatprep.subr.mxu0 0.0
        %3230 = vmatpush1.msra.mxu0 0.0
        %3231 = vmatprep.subr.mxu0 0.0
        %3232 = vmatpush1.msra.mxu0 0.0
        %3233 = vmatprep.subr.mxu0 0.0
        %3234 = vmatpush1.msra.mxu0 0.0
        %3235 = vmatprep.subr.mxu0 0.0
        %3236 = vmatpush1.msra.mxu0 0.0
        %3237 = vmatprep.subr.mxu0 0.0
        %3238 = vmatpush1.msra.mxu0 0.0
        %3239 = vmatprep.subr.mxu0 0.0
        %3240 = vmatpush1.msra.mxu0 0.0
        %3241 = vmatprep.subr.mxu0 0.0
        %3242 = vmatpush1.msra.mxu0 0.0
        %3243 = vmatprep.subr.mxu0 0.0
        %3244 = vmatpush1.msra.mxu0 0.0
        %3245 = vmatprep.subr.mxu0 0.0
        %3246 = vmatpush1.msra.mxu0 0.0
        %3247 = vmatprep.subr.mxu0 0.0
        %3248 = vmatpush1.msra.mxu0 0.0
        %3249 = vmatprep.subr.mxu0 0.0
        %3250 = vmatpush1.msra.mxu0 0.0
        %3251 = vmatprep.subr.mxu0 0.0
        %3252 = vmatpush1.msra.mxu0 0.0
        %3253 = vmatprep.subr.mxu0 0.0
        %3254 = vmatpush1.msra.mxu0 0.0
        %3255 = vmatprep.subr.mxu0 0.0
        %3256 = vmatpush1.msra.mxu0 0.0
        %3257 = vmatprep.subr.mxu0 0.0
        %3258 = vmatpush1.msra.mxu0 0.0
        %3259 = vmatprep.subr.mxu0 0.0
        %3260 = vmatpush1.msra.mxu0 0.0
        %3261 = vmatprep.subr.mxu0 0.0
        %3262 = vmatpush1.msra.mxu0 0.0
        %3263 = vmatprep.subr.mxu0 0.0
        %3264 = vmatpush1.msra.mxu0 0.0
        %3265 = vmatprep.subr.mxu0 0.0
        %3266 = vmatpush1.msra.mxu0 0.0
        %3267 = vmatprep.subr.mxu0 0.0
        %3268 = vmatpush1.msra.mxu0 0.0
        %3269 = vmatprep.subr.mxu0 0.0
        %3270 = vmatpush1.msra.mxu0 0.0
        %3271 = vmatprep.subr.mxu0 0.0
        %3272 = vmatpush1.msra.mxu0 0.0
        %3273 = vmatprep.subr.mxu0 0.0
        %3274 = vmatpush1.msra.mxu0 0.0
        %3275 = vmatprep.subr.mxu0 0.0
        %3276 = vmatpush1.msra.mxu0 0.0
        %3277 = vmatprep.subr.mxu0 0.0
        %3278 = vmatpush1.msra.mxu0 0.0
        %3279 = vmatprep.mubr.f32.mxu0 0.0
        %3280 = vmatmul.mubr.f32.gmra.mrb[0].mxu0 %v3142
        %v3281 = vpop.f32.mrb[0].mxu0
        %v3282 = vadd.f32 0.0, %v3281
        %v3283 = vpop.f32.mrb[0].mxu0
        %3284 = vdwg.mxu0
        %v3285 = vadd.f32 %v3127, %v3211
        %v3286 = vadd.f32 %v3128, %v3213
        %v3287 = vadd.f32 %v3129, %v3282
        %s3288 = scalar_lea.vmem %s4, 16
        %v3289 = vld [vmem:[%s3288] sm:$0xff]
        %3291 = vset.pattern.permute.xlu0 0
        %3292 = vperm.xlu0 %3291, %v3289
        %v3293 = vpop.permute.xlu0 %3292
        %v3295 = vmul.f32 %v3285, %v3293
        %v3296 = vmul.f32 %v3286, %v3293
        %v3297 = vmul.f32 %v3287, %v3293
        %s3298 = scalar_lea.vmem %s4, 24
        %v3299 = vld [vmem:[%s3298] sm:$0xff]
        %3301 = vset.pattern.permute.xlu0 0
        %3302 = vperm.xlu0 %3301, %v3299
        %v3303 = vpop.permute.xlu0 %3302
        %v3305 = vadd.f32 %v3295, %v3303
        %v3306 = vadd.f32 %v3296, %v3303
        %v3307 = vadd.f32 %v3297, %v3303
        %v3308 = vadd.f32 %v3305, %v417
        %v3309 = vadd.f32 %v3306, %v418
        %v3310 = vadd.f32 %v3307, %v419
        %v3311 = vmax.f32 %v3308, 0.0
        %v3312 = vmax.f32 %v3309, 0.0
        %v3313 = vmax.f32 %v3310, 0.0
        %v3314 = vmul.f32 %v3311, %v1866
        %v3315 = vmul.f32 %v3312, %v1870
        %v3316 = vmul.f32 %v3313, %v1874
        %s3317 = scalar_lea.vmem %s2, 144
        %v3318 = vld [vmem:[%s3317] sm:$0xff]
        %3319 = vrot.lane.b32.xlu0 %v420, 11
        %v3320 = vpop.permute.xlu0 %3319
        %s3321 = scalar_lea.vmem %s2, 152
        %v3322 = vld [vmem:[%s3321] sm:$0xff]
        %3323 = vrot.lane.b32.xlu0 %v420, 10
        %v3324 = vpop.permute.xlu0 %3323
        %v3326 = vsel %vm448, %v3322, 0
        %3328 = vmatprep.subr.mxu0 0.0
        %3329 = vmatpush1.msra.mxu0 %v3324
        %3330 = vmatprep.subr.mxu0 0.0
        %3331 = vmatpush1.msra.mxu0 0.0
        %3332 = vmatprep.subr.mxu0 0.0
        %3333 = vmatpush1.msra.mxu0 0.0
        %3334 = vmatprep.subr.mxu0 0.0
        %3335 = vmatpush1.msra.mxu0 0.0
        %3336 = vmatprep.subr.mxu0 0.0
        %3337 = vmatpush1.msra.mxu0 0.0
        %3338 = vmatprep.subr.mxu0 0.0
        %3339 = vmatpush1.msra.mxu0 0.0
        %3340 = vmatprep.subr.mxu0 0.0
        %3341 = vmatpush1.msra.mxu0 0.0
        %3342 = vmatprep.subr.mxu0 0.0
        %3343 = vmatpush1.msra.mxu0 0.0
        %3344 = vmatprep.subr.mxu0 0.0
        %3345 = vmatpush1.msra.mxu0 0.0
        %3346 = vmatprep.subr.mxu0 0.0
        %3347 = vmatpush1.msra.mxu0 0.0
        %3348 = vmatprep.subr.mxu0 0.0
        %3349 = vmatpush1.msra.mxu0 0.0
        %3350 = vmatprep.subr.mxu0 0.0
        %3351 = vmatpush1.msra.mxu0 0.0
        %3352 = vmatprep.subr.mxu0 0.0
        %3353 = vmatpush1.msra.mxu0 0.0
        %3354 = vmatprep.subr.mxu0 0.0
        %3355 = vmatpush1.msra.mxu0 0.0
        %3356 = vmatprep.subr.mxu0 0.0
        %3357 = vmatpush1.msra.mxu0 0.0
        %3358 = vmatprep.subr.mxu0 0.0
        %3359 = vmatpush1.msra.mxu0 0.0
        %3360 = vmatprep.subr.mxu0 0.0
        %3361 = vmatpush1.msra.mxu0 0.0
        %3362 = vmatprep.subr.mxu0 0.0
        %3363 = vmatpush1.msra.mxu0 0.0
        %3364 = vmatprep.subr.mxu0 0.0
        %3365 = vmatpush1.msra.mxu0 0.0
        %3366 = vmatprep.subr.mxu0 0.0
        %3367 = vmatpush1.msra.mxu0 0.0
        %3368 = vmatprep.subr.mxu0 0.0
        %3369 = vmatpush1.msra.mxu0 0.0
        %3370 = vmatprep.subr.mxu0 0.0
        %3371 = vmatpush1.msra.mxu0 0.0
        %3372 = vmatprep.subr.mxu0 0.0
        %3373 = vmatpush1.msra.mxu0 0.0
        %3374 = vmatprep.subr.mxu0 0.0
        %3375 = vmatpush1.msra.mxu0 0.0
        %3376 = vmatprep.subr.mxu0 0.0
        %3377 = vmatpush1.msra.mxu0 0.0
        %3378 = vmatprep.subr.mxu0 0.0
        %3379 = vmatpush1.msra.mxu0 0.0
        %3380 = vmatprep.subr.mxu0 0.0
        %3381 = vmatpush1.msra.mxu0 0.0
        %3382 = vmatprep.subr.mxu0 0.0
        %3383 = vmatpush1.msra.mxu0 0.0
        %3384 = vmatprep.subr.mxu0 0.0
        %3385 = vmatpush1.msra.mxu0 0.0
        %3386 = vmatprep.subr.mxu0 0.0
        %3387 = vmatpush1.msra.mxu0 0.0
        %3388 = vmatprep.subr.mxu0 0.0
        %3389 = vmatpush1.msra.mxu0 0.0
        %3390 = vmatprep.subr.mxu0 0.0
        %3391 = vmatpush1.msra.mxu0 0.0
        %3392 = vmatprep.mubr.f32.mxu0 0.0
        %3393 = vmatmul.mubr.f32.gmra.mrb[0].mxu0 %v3326
        %v3394 = vpop.f32.mrb[0].mxu0
        %v3395 = vadd.f32 0.0, %v3394
        %v3396 = vpop.f32.mrb[0].mxu0
        %3397 = vdwg.mxu0
        %v3399 = vsel %vm448, %v3318, 0
        %3401 = vmatprep.subr.mxu0 0.0
        %3402 = vmatpush1.msra.mxu0 %v3320
        %3403 = vmatprep.subr.mxu0 0.0
        %3404 = vmatpush1.msra.mxu0 0.0
        %3405 = vmatprep.subr.mxu0 0.0
        %3406 = vmatpush1.msra.mxu0 0.0
        %3407 = vmatprep.subr.mxu0 0.0
        %3408 = vmatpush1.msra.mxu0 0.0
        %3409 = vmatprep.subr.mxu0 0.0
        %3410 = vmatpush1.msra.mxu0 0.0
        %3411 = vmatprep.subr.mxu0 0.0
        %3412 = vmatpush1.msra.mxu0 0.0
        %3413 = vmatprep.subr.mxu0 0.0
        %3414 = vmatpush1.msra.mxu0 0.0
        %3415 = vmatprep.subr.mxu0 0.0
        %3416 = vmatpush1.msra.mxu0 0.0
        %3417 = vmatprep.subr.mxu0 0.0
        %3418 = vmatpush1.msra.mxu0 0.0
        %3419 = vmatprep.subr.mxu0 0.0
        %3420 = vmatpush1.msra.mxu0 0.0
        %3421 = vmatprep.subr.mxu0 0.0
        %3422 = vmatpush1.msra.mxu0 0.0
        %3423 = vmatprep.subr.mxu0 0.0
        %3424 = vmatpush1.msra.mxu0 0.0
        %3425 = vmatprep.subr.mxu0 0.0
        %3426 = vmatpush1.msra.mxu0 0.0
        %3427 = vmatprep.subr.mxu0 0.0
        %3428 = vmatpush1.msra.mxu0 0.0
        %3429 = vmatprep.subr.mxu0 0.0
        %3430 = vmatpush1.msra.mxu0 0.0
        %3431 = vmatprep.subr.mxu0 0.0
        %3432 = vmatpush1.msra.mxu0 0.0
        %3433 = vmatprep.subr.mxu0 0.0
        %3434 = vmatpush1.msra.mxu0 0.0
        %3435 = vmatprep.subr.mxu0 0.0
        %3436 = vmatpush1.msra.mxu0 0.0
        %3437 = vmatprep.subr.mxu0 0.0
        %3438 = vmatpush1.msra.mxu0 0.0
        %3439 = vmatprep.subr.mxu0 0.0
        %3440 = vmatpush1.msra.mxu0 0.0
        %3441 = vmatprep.subr.mxu0 0.0
        %3442 = vmatpush1.msra.mxu0 0.0
        %3443 = vmatprep.subr.mxu0 0.0
        %3444 = vmatpush1.msra.mxu0 0.0
        %3445 = vmatprep.subr.mxu0 0.0
        %3446 = vmatpush1.msra.mxu0 0.0
        %3447 = vmatprep.subr.mxu0 0.0
        %3448 = vmatpush1.msra.mxu0 0.0
        %3449 = vmatprep.subr.mxu0 0.0
        %3450 = vmatpush1.msra.mxu0 0.0
        %3451 = vmatprep.subr.mxu0 0.0
        %3452 = vmatpush1.msra.mxu0 0.0
        %3453 = vmatprep.subr.mxu0 0.0
        %3454 = vmatpush1.msra.mxu0 0.0
        %3455 = vmatprep.subr.mxu0 0.0
        %3456 = vmatpush1.msra.mxu0 0.0
        %3457 = vmatprep.subr.mxu0 0.0
        %3458 = vmatpush1.msra.mxu0 0.0
        %3459 = vmatprep.subr.mxu0 0.0
        %3460 = vmatpush1.msra.mxu0 0.0
        %3461 = vmatprep.subr.mxu0 0.0
        %3462 = vmatpush1.msra.mxu0 0.0
        %3463 = vmatprep.subr.mxu0 0.0
        %3464 = vmatpush1.msra.mxu0 0.0
        %3465 = vmatprep.mubr.f32.mxu0 0.0
        %3466 = vmatmul.mubr.f32.gmra.mrb[0].mxu0 %v3399
        %v3467 = vpop.f32.mrb[0].mxu0
        %v3468 = vadd.f32 %v3395, %v3467
        %v3469 = vpop.f32.mrb[0].mxu0
        %3470 = vdwg.mxu0
        %s3471 = scalar_lea.vmem %s2, 160
        %v3472 = vld [vmem:[%s3471] sm:$0xff]
        %3473 = vrot.lane.b32.xlu0 %v420, 9
        %v3474 = vpop.permute.xlu0 %3473
        %v3476 = vsel %vm448, %v3472, 0
        %3478 = vmatprep.subr.mxu0 0.0
        %3479 = vmatpush1.msra.mxu0 %v3474
        %3480 = vmatprep.subr.mxu0 0.0
        %3481 = vmatpush1.msra.mxu0 0.0
        %3482 = vmatprep.subr.mxu0 0.0
        %3483 = vmatpush1.msra.mxu0 0.0
        %3484 = vmatprep.subr.mxu0 0.0
        %3485 = vmatpush1.msra.mxu0 0.0
        %3486 = vmatprep.subr.mxu0 0.0
        %3487 = vmatpush1.msra.mxu0 0.0
        %3488 = vmatprep.subr.mxu0 0.0
        %3489 = vmatpush1.msra.mxu0 0.0
        %3490 = vmatprep.subr.mxu0 0.0
        %3491 = vmatpush1.msra.mxu0 0.0
        %3492 = vmatprep.subr.mxu0 0.0
        %3493 = vmatpush1.msra.mxu0 0.0
        %3494 = vmatprep.subr.mxu0 0.0
        %3495 = vmatpush1.msra.mxu0 0.0
        %3496 = vmatprep.subr.mxu0 0.0
        %3497 = vmatpush1.msra.mxu0 0.0
        %3498 = vmatprep.subr.mxu0 0.0
        %3499 = vmatpush1.msra.mxu0 0.0
        %3500 = vmatprep.subr.mxu0 0.0
        %3501 = vmatpush1.msra.mxu0 0.0
        %3502 = vmatprep.subr.mxu0 0.0
        %3503 = vmatpush1.msra.mxu0 0.0
        %3504 = vmatprep.subr.mxu0 0.0
        %3505 = vmatpush1.msra.mxu0 0.0
        %3506 = vmatprep.subr.mxu0 0.0
        %3507 = vmatpush1.msra.mxu0 0.0
        %3508 = vmatprep.subr.mxu0 0.0
        %3509 = vmatpush1.msra.mxu0 0.0
        %3510 = vmatprep.subr.mxu0 0.0
        %3511 = vmatpush1.msra.mxu0 0.0
        %3512 = vmatprep.subr.mxu0 0.0
        %3513 = vmatpush1.msra.mxu0 0.0
        %3514 = vmatprep.subr.mxu0 0.0
        %3515 = vmatpush1.msra.mxu0 0.0
        %3516 = vmatprep.subr.mxu0 0.0
        %3517 = vmatpush1.msra.mxu0 0.0
        %3518 = vmatprep.subr.mxu0 0.0
        %3519 = vmatpush1.msra.mxu0 0.0
        %3520 = vmatprep.subr.mxu0 0.0
        %3521 = vmatpush1.msra.mxu0 0.0
        %3522 = vmatprep.subr.mxu0 0.0
        %3523 = vmatpush1.msra.mxu0 0.0
        %3524 = vmatprep.subr.mxu0 0.0
        %3525 = vmatpush1.msra.mxu0 0.0
        %3526 = vmatprep.subr.mxu0 0.0
        %3527 = vmatpush1.msra.mxu0 0.0
        %3528 = vmatprep.subr.mxu0 0.0
        %3529 = vmatpush1.msra.mxu0 0.0
        %3530 = vmatprep.subr.mxu0 0.0
        %3531 = vmatpush1.msra.mxu0 0.0
        %3532 = vmatprep.subr.mxu0 0.0
        %3533 = vmatpush1.msra.mxu0 0.0
        %3534 = vmatprep.subr.mxu0 0.0
        %3535 = vmatpush1.msra.mxu0 0.0
        %3536 = vmatprep.subr.mxu0 0.0
        %3537 = vmatpush1.msra.mxu0 0.0
        %3538 = vmatprep.subr.mxu0 0.0
        %3539 = vmatpush1.msra.mxu0 0.0
        %3540 = vmatprep.subr.mxu0 0.0
        %3541 = vmatpush1.msra.mxu0 0.0
        %3542 = vmatprep.mubr.f32.mxu0 0.0
        %3543 = vmatmul.mubr.f32.gmra.mrb[0].mxu0 %v3476
        %v3544 = vpop.f32.mrb[0].mxu0
        %v3545 = vadd.f32 0.0, %v3544
        %v3546 = vpop.f32.mrb[0].mxu0
        %3547 = vdwg.mxu0
        %v3548 = vadd.f32 %v3468, %v3545
        %s3549 = scalar_lea.vmem %s2, 168
        %v3550 = vld [vmem:[%s3549] sm:$0xff]
        %3551 = vrot.lane.b32.xlu0 %v420, 1
        %v3552 = vpop.permute.xlu0 %3551
        %v3554 = vsel %vm448, %v3550, 0
        %3556 = vmatprep.subr.mxu0 0.0
        %3557 = vmatpush1.msra.mxu0 %v3552
        %3558 = vmatprep.subr.mxu0 0.0
        %3559 = vmatpush1.msra.mxu0 0.0
        %3560 = vmatprep.subr.mxu0 0.0
        %3561 = vmatpush1.msra.mxu0 0.0
        %3562 = vmatprep.subr.mxu0 0.0
        %3563 = vmatpush1.msra.mxu0 0.0
        %3564 = vmatprep.subr.mxu0 0.0
        %3565 = vmatpush1.msra.mxu0 0.0
        %3566 = vmatprep.subr.mxu0 0.0
        %3567 = vmatpush1.msra.mxu0 0.0
        %3568 = vmatprep.subr.mxu0 0.0
        %3569 = vmatpush1.msra.mxu0 0.0
        %3570 = vmatprep.subr.mxu0 0.0
        %3571 = vmatpush1.msra.mxu0 0.0
        %3572 = vmatprep.subr.mxu0 0.0
        %3573 = vmatpush1.msra.mxu0 0.0
        %3574 = vmatprep.subr.mxu0 0.0
        %3575 = vmatpush1.msra.mxu0 0.0
        %3576 = vmatprep.subr.mxu0 0.0
        %3577 = vmatpush1.msra.mxu0 0.0
        %3578 = vmatprep.subr.mxu0 0.0
        %3579 = vmatpush1.msra.mxu0 0.0
        %3580 = vmatprep.subr.mxu0 0.0
        %3581 = vmatpush1.msra.mxu0 0.0
        %3582 = vmatprep.subr.mxu0 0.0
        %3583 = vmatpush1.msra.mxu0 0.0
        %3584 = vmatprep.subr.mxu0 0.0
        %3585 = vmatpush1.msra.mxu0 0.0
        %3586 = vmatprep.subr.mxu0 0.0
        %3587 = vmatpush1.msra.mxu0 0.0
        %3588 = vmatprep.subr.mxu0 0.0
        %3589 = vmatpush1.msra.mxu0 0.0
        %3590 = vmatprep.subr.mxu0 0.0
        %3591 = vmatpush1.msra.mxu0 0.0
        %3592 = vmatprep.subr.mxu0 0.0
        %3593 = vmatpush1.msra.mxu0 0.0
        %3594 = vmatprep.subr.mxu0 0.0
        %3595 = vmatpush1.msra.mxu0 0.0
        %3596 = vmatprep.subr.mxu0 0.0
        %3597 = vmatpush1.msra.mxu0 0.0
        %3598 = vmatprep.subr.mxu0 0.0
        %3599 = vmatpush1.msra.mxu0 0.0
        %3600 = vmatprep.subr.mxu0 0.0
        %3601 = vmatpush1.msra.mxu0 0.0
        %3602 = vmatprep.subr.mxu0 0.0
        %3603 = vmatpush1.msra.mxu0 0.0
        %3604 = vmatprep.subr.mxu0 0.0
        %3605 = vmatpush1.msra.mxu0 0.0
        %3606 = vmatprep.subr.mxu0 0.0
        %3607 = vmatpush1.msra.mxu0 0.0
        %3608 = vmatprep.subr.mxu0 0.0
        %3609 = vmatpush1.msra.mxu0 0.0
        %3610 = vmatprep.subr.mxu0 0.0
        %3611 = vmatpush1.msra.mxu0 0.0
        %3612 = vmatprep.subr.mxu0 0.0
        %3613 = vmatpush1.msra.mxu0 0.0
        %3614 = vmatprep.subr.mxu0 0.0
        %3615 = vmatpush1.msra.mxu0 0.0
        %3616 = vmatprep.subr.mxu0 0.0
        %3617 = vmatpush1.msra.mxu0 0.0
        %3618 = vmatprep.subr.mxu0 0.0
        %3619 = vmatpush1.msra.mxu0 0.0
        %3620 = vmatprep.mubr.f32.mxu0 0.0
        %3621 = vmatmul.mubr.f32.gmra.mrb[0].mxu0 %v3554
        %v3622 = vpop.f32.mrb[0].mxu0
        %v3623 = vadd.f32 0.0, %v3622
        %v3624 = vpop.f32.mrb[0].mxu0
        %3625 = vdwg.mxu0
        %v3626 = vadd.f32 %v3548, %v3623
        %s3627 = scalar_lea.vmem %s2, 176
        %v3628 = vld [vmem:[%s3627] sm:$0xff]
        %v3630 = vsel %vm448, %v3628, 0
        %3632 = vmatprep.subr.mxu0 0.0
        %3633 = vmatpush1.msra.mxu0 %v420
        %3634 = vmatprep.subr.mxu0 0.0
        %3635 = vmatpush1.msra.mxu0 0.0
        %3636 = vmatprep.subr.mxu0 0.0
        %3637 = vmatpush1.msra.mxu0 0.0
        %3638 = vmatprep.subr.mxu0 0.0
        %3639 = vmatpush1.msra.mxu0 0.0
        %3640 = vmatprep.subr.mxu0 0.0
        %3641 = vmatpush1.msra.mxu0 0.0
        %3642 = vmatprep.subr.mxu0 0.0
        %3643 = vmatpush1.msra.mxu0 0.0
        %3644 = vmatprep.subr.mxu0 0.0
        %3645 = vmatpush1.msra.mxu0 0.0
        %3646 = vmatprep.subr.mxu0 0.0
        %3647 = vmatpush1.msra.mxu0 0.0
        %3648 = vmatprep.subr.mxu0 0.0
        %3649 = vmatpush1.msra.mxu0 0.0
        %3650 = vmatprep.subr.mxu0 0.0
        %3651 = vmatpush1.msra.mxu0 0.0
        %3652 = vmatprep.subr.mxu0 0.0
        %3653 = vmatpush1.msra.mxu0 0.0
        %3654 = vmatprep.subr.mxu0 0.0
        %3655 = vmatpush1.msra.mxu0 0.0
        %3656 = vmatprep.subr.mxu0 0.0
        %3657 = vmatpush1.msra.mxu0 0.0
        %3658 = vmatprep.subr.mxu0 0.0
        %3659 = vmatpush1.msra.mxu0 0.0
        %3660 = vmatprep.subr.mxu0 0.0
        %3661 = vmatpush1.msra.mxu0 0.0
        %3662 = vmatprep.subr.mxu0 0.0
        %3663 = vmatpush1.msra.mxu0 0.0
        %3664 = vmatprep.subr.mxu0 0.0
        %3665 = vmatpush1.msra.mxu0 0.0
        %3666 = vmatprep.subr.mxu0 0.0
        %3667 = vmatpush1.msra.mxu0 0.0
        %3668 = vmatprep.subr.mxu0 0.0
        %3669 = vmatpush1.msra.mxu0 0.0
        %3670 = vmatprep.subr.mxu0 0.0
        %3671 = vmatpush1.msra.mxu0 0.0
        %3672 = vmatprep.subr.mxu0 0.0
        %3673 = vmatpush1.msra.mxu0 0.0
        %3674 = vmatprep.subr.mxu0 0.0
        %3675 = vmatpush1.msra.mxu0 0.0
        %3676 = vmatprep.subr.mxu0 0.0
        %3677 = vmatpush1.msra.mxu0 0.0
        %3678 = vmatprep.subr.mxu0 0.0
        %3679 = vmatpush1.msra.mxu0 0.0
        %3680 = vmatprep.subr.mxu0 0.0
        %3681 = vmatpush1.msra.mxu0 0.0
        %3682 = vmatprep.subr.mxu0 0.0
        %3683 = vmatpush1.msra.mxu0 0.0
        %3684 = vmatprep.subr.mxu0 0.0
        %3685 = vmatpush1.msra.mxu0 0.0
        %3686 = vmatprep.subr.mxu0 0.0
        %3687 = vmatpush1.msra.mxu0 0.0
        %3688 = vmatprep.subr.mxu0 0.0
        %3689 = vmatpush1.msra.mxu0 0.0
        %3690 = vmatprep.subr.mxu0 0.0
        %3691 = vmatpush1.msra.mxu0 0.0
        %3692 = vmatprep.subr.mxu0 0.0
        %3693 = vmatpush1.msra.mxu0 0.0
        %3694 = vmatprep.subr.mxu0 0.0
        %3695 = vmatpush1.msra.mxu0 0.0
        %3696 = vmatprep.mubr.f32.mxu0 0.0
        %3697 = vmatmul.mubr.f32.gmra.mrb[0].mxu0 %v3630
        %v3698 = vpop.f32.mrb[0].mxu0
        %v3699 = vadd.f32 0.0, %v3698
        %v3700 = vpop.f32.mrb[0].mxu0
        %3701 = vdwg.mxu0
        %v3702 = vadd.f32 %v3626, %v3699
        %s3703 = scalar_lea.vmem %s2, 184
        %v3704 = vld [vmem:[%s3703] sm:$0xff]
        %3705 = vrot.lane.b32.xlu0 %v420, 127
        %v3706 = vpop.permute.xlu0 %3705
        %v3708 = vsel %vm448, %v3704, 0
        %3710 = vmatprep.subr.mxu0 0.0
        %3711 = vmatpush1.msra.mxu0 %v3706
        %3712 = vmatprep.subr.mxu0 0.0
        %3713 = vmatpush1.msra.mxu0 0.0
        %3714 = vmatprep.subr.mxu0 0.0
        %3715 = vmatpush1.msra.mxu0 0.0
        %3716 = vmatprep.subr.mxu0 0.0
        %3717 = vmatpush1.msra.mxu0 0.0
        %3718 = vmatprep.subr.mxu0 0.0
        %3719 = vmatpush1.msra.mxu0 0.0
        %3720 = vmatprep.subr.mxu0 0.0
        %3721 = vmatpush1.msra.mxu0 0.0
        %3722 = vmatprep.subr.mxu0 0.0
        %3723 = vmatpush1.msra.mxu0 0.0
        %3724 = vmatprep.subr.mxu0 0.0
        %3725 = vmatpush1.msra.mxu0 0.0
        %3726 = vmatprep.subr.mxu0 0.0
        %3727 = vmatpush1.msra.mxu0 0.0
        %3728 = vmatprep.subr.mxu0 0.0
        %3729 = vmatpush1.msra.mxu0 0.0
        %3730 = vmatprep.subr.mxu0 0.0
        %3731 = vmatpush1.msra.mxu0 0.0
        %3732 = vmatprep.subr.mxu0 0.0
        %3733 = vmatpush1.msra.mxu0 0.0
        %3734 = vmatprep.subr.mxu0 0.0
        %3735 = vmatpush1.msra.mxu0 0.0
        %3736 = vmatprep.subr.mxu0 0.0
        %3737 = vmatpush1.msra.mxu0 0.0
        %3738 = vmatprep.subr.mxu0 0.0
        %3739 = vmatpush1.msra.mxu0 0.0
        %3740 = vmatprep.subr.mxu0 0.0
        %3741 = vmatpush1.msra.mxu0 0.0
        %3742 = vmatprep.subr.mxu0 0.0
        %3743 = vmatpush1.msra.mxu0 0.0
        %3744 = vmatprep.subr.mxu0 0.0
        %3745 = vmatpush1.msra.mxu0 0.0
        %3746 = vmatprep.subr.mxu0 0.0
        %3747 = vmatpush1.msra.mxu0 0.0
        %3748 = vmatprep.subr.mxu0 0.0
        %3749 = vmatpush1.msra.mxu0 0.0
        %3750 = vmatprep.subr.mxu0 0.0
        %3751 = vmatpush1.msra.mxu0 0.0
        %3752 = vmatprep.subr.mxu0 0.0
        %3753 = vmatpush1.msra.mxu0 0.0
        %3754 = vmatprep.subr.mxu0 0.0
        %3755 = vmatpush1.msra.mxu0 0.0
        %3756 = vmatprep.subr.mxu0 0.0
        %3757 = vmatpush1.msra.mxu0 0.0
        %3758 = vmatprep.subr.mxu0 0.0
        %3759 = vmatpush1.msra.mxu0 0.0
        %3760 = vmatprep.subr.mxu0 0.0
        %3761 = vmatpush1.msra.mxu0 0.0
        %3762 = vmatprep.subr.mxu0 0.0
        %3763 = vmatpush1.msra.mxu0 0.0
        %3764 = vmatprep.subr.mxu0 0.0
        %3765 = vmatpush1.msra.mxu0 0.0
        %3766 = vmatprep.subr.mxu0 0.0
        %3767 = vmatpush1.msra.mxu0 0.0
        %3768 = vmatprep.subr.mxu0 0.0
        %3769 = vmatpush1.msra.mxu0 0.0
        %3770 = vmatprep.subr.mxu0 0.0
        %3771 = vmatpush1.msra.mxu0 0.0
        %3772 = vmatprep.subr.mxu0 0.0
        %3773 = vmatpush1.msra.mxu0 0.0
        %3774 = vmatprep.mubr.f32.mxu0 0.0
        %3775 = vmatmul.mubr.f32.gmra.mrb[0].mxu0 %v3708
        %v3776 = vpop.f32.mrb[0].mxu0
        %v3777 = vadd.f32 0.0, %v3776
        %v3778 = vpop.f32.mrb[0].mxu0
        %3779 = vdwg.mxu0
        %v3780 = vadd.f32 %v3702, %v3777
        %s3781 = scalar_lea.vmem %s2, 192
        %v3782 = vld [vmem:[%s3781] sm:$0xff]
        %3783 = vrot.lane.b32.xlu0 %v420, 119
        %v3784 = vpop.permute.xlu0 %3783
        %v3786 = vsel %vm448, %v3782, 0
        %3788 = vmatprep.subr.mxu0 0.0
        %3789 = vmatpush1.msra.mxu0 %v3784
        %3790 = vmatprep.subr.mxu0 0.0
        %3791 = vmatpush1.msra.mxu0 0.0
        %3792 = vmatprep.subr.mxu0 0.0
        %3793 = vmatpush1.msra.mxu0 0.0
        %3794 = vmatprep.subr.mxu0 0.0
        %3795 = vmatpush1.msra.mxu0 0.0
        %3796 = vmatprep.subr.mxu0 0.0
        %3797 = vmatpush1.msra.mxu0 0.0
        %3798 = vmatprep.subr.mxu0 0.0
        %3799 = vmatpush1.msra.mxu0 0.0
        %3800 = vmatprep.subr.mxu0 0.0
        %3801 = vmatpush1.msra.mxu0 0.0
        %3802 = vmatprep.subr.mxu0 0.0
        %3803 = vmatpush1.msra.mxu0 0.0
        %3804 = vmatprep.subr.mxu0 0.0
        %3805 = vmatpush1.msra.mxu0 0.0
        %3806 = vmatprep.subr.mxu0 0.0
        %3807 = vmatpush1.msra.mxu0 0.0
        %3808 = vmatprep.subr.mxu0 0.0
        %3809 = vmatpush1.msra.mxu0 0.0
        %3810 = vmatprep.subr.mxu0 0.0
        %3811 = vmatpush1.msra.mxu0 0.0
        %3812 = vmatprep.subr.mxu0 0.0
        %3813 = vmatpush1.msra.mxu0 0.0
        %3814 = vmatprep.subr.mxu0 0.0
        %3815 = vmatpush1.msra.mxu0 0.0
        %3816 = vmatprep.subr.mxu0 0.0
        %3817 = vmatpush1.msra.mxu0 0.0
        %3818 = vmatprep.subr.mxu0 0.0
        %3819 = vmatpush1.msra.mxu0 0.0
        %3820 = vmatprep.subr.mxu0 0.0
        %3821 = vmatpush1.msra.mxu0 0.0
        %3822 = vmatprep.subr.mxu0 0.0
        %3823 = vmatpush1.msra.mxu0 0.0
        %3824 = vmatprep.subr.mxu0 0.0
        %3825 = vmatpush1.msra.mxu0 0.0
        %3826 = vmatprep.subr.mxu0 0.0
        %3827 = vmatpush1.msra.mxu0 0.0
        %3828 = vmatprep.subr.mxu0 0.0
        %3829 = vmatpush1.msra.mxu0 0.0
        %3830 = vmatprep.subr.mxu0 0.0
        %3831 = vmatpush1.msra.mxu0 0.0
        %3832 = vmatprep.subr.mxu0 0.0
        %3833 = vmatpush1.msra.mxu0 0.0
        %3834 = vmatprep.subr.mxu0 0.0
        %3835 = vmatpush1.msra.mxu0 0.0
        %3836 = vmatprep.subr.mxu0 0.0
        %3837 = vmatpush1.msra.mxu0 0.0
        %3838 = vmatprep.subr.mxu0 0.0
        %3839 = vmatpush1.msra.mxu0 0.0
        %3840 = vmatprep.subr.mxu0 0.0
        %3841 = vmatpush1.msra.mxu0 0.0
        %3842 = vmatprep.subr.mxu0 0.0
        %3843 = vmatpush1.msra.mxu0 0.0
        %3844 = vmatprep.subr.mxu0 0.0
        %3845 = vmatpush1.msra.mxu0 0.0
        %3846 = vmatprep.subr.mxu0 0.0
        %3847 = vmatpush1.msra.mxu0 0.0
        %3848 = vmatprep.subr.mxu0 0.0
        %3849 = vmatpush1.msra.mxu0 0.0
        %3850 = vmatprep.subr.mxu0 0.0
        %3851 = vmatpush1.msra.mxu0 0.0
        %3852 = vmatprep.mubr.f32.mxu0 0.0
        %3853 = vmatmul.mubr.f32.gmra.mrb[0].mxu0 %v3786
        %v3854 = vpop.f32.mrb[0].mxu0
        %v3855 = vadd.f32 0.0, %v3854
        %v3856 = vpop.f32.mrb[0].mxu0
        %3857 = vdwg.mxu0
        %v3858 = vadd.f32 %v3780, %v3855
        %s3859 = scalar_lea.vmem %s2, 200
        %v3860 = vld [vmem:[%s3859] sm:$0xff]
        %3861 = vrot.lane.b32.xlu0 %v420, 118
        %v3862 = vpop.permute.xlu0 %3861
        %v3864 = vsel %vm448, %v3860, 0
        %3866 = vmatprep.subr.mxu0 0.0
        %3867 = vmatpush1.msra.mxu0 %v3862
        %3868 = vmatprep.subr.mxu0 0.0
        %3869 = vmatpush1.msra.mxu0 0.0
        %3870 = vmatprep.subr.mxu0 0.0
        %3871 = vmatpush1.msra.mxu0 0.0
        %3872 = vmatprep.subr.mxu0 0.0
        %3873 = vmatpush1.msra.mxu0 0.0
        %3874 = vmatprep.subr.mxu0 0.0
        %3875 = vmatpush1.msra.mxu0 0.0
        %3876 = vmatprep.subr.mxu0 0.0
        %3877 = vmatpush1.msra.mxu0 0.0
        %3878 = vmatprep.subr.mxu0 0.0
        %3879 = vmatpush1.msra.mxu0 0.0
        %3880 = vmatprep.subr.mxu0 0.0
        %3881 = vmatpush1.msra.mxu0 0.0
        %3882 = vmatprep.subr.mxu0 0.0
        %3883 = vmatpush1.msra.mxu0 0.0
        %3884 = vmatprep.subr.mxu0 0.0
        %3885 = vmatpush1.msra.mxu0 0.0
        %3886 = vmatprep.subr.mxu0 0.0
        %3887 = vmatpush1.msra.mxu0 0.0
        %3888 = vmatprep.subr.mxu0 0.0
        %3889 = vmatpush1.msra.mxu0 0.0
        %3890 = vmatprep.subr.mxu0 0.0
        %3891 = vmatpush1.msra.mxu0 0.0
        %3892 = vmatprep.subr.mxu0 0.0
        %3893 = vmatpush1.msra.mxu0 0.0
        %3894 = vmatprep.subr.mxu0 0.0
        %3895 = vmatpush1.msra.mxu0 0.0
        %3896 = vmatprep.subr.mxu0 0.0
        %3897 = vmatpush1.msra.mxu0 0.0
        %3898 = vmatprep.subr.mxu0 0.0
        %3899 = vmatpush1.msra.mxu0 0.0
        %3900 = vmatprep.subr.mxu0 0.0
        %3901 = vmatpush1.msra.mxu0 0.0
        %3902 = vmatprep.subr.mxu0 0.0
        %3903 = vmatpush1.msra.mxu0 0.0
        %3904 = vmatprep.subr.mxu0 0.0
        %3905 = vmatpush1.msra.mxu0 0.0
        %3906 = vmatprep.subr.mxu0 0.0
        %3907 = vmatpush1.msra.mxu0 0.0
        %3908 = vmatprep.subr.mxu0 0.0
        %3909 = vmatpush1.msra.mxu0 0.0
        %3910 = vmatprep.subr.mxu0 0.0
        %3911 = vmatpush1.msra.mxu0 0.0
        %3912 = vmatprep.subr.mxu0 0.0
        %3913 = vmatpush1.msra.mxu0 0.0
        %3914 = vmatprep.subr.mxu0 0.0
        %3915 = vmatpush1.msra.mxu0 0.0
        %3916 = vmatprep.subr.mxu0 0.0
        %3917 = vmatpush1.msra.mxu0 0.0
        %3918 = vmatprep.subr.mxu0 0.0
        %3919 = vmatpush1.msra.mxu0 0.0
        %3920 = vmatprep.subr.mxu0 0.0
        %3921 = vmatpush1.msra.mxu0 0.0
        %3922 = vmatprep.subr.mxu0 0.0
        %3923 = vmatpush1.msra.mxu0 0.0
        %3924 = vmatprep.subr.mxu0 0.0
        %3925 = vmatpush1.msra.mxu0 0.0
        %3926 = vmatprep.subr.mxu0 0.0
        %3927 = vmatpush1.msra.mxu0 0.0
        %3928 = vmatprep.subr.mxu0 0.0
        %3929 = vmatpush1.msra.mxu0 0.0
        %3930 = vmatprep.mubr.f32.mxu0 0.0
        %3931 = vmatmul.mubr.f32.gmra.mrb[0].mxu0 %v3864
        %v3932 = vpop.f32.mrb[0].mxu0
        %v3933 = vadd.f32 0.0, %v3932
        %v3934 = vpop.f32.mrb[0].mxu0
        %3935 = vdwg.mxu0
        %v3936 = vadd.f32 %v3858, %v3933
        %s3937 = scalar_lea.vmem %s2, 208
        %v3938 = vld [vmem:[%s3937] sm:$0xff]
        %3939 = vrot.lane.b32.xlu0 %v420, 117
        %v3940 = vpop.permute.xlu0 %3939
        %v3942 = vsel %vm448, %v3938, 0
        %3944 = vmatprep.subr.mxu0 0.0
        %3945 = vmatpush1.msra.mxu0 %v3940
        %3946 = vmatprep.subr.mxu0 0.0
        %3947 = vmatpush1.msra.mxu0 0.0
        %3948 = vmatprep.subr.mxu0 0.0
        %3949 = vmatpush1.msra.mxu0 0.0
        %3950 = vmatprep.subr.mxu0 0.0
        %3951 = vmatpush1.msra.mxu0 0.0
        %3952 = vmatprep.subr.mxu0 0.0
        %3953 = vmatpush1.msra.mxu0 0.0
        %3954 = vmatprep.subr.mxu0 0.0
        %3955 = vmatpush1.msra.mxu0 0.0
        %3956 = vmatprep.subr.mxu0 0.0
        %3957 = vmatpush1.msra.mxu0 0.0
        %3958 = vmatprep.subr.mxu0 0.0
        %3959 = vmatpush1.msra.mxu0 0.0
        %3960 = vmatprep.subr.mxu0 0.0
        %3961 = vmatpush1.msra.mxu0 0.0
        %3962 = vmatprep.subr.mxu0 0.0
        %3963 = vmatpush1.msra.mxu0 0.0
        %3964 = vmatprep.subr.mxu0 0.0
        %3965 = vmatpush1.msra.mxu0 0.0
        %3966 = vmatprep.subr.mxu0 0.0
        %3967 = vmatpush1.msra.mxu0 0.0
        %3968 = vmatprep.subr.mxu0 0.0
        %3969 = vmatpush1.msra.mxu0 0.0
        %3970 = vmatprep.subr.mxu0 0.0
        %3971 = vmatpush1.msra.mxu0 0.0
        %3972 = vmatprep.subr.mxu0 0.0
        %3973 = vmatpush1.msra.mxu0 0.0
        %3974 = vmatprep.subr.mxu0 0.0
        %3975 = vmatpush1.msra.mxu0 0.0
        %3976 = vmatprep.subr.mxu0 0.0
        %3977 = vmatpush1.msra.mxu0 0.0
        %3978 = vmatprep.subr.mxu0 0.0
        %3979 = vmatpush1.msra.mxu0 0.0
        %3980 = vmatprep.subr.mxu0 0.0
        %3981 = vmatpush1.msra.mxu0 0.0
        %3982 = vmatprep.subr.mxu0 0.0
        %3983 = vmatpush1.msra.mxu0 0.0
        %3984 = vmatprep.subr.mxu0 0.0
        %3985 = vmatpush1.msra.mxu0 0.0
        %3986 = vmatprep.subr.mxu0 0.0
        %3987 = vmatpush1.msra.mxu0 0.0
        %3988 = vmatprep.subr.mxu0 0.0
        %3989 = vmatpush1.msra.mxu0 0.0
        %3990 = vmatprep.subr.mxu0 0.0
        %3991 = vmatpush1.msra.mxu0 0.0
        %3992 = vmatprep.subr.mxu0 0.0
        %3993 = vmatpush1.msra.mxu0 0.0
        %3994 = vmatprep.subr.mxu0 0.0
        %3995 = vmatpush1.msra.mxu0 0.0
        %3996 = vmatprep.subr.mxu0 0.0
        %3997 = vmatpush1.msra.mxu0 0.0
        %3998 = vmatprep.subr.mxu0 0.0
        %3999 = vmatpush1.msra.mxu0 0.0
        %4000 = vmatprep.subr.mxu0 0.0
        %4001 = vmatpush1.msra.mxu0 0.0
        %4002 = vmatprep.subr.mxu0 0.0
        %4003 = vmatpush1.msra.mxu0 0.0
        %4004 = vmatprep.subr.mxu0 0.0
        %4005 = vmatpush1.msra.mxu0 0.0
        %4006 = vmatprep.subr.mxu0 0.0
        %4007 = vmatpush1.msra.mxu0 0.0
        %4008 = vmatprep.mubr.f32.mxu0 0.0
        %4009 = vmatmul.mubr.f32.gmra.mrb[0].mxu0 %v3942
        %v4010 = vpop.f32.mrb[0].mxu0
        %v4011 = vadd.f32 0.0, %v4010
        %v4012 = vpop.f32.mrb[0].mxu0
        %4013 = vdwg.mxu0
        %v4014 = vadd.f32 %v3936, %v4011
        %s4015 = scalar_lea.vmem %s4, 32
        %v4016 = vld [vmem:[%s4015] sm:$0xff]
        %4018 = vset.pattern.permute.xlu0 0
        %4019 = vperm.xlu0 %4018, %v4016
        %v4020 = vpop.permute.xlu0 %4019
        %v4022 = vmul.f32 %v4014, %v4020
        %s4023 = scalar_lea.vmem %s4, 40
        %v4024 = vld [vmem:[%s4023] sm:$0xff]
        %4026 = vset.pattern.permute.xlu0 0
        %4027 = vperm.xlu0 %4026, %v4024
        %v4028 = vpop.permute.xlu0 %4027
        %v4030 = vadd.f32 %v4022, %v4028
        %v4031 = vmax.f32 %v4030, 0.0
        %v4033 = vlaneseq
        %v4034 = vshrl.u32 %v4033, 7
        %v4035 = vsub.s32 0, %v4034
        %v4036 = vrot.slane %v422, %v4035
        %v4038 = vmul.f32 %v4031, %v4036
        %s4039 = scalar_lea.vmem %s2, 216
        %v4040 = vld [vmem:[%s4039] sm:$0xff]
        %4041 = vrot.lane.b32.xlu0 %v4038, 11
        %v4042 = vpop.permute.xlu0 %4041
        %s4043 = scalar_lea.vmem %s2, 224
        %v4044 = vld [vmem:[%s4043] sm:$0xff]
        %4045 = vrot.lane.b32.xlu0 %v4038, 10
        %v4046 = vpop.permute.xlu0 %4045
        %v4048 = vsel %vm448, %v4044, 0
        %4050 = vmatprep.subr.mxu0 0.0
        %4051 = vmatpush1.msra.mxu0 %v4046
        %4052 = vmatprep.subr.mxu0 0.0
        %4053 = vmatpush1.msra.mxu0 0.0
        %4054 = vmatprep.subr.mxu0 0.0
        %4055 = vmatpush1.msra.mxu0 0.0
        %4056 = vmatprep.subr.mxu0 0.0
        %4057 = vmatpush1.msra.mxu0 0.0
        %4058 = vmatprep.subr.mxu0 0.0
        %4059 = vmatpush1.msra.mxu0 0.0
        %4060 = vmatprep.subr.mxu0 0.0
        %4061 = vmatpush1.msra.mxu0 0.0
        %4062 = vmatprep.subr.mxu0 0.0
        %4063 = vmatpush1.msra.mxu0 0.0
        %4064 = vmatprep.subr.mxu0 0.0
        %4065 = vmatpush1.msra.mxu0 0.0
        %4066 = vmatprep.subr.mxu0 0.0
        %4067 = vmatpush1.msra.mxu0 0.0
        %4068 = vmatprep.subr.mxu0 0.0
        %4069 = vmatpush1.msra.mxu0 0.0
        %4070 = vmatprep.subr.mxu0 0.0
        %4071 = vmatpush1.msra.mxu0 0.0
        %4072 = vmatprep.subr.mxu0 0.0
        %4073 = vmatpush1.msra.mxu0 0.0
        %4074 = vmatprep.subr.mxu0 0.0
        %4075 = vmatpush1.msra.mxu0 0.0
        %4076 = vmatprep.subr.mxu0 0.0
        %4077 = vmatpush1.msra.mxu0 0.0
        %4078 = vmatprep.subr.mxu0 0.0
        %4079 = vmatpush1.msra.mxu0 0.0
        %4080 = vmatprep.subr.mxu0 0.0
        %4081 = vmatpush1.msra.mxu0 0.0
        %4082 = vmatprep.subr.mxu0 0.0
        %4083 = vmatpush1.msra.mxu0 0.0
        %4084 = vmatprep.subr.mxu0 0.0
        %4085 = vmatpush1.msra.mxu0 0.0
        %4086 = vmatprep.subr.mxu0 0.0
        %4087 = vmatpush1.msra.mxu0 0.0
        %4088 = vmatprep.subr.mxu0 0.0
        %4089 = vmatpush1.msra.mxu0 0.0
        %4090 = vmatprep.subr.mxu0 0.0
        %4091 = vmatpush1.msra.mxu0 0.0
        %4092 = vmatprep.subr.mxu0 0.0
        %4093 = vmatpush1.msra.mxu0 0.0
        %4094 = vmatprep.subr.mxu0 0.0
        %4095 = vmatpush1.msra.mxu0 0.0
        %4096 = vmatprep.subr.mxu0 0.0
        %4097 = vmatpush1.msra.mxu0 0.0
        %4098 = vmatprep.subr.mxu0 0.0
        %4099 = vmatpush1.msra.mxu0 0.0
        %4100 = vmatprep.subr.mxu0 0.0
        %4101 = vmatpush1.msra.mxu0 0.0
        %4102 = vmatprep.subr.mxu0 0.0
        %4103 = vmatpush1.msra.mxu0 0.0
        %4104 = vmatprep.subr.mxu0 0.0
        %4105 = vmatpush1.msra.mxu0 0.0
        %4106 = vmatprep.subr.mxu0 0.0
        %4107 = vmatpush1.msra.mxu0 0.0
        %4108 = vmatprep.subr.mxu0 0.0
        %4109 = vmatpush1.msra.mxu0 0.0
        %4110 = vmatprep.subr.mxu0 0.0
        %4111 = vmatpush1.msra.mxu0 0.0
        %4112 = vmatprep.subr.mxu0 0.0
        %4113 = vmatpush1.msra.mxu0 0.0
        %4114 = vmatprep.mubr.f32.mxu0 0.0
        %4115 = vmatmul.mubr.f32.gmra.mrb[0].mxu0 %v4048
        %v4116 = vpop.f32.mrb[0].mxu0
        %v4117 = vadd.f32 0.0, %v4116
        %v4118 = vpop.f32.mrb[0].mxu0
        %4119 = vdwg.mxu0
        %v4121 = vsel %vm448, %v4040, 0
        %4123 = vmatprep.subr.mxu0 0.0
        %4124 = vmatpush1.msra.mxu0 %v4042
        %4125 = vmatprep.subr.mxu0 0.0
        %4126 = vmatpush1.msra.mxu0 0.0
        %4127 = vmatprep.subr.mxu0 0.0
        %4128 = vmatpush1.msra.mxu0 0.0
        %4129 = vmatprep.subr.mxu0 0.0
        %4130 = vmatpush1.msra.mxu0 0.0
        %4131 = vmatprep.subr.mxu0 0.0
        %4132 = vmatpush1.msra.mxu0 0.0
        %4133 = vmatprep.subr.mxu0 0.0
        %4134 = vmatpush1.msra.mxu0 0.0
        %4135 = vmatprep.subr.mxu0 0.0
        %4136 = vmatpush1.msra.mxu0 0.0
        %4137 = vmatprep.subr.mxu0 0.0
        %4138 = vmatpush1.msra.mxu0 0.0
        %4139 = vmatprep.subr.mxu0 0.0
        %4140 = vmatpush1.msra.mxu0 0.0
        %4141 = vmatprep.subr.mxu0 0.0
        %4142 = vmatpush1.msra.mxu0 0.0
        %4143 = vmatprep.subr.mxu0 0.0
        %4144 = vmatpush1.msra.mxu0 0.0
        %4145 = vmatprep.subr.mxu0 0.0
        %4146 = vmatpush1.msra.mxu0 0.0
        %4147 = vmatprep.subr.mxu0 0.0
        %4148 = vmatpush1.msra.mxu0 0.0
        %4149 = vmatprep.subr.mxu0 0.0
        %4150 = vmatpush1.msra.mxu0 0.0
        %4151 = vmatprep.subr.mxu0 0.0
        %4152 = vmatpush1.msra.mxu0 0.0
        %4153 = vmatprep.subr.mxu0 0.0
        %4154 = vmatpush1.msra.mxu0 0.0
        %4155 = vmatprep.subr.mxu0 0.0
        %4156 = vmatpush1.msra.mxu0 0.0
        %4157 = vmatprep.subr.mxu0 0.0
        %4158 = vmatpush1.msra.mxu0 0.0
        %4159 = vmatprep.subr.mxu0 0.0
        %4160 = vmatpush1.msra.mxu0 0.0
        %4161 = vmatprep.subr.mxu0 0.0
        %4162 = vmatpush1.msra.mxu0 0.0
        %4163 = vmatprep.subr.mxu0 0.0
        %4164 = vmatpush1.msra.mxu0 0.0
        %4165 = vmatprep.subr.mxu0 0.0
        %4166 = vmatpush1.msra.mxu0 0.0
        %4167 = vmatprep.subr.mxu0 0.0
        %4168 = vmatpush1.msra.mxu0 0.0
        %4169 = vmatprep.subr.mxu0 0.0
        %4170 = vmatpush1.msra.mxu0 0.0
        %4171 = vmatprep.subr.mxu0 0.0
        %4172 = vmatpush1.msra.mxu0 0.0
        %4173 = vmatprep.subr.mxu0 0.0
        %4174 = vmatpush1.msra.mxu0 0.0
        %4175 = vmatprep.subr.mxu0 0.0
        %4176 = vmatpush1.msra.mxu0 0.0
        %4177 = vmatprep.subr.mxu0 0.0
        %4178 = vmatpush1.msra.mxu0 0.0
        %4179 = vmatprep.subr.mxu0 0.0
        %4180 = vmatpush1.msra.mxu0 0.0
        %4181 = vmatprep.subr.mxu0 0.0
        %4182 = vmatpush1.msra.mxu0 0.0
        %4183 = vmatprep.subr.mxu0 0.0
        %4184 = vmatpush1.msra.mxu0 0.0
        %4185 = vmatprep.subr.mxu0 0.0
        %4186 = vmatpush1.msra.mxu0 0.0
        %4187 = vmatprep.mubr.f32.mxu0 0.0
        %4188 = vmatmul.mubr.f32.gmra.mrb[0].mxu0 %v4121
        %v4189 = vpop.f32.mrb[0].mxu0
        %v4190 = vadd.f32 %v4117, %v4189
        %v4191 = vpop.f32.mrb[0].mxu0
        %4192 = vdwg.mxu0
        %s4193 = scalar_lea.vmem %s2, 232
        %v4194 = vld [vmem:[%s4193] sm:$0xff]
        %4195 = vrot.lane.b32.xlu0 %v4038, 9
        %v4196 = vpop.permute.xlu0 %4195
        %v4198 = vsel %vm448, %v4194, 0
        %4200 = vmatprep.subr.mxu0 0.0
        %4201 = vmatpush1.msra.mxu0 %v4196
        %4202 = vmatprep.subr.mxu0 0.0
        %4203 = vmatpush1.msra.mxu0 0.0
        %4204 = vmatprep.subr.mxu0 0.0
        %4205 = vmatpush1.msra.mxu0 0.0
        %4206 = vmatprep.subr.mxu0 0.0
        %4207 = vmatpush1.msra.mxu0 0.0
        %4208 = vmatprep.subr.mxu0 0.0
        %4209 = vmatpush1.msra.mxu0 0.0
        %4210 = vmatprep.subr.mxu0 0.0
        %4211 = vmatpush1.msra.mxu0 0.0
        %4212 = vmatprep.subr.mxu0 0.0
        %4213 = vmatpush1.msra.mxu0 0.0
        %4214 = vmatprep.subr.mxu0 0.0
        %4215 = vmatpush1.msra.mxu0 0.0
        %4216 = vmatprep.subr.mxu0 0.0
        %4217 = vmatpush1.msra.mxu0 0.0
        %4218 = vmatprep.subr.mxu0 0.0
        %4219 = vmatpush1.msra.mxu0 0.0
        %4220 = vmatprep.subr.mxu0 0.0
        %4221 = vmatpush1.msra.mxu0 0.0
        %4222 = vmatprep.subr.mxu0 0.0
        %4223 = vmatpush1.msra.mxu0 0.0
        %4224 = vmatprep.subr.mxu0 0.0
        %4225 = vmatpush1.msra.mxu0 0.0
        %4226 = vmatprep.subr.mxu0 0.0
        %4227 = vmatpush1.msra.mxu0 0.0
        %4228 = vmatprep.subr.mxu0 0.0
        %4229 = vmatpush1.msra.mxu0 0.0
        %4230 = vmatprep.subr.mxu0 0.0
        %4231 = vmatpush1.msra.mxu0 0.0
        %4232 = vmatprep.subr.mxu0 0.0
        %4233 = vmatpush1.msra.mxu0 0.0
        %4234 = vmatprep.subr.mxu0 0.0
        %4235 = vmatpush1.msra.mxu0 0.0
        %4236 = vmatprep.subr.mxu0 0.0
        %4237 = vmatpush1.msra.mxu0 0.0
        %4238 = vmatprep.subr.mxu0 0.0
        %4239 = vmatpush1.msra.mxu0 0.0
        %4240 = vmatprep.subr.mxu0 0.0
        %4241 = vmatpush1.msra.mxu0 0.0
        %4242 = vmatprep.subr.mxu0 0.0
        %4243 = vmatpush1.msra.mxu0 0.0
        %4244 = vmatprep.subr.mxu0 0.0
        %4245 = vmatpush1.msra.mxu0 0.0
        %4246 = vmatprep.subr.mxu0 0.0
        %4247 = vmatpush1.msra.mxu0 0.0
        %4248 = vmatprep.subr.mxu0 0.0
        %4249 = vmatpush1.msra.mxu0 0.0
        %4250 = vmatprep.subr.mxu0 0.0
        %4251 = vmatpush1.msra.mxu0 0.0
        %4252 = vmatprep.subr.mxu0 0.0
        %4253 = vmatpush1.msra.mxu0 0.0
        %4254 = vmatprep.subr.mxu0 0.0
        %4255 = vmatpush1.msra.mxu0 0.0
        %4256 = vmatprep.subr.mxu0 0.0
        %4257 = vmatpush1.msra.mxu0 0.0
        %4258 = vmatprep.subr.mxu0 0.0
        %4259 = vmatpush1.msra.mxu0 0.0
        %4260 = vmatprep.subr.mxu0 0.0
        %4261 = vmatpush1.msra.mxu0 0.0
        %4262 = vmatprep.subr.mxu0 0.0
        %4263 = vmatpush1.msra.mxu0 0.0
        %4264 = vmatprep.mubr.f32.mxu0 0.0
        %4265 = vmatmul.mubr.f32.gmra.mrb[0].mxu0 %v4198
        %v4266 = vpop.f32.mrb[0].mxu0
        %v4267 = vadd.f32 0.0, %v4266
        %v4268 = vpop.f32.mrb[0].mxu0
        %4269 = vdwg.mxu0
        %v4270 = vadd.f32 %v4190, %v4267
        %s4271 = scalar_lea.vmem %s2, 240
        %v4272 = vld [vmem:[%s4271] sm:$0xff]
        %4273 = vrot.lane.b32.xlu0 %v4038, 1
        %v4274 = vpop.permute.xlu0 %4273
        %v4276 = vsel %vm448, %v4272, 0
        %4278 = vmatprep.subr.mxu0 0.0
        %4279 = vmatpush1.msra.mxu0 %v4274
        %4280 = vmatprep.subr.mxu0 0.0
        %4281 = vmatpush1.msra.mxu0 0.0
        %4282 = vmatprep.subr.mxu0 0.0
        %4283 = vmatpush1.msra.mxu0 0.0
        %4284 = vmatprep.subr.mxu0 0.0
        %4285 = vmatpush1.msra.mxu0 0.0
        %4286 = vmatprep.subr.mxu0 0.0
        %4287 = vmatpush1.msra.mxu0 0.0
        %4288 = vmatprep.subr.mxu0 0.0
        %4289 = vmatpush1.msra.mxu0 0.0
        %4290 = vmatprep.subr.mxu0 0.0
        %4291 = vmatpush1.msra.mxu0 0.0
        %4292 = vmatprep.subr.mxu0 0.0
        %4293 = vmatpush1.msra.mxu0 0.0
        %4294 = vmatprep.subr.mxu0 0.0
        %4295 = vmatpush1.msra.mxu0 0.0
        %4296 = vmatprep.subr.mxu0 0.0
        %4297 = vmatpush1.msra.mxu0 0.0
        %4298 = vmatprep.subr.mxu0 0.0
        %4299 = vmatpush1.msra.mxu0 0.0
        %4300 = vmatprep.subr.mxu0 0.0
        %4301 = vmatpush1.msra.mxu0 0.0
        %4302 = vmatprep.subr.mxu0 0.0
        %4303 = vmatpush1.msra.mxu0 0.0
        %4304 = vmatprep.subr.mxu0 0.0
        %4305 = vmatpush1.msra.mxu0 0.0
        %4306 = vmatprep.subr.mxu0 0.0
        %4307 = vmatpush1.msra.mxu0 0.0
        %4308 = vmatprep.subr.mxu0 0.0
        %4309 = vmatpush1.msra.mxu0 0.0
        %4310 = vmatprep.subr.mxu0 0.0
        %4311 = vmatpush1.msra.mxu0 0.0
        %4312 = vmatprep.subr.mxu0 0.0
        %4313 = vmatpush1.msra.mxu0 0.0
        %4314 = vmatprep.subr.mxu0 0.0
        %4315 = vmatpush1.msra.mxu0 0.0
        %4316 = vmatprep.subr.mxu0 0.0
        %4317 = vmatpush1.msra.mxu0 0.0
        %4318 = vmatprep.subr.mxu0 0.0
        %4319 = vmatpush1.msra.mxu0 0.0
        %4320 = vmatprep.subr.mxu0 0.0
        %4321 = vmatpush1.msra.mxu0 0.0
        %4322 = vmatprep.subr.mxu0 0.0
        %4323 = vmatpush1.msra.mxu0 0.0
        %4324 = vmatprep.subr.mxu0 0.0
        %4325 = vmatpush1.msra.mxu0 0.0
        %4326 = vmatprep.subr.mxu0 0.0
        %4327 = vmatpush1.msra.mxu0 0.0
        %4328 = vmatprep.subr.mxu0 0.0
        %4329 = vmatpush1.msra.mxu0 0.0
        %4330 = vmatprep.subr.mxu0 0.0
        %4331 = vmatpush1.msra.mxu0 0.0
        %4332 = vmatprep.subr.mxu0 0.0
        %4333 = vmatpush1.msra.mxu0 0.0
        %4334 = vmatprep.subr.mxu0 0.0
        %4335 = vmatpush1.msra.mxu0 0.0
        %4336 = vmatprep.subr.mxu0 0.0
        %4337 = vmatpush1.msra.mxu0 0.0
        %4338 = vmatprep.subr.mxu0 0.0
        %4339 = vmatpush1.msra.mxu0 0.0
        %4340 = vmatprep.subr.mxu0 0.0
        %4341 = vmatpush1.msra.mxu0 0.0
        %4342 = vmatprep.mubr.f32.mxu0 0.0
        %4343 = vmatmul.mubr.f32.gmra.mrb[0].mxu0 %v4276
        %v4344 = vpop.f32.mrb[0].mxu0
        %v4345 = vadd.f32 0.0, %v4344
        %v4346 = vpop.f32.mrb[0].mxu0
        %4347 = vdwg.mxu0
        %v4348 = vadd.f32 %v4270, %v4345
        %s4349 = scalar_lea.vmem %s2, 248
        %v4350 = vld [vmem:[%s4349] sm:$0xff]
        %v4352 = vsel %vm448, %v4350, 0
        %4354 = vmatprep.subr.mxu0 0.0
        %4355 = vmatpush1.msra.mxu0 %v4038
        %4356 = vmatprep.subr.mxu0 0.0
        %4357 = vmatpush1.msra.mxu0 0.0
        %4358 = vmatprep.subr.mxu0 0.0
        %4359 = vmatpush1.msra.mxu0 0.0
        %4360 = vmatprep.subr.mxu0 0.0
        %4361 = vmatpush1.msra.mxu0 0.0
        %4362 = vmatprep.subr.mxu0 0.0
        %4363 = vmatpush1.msra.mxu0 0.0
        %4364 = vmatprep.subr.mxu0 0.0
        %4365 = vmatpush1.msra.mxu0 0.0
        %4366 = vmatprep.subr.mxu0 0.0
        %4367 = vmatpush1.msra.mxu0 0.0
        %4368 = vmatprep.subr.mxu0 0.0
        %4369 = vmatpush1.msra.mxu0 0.0
        %4370 = vmatprep.subr.mxu0 0.0
        %4371 = vmatpush1.msra.mxu0 0.0
        %4372 = vmatprep.subr.mxu0 0.0
        %4373 = vmatpush1.msra.mxu0 0.0
        %4374 = vmatprep.subr.mxu0 0.0
        %4375 = vmatpush1.msra.mxu0 0.0
        %4376 = vmatprep.subr.mxu0 0.0
        %4377 = vmatpush1.msra.mxu0 0.0
        %4378 = vmatprep.subr.mxu0 0.0
        %4379 = vmatpush1.msra.mxu0 0.0
        %4380 = vmatprep.subr.mxu0 0.0
        %4381 = vmatpush1.msra.mxu0 0.0
        %4382 = vmatprep.subr.mxu0 0.0
        %4383 = vmatpush1.msra.mxu0 0.0
        %4384 = vmatprep.subr.mxu0 0.0
        %4385 = vmatpush1.msra.mxu0 0.0
        %4386 = vmatprep.subr.mxu0 0.0
        %4387 = vmatpush1.msra.mxu0 0.0
        %4388 = vmatprep.subr.mxu0 0.0
        %4389 = vmatpush1.msra.mxu0 0.0
        %4390 = vmatprep.subr.mxu0 0.0
        %4391 = vmatpush1.msra.mxu0 0.0
        %4392 = vmatprep.subr.mxu0 0.0
        %4393 = vmatpush1.msra.mxu0 0.0
        %4394 = vmatprep.subr.mxu0 0.0
        %4395 = vmatpush1.msra.mxu0 0.0
        %4396 = vmatprep.subr.mxu0 0.0
        %4397 = vmatpush1.msra.mxu0 0.0
        %4398 = vmatprep.subr.mxu0 0.0
        %4399 = vmatpush1.msra.mxu0 0.0
        %4400 = vmatprep.subr.mxu0 0.0
        %4401 = vmatpush1.msra.mxu0 0.0
        %4402 = vmatprep.subr.mxu0 0.0
        %4403 = vmatpush1.msra.mxu0 0.0
        %4404 = vmatprep.subr.mxu0 0.0
        %4405 = vmatpush1.msra.mxu0 0.0
        %4406 = vmatprep.subr.mxu0 0.0
        %4407 = vmatpush1.msra.mxu0 0.0
        %4408 = vmatprep.subr.mxu0 0.0
        %4409 = vmatpush1.msra.mxu0 0.0
        %4410 = vmatprep.subr.mxu0 0.0
        %4411 = vmatpush1.msra.mxu0 0.0
        %4412 = vmatprep.subr.mxu0 0.0
        %4413 = vmatpush1.msra.mxu0 0.0
        %4414 = vmatprep.subr.mxu0 0.0
        %4415 = vmatpush1.msra.mxu0 0.0
        %4416 = vmatprep.subr.mxu0 0.0
        %4417 = vmatpush1.msra.mxu0 0.0
        %4418 = vmatprep.mubr.f32.mxu0 0.0
        %4419 = vmatmul.mubr.f32.gmra.mrb[0].mxu0 %v4352
        %v4420 = vpop.f32.mrb[0].mxu0
        %v4421 = vadd.f32 0.0, %v4420
        %v4422 = vpop.f32.mrb[0].mxu0
        %4423 = vdwg.mxu0
        %v4424 = vadd.f32 %v4348, %v4421
        %s4425 = scalar_lea.vmem %s2, 256
        %v4426 = vld [vmem:[%s4425] sm:$0xff]
        %4427 = vrot.lane.b32.xlu0 %v4038, 127
        %v4428 = vpop.permute.xlu0 %4427
        %v4430 = vsel %vm448, %v4426, 0
        %4432 = vmatprep.subr.mxu0 0.0
        %4433 = vmatpush1.msra.mxu0 %v4428
        %4434 = vmatprep.subr.mxu0 0.0
        %4435 = vmatpush1.msra.mxu0 0.0
        %4436 = vmatprep.subr.mxu0 0.0
        %4437 = vmatpush1.msra.mxu0 0.0
        %4438 = vmatprep.subr.mxu0 0.0
        %4439 = vmatpush1.msra.mxu0 0.0
        %4440 = vmatprep.subr.mxu0 0.0
        %4441 = vmatpush1.msra.mxu0 0.0
        %4442 = vmatprep.subr.mxu0 0.0
        %4443 = vmatpush1.msra.mxu0 0.0
        %4444 = vmatprep.subr.mxu0 0.0
        %4445 = vmatpush1.msra.mxu0 0.0
        %4446 = vmatprep.subr.mxu0 0.0
        %4447 = vmatpush1.msra.mxu0 0.0
        %4448 = vmatprep.subr.mxu0 0.0
        %4449 = vmatpush1.msra.mxu0 0.0
        %4450 = vmatprep.subr.mxu0 0.0
        %4451 = vmatpush1.msra.mxu0 0.0
        %4452 = vmatprep.subr.mxu0 0.0
        %4453 = vmatpush1.msra.mxu0 0.0
        %4454 = vmatprep.subr.mxu0 0.0
        %4455 = vmatpush1.msra.mxu0 0.0
        %4456 = vmatprep.subr.mxu0 0.0
        %4457 = vmatpush1.msra.mxu0 0.0
        %4458 = vmatprep.subr.mxu0 0.0
        %4459 = vmatpush1.msra.mxu0 0.0
        %4460 = vmatprep.subr.mxu0 0.0
        %4461 = vmatpush1.msra.mxu0 0.0
        %4462 = vmatprep.subr.mxu0 0.0
        %4463 = vmatpush1.msra.mxu0 0.0
        %4464 = vmatprep.subr.mxu0 0.0
        %4465 = vmatpush1.msra.mxu0 0.0
        %4466 = vmatprep.subr.mxu0 0.0
        %4467 = vmatpush1.msra.mxu0 0.0
        %4468 = vmatprep.subr.mxu0 0.0
        %4469 = vmatpush1.msra.mxu0 0.0
        %4470 = vmatprep.subr.mxu0 0.0
        %4471 = vmatpush1.msra.mxu0 0.0
        %4472 = vmatprep.subr.mxu0 0.0
        %4473 = vmatpush1.msra.mxu0 0.0
        %4474 = vmatprep.subr.mxu0 0.0
        %4475 = vmatpush1.msra.mxu0 0.0
        %4476 = vmatprep.subr.mxu0 0.0
        %4477 = vmatpush1.msra.mxu0 0.0
        %4478 = vmatprep.subr.mxu0 0.0
        %4479 = vmatpush1.msra.mxu0 0.0
        %4480 = vmatprep.subr.mxu0 0.0
        %4481 = vmatpush1.msra.mxu0 0.0
        %4482 = vmatprep.subr.mxu0 0.0
        %4483 = vmatpush1.msra.mxu0 0.0
        %4484 = vmatprep.subr.mxu0 0.0
        %4485 = vmatpush1.msra.mxu0 0.0
        %4486 = vmatprep.subr.mxu0 0.0
        %4487 = vmatpush1.msra.mxu0 0.0
        %4488 = vmatprep.subr.mxu0 0.0
        %4489 = vmatpush1.msra.mxu0 0.0
        %4490 = vmatprep.subr.mxu0 0.0
        %4491 = vmatpush1.msra.mxu0 0.0
        %4492 = vmatprep.subr.mxu0 0.0
        %4493 = vmatpush1.msra.mxu0 0.0
        %4494 = vmatprep.subr.mxu0 0.0
        %4495 = vmatpush1.msra.mxu0 0.0
        %4496 = vmatprep.mubr.f32.mxu0 0.0
        %4497 = vmatmul.mubr.f32.gmra.mrb[0].mxu0 %v4430
        %v4498 = vpop.f32.mrb[0].mxu0
        %v4499 = vadd.f32 0.0, %v4498
        %v4500 = vpop.f32.mrb[0].mxu0
        %4501 = vdwg.mxu0
        %v4502 = vadd.f32 %v4424, %v4499
        %s4503 = scalar_lea.vmem %s2, 264
        %v4504 = vld [vmem:[%s4503] sm:$0xff]
        %4505 = vrot.lane.b32.xlu0 %v4038, 119
        %v4506 = vpop.permute.xlu0 %4505
        %v4508 = vsel %vm448, %v4504, 0
        %4510 = vmatprep.subr.mxu0 0.0
        %4511 = vmatpush1.msra.mxu0 %v4506
        %4512 = vmatprep.subr.mxu0 0.0
        %4513 = vmatpush1.msra.mxu0 0.0
        %4514 = vmatprep.subr.mxu0 0.0
        %4515 = vmatpush1.msra.mxu0 0.0
        %4516 = vmatprep.subr.mxu0 0.0
        %4517 = vmatpush1.msra.mxu0 0.0
        %4518 = vmatprep.subr.mxu0 0.0
        %4519 = vmatpush1.msra.mxu0 0.0
        %4520 = vmatprep.subr.mxu0 0.0
        %4521 = vmatpush1.msra.mxu0 0.0
        %4522 = vmatprep.subr.mxu0 0.0
        %4523 = vmatpush1.msra.mxu0 0.0
        %4524 = vmatprep.subr.mxu0 0.0
        %4525 = vmatpush1.msra.mxu0 0.0
        %4526 = vmatprep.subr.mxu0 0.0
        %4527 = vmatpush1.msra.mxu0 0.0
        %4528 = vmatprep.subr.mxu0 0.0
        %4529 = vmatpush1.msra.mxu0 0.0
        %4530 = vmatprep.subr.mxu0 0.0
        %4531 = vmatpush1.msra.mxu0 0.0
        %4532 = vmatprep.subr.mxu0 0.0
        %4533 = vmatpush1.msra.mxu0 0.0
        %4534 = vmatprep.subr.mxu0 0.0
        %4535 = vmatpush1.msra.mxu0 0.0
        %4536 = vmatprep.subr.mxu0 0.0
        %4537 = vmatpush1.msra.mxu0 0.0
        %4538 = vmatprep.subr.mxu0 0.0
        %4539 = vmatpush1.msra.mxu0 0.0
        %4540 = vmatprep.subr.mxu0 0.0
        %4541 = vmatpush1.msra.mxu0 0.0
        %4542 = vmatprep.subr.mxu0 0.0
        %4543 = vmatpush1.msra.mxu0 0.0
        %4544 = vmatprep.subr.mxu0 0.0
        %4545 = vmatpush1.msra.mxu0 0.0
        %4546 = vmatprep.subr.mxu0 0.0
        %4547 = vmatpush1.msra.mxu0 0.0
        %4548 = vmatprep.subr.mxu0 0.0
        %4549 = vmatpush1.msra.mxu0 0.0
        %4550 = vmatprep.subr.mxu0 0.0
        %4551 = vmatpush1.msra.mxu0 0.0
        %4552 = vmatprep.subr.mxu0 0.0
        %4553 = vmatpush1.msra.mxu0 0.0
        %4554 = vmatprep.subr.mxu0 0.0
        %4555 = vmatpush1.msra.mxu0 0.0
        %4556 = vmatprep.subr.mxu0 0.0
        %4557 = vmatpush1.msra.mxu0 0.0
        %4558 = vmatprep.subr.mxu0 0.0
        %4559 = vmatpush1.msra.mxu0 0.0
        %4560 = vmatprep.subr.mxu0 0.0
        %4561 = vmatpush1.msra.mxu0 0.0
        %4562 = vmatprep.subr.mxu0 0.0
        %4563 = vmatpush1.msra.mxu0 0.0
        %4564 = vmatprep.subr.mxu0 0.0
        %4565 = vmatpush1.msra.mxu0 0.0
        %4566 = vmatprep.subr.mxu0 0.0
        %4567 = vmatpush1.msra.mxu0 0.0
        %4568 = vmatprep.subr.mxu0 0.0
        %4569 = vmatpush1.msra.mxu0 0.0
        %4570 = vmatprep.subr.mxu0 0.0
        %4571 = vmatpush1.msra.mxu0 0.0
        %4572 = vmatprep.subr.mxu0 0.0
        %4573 = vmatpush1.msra.mxu0 0.0
        %4574 = vmatprep.mubr.f32.mxu0 0.0
        %4575 = vmatmul.mubr.f32.gmra.mrb[0].mxu0 %v4508
        %v4576 = vpop.f32.mrb[0].mxu0
        %v4577 = vadd.f32 0.0, %v4576
        %v4578 = vpop.f32.mrb[0].mxu0
        %4579 = vdwg.mxu0
        %v4580 = vadd.f32 %v4502, %v4577
        %s4581 = scalar_lea.vmem %s2, 272
        %v4582 = vld [vmem:[%s4581] sm:$0xff]
        %4583 = vrot.lane.b32.xlu0 %v4038, 118
        %v4584 = vpop.permute.xlu0 %4583
        %v4586 = vsel %vm448, %v4582, 0
        %4588 = vmatprep.subr.mxu0 0.0
        %4589 = vmatpush1.msra.mxu0 %v4584
        %4590 = vmatprep.subr.mxu0 0.0
        %4591 = vmatpush1.msra.mxu0 0.0
        %4592 = vmatprep.subr.mxu0 0.0
        %4593 = vmatpush1.msra.mxu0 0.0
        %4594 = vmatprep.subr.mxu0 0.0
        %4595 = vmatpush1.msra.mxu0 0.0
        %4596 = vmatprep.subr.mxu0 0.0
        %4597 = vmatpush1.msra.mxu0 0.0
        %4598 = vmatprep.subr.mxu0 0.0
        %4599 = vmatpush1.msra.mxu0 0.0
        %4600 = vmatprep.subr.mxu0 0.0
        %4601 = vmatpush1.msra.mxu0 0.0
        %4602 = vmatprep.subr.mxu0 0.0
        %4603 = vmatpush1.msra.mxu0 0.0
        %4604 = vmatprep.subr.mxu0 0.0
        %4605 = vmatpush1.msra.mxu0 0.0
        %4606 = vmatprep.subr.mxu0 0.0
        %4607 = vmatpush1.msra.mxu0 0.0
        %4608 = vmatprep.subr.mxu0 0.0
        %4609 = vmatpush1.msra.mxu0 0.0
        %4610 = vmatprep.subr.mxu0 0.0
        %4611 = vmatpush1.msra.mxu0 0.0
        %4612 = vmatprep.subr.mxu0 0.0
        %4613 = vmatpush1.msra.mxu0 0.0
        %4614 = vmatprep.subr.mxu0 0.0
        %4615 = vmatpush1.msra.mxu0 0.0
        %4616 = vmatprep.subr.mxu0 0.0
        %4617 = vmatpush1.msra.mxu0 0.0
        %4618 = vmatprep.subr.mxu0 0.0
        %4619 = vmatpush1.msra.mxu0 0.0
        %4620 = vmatprep.subr.mxu0 0.0
        %4621 = vmatpush1.msra.mxu0 0.0
        %4622 = vmatprep.subr.mxu0 0.0
        %4623 = vmatpush1.msra.mxu0 0.0
        %4624 = vmatprep.subr.mxu0 0.0
        %4625 = vmatpush1.msra.mxu0 0.0
        %4626 = vmatprep.subr.mxu0 0.0
        %4627 = vmatpush1.msra.mxu0 0.0
        %4628 = vmatprep.subr.mxu0 0.0
        %4629 = vmatpush1.msra.mxu0 0.0
        %4630 = vmatprep.subr.mxu0 0.0
        %4631 = vmatpush1.msra.mxu0 0.0
        %4632 = vmatprep.subr.mxu0 0.0
        %4633 = vmatpush1.msra.mxu0 0.0
        %4634 = vmatprep.subr.mxu0 0.0
        %4635 = vmatpush1.msra.mxu0 0.0
        %4636 = vmatprep.subr.mxu0 0.0
        %4637 = vmatpush1.msra.mxu0 0.0
        %4638 = vmatprep.subr.mxu0 0.0
        %4639 = vmatpush1.msra.mxu0 0.0
        %4640 = vmatprep.subr.mxu0 0.0
        %4641 = vmatpush1.msra.mxu0 0.0
        %4642 = vmatprep.subr.mxu0 0.0
        %4643 = vmatpush1.msra.mxu0 0.0
        %4644 = vmatprep.subr.mxu0 0.0
        %4645 = vmatpush1.msra.mxu0 0.0
        %4646 = vmatprep.subr.mxu0 0.0
        %4647 = vmatpush1.msra.mxu0 0.0
        %4648 = vmatprep.subr.mxu0 0.0
        %4649 = vmatpush1.msra.mxu0 0.0
        %4650 = vmatprep.subr.mxu0 0.0
        %4651 = vmatpush1.msra.mxu0 0.0
        %4652 = vmatprep.mubr.f32.mxu0 0.0
        %4653 = vmatmul.mubr.f32.gmra.mrb[0].mxu0 %v4586
        %v4654 = vpop.f32.mrb[0].mxu0
        %v4655 = vadd.f32 0.0, %v4654
        %v4656 = vpop.f32.mrb[0].mxu0
        %4657 = vdwg.mxu0
        %v4658 = vadd.f32 %v4580, %v4655
        %s4659 = scalar_lea.vmem %s2, 280
        %v4660 = vld [vmem:[%s4659] sm:$0xff]
        %4661 = vrot.lane.b32.xlu0 %v4038, 117
        %v4662 = vpop.permute.xlu0 %4661
        %v4664 = vsel %vm448, %v4660, 0
        %4666 = vmatprep.subr.mxu0 0.0
        %4667 = vmatpush1.msra.mxu0 %v4662
        %4668 = vmatprep.subr.mxu0 0.0
        %4669 = vmatpush1.msra.mxu0 0.0
        %4670 = vmatprep.subr.mxu0 0.0
        %4671 = vmatpush1.msra.mxu0 0.0
        %4672 = vmatprep.subr.mxu0 0.0
        %4673 = vmatpush1.msra.mxu0 0.0
        %4674 = vmatprep.subr.mxu0 0.0
        %4675 = vmatpush1.msra.mxu0 0.0
        %4676 = vmatprep.subr.mxu0 0.0
        %4677 = vmatpush1.msra.mxu0 0.0
        %4678 = vmatprep.subr.mxu0 0.0
        %4679 = vmatpush1.msra.mxu0 0.0
        %4680 = vmatprep.subr.mxu0 0.0
        %4681 = vmatpush1.msra.mxu0 0.0
        %4682 = vmatprep.subr.mxu0 0.0
        %4683 = vmatpush1.msra.mxu0 0.0
        %4684 = vmatprep.subr.mxu0 0.0
        %4685 = vmatpush1.msra.mxu0 0.0
        %4686 = vmatprep.subr.mxu0 0.0
        %4687 = vmatpush1.msra.mxu0 0.0
        %4688 = vmatprep.subr.mxu0 0.0
        %4689 = vmatpush1.msra.mxu0 0.0
        %4690 = vmatprep.subr.mxu0 0.0
        %4691 = vmatpush1.msra.mxu0 0.0
        %4692 = vmatprep.subr.mxu0 0.0
        %4693 = vmatpush1.msra.mxu0 0.0
        %4694 = vmatprep.subr.mxu0 0.0
        %4695 = vmatpush1.msra.mxu0 0.0
        %4696 = vmatprep.subr.mxu0 0.0
        %4697 = vmatpush1.msra.mxu0 0.0
        %4698 = vmatprep.subr.mxu0 0.0
        %4699 = vmatpush1.msra.mxu0 0.0
        %4700 = vmatprep.subr.mxu0 0.0
        %4701 = vmatpush1.msra.mxu0 0.0
        %4702 = vmatprep.subr.mxu0 0.0
        %4703 = vmatpush1.msra.mxu0 0.0
        %4704 = vmatprep.subr.mxu0 0.0
        %4705 = vmatpush1.msra.mxu0 0.0
        %4706 = vmatprep.subr.mxu0 0.0
        %4707 = vmatpush1.msra.mxu0 0.0
        %4708 = vmatprep.subr.mxu0 0.0
        %4709 = vmatpush1.msra.mxu0 0.0
        %4710 = vmatprep.subr.mxu0 0.0
        %4711 = vmatpush1.msra.mxu0 0.0
        %4712 = vmatprep.subr.mxu0 0.0
        %4713 = vmatpush1.msra.mxu0 0.0
        %4714 = vmatprep.subr.mxu0 0.0
        %4715 = vmatpush1.msra.mxu0 0.0
        %4716 = vmatprep.subr.mxu0 0.0
        %4717 = vmatpush1.msra.mxu0 0.0
        %4718 = vmatprep.subr.mxu0 0.0
        %4719 = vmatpush1.msra.mxu0 0.0
        %4720 = vmatprep.subr.mxu0 0.0
        %4721 = vmatpush1.msra.mxu0 0.0
        %4722 = vmatprep.subr.mxu0 0.0
        %4723 = vmatpush1.msra.mxu0 0.0
        %4724 = vmatprep.subr.mxu0 0.0
        %4725 = vmatpush1.msra.mxu0 0.0
        %4726 = vmatprep.subr.mxu0 0.0
        %4727 = vmatpush1.msra.mxu0 0.0
        %4728 = vmatprep.subr.mxu0 0.0
        %4729 = vmatpush1.msra.mxu0 0.0
        %4730 = vmatprep.mubr.f32.mxu0 0.0
        %4731 = vmatmul.mubr.f32.gmra.mrb[0].mxu0 %v4664
        %v4732 = vpop.f32.mrb[0].mxu0
        %v4733 = vadd.f32 0.0, %v4732
        %v4734 = vpop.f32.mrb[0].mxu0
        %4735 = vdwg.mxu0
        %v4736 = vadd.f32 %v4658, %v4733
        %s4737 = scalar_lea.vmem %s4, 48
        %v4738 = vld [vmem:[%s4737] sm:$0xff]
        %4740 = vset.pattern.permute.xlu0 0
        %4741 = vperm.xlu0 %4740, %v4738
        %v4742 = vpop.permute.xlu0 %4741
        %v4744 = vmul.f32 %v4736, %v4742
        %s4745 = scalar_lea.vmem %s4, 56
        %v4746 = vld [vmem:[%s4745] sm:$0xff]
        %4748 = vset.pattern.permute.xlu0 0
        %4749 = vperm.xlu0 %4748, %v4746
        %v4750 = vpop.permute.xlu0 %4749
        %v4752 = vadd.f32 %v4744, %v4750
        %v4753 = vadd.f32 %v4752, %v420
        %v4754 = vmax.f32 %v4753, 0.0
        %v4755 = vmul.f32 %v4754, %v4036
        %v4756 = vld [vmem:[#allocation5] sm:$0xff]
        %v4758 = vsel %vm448, %v4756, 0
        %4760 = vmatprep.subr.mxu0 0.0
        %4761 = vmatpush1.msra.mxu0 %v4755
        %4762 = vmatprep.subr.mxu0 0.0
        %4763 = vmatpush1.msra.mxu0 0.0
        %4764 = vmatprep.subr.mxu0 0.0
        %4765 = vmatpush1.msra.mxu0 0.0
        %4766 = vmatprep.subr.mxu0 0.0
        %4767 = vmatpush1.msra.mxu0 0.0
        %4768 = vmatprep.subr.mxu0 0.0
        %4769 = vmatpush1.msra.mxu0 0.0
        %4770 = vmatprep.subr.mxu0 0.0
        %4771 = vmatpush1.msra.mxu0 0.0
        %4772 = vmatprep.subr.mxu0 0.0
        %4773 = vmatpush1.msra.mxu0 0.0
        %4774 = vmatprep.subr.mxu0 0.0
        %4775 = vmatpush1.msra.mxu0 0.0
        %4776 = vmatprep.subr.mxu0 0.0
        %4777 = vmatpush1.msra.mxu0 0.0
        %4778 = vmatprep.subr.mxu0 0.0
        %4779 = vmatpush1.msra.mxu0 0.0
        %4780 = vmatprep.subr.mxu0 0.0
        %4781 = vmatpush1.msra.mxu0 0.0
        %4782 = vmatprep.subr.mxu0 0.0
        %4783 = vmatpush1.msra.mxu0 0.0
        %4784 = vmatprep.subr.mxu0 0.0
        %4785 = vmatpush1.msra.mxu0 0.0
        %4786 = vmatprep.subr.mxu0 0.0
        %4787 = vmatpush1.msra.mxu0 0.0
        %4788 = vmatprep.subr.mxu0 0.0
        %4789 = vmatpush1.msra.mxu0 0.0
        %4790 = vmatprep.subr.mxu0 0.0
        %4791 = vmatpush1.msra.mxu0 0.0
        %4792 = vmatprep.subr.mxu0 0.0
        %4793 = vmatpush1.msra.mxu0 0.0
        %4794 = vmatprep.subr.mxu0 0.0
        %4795 = vmatpush1.msra.mxu0 0.0
        %4796 = vmatprep.subr.mxu0 0.0
        %4797 = vmatpush1.msra.mxu0 0.0
        %4798 = vmatprep.subr.mxu0 0.0
        %4799 = vmatpush1.msra.mxu0 0.0
        %4800 = vmatprep.subr.mxu0 0.0
        %4801 = vmatpush1.msra.mxu0 0.0
        %4802 = vmatprep.subr.mxu0 0.0
        %4803 = vmatpush1.msra.mxu0 0.0
        %4804 = vmatprep.subr.mxu0 0.0
        %4805 = vmatpush1.msra.mxu0 0.0
        %4806 = vmatprep.subr.mxu0 0.0
        %4807 = vmatpush1.msra.mxu0 0.0
        %4808 = vmatprep.subr.mxu0 0.0
        %4809 = vmatpush1.msra.mxu0 0.0
        %4810 = vmatprep.subr.mxu0 0.0
        %4811 = vmatpush1.msra.mxu0 0.0
        %4812 = vmatprep.subr.mxu0 0.0
        %4813 = vmatpush1.msra.mxu0 0.0
        %4814 = vmatprep.subr.mxu0 0.0
        %4815 = vmatpush1.msra.mxu0 0.0
        %4816 = vmatprep.subr.mxu0 0.0
        %4817 = vmatpush1.msra.mxu0 0.0
        %4818 = vmatprep.subr.mxu0 0.0
        %4819 = vmatpush1.msra.mxu0 0.0
        %4820 = vmatprep.subr.mxu0 0.0
        %4821 = vmatpush1.msra.mxu0 0.0
        %4822 = vmatprep.subr.mxu0 0.0
        %4823 = vmatpush1.msra.mxu0 0.0
        %4824 = vmatprep.mubr.f32.mxu0 0.0
        %4825 = vmatmul.mubr.f32.gmra.mrb[0].mxu0 %v4758
        %v4826 = vpop.f32.mrb[0].mxu0
        %v4827 = vadd.f32 0.0, %v4826
        %v4828 = vpop.f32.mrb[0].mxu0
        %4829 = vdwg.mxu0
        %s4830 = scalar_lea.vmem %s4, 64
        %v4831 = vld [vmem:[%s4830] sm:$0xff]
        %4833 = vset.pattern.permute.xlu0 0
        %4834 = vperm.xlu0 %4833, %v4831
        %v4835 = vpop.permute.xlu0 %4834
        %v4837 = vmul.f32 %v4827, %v4835
        %s4838 = scalar_lea.vmem %s4, 72
        %v4839 = vld [vmem:[%s4838] sm:$0xff]
        %4841 = vset.pattern.permute.xlu0 0
        %4842 = vperm.xlu0 %4841, %v4839
        %v4843 = vpop.permute.xlu0 %4842
        %v4845 = vadd.f32 %v4837, %v4843
        %v4846 = vld [vmem:[%s5] sm:$0xff]
        %v4847 = vld [vmem:[%s5 + $0x8] sm:$0xff]
        %v4848 = vld [vmem:[%s5 + $0x10] sm:$0xff]
        %v4849 = vld [vmem:[%s5 + $0x18] sm:$0xff]
        %v4850 = vld [vmem:[%s5 + $0x20] sm:$0xff]
        %v4851 = vld [vmem:[%s5 + $0x28] sm:$0xff]
        %v4852 = vld [vmem:[%s5 + $0x30] sm:$0xff]
        %v4853 = vld [vmem:[%s5 + $0x38] sm:$0xff]
        %v4854 = vld [vmem:[%s5 + $0x40] sm:$0xff]
        %v4855 = vld [vmem:[%s5 + $0x48] sm:$0xff]
        %v4856 = vld [vmem:[%s5 + $0x50] sm:$0xff]
        %v4857 = vld [vmem:[%s5 + $0x58] sm:$0xff]
        %v4858 = vld [vmem:[%s5 + $0x60] sm:$0xff]
        %v4859 = vld [vmem:[%s5 + $0x68] sm:$0xff]
        %v4860 = vld [vmem:[%s5 + $0x70] sm:$0xff]
        %v4861 = vld [vmem:[%s5 + $0x78] sm:$0xff]
        %v4862 = vld [vmem:[%s5 + $0x80] sm:$0xff]
        %v4863 = vld [vmem:[%s5 + $0x88] sm:$0xff]
        %v4864 = vld [vmem:[%s5 + $0x90] sm:$0xff]
        %v4865 = vld [vmem:[%s5 + $0x98] sm:$0xff]
        %v4866 = vld [vmem:[%s5 + $0xa0] sm:$0xff]
        %v4867 = vld [vmem:[%s5 + $0xa8] sm:$0xff]
        %v4868 = vld [vmem:[%s5 + $0xb0] sm:$0xff]
        %v4869 = vld [vmem:[%s5 + $0xb8] sm:$0xff]
        %v4870 = vld [vmem:[%s5 + $0xc0] sm:$0xff]
        %v4871 = vld [vmem:[%s5 + $0xc8] sm:$0xff]
        %v4872 = vld [vmem:[%s5 + $0xd0] sm:$0xff]
        %v4873 = vld [vmem:[%s5 + $0xd8] sm:$0xff]
        %v4874 = vld [vmem:[%s5 + $0xe0] sm:$0xff]
        %v4875 = vld [vmem:[%s5 + $0xe8] sm:$0xff]
        %v4876 = vld [vmem:[%s5 + $0xf0] sm:$0xff]
        %v4877 = vld [vmem:[%s5 + $0xf8] sm:$0xff]
        %v4878 = vld [vmem:[%s5 + $0x100] sm:$0xff]
        %v4879 = vld [vmem:[%s5 + $0x108] sm:$0xff]
        %v4880 = vld [vmem:[%s5 + $0x110] sm:$0xff]
        %v4881 = vld [vmem:[%s5 + $0x118] sm:$0xff]
        %v4882 = vld [vmem:[%s5 + $0x120] sm:$0xff]
        %v4883 = vld [vmem:[%s5 + $0x128] sm:$0xff]
        %v4884 = vld [vmem:[%s5 + $0x130] sm:$0xff]
        %v4885 = vld [vmem:[%s5 + $0x138] sm:$0xff]
        %v4886 = vld [vmem:[%s5 + $0x140] sm:$0xff]
        %v4887 = vld [vmem:[%s5 + $0x148] sm:$0xff]
        %v4888 = vld [vmem:[%s5 + $0x150] sm:$0xff]
        %v4889 = vld [vmem:[%s5 + $0x158] sm:$0xff]
        %v4890 = vld [vmem:[%s5 + $0x160] sm:$0xff]
        %v4891 = vld [vmem:[%s5 + $0x168] sm:$0xff]
        %v4892 = vld [vmem:[%s5 + $0x170] sm:$0xff]
        %v4893 = vld [vmem:[%s5 + $0x178] sm:$0xff]
        %4894 = vmatprep.subr.mxu0 %v4847
        %4895 = vmatpush1.msra.mxu0 %v4846
        %4896 = vmatprep.subr.mxu0 %v4850
        %4897 = vmatpush1.msra.mxu0 %v4849
        %4898 = vmatprep.subr.mxu0 %v4853
        %4899 = vmatpush1.msra.mxu0 %v4852
        %4900 = vmatprep.subr.mxu0 %v4856
        %4901 = vmatpush1.msra.mxu0 %v4855
        %4902 = vmatprep.subr.mxu0 %v4859
        %4903 = vmatpush1.msra.mxu0 %v4858
        %4904 = vmatprep.subr.mxu0 %v4862
        %4905 = vmatpush1.msra.mxu0 %v4861
        %4906 = vmatprep.subr.mxu0 %v4865
        %4907 = vmatpush1.msra.mxu0 %v4864
        %4908 = vmatprep.subr.mxu0 %v4868
        %4909 = vmatpush1.msra.mxu0 %v4867
        %4910 = vmatprep.subr.mxu0 %v4871
        %4911 = vmatpush1.msra.mxu0 %v4870
        %4912 = vmatprep.subr.mxu0 %v4874
        %4913 = vmatpush1.msra.mxu0 %v4873
        %4914 = vmatprep.subr.mxu0 %v4877
        %4915 = vmatpush1.msra.mxu0 %v4876
        %4916 = vmatprep.subr.mxu0 %v4880
        %4917 = vmatpush1.msra.mxu0 %v4879
        %4918 = vmatprep.subr.mxu0 %v4883
        %4919 = vmatpush1.msra.mxu0 %v4882
        %4920 = vmatprep.subr.mxu0 %v4886
        %4921 = vmatpush1.msra.mxu0 %v4885
        %4922 = vmatprep.subr.mxu0 %v4889
        %4923 = vmatpush1.msra.mxu0 %v4888
        %4924 = vmatprep.subr.mxu0 %v4892
        %4925 = vmatpush1.msra.mxu0 %v4891
        %4926 = vmatprep.subr.mxu0 0.0
        %4927 = vmatpush1.msra.mxu0 0.0
        %4928 = vmatprep.subr.mxu0 0.0
        %4929 = vmatpush1.msra.mxu0 0.0
        %4930 = vmatprep.subr.mxu0 0.0
        %4931 = vmatpush1.msra.mxu0 0.0
        %4932 = vmatprep.subr.mxu0 0.0
        %4933 = vmatpush1.msra.mxu0 0.0
        %4934 = vmatprep.subr.mxu0 0.0
        %4935 = vmatpush1.msra.mxu0 0.0
        %4936 = vmatprep.subr.mxu0 0.0
        %4937 = vmatpush1.msra.mxu0 0.0
        %4938 = vmatprep.subr.mxu0 0.0
        %4939 = vmatpush1.msra.mxu0 0.0
        %4940 = vmatprep.subr.mxu0 0.0
        %4941 = vmatpush1.msra.mxu0 0.0
        %4942 = vmatprep.subr.mxu0 0.0
        %4943 = vmatpush1.msra.mxu0 0.0
        %4944 = vmatprep.subr.mxu0 0.0
        %4945 = vmatpush1.msra.mxu0 0.0
        %4946 = vmatprep.subr.mxu0 0.0
        %4947 = vmatpush1.msra.mxu0 0.0
        %4948 = vmatprep.subr.mxu0 0.0
        %4949 = vmatpush1.msra.mxu0 0.0
        %4950 = vmatprep.subr.mxu0 0.0
        %4951 = vmatpush1.msra.mxu0 0.0
        %4952 = vmatprep.subr.mxu0 0.0
        %4953 = vmatpush1.msra.mxu0 0.0
        %4954 = vmatprep.subr.mxu0 0.0
        %4955 = vmatpush1.msra.mxu0 0.0
        %4956 = vmatprep.subr.mxu0 0.0
        %4957 = vmatpush1.msra.mxu0 0.0
        %4958 = vmatprep.mubr.f32.mxu0 0.0
        %4959 = vmatmul.mubr.f32.gmra.mrb[0].mxu0 %v4845
        %v4960 = vpop.f32.mrb[0].mxu0
        %v4961 = vadd.f32 0.0, %v4960
        %v4962 = vpop.f32.mrb[0].mxu0
        %v4963 = vadd.f32 0.0, %v4962
        %4964 = vdwg.mxu0
        %4965 = vmatprep.subr.mxu0 0.0
        %4966 = vmatpush1.msra.mxu0 %v4848
        %4967 = vmatprep.subr.mxu0 0.0
        %4968 = vmatpush1.msra.mxu0 %v4851
        %4969 = vmatprep.subr.mxu0 0.0
        %4970 = vmatpush1.msra.mxu0 %v4854
        %4971 = vmatprep.subr.mxu0 0.0
        %4972 = vmatpush1.msra.mxu0 %v4857
        %4973 = vmatprep.subr.mxu0 0.0
        %4974 = vmatpush1.msra.mxu0 %v4860
        %4975 = vmatprep.subr.mxu0 0.0
        %4976 = vmatpush1.msra.mxu0 %v4863
        %4977 = vmatprep.subr.mxu0 0.0
        %4978 = vmatpush1.msra.mxu0 %v4866
        %4979 = vmatprep.subr.mxu0 0.0
        %4980 = vmatpush1.msra.mxu0 %v4869
        %4981 = vmatprep.subr.mxu0 0.0
        %4982 = vmatpush1.msra.mxu0 %v4872
        %4983 = vmatprep.subr.mxu0 0.0
        %4984 = vmatpush1.msra.mxu0 %v4875
        %4985 = vmatprep.subr.mxu0 0.0
        %4986 = vmatpush1.msra.mxu0 %v4878
        %4987 = vmatprep.subr.mxu0 0.0
        %4988 = vmatpush1.msra.mxu0 %v4881
        %4989 = vmatprep.subr.mxu0 0.0
        %4990 = vmatpush1.msra.mxu0 %v4884
        %4991 = vmatprep.subr.mxu0 0.0
        %4992 = vmatpush1.msra.mxu0 %v4887
        %4993 = vmatprep.subr.mxu0 0.0
        %4994 = vmatpush1.msra.mxu0 %v4890
        %4995 = vmatprep.subr.mxu0 0.0
        %4996 = vmatpush1.msra.mxu0 %v4893
        %4997 = vmatprep.subr.mxu0 0.0
        %4998 = vmatpush1.msra.mxu0 0.0
        %4999 = vmatprep.subr.mxu0 0.0
        %5000 = vmatpush1.msra.mxu0 0.0
        %5001 = vmatprep.subr.mxu0 0.0
        %5002 = vmatpush1.msra.mxu0 0.0
        %5003 = vmatprep.subr.mxu0 0.0
        %5004 = vmatpush1.msra.mxu0 0.0
        %5005 = vmatprep.subr.mxu0 0.0
        %5006 = vmatpush1.msra.mxu0 0.0
        %5007 = vmatprep.subr.mxu0 0.0
        %5008 = vmatpush1.msra.mxu0 0.0
        %5009 = vmatprep.subr.mxu0 0.0
        %5010 = vmatpush1.msra.mxu0 0.0
        %5011 = vmatprep.subr.mxu0 0.0
        %5012 = vmatpush1.msra.mxu0 0.0
        %5013 = vmatprep.subr.mxu0 0.0
        %5014 = vmatpush1.msra.mxu0 0.0
        %5015 = vmatprep.subr.mxu0 0.0
        %5016 = vmatpush1.msra.mxu0 0.0
        %5017 = vmatprep.subr.mxu0 0.0
        %5018 = vmatpush1.msra.mxu0 0.0
        %5019 = vmatprep.subr.mxu0 0.0
        %5020 = vmatpush1.msra.mxu0 0.0
        %5021 = vmatprep.subr.mxu0 0.0
        %5022 = vmatpush1.msra.mxu0 0.0
        %5023 = vmatprep.subr.mxu0 0.0
        %5024 = vmatpush1.msra.mxu0 0.0
        %5025 = vmatprep.subr.mxu0 0.0
        %5026 = vmatpush1.msra.mxu0 0.0
        %5027 = vmatprep.subr.mxu0 0.0
        %5028 = vmatpush1.msra.mxu0 0.0
        %5029 = vmatprep.mubr.f32.mxu0 0.0
        %5030 = vmatmul.mubr.f32.gmra.mrb[0].mxu0 %v4845
        %v5031 = vpop.f32.mrb[0].mxu0
        %v5032 = vadd.f32 0.0, %v5031
        %v5033 = vpop.f32.mrb[0].mxu0
        %5034 = vdwg.mxu0
        %v5035 = vadd.f32 %v3314, %v4961
        %v5036 = vadd.f32 %v3315, %v4963
        %v5037 = vadd.f32 %v3316, %v5032
        %v5038 = vmax.f32 %v5035, 0.0
        %v5039 = vmax.f32 %v5036, 0.0
        %v5040 = vmax.f32 %v5037, 0.0
        %v5041 = vmul.f32 %v5038, %v1866
        %v5042 = vmul.f32 %v5039, %v1870
        %v5043 = vmul.f32 %v5040, %v1874
        %5044 = vst [vmem:[%s405] sm:$0xff] %v5041
        %5045 = vst [vmem:[%s405 + $0x8] sm:$0xff] %v5042
        %5046 = vst [vmem:[%s405 + $0x10] sm:$0xff] %v5043
        %s5047 = scalar_lea.vmem %s2, 288
        %v5048 = vld [vmem:[%s5047] sm:$0xff]
        %5049 = vrot.lane.b32.xlu0 %v3314, 19
        %v5050 = vpop.permute.xlu0 %5049
        %5051 = vrot.lane.b32.xlu0 %v3315, 19
        %v5052 = vpop.permute.xlu0 %5051
        %5053 = vrot.lane.b32.xlu0 %v3316, 19
        %v5054 = vpop.permute.xlu0 %5053
        %v5055 = vsel %vm432, %v5052, %v5054
        %v5056 = vsel %vm432, %v5050, %v5052
        %v5057 = vsel %vm432, %v5054, %v5050
        %s5058 = scalar_lea.vmem %s2, 296
        %v5059 = vld [vmem:[%s5058] sm:$0xff]
        %5060 = vrot.lane.b32.xlu0 %v3314, 18
        %v5061 = vpop.permute.xlu0 %5060
        %5062 = vrot.lane.b32.xlu0 %v3315, 18
        %v5063 = vpop.permute.xlu0 %5062
        %5064 = vrot.lane.b32.xlu0 %v3316, 18
        %v5065 = vpop.permute.xlu0 %5064
        %v5066 = vsel %vm444, %v5063, %v5065
        %v5067 = vsel %vm444, %v5061, %v5063
        %v5068 = vsel %vm444, %v5065, %v5061
        %v5070 = vsel %vm448, %v5059, 0
        %5072 = vmatprep.subr.mxu0 %v5067
        %5073 = vmatpush1.msra.mxu0 %v5068
        %5074 = vmatprep.subr.mxu0 0.0
        %5075 = vmatpush1.msra.mxu0 0.0
        %5076 = vmatprep.subr.mxu0 0.0
        %5077 = vmatpush1.msra.mxu0 0.0
        %5078 = vmatprep.subr.mxu0 0.0
        %5079 = vmatpush1.msra.mxu0 0.0
        %5080 = vmatprep.subr.mxu0 0.0
        %5081 = vmatpush1.msra.mxu0 0.0
        %5082 = vmatprep.subr.mxu0 0.0
        %5083 = vmatpush1.msra.mxu0 0.0
        %5084 = vmatprep.subr.mxu0 0.0
        %5085 = vmatpush1.msra.mxu0 0.0
        %5086 = vmatprep.subr.mxu0 0.0
        %5087 = vmatpush1.msra.mxu0 0.0
        %5088 = vmatprep.subr.mxu0 0.0
        %5089 = vmatpush1.msra.mxu0 0.0
        %5090 = vmatprep.subr.mxu0 0.0
        %5091 = vmatpush1.msra.mxu0 0.0
        %5092 = vmatprep.subr.mxu0 0.0
        %5093 = vmatpush1.msra.mxu0 0.0
        %5094 = vmatprep.subr.mxu0 0.0
        %5095 = vmatpush1.msra.mxu0 0.0
        %5096 = vmatprep.subr.mxu0 0.0
        %5097 = vmatpush1.msra.mxu0 0.0
        %5098 = vmatprep.subr.mxu0 0.0
        %5099 = vmatpush1.msra.mxu0 0.0
        %5100 = vmatprep.subr.mxu0 0.0
        %5101 = vmatpush1.msra.mxu0 0.0
        %5102 = vmatprep.subr.mxu0 0.0
        %5103 = vmatpush1.msra.mxu0 0.0
        %5104 = vmatprep.subr.mxu0 0.0
        %5105 = vmatpush1.msra.mxu0 0.0
        %5106 = vmatprep.subr.mxu0 0.0
        %5107 = vmatpush1.msra.mxu0 0.0
        %5108 = vmatprep.subr.mxu0 0.0
        %5109 = vmatpush1.msra.mxu0 0.0
        %5110 = vmatprep.subr.mxu0 0.0
        %5111 = vmatpush1.msra.mxu0 0.0
        %5112 = vmatprep.subr.mxu0 0.0
        %5113 = vmatpush1.msra.mxu0 0.0
        %5114 = vmatprep.subr.mxu0 0.0
        %5115 = vmatpush1.msra.mxu0 0.0
        %5116 = vmatprep.subr.mxu0 0.0
        %5117 = vmatpush1.msra.mxu0 0.0
        %5118 = vmatprep.subr.mxu0 0.0
        %5119 = vmatpush1.msra.mxu0 0.0
        %5120 = vmatprep.subr.mxu0 0.0
        %5121 = vmatpush1.msra.mxu0 0.0
        %5122 = vmatprep.subr.mxu0 0.0
        %5123 = vmatpush1.msra.mxu0 0.0
        %5124 = vmatprep.subr.mxu0 0.0
        %5125 = vmatpush1.msra.mxu0 0.0
        %5126 = vmatprep.subr.mxu0 0.0
        %5127 = vmatpush1.msra.mxu0 0.0
        %5128 = vmatprep.subr.mxu0 0.0
        %5129 = vmatpush1.msra.mxu0 0.0
        %5130 = vmatprep.subr.mxu0 0.0
        %5131 = vmatpush1.msra.mxu0 0.0
        %5132 = vmatprep.subr.mxu0 0.0
        %5133 = vmatpush1.msra.mxu0 0.0
        %5134 = vmatprep.subr.mxu0 0.0
        %5135 = vmatpush1.msra.mxu0 0.0
        %5136 = vmatprep.mubr.f32.mxu0 0.0
        %5137 = vmatmul.mubr.f32.gmra.mrb[0].mxu0 %v5070
        %v5138 = vpop.f32.mrb[0].mxu0
        %v5139 = vadd.f32 0.0, %v5138
        %v5140 = vpop.f32.mrb[0].mxu0
        %v5141 = vadd.f32 0.0, %v5140
        %5142 = vdwg.mxu0
        %5143 = vmatprep.subr.mxu0 0.0
        %5144 = vmatpush1.msra.mxu0 %v5066
        %5145 = vmatprep.subr.mxu0 0.0
        %5146 = vmatpush1.msra.mxu0 0.0
        %5147 = vmatprep.subr.mxu0 0.0
        %5148 = vmatpush1.msra.mxu0 0.0
        %5149 = vmatprep.subr.mxu0 0.0
        %5150 = vmatpush1.msra.mxu0 0.0
        %5151 = vmatprep.subr.mxu0 0.0
        %5152 = vmatpush1.msra.mxu0 0.0
        %5153 = vmatprep.subr.mxu0 0.0
        %5154 = vmatpush1.msra.mxu0 0.0
        %5155 = vmatprep.subr.mxu0 0.0
        %5156 = vmatpush1.msra.mxu0 0.0
        %5157 = vmatprep.subr.mxu0 0.0
        %5158 = vmatpush1.msra.mxu0 0.0
        %5159 = vmatprep.subr.mxu0 0.0
        %5160 = vmatpush1.msra.mxu0 0.0
        %5161 = vmatprep.subr.mxu0 0.0
        %5162 = vmatpush1.msra.mxu0 0.0
        %5163 = vmatprep.subr.mxu0 0.0
        %5164 = vmatpush1.msra.mxu0 0.0
        %5165 = vmatprep.subr.mxu0 0.0
        %5166 = vmatpush1.msra.mxu0 0.0
        %5167 = vmatprep.subr.mxu0 0.0
        %5168 = vmatpush1.msra.mxu0 0.0
        %5169 = vmatprep.subr.mxu0 0.0
        %5170 = vmatpush1.msra.mxu0 0.0
        %5171 = vmatprep.subr.mxu0 0.0
        %5172 = vmatpush1.msra.mxu0 0.0
        %5173 = vmatprep.subr.mxu0 0.0
        %5174 = vmatpush1.msra.mxu0 0.0
        %5175 = vmatprep.subr.mxu0 0.0
        %5176 = vmatpush1.msra.mxu0 0.0
        %5177 = vmatprep.subr.mxu0 0.0
        %5178 = vmatpush1.msra.mxu0 0.0
        %5179 = vmatprep.subr.mxu0 0.0
        %5180 = vmatpush1.msra.mxu0 0.0
        %5181 = vmatprep.subr.mxu0 0.0
        %5182 = vmatpush1.msra.mxu0 0.0
        %5183 = vmatprep.subr.mxu0 0.0
        %5184 = vmatpush1.msra.mxu0 0.0
        %5185 = vmatprep.subr.mxu0 0.0
        %5186 = vmatpush1.msra.mxu0 0.0
        %5187 = vmatprep.subr.mxu0 0.0
        %5188 = vmatpush1.msra.mxu0 0.0
        %5189 = vmatprep.subr.mxu0 0.0
        %5190 = vmatpush1.msra.mxu0 0.0
        %5191 = vmatprep.subr.mxu0 0.0
        %5192 = vmatpush1.msra.mxu0 0.0
        %5193 = vmatprep.subr.mxu0 0.0
        %5194 = vmatpush1.msra.mxu0 0.0
        %5195 = vmatprep.subr.mxu0 0.0
        %5196 = vmatpush1.msra.mxu0 0.0
        %5197 = vmatprep.subr.mxu0 0.0
        %5198 = vmatpush1.msra.mxu0 0.0
        %5199 = vmatprep.subr.mxu0 0.0
        %5200 = vmatpush1.msra.mxu0 0.0
        %5201 = vmatprep.subr.mxu0 0.0
        %5202 = vmatpush1.msra.mxu0 0.0
        %5203 = vmatprep.subr.mxu0 0.0
        %5204 = vmatpush1.msra.mxu0 0.0
        %5205 = vmatprep.subr.mxu0 0.0
        %5206 = vmatpush1.msra.mxu0 0.0
        %5207 = vmatprep.mubr.f32.mxu0 0.0
        %5208 = vmatmul.mubr.f32.gmra.mrb[0].mxu0 %v5070
        %v5209 = vpop.f32.mrb[0].mxu0
        %v5210 = vadd.f32 0.0, %v5209
        %v5211 = vpop.f32.mrb[0].mxu0
        %5212 = vdwg.mxu0
        %v5214 = vsel %vm448, %v5048, 0
        %5216 = vmatprep.subr.mxu0 %v5056
        %5217 = vmatpush1.msra.mxu0 %v5057
        %5218 = vmatprep.subr.mxu0 0.0
        %5219 = vmatpush1.msra.mxu0 0.0
        %5220 = vmatprep.subr.mxu0 0.0
        %5221 = vmatpush1.msra.mxu0 0.0
        %5222 = vmatprep.subr.mxu0 0.0
        %5223 = vmatpush1.msra.mxu0 0.0
        %5224 = vmatprep.subr.mxu0 0.0
        %5225 = vmatpush1.msra.mxu0 0.0
        %5226 = vmatprep.subr.mxu0 0.0
        %5227 = vmatpush1.msra.mxu0 0.0
        %5228 = vmatprep.subr.mxu0 0.0
        %5229 = vmatpush1.msra.mxu0 0.0
        %5230 = vmatprep.subr.mxu0 0.0
        %5231 = vmatpush1.msra.mxu0 0.0
        %5232 = vmatprep.subr.mxu0 0.0
        %5233 = vmatpush1.msra.mxu0 0.0
        %5234 = vmatprep.subr.mxu0 0.0
        %5235 = vmatpush1.msra.mxu0 0.0
        %5236 = vmatprep.subr.mxu0 0.0
        %5237 = vmatpush1.msra.mxu0 0.0
        %5238 = vmatprep.subr.mxu0 0.0
        %5239 = vmatpush1.msra.mxu0 0.0
        %5240 = vmatprep.subr.mxu0 0.0
        %5241 = vmatpush1.msra.mxu0 0.0
        %5242 = vmatprep.subr.mxu0 0.0
        %5243 = vmatpush1.msra.mxu0 0.0
        %5244 = vmatprep.subr.mxu0 0.0
        %5245 = vmatpush1.msra.mxu0 0.0
        %5246 = vmatprep.subr.mxu0 0.0
        %5247 = vmatpush1.msra.mxu0 0.0
        %5248 = vmatprep.subr.mxu0 0.0
        %5249 = vmatpush1.msra.mxu0 0.0
        %5250 = vmatprep.subr.mxu0 0.0
        %5251 = vmatpush1.msra.mxu0 0.0
        %5252 = vmatprep.subr.mxu0 0.0
        %5253 = vmatpush1.msra.mxu0 0.0
        %5254 = vmatprep.subr.mxu0 0.0
        %5255 = vmatpush1.msra.mxu0 0.0
        %5256 = vmatprep.subr.mxu0 0.0
        %5257 = vmatpush1.msra.mxu0 0.0
        %5258 = vmatprep.subr.mxu0 0.0
        %5259 = vmatpush1.msra.mxu0 0.0
        %5260 = vmatprep.subr.mxu0 0.0
        %5261 = vmatpush1.msra.mxu0 0.0
        %5262 = vmatprep.subr.mxu0 0.0
        %5263 = vmatpush1.msra.mxu0 0.0
        %5264 = vmatprep.subr.mxu0 0.0
        %5265 = vmatpush1.msra.mxu0 0.0
        %5266 = vmatprep.subr.mxu0 0.0
        %5267 = vmatpush1.msra.mxu0 0.0
        %5268 = vmatprep.subr.mxu0 0.0
        %5269 = vmatpush1.msra.mxu0 0.0
        %5270 = vmatprep.subr.mxu0 0.0
        %5271 = vmatpush1.msra.mxu0 0.0
        %5272 = vmatprep.subr.mxu0 0.0
        %5273 = vmatpush1.msra.mxu0 0.0
        %5274 = vmatprep.subr.mxu0 0.0
        %5275 = vmatpush1.msra.mxu0 0.0
        %5276 = vmatprep.subr.mxu0 0.0
        %5277 = vmatpush1.msra.mxu0 0.0
        %5278 = vmatprep.subr.mxu0 0.0
        %5279 = vmatpush1.msra.mxu0 0.0
        %5280 = vmatprep.mubr.f32.mxu0 0.0
        %5281 = vmatmul.mubr.f32.gmra.mrb[0].mxu0 %v5214
        %v5282 = vpop.f32.mrb[0].mxu0
        %v5283 = vadd.f32 %v5139, %v5282
        %v5284 = vpop.f32.mrb[0].mxu0
        %v5285 = vadd.f32 %v5141, %v5284
        %5286 = vdwg.mxu0
        %5287 = vmatprep.subr.mxu0 0.0
        %5288 = vmatpush1.msra.mxu0 %v5055
        %5289 = vmatprep.subr.mxu0 0.0
        %5290 = vmatpush1.msra.mxu0 0.0
        %5291 = vmatprep.subr.mxu0 0.0
        %5292 = vmatpush1.msra.mxu0 0.0
        %5293 = vmatprep.subr.mxu0 0.0
        %5294 = vmatpush1.msra.mxu0 0.0
        %5295 = vmatprep.subr.mxu0 0.0
        %5296 = vmatpush1.msra.mxu0 0.0
        %5297 = vmatprep.subr.mxu0 0.0
        %5298 = vmatpush1.msra.mxu0 0.0
        %5299 = vmatprep.subr.mxu0 0.0
        %5300 = vmatpush1.msra.mxu0 0.0
        %5301 = vmatprep.subr.mxu0 0.0
        %5302 = vmatpush1.msra.mxu0 0.0
        %5303 = vmatprep.subr.mxu0 0.0
        %5304 = vmatpush1.msra.mxu0 0.0
        %5305 = vmatprep.subr.mxu0 0.0
        %5306 = vmatpush1.msra.mxu0 0.0
        %5307 = vmatprep.subr.mxu0 0.0
        %5308 = vmatpush1.msra.mxu0 0.0
        %5309 = vmatprep.subr.mxu0 0.0
        %5310 = vmatpush1.msra.mxu0 0.0
        %5311 = vmatprep.subr.mxu0 0.0
        %5312 = vmatpush1.msra.mxu0 0.0
        %5313 = vmatprep.subr.mxu0 0.0
        %5314 = vmatpush1.msra.mxu0 0.0
        %5315 = vmatprep.subr.mxu0 0.0
        %5316 = vmatpush1.msra.mxu0 0.0
        %5317 = vmatprep.subr.mxu0 0.0
        %5318 = vmatpush1.msra.mxu0 0.0
        %5319 = vmatprep.subr.mxu0 0.0
        %5320 = vmatpush1.msra.mxu0 0.0
        %5321 = vmatprep.subr.mxu0 0.0
        %5322 = vmatpush1.msra.mxu0 0.0
        %5323 = vmatprep.subr.mxu0 0.0
        %5324 = vmatpush1.msra.mxu0 0.0
        %5325 = vmatprep.subr.mxu0 0.0
        %5326 = vmatpush1.msra.mxu0 0.0
        %5327 = vmatprep.subr.mxu0 0.0
        %5328 = vmatpush1.msra.mxu0 0.0
        %5329 = vmatprep.subr.mxu0 0.0
        %5330 = vmatpush1.msra.mxu0 0.0
        %5331 = vmatprep.subr.mxu0 0.0
        %5332 = vmatpush1.msra.mxu0 0.0
        %5333 = vmatprep.subr.mxu0 0.0
        %5334 = vmatpush1.msra.mxu0 0.0
        %5335 = vmatprep.subr.mxu0 0.0
        %5336 = vmatpush1.msra.mxu0 0.0
        %5337 = vmatprep.subr.mxu0 0.0
        %5338 = vmatpush1.msra.mxu0 0.0
        %5339 = vmatprep.subr.mxu0 0.0
        %5340 = vmatpush1.msra.mxu0 0.0
        %5341 = vmatprep.subr.mxu0 0.0
        %5342 = vmatpush1.msra.mxu0 0.0
        %5343 = vmatprep.subr.mxu0 0.0
        %5344 = vmatpush1.msra.mxu0 0.0
        %5345 = vmatprep.subr.mxu0 0.0
        %5346 = vmatpush1.msra.mxu0 0.0
        %5347 = vmatprep.subr.mxu0 0.0
        %5348 = vmatpush1.msra.mxu0 0.0
        %5349 = vmatprep.subr.mxu0 0.0
        %5350 = vmatpush1.msra.mxu0 0.0
        %5351 = vmatprep.mubr.f32.mxu0 0.0
        %5352 = vmatmul.mubr.f32.gmra.mrb[0].mxu0 %v5214
        %v5353 = vpop.f32.mrb[0].mxu0
        %v5354 = vadd.f32 %v5210, %v5353
        %v5355 = vpop.f32.mrb[0].mxu0
        %5356 = vdwg.mxu0
        %s5357 = scalar_lea.vmem %s2, 304
        %v5358 = vld [vmem:[%s5357] sm:$0xff]
        %5359 = vrot.lane.b32.xlu0 %v3314, 17
        %v5360 = vpop.permute.xlu0 %5359
        %5361 = vrot.lane.b32.xlu0 %v3315, 17
        %v5362 = vpop.permute.xlu0 %5361
        %5363 = vrot.lane.b32.xlu0 %v3316, 17
        %v5364 = vpop.permute.xlu0 %5363
        %v5365 = vsel %vm745, %v5362, %v5364
        %v5366 = vsel %vm745, %v5360, %v5362
        %v5367 = vsel %vm745, %v5364, %v5360
        %v5369 = vsel %vm448, %v5358, 0
        %5371 = vmatprep.subr.mxu0 %v5366
        %5372 = vmatpush1.msra.mxu0 %v5367
        %5373 = vmatprep.subr.mxu0 0.0
        %5374 = vmatpush1.msra.mxu0 0.0
        %5375 = vmatprep.subr.mxu0 0.0
        %5376 = vmatpush1.msra.mxu0 0.0
        %5377 = vmatprep.subr.mxu0 0.0
        %5378 = vmatpush1.msra.mxu0 0.0
        %5379 = vmatprep.subr.mxu0 0.0
        %5380 = vmatpush1.msra.mxu0 0.0
        %5381 = vmatprep.subr.mxu0 0.0
        %5382 = vmatpush1.msra.mxu0 0.0
        %5383 = vmatprep.subr.mxu0 0.0
        %5384 = vmatpush1.msra.mxu0 0.0
        %5385 = vmatprep.subr.mxu0 0.0
        %5386 = vmatpush1.msra.mxu0 0.0
        %5387 = vmatprep.subr.mxu0 0.0
        %5388 = vmatpush1.msra.mxu0 0.0
        %5389 = vmatprep.subr.mxu0 0.0
        %5390 = vmatpush1.msra.mxu0 0.0
        %5391 = vmatprep.subr.mxu0 0.0
        %5392 = vmatpush1.msra.mxu0 0.0
        %5393 = vmatprep.subr.mxu0 0.0
        %5394 = vmatpush1.msra.mxu0 0.0
        %5395 = vmatprep.subr.mxu0 0.0
        %5396 = vmatpush1.msra.mxu0 0.0
        %5397 = vmatprep.subr.mxu0 0.0
        %5398 = vmatpush1.msra.mxu0 0.0
        %5399 = vmatprep.subr.mxu0 0.0
        %5400 = vmatpush1.msra.mxu0 0.0
        %5401 = vmatprep.subr.mxu0 0.0
        %5402 = vmatpush1.msra.mxu0 0.0
        %5403 = vmatprep.subr.mxu0 0.0
        %5404 = vmatpush1.msra.mxu0 0.0
        %5405 = vmatprep.subr.mxu0 0.0
        %5406 = vmatpush1.msra.mxu0 0.0
        %5407 = vmatprep.subr.mxu0 0.0
        %5408 = vmatpush1.msra.mxu0 0.0
        %5409 = vmatprep.subr.mxu0 0.0
        %5410 = vmatpush1.msra.mxu0 0.0
        %5411 = vmatprep.subr.mxu0 0.0
        %5412 = vmatpush1.msra.mxu0 0.0
        %5413 = vmatprep.subr.mxu0 0.0
        %5414 = vmatpush1.msra.mxu0 0.0
        %5415 = vmatprep.subr.mxu0 0.0
        %5416 = vmatpush1.msra.mxu0 0.0
        %5417 = vmatprep.subr.mxu0 0.0
        %5418 = vmatpush1.msra.mxu0 0.0
        %5419 = vmatprep.subr.mxu0 0.0
        %5420 = vmatpush1.msra.mxu0 0.0
        %5421 = vmatprep.subr.mxu0 0.0
        %5422 = vmatpush1.msra.mxu0 0.0
        %5423 = vmatprep.subr.mxu0 0.0
        %5424 = vmatpush1.msra.mxu0 0.0
        %5425 = vmatprep.subr.mxu0 0.0
        %5426 = vmatpush1.msra.mxu0 0.0
        %5427 = vmatprep.subr.mxu0 0.0
        %5428 = vmatpush1.msra.mxu0 0.0
        %5429 = vmatprep.subr.mxu0 0.0
        %5430 = vmatpush1.msra.mxu0 0.0
        %5431 = vmatprep.subr.mxu0 0.0
        %5432 = vmatpush1.msra.mxu0 0.0
        %5433 = vmatprep.subr.mxu0 0.0
        %5434 = vmatpush1.msra.mxu0 0.0
        %5435 = vmatprep.mubr.f32.mxu0 0.0
        %5436 = vmatmul.mubr.f32.gmra.mrb[0].mxu0 %v5369
        %v5437 = vpop.f32.mrb[0].mxu0
        %v5438 = vadd.f32 0.0, %v5437
        %v5439 = vpop.f32.mrb[0].mxu0
        %v5440 = vadd.f32 0.0, %v5439
        %5441 = vdwg.mxu0
        %5442 = vmatprep.subr.mxu0 0.0
        %5443 = vmatpush1.msra.mxu0 %v5365
        %5444 = vmatprep.subr.mxu0 0.0
        %5445 = vmatpush1.msra.mxu0 0.0
        %5446 = vmatprep.subr.mxu0 0.0
        %5447 = vmatpush1.msra.mxu0 0.0
        %5448 = vmatprep.subr.mxu0 0.0
        %5449 = vmatpush1.msra.mxu0 0.0
        %5450 = vmatprep.subr.mxu0 0.0
        %5451 = vmatpush1.msra.mxu0 0.0
        %5452 = vmatprep.subr.mxu0 0.0
        %5453 = vmatpush1.msra.mxu0 0.0
        %5454 = vmatprep.subr.mxu0 0.0
        %5455 = vmatpush1.msra.mxu0 0.0
        %5456 = vmatprep.subr.mxu0 0.0
        %5457 = vmatpush1.msra.mxu0 0.0
        %5458 = vmatprep.subr.mxu0 0.0
        %5459 = vmatpush1.msra.mxu0 0.0
        %5460 = vmatprep.subr.mxu0 0.0
        %5461 = vmatpush1.msra.mxu0 0.0
        %5462 = vmatprep.subr.mxu0 0.0
        %5463 = vmatpush1.msra.mxu0 0.0
        %5464 = vmatprep.subr.mxu0 0.0
        %5465 = vmatpush1.msra.mxu0 0.0
        %5466 = vmatprep.subr.mxu0 0.0
        %5467 = vmatpush1.msra.mxu0 0.0
        %5468 = vmatprep.subr.mxu0 0.0
        %5469 = vmatpush1.msra.mxu0 0.0
        %5470 = vmatprep.subr.mxu0 0.0
        %5471 = vmatpush1.msra.mxu0 0.0
        %5472 = vmatprep.subr.mxu0 0.0
        %5473 = vmatpush1.msra.mxu0 0.0
        %5474 = vmatprep.subr.mxu0 0.0
        %5475 = vmatpush1.msra.mxu0 0.0
        %5476 = vmatprep.subr.mxu0 0.0
        %5477 = vmatpush1.msra.mxu0 0.0
        %5478 = vmatprep.subr.mxu0 0.0
        %5479 = vmatpush1.msra.mxu0 0.0
        %5480 = vmatprep.subr.mxu0 0.0
        %5481 = vmatpush1.msra.mxu0 0.0
        %5482 = vmatprep.subr.mxu0 0.0
        %5483 = vmatpush1.msra.mxu0 0.0
        %5484 = vmatprep.subr.mxu0 0.0
        %5485 = vmatpush1.msra.mxu0 0.0
        %5486 = vmatprep.subr.mxu0 0.0
        %5487 = vmatpush1.msra.mxu0 0.0
        %5488 = vmatprep.subr.mxu0 0.0
        %5489 = vmatpush1.msra.mxu0 0.0
        %5490 = vmatprep.subr.mxu0 0.0
        %5491 = vmatpush1.msra.mxu0 0.0
        %5492 = vmatprep.subr.mxu0 0.0
        %5493 = vmatpush1.msra.mxu0 0.0
        %5494 = vmatprep.subr.mxu0 0.0
        %5495 = vmatpush1.msra.mxu0 0.0
        %5496 = vmatprep.subr.mxu0 0.0
        %5497 = vmatpush1.msra.mxu0 0.0
        %5498 = vmatprep.subr.mxu0 0.0
        %5499 = vmatpush1.msra.mxu0 0.0
        %5500 = vmatprep.subr.mxu0 0.0
        %5501 = vmatpush1.msra.mxu0 0.0
        %5502 = vmatprep.subr.mxu0 0.0
        %5503 = vmatpush1.msra.mxu0 0.0
        %5504 = vmatprep.subr.mxu0 0.0
        %5505 = vmatpush1.msra.mxu0 0.0
        %5506 = vmatprep.mubr.f32.mxu0 0.0
        %5507 = vmatmul.mubr.f32.gmra.mrb[0].mxu0 %v5369
        %v5508 = vpop.f32.mrb[0].mxu0
        %v5509 = vadd.f32 0.0, %v5508
        %v5510 = vpop.f32.mrb[0].mxu0
        %5511 = vdwg.mxu0
        %v5512 = vadd.f32 %v5283, %v5438
        %v5513 = vadd.f32 %v5285, %v5440
        %v5514 = vadd.f32 %v5354, %v5509
        %s5515 = scalar_lea.vmem %s2, 312
        %v5516 = vld [vmem:[%s5515] sm:$0xff]
        %5517 = vrot.lane.b32.xlu0 %v3314, 1
        %v5518 = vpop.permute.xlu0 %5517
        %5519 = vrot.lane.b32.xlu0 %v3315, 1
        %v5520 = vpop.permute.xlu0 %5519
        %5521 = vrot.lane.b32.xlu0 %v3316, 1
        %v5522 = vpop.permute.xlu0 %5521
        %v5523 = vsel %vm904, %v5520, %v5522
        %v5524 = vsel %vm904, %v5518, %v5520
        %v5525 = vsel %vm904, %v5522, %v5518
        %v5527 = vsel %vm448, %v5516, 0
        %5529 = vmatprep.subr.mxu0 %v5524
        %5530 = vmatpush1.msra.mxu0 %v5525
        %5531 = vmatprep.subr.mxu0 0.0
        %5532 = vmatpush1.msra.mxu0 0.0
        %5533 = vmatprep.subr.mxu0 0.0
        %5534 = vmatpush1.msra.mxu0 0.0
        %5535 = vmatprep.subr.mxu0 0.0
        %5536 = vmatpush1.msra.mxu0 0.0
        %5537 = vmatprep.subr.mxu0 0.0
        %5538 = vmatpush1.msra.mxu0 0.0
        %5539 = vmatprep.subr.mxu0 0.0
        %5540 = vmatpush1.msra.mxu0 0.0
        %5541 = vmatprep.subr.mxu0 0.0
        %5542 = vmatpush1.msra.mxu0 0.0
        %5543 = vmatprep.subr.mxu0 0.0
        %5544 = vmatpush1.msra.mxu0 0.0
        %5545 = vmatprep.subr.mxu0 0.0
        %5546 = vmatpush1.msra.mxu0 0.0
        %5547 = vmatprep.subr.mxu0 0.0
        %5548 = vmatpush1.msra.mxu0 0.0
        %5549 = vmatprep.subr.mxu0 0.0
        %5550 = vmatpush1.msra.mxu0 0.0
        %5551 = vmatprep.subr.mxu0 0.0
        %5552 = vmatpush1.msra.mxu0 0.0
        %5553 = vmatprep.subr.mxu0 0.0
        %5554 = vmatpush1.msra.mxu0 0.0
        %5555 = vmatprep.subr.mxu0 0.0
        %5556 = vmatpush1.msra.mxu0 0.0
        %5557 = vmatprep.subr.mxu0 0.0
        %5558 = vmatpush1.msra.mxu0 0.0
        %5559 = vmatprep.subr.mxu0 0.0
        %5560 = vmatpush1.msra.mxu0 0.0
        %5561 = vmatprep.subr.mxu0 0.0
        %5562 = vmatpush1.msra.mxu0 0.0
        %5563 = vmatprep.subr.mxu0 0.0
        %5564 = vmatpush1.msra.mxu0 0.0
        %5565 = vmatprep.subr.mxu0 0.0
        %5566 = vmatpush1.msra.mxu0 0.0
        %5567 = vmatprep.subr.mxu0 0.0
        %5568 = vmatpush1.msra.mxu0 0.0
        %5569 = vmatprep.subr.mxu0 0.0
        %5570 = vmatpush1.msra.mxu0 0.0
        %5571 = vmatprep.subr.mxu0 0.0
        %5572 = vmatpush1.msra.mxu0 0.0
        %5573 = vmatprep.subr.mxu0 0.0
        %5574 = vmatpush1.msra.mxu0 0.0
        %5575 = vmatprep.subr.mxu0 0.0
        %5576 = vmatpush1.msra.mxu0 0.0
        %5577 = vmatprep.subr.mxu0 0.0
        %5578 = vmatpush1.msra.mxu0 0.0
        %5579 = vmatprep.subr.mxu0 0.0
        %5580 = vmatpush1.msra.mxu0 0.0
        %5581 = vmatprep.subr.mxu0 0.0
        %5582 = vmatpush1.msra.mxu0 0.0
        %5583 = vmatprep.subr.mxu0 0.0
        %5584 = vmatpush1.msra.mxu0 0.0
        %5585 = vmatprep.subr.mxu0 0.0
        %5586 = vmatpush1.msra.mxu0 0.0
        %5587 = vmatprep.subr.mxu0 0.0
        %5588 = vmatpush1.msra.mxu0 0.0
        %5589 = vmatprep.subr.mxu0 0.0
        %5590 = vmatpush1.msra.mxu0 0.0
        %5591 = vmatprep.subr.mxu0 0.0
        %5592 = vmatpush1.msra.mxu0 0.0
        %5593 = vmatprep.mubr.f32.mxu0 0.0
        %5594 = vmatmul.mubr.f32.gmra.mrb[0].mxu0 %v5527
        %v5595 = vpop.f32.mrb[0].mxu0
        %v5596 = vadd.f32 0.0, %v5595
        %v5597 = vpop.f32.mrb[0].mxu0
        %v5598 = vadd.f32 0.0, %v5597
        %5599 = vdwg.mxu0
        %5600 = vmatprep.subr.mxu0 0.0
        %5601 = vmatpush1.msra.mxu0 %v5523
        %5602 = vmatprep.subr.mxu0 0.0
        %5603 = vmatpush1.msra.mxu0 0.0
        %5604 = vmatprep.subr.mxu0 0.0
        %5605 = vmatpush1.msra.mxu0 0.0
        %5606 = vmatprep.subr.mxu0 0.0
        %5607 = vmatpush1.msra.mxu0 0.0
        %5608 = vmatprep.subr.mxu0 0.0
        %5609 = vmatpush1.msra.mxu0 0.0
        %5610 = vmatprep.subr.mxu0 0.0
        %5611 = vmatpush1.msra.mxu0 0.0
        %5612 = vmatprep.subr.mxu0 0.0
        %5613 = vmatpush1.msra.mxu0 0.0
        %5614 = vmatprep.subr.mxu0 0.0
        %5615 = vmatpush1.msra.mxu0 0.0
        %5616 = vmatprep.subr.mxu0 0.0
        %5617 = vmatpush1.msra.mxu0 0.0
        %5618 = vmatprep.subr.mxu0 0.0
        %5619 = vmatpush1.msra.mxu0 0.0
        %5620 = vmatprep.subr.mxu0 0.0
        %5621 = vmatpush1.msra.mxu0 0.0
        %5622 = vmatprep.subr.mxu0 0.0
        %5623 = vmatpush1.msra.mxu0 0.0
        %5624 = vmatprep.subr.mxu0 0.0
        %5625 = vmatpush1.msra.mxu0 0.0
        %5626 = vmatprep.subr.mxu0 0.0
        %5627 = vmatpush1.msra.mxu0 0.0
        %5628 = vmatprep.subr.mxu0 0.0
        %5629 = vmatpush1.msra.mxu0 0.0
        %5630 = vmatprep.subr.mxu0 0.0
        %5631 = vmatpush1.msra.mxu0 0.0
        %5632 = vmatprep.subr.mxu0 0.0
        %5633 = vmatpush1.msra.mxu0 0.0
        %5634 = vmatprep.subr.mxu0 0.0
        %5635 = vmatpush1.msra.mxu0 0.0
        %5636 = vmatprep.subr.mxu0 0.0
        %5637 = vmatpush1.msra.mxu0 0.0
        %5638 = vmatprep.subr.mxu0 0.0
        %5639 = vmatpush1.msra.mxu0 0.0
        %5640 = vmatprep.subr.mxu0 0.0
        %5641 = vmatpush1.msra.mxu0 0.0
        %5642 = vmatprep.subr.mxu0 0.0
        %5643 = vmatpush1.msra.mxu0 0.0
        %5644 = vmatprep.subr.mxu0 0.0
        %5645 = vmatpush1.msra.mxu0 0.0
        %5646 = vmatprep.subr.mxu0 0.0
        %5647 = vmatpush1.msra.mxu0 0.0
        %5648 = vmatprep.subr.mxu0 0.0
        %5649 = vmatpush1.msra.mxu0 0.0
        %5650 = vmatprep.subr.mxu0 0.0
        %5651 = vmatpush1.msra.mxu0 0.0
        %5652 = vmatprep.subr.mxu0 0.0
        %5653 = vmatpush1.msra.mxu0 0.0
        %5654 = vmatprep.subr.mxu0 0.0
        %5655 = vmatpush1.msra.mxu0 0.0
        %5656 = vmatprep.subr.mxu0 0.0
        %5657 = vmatpush1.msra.mxu0 0.0
        %5658 = vmatprep.subr.mxu0 0.0
        %5659 = vmatpush1.msra.mxu0 0.0
        %5660 = vmatprep.subr.mxu0 0.0
        %5661 = vmatpush1.msra.mxu0 0.0
        %5662 = vmatprep.subr.mxu0 0.0
        %5663 = vmatpush1.msra.mxu0 0.0
        %5664 = vmatprep.mubr.f32.mxu0 0.0
        %5665 = vmatmul.mubr.f32.gmra.mrb[0].mxu0 %v5527
        %v5666 = vpop.f32.mrb[0].mxu0
        %v5667 = vadd.f32 0.0, %v5666
        %v5668 = vpop.f32.mrb[0].mxu0
        %5669 = vdwg.mxu0
        %v5670 = vadd.f32 %v5512, %v5596
        %v5671 = vadd.f32 %v5513, %v5598
        %v5672 = vadd.f32 %v5514, %v5667
        %s5673 = scalar_lea.vmem %s2, 320
        %v5674 = vld [vmem:[%s5673] sm:$0xff]
        %v5676 = vsel %vm448, %v5674, 0
        %5678 = vmatprep.subr.mxu0 %v3315
        %5679 = vmatpush1.msra.mxu0 %v3314
        %5680 = vmatprep.subr.mxu0 0.0
        %5681 = vmatpush1.msra.mxu0 0.0
        %5682 = vmatprep.subr.mxu0 0.0
        %5683 = vmatpush1.msra.mxu0 0.0
        %5684 = vmatprep.subr.mxu0 0.0
        %5685 = vmatpush1.msra.mxu0 0.0
        %5686 = vmatprep.subr.mxu0 0.0
        %5687 = vmatpush1.msra.mxu0 0.0
        %5688 = vmatprep.subr.mxu0 0.0
        %5689 = vmatpush1.msra.mxu0 0.0
        %5690 = vmatprep.subr.mxu0 0.0
        %5691 = vmatpush1.msra.mxu0 0.0
        %5692 = vmatprep.subr.mxu0 0.0
        %5693 = vmatpush1.msra.mxu0 0.0
        %5694 = vmatprep.subr.mxu0 0.0
        %5695 = vmatpush1.msra.mxu0 0.0
        %5696 = vmatprep.subr.mxu0 0.0
        %5697 = vmatpush1.msra.mxu0 0.0
        %5698 = vmatprep.subr.mxu0 0.0
        %5699 = vmatpush1.msra.mxu0 0.0
        %5700 = vmatprep.subr.mxu0 0.0
        %5701 = vmatpush1.msra.mxu0 0.0
        %5702 = vmatprep.subr.mxu0 0.0
        %5703 = vmatpush1.msra.mxu0 0.0
        %5704 = vmatprep.subr.mxu0 0.0
        %5705 = vmatpush1.msra.mxu0 0.0
        %5706 = vmatprep.subr.mxu0 0.0
        %5707 = vmatpush1.msra.mxu0 0.0
        %5708 = vmatprep.subr.mxu0 0.0
        %5709 = vmatpush1.msra.mxu0 0.0
        %5710 = vmatprep.subr.mxu0 0.0
        %5711 = vmatpush1.msra.mxu0 0.0
        %5712 = vmatprep.subr.mxu0 0.0
        %5713 = vmatpush1.msra.mxu0 0.0
        %5714 = vmatprep.subr.mxu0 0.0
        %5715 = vmatpush1.msra.mxu0 0.0
        %5716 = vmatprep.subr.mxu0 0.0
        %5717 = vmatpush1.msra.mxu0 0.0
        %5718 = vmatprep.subr.mxu0 0.0
        %5719 = vmatpush1.msra.mxu0 0.0
        %5720 = vmatprep.subr.mxu0 0.0
        %5721 = vmatpush1.msra.mxu0 0.0
        %5722 = vmatprep.subr.mxu0 0.0
        %5723 = vmatpush1.msra.mxu0 0.0
        %5724 = vmatprep.subr.mxu0 0.0
        %5725 = vmatpush1.msra.mxu0 0.0
        %5726 = vmatprep.subr.mxu0 0.0
        %5727 = vmatpush1.msra.mxu0 0.0
        %5728 = vmatprep.subr.mxu0 0.0
        %5729 = vmatpush1.msra.mxu0 0.0
        %5730 = vmatprep.subr.mxu0 0.0
        %5731 = vmatpush1.msra.mxu0 0.0
        %5732 = vmatprep.subr.mxu0 0.0
        %5733 = vmatpush1.msra.mxu0 0.0
        %5734 = vmatprep.subr.mxu0 0.0
        %5735 = vmatpush1.msra.mxu0 0.0
        %5736 = vmatprep.subr.mxu0 0.0
        %5737 = vmatpush1.msra.mxu0 0.0
        %5738 = vmatprep.subr.mxu0 0.0
        %5739 = vmatpush1.msra.mxu0 0.0
        %5740 = vmatprep.subr.mxu0 0.0
        %5741 = vmatpush1.msra.mxu0 0.0
        %5742 = vmatprep.mubr.f32.mxu0 0.0
        %5743 = vmatmul.mubr.f32.gmra.mrb[0].mxu0 %v5676
        %v5744 = vpop.f32.mrb[0].mxu0
        %v5745 = vadd.f32 0.0, %v5744
        %v5746 = vpop.f32.mrb[0].mxu0
        %v5747 = vadd.f32 0.0, %v5746
        %5748 = vdwg.mxu0
        %5749 = vmatprep.subr.mxu0 0.0
        %5750 = vmatpush1.msra.mxu0 %v3316
        %5751 = vmatprep.subr.mxu0 0.0
        %5752 = vmatpush1.msra.mxu0 0.0
        %5753 = vmatprep.subr.mxu0 0.0
        %5754 = vmatpush1.msra.mxu0 0.0
        %5755 = vmatprep.subr.mxu0 0.0
        %5756 = vmatpush1.msra.mxu0 0.0
        %5757 = vmatprep.subr.mxu0 0.0
        %5758 = vmatpush1.msra.mxu0 0.0
        %5759 = vmatprep.subr.mxu0 0.0
        %5760 = vmatpush1.msra.mxu0 0.0
        %5761 = vmatprep.subr.mxu0 0.0
        %5762 = vmatpush1.msra.mxu0 0.0
        %5763 = vmatprep.subr.mxu0 0.0
        %5764 = vmatpush1.msra.mxu0 0.0
        %5765 = vmatprep.subr.mxu0 0.0
        %5766 = vmatpush1.msra.mxu0 0.0
        %5767 = vmatprep.subr.mxu0 0.0
        %5768 = vmatpush1.msra.mxu0 0.0
        %5769 = vmatprep.subr.mxu0 0.0
        %5770 = vmatpush1.msra.mxu0 0.0
        %5771 = vmatprep.subr.mxu0 0.0
        %5772 = vmatpush1.msra.mxu0 0.0
        %5773 = vmatprep.subr.mxu0 0.0
        %5774 = vmatpush1.msra.mxu0 0.0
        %5775 = vmatprep.subr.mxu0 0.0
        %5776 = vmatpush1.msra.mxu0 0.0
        %5777 = vmatprep.subr.mxu0 0.0
        %5778 = vmatpush1.msra.mxu0 0.0
        %5779 = vmatprep.subr.mxu0 0.0
        %5780 = vmatpush1.msra.mxu0 0.0
        %5781 = vmatprep.subr.mxu0 0.0
        %5782 = vmatpush1.msra.mxu0 0.0
        %5783 = vmatprep.subr.mxu0 0.0
        %5784 = vmatpush1.msra.mxu0 0.0
        %5785 = vmatprep.subr.mxu0 0.0
        %5786 = vmatpush1.msra.mxu0 0.0
        %5787 = vmatprep.subr.mxu0 0.0
        %5788 = vmatpush1.msra.mxu0 0.0
        %5789 = vmatprep.subr.mxu0 0.0
        %5790 = vmatpush1.msra.mxu0 0.0
        %5791 = vmatprep.subr.mxu0 0.0
        %5792 = vmatpush1.msra.mxu0 0.0
        %5793 = vmatprep.subr.mxu0 0.0
        %5794 = vmatpush1.msra.mxu0 0.0
        %5795 = vmatprep.subr.mxu0 0.0
        %5796 = vmatpush1.msra.mxu0 0.0
        %5797 = vmatprep.subr.mxu0 0.0
        %5798 = vmatpush1.msra.mxu0 0.0
        %5799 = vmatprep.subr.mxu0 0.0
        %5800 = vmatpush1.msra.mxu0 0.0
        %5801 = vmatprep.subr.mxu0 0.0
        %5802 = vmatpush1.msra.mxu0 0.0
        %5803 = vmatprep.subr.mxu0 0.0
        %5804 = vmatpush1.msra.mxu0 0.0
        %5805 = vmatprep.subr.mxu0 0.0
        %5806 = vmatpush1.msra.mxu0 0.0
        %5807 = vmatprep.subr.mxu0 0.0
        %5808 = vmatpush1.msra.mxu0 0.0
        %5809 = vmatprep.subr.mxu0 0.0
        %5810 = vmatpush1.msra.mxu0 0.0
        %5811 = vmatprep.subr.mxu0 0.0
        %5812 = vmatpush1.msra.mxu0 0.0
        %5813 = vmatprep.mubr.f32.mxu0 0.0
        %5814 = vmatmul.mubr.f32.gmra.mrb[0].mxu0 %v5676
        %v5815 = vpop.f32.mrb[0].mxu0
        %v5816 = vadd.f32 0.0, %v5815
        %v5817 = vpop.f32.mrb[0].mxu0
        %5818 = vdwg.mxu0
        %v5819 = vadd.f32 %v5670, %v5745
        %v5820 = vadd.f32 %v5671, %v5747
        %v5821 = vadd.f32 %v5672, %v5816
        %s5822 = scalar_lea.vmem %s2, 328
        %v5823 = vld [vmem:[%s5822] sm:$0xff]
        %5824 = vrot.lane.b32.xlu0 %v3314, 127
        %v5825 = vpop.permute.xlu0 %5824
        %5826 = vrot.lane.b32.xlu0 %v3315, 127
        %v5827 = vpop.permute.xlu0 %5826
        %5828 = vrot.lane.b32.xlu0 %v3316, 127
        %v5829 = vpop.permute.xlu0 %5828
        %v5830 = vsel %vm1212, %v5827, %v5829
        %v5831 = vsel %vm1212, %v5825, %v5827
        %v5832 = vsel %vm1212, %v5829, %v5825
        %v5834 = vsel %vm448, %v5823, 0
        %5836 = vmatprep.subr.mxu0 %v5830
        %5837 = vmatpush1.msra.mxu0 %v5831
        %5838 = vmatprep.subr.mxu0 0.0
        %5839 = vmatpush1.msra.mxu0 0.0
        %5840 = vmatprep.subr.mxu0 0.0
        %5841 = vmatpush1.msra.mxu0 0.0
        %5842 = vmatprep.subr.mxu0 0.0
        %5843 = vmatpush1.msra.mxu0 0.0
        %5844 = vmatprep.subr.mxu0 0.0
        %5845 = vmatpush1.msra.mxu0 0.0
        %5846 = vmatprep.subr.mxu0 0.0
        %5847 = vmatpush1.msra.mxu0 0.0
        %5848 = vmatprep.subr.mxu0 0.0
        %5849 = vmatpush1.msra.mxu0 0.0
        %5850 = vmatprep.subr.mxu0 0.0
        %5851 = vmatpush1.msra.mxu0 0.0
        %5852 = vmatprep.subr.mxu0 0.0
        %5853 = vmatpush1.msra.mxu0 0.0
        %5854 = vmatprep.subr.mxu0 0.0
        %5855 = vmatpush1.msra.mxu0 0.0
        %5856 = vmatprep.subr.mxu0 0.0
        %5857 = vmatpush1.msra.mxu0 0.0
        %5858 = vmatprep.subr.mxu0 0.0
        %5859 = vmatpush1.msra.mxu0 0.0
        %5860 = vmatprep.subr.mxu0 0.0
        %5861 = vmatpush1.msra.mxu0 0.0
        %5862 = vmatprep.subr.mxu0 0.0
        %5863 = vmatpush1.msra.mxu0 0.0
        %5864 = vmatprep.subr.mxu0 0.0
        %5865 = vmatpush1.msra.mxu0 0.0
        %5866 = vmatprep.subr.mxu0 0.0
        %5867 = vmatpush1.msra.mxu0 0.0
        %5868 = vmatprep.subr.mxu0 0.0
        %5869 = vmatpush1.msra.mxu0 0.0
        %5870 = vmatprep.subr.mxu0 0.0
        %5871 = vmatpush1.msra.mxu0 0.0
        %5872 = vmatprep.subr.mxu0 0.0
        %5873 = vmatpush1.msra.mxu0 0.0
        %5874 = vmatprep.subr.mxu0 0.0
        %5875 = vmatpush1.msra.mxu0 0.0
        %5876 = vmatprep.subr.mxu0 0.0
        %5877 = vmatpush1.msra.mxu0 0.0
        %5878 = vmatprep.subr.mxu0 0.0
        %5879 = vmatpush1.msra.mxu0 0.0
        %5880 = vmatprep.subr.mxu0 0.0
        %5881 = vmatpush1.msra.mxu0 0.0
        %5882 = vmatprep.subr.mxu0 0.0
        %5883 = vmatpush1.msra.mxu0 0.0
        %5884 = vmatprep.subr.mxu0 0.0
        %5885 = vmatpush1.msra.mxu0 0.0
        %5886 = vmatprep.subr.mxu0 0.0
        %5887 = vmatpush1.msra.mxu0 0.0
        %5888 = vmatprep.subr.mxu0 0.0
        %5889 = vmatpush1.msra.mxu0 0.0
        %5890 = vmatprep.subr.mxu0 0.0
        %5891 = vmatpush1.msra.mxu0 0.0
        %5892 = vmatprep.subr.mxu0 0.0
        %5893 = vmatpush1.msra.mxu0 0.0
        %5894 = vmatprep.subr.mxu0 0.0
        %5895 = vmatpush1.msra.mxu0 0.0
        %5896 = vmatprep.subr.mxu0 0.0
        %5897 = vmatpush1.msra.mxu0 0.0
        %5898 = vmatprep.subr.mxu0 0.0
        %5899 = vmatpush1.msra.mxu0 0.0
        %5900 = vmatprep.mubr.f32.mxu0 0.0
        %5901 = vmatmul.mubr.f32.gmra.mrb[0].mxu0 %v5834
        %v5902 = vpop.f32.mrb[0].mxu0
        %v5903 = vadd.f32 0.0, %v5902
        %v5904 = vpop.f32.mrb[0].mxu0
        %v5905 = vadd.f32 0.0, %v5904
        %5906 = vdwg.mxu0
        %5907 = vmatprep.subr.mxu0 0.0
        %5908 = vmatpush1.msra.mxu0 %v5832
        %5909 = vmatprep.subr.mxu0 0.0
        %5910 = vmatpush1.msra.mxu0 0.0
        %5911 = vmatprep.subr.mxu0 0.0
        %5912 = vmatpush1.msra.mxu0 0.0
        %5913 = vmatprep.subr.mxu0 0.0
        %5914 = vmatpush1.msra.mxu0 0.0
        %5915 = vmatprep.subr.mxu0 0.0
        %5916 = vmatpush1.msra.mxu0 0.0
        %5917 = vmatprep.subr.mxu0 0.0
        %5918 = vmatpush1.msra.mxu0 0.0
        %5919 = vmatprep.subr.mxu0 0.0
        %5920 = vmatpush1.msra.mxu0 0.0
        %5921 = vmatprep.subr.mxu0 0.0
        %5922 = vmatpush1.msra.mxu0 0.0
        %5923 = vmatprep.subr.mxu0 0.0
        %5924 = vmatpush1.msra.mxu0 0.0
        %5925 = vmatprep.subr.mxu0 0.0
        %5926 = vmatpush1.msra.mxu0 0.0
        %5927 = vmatprep.subr.mxu0 0.0
        %5928 = vmatpush1.msra.mxu0 0.0
        %5929 = vmatprep.subr.mxu0 0.0
        %5930 = vmatpush1.msra.mxu0 0.0
        %5931 = vmatprep.subr.mxu0 0.0
        %5932 = vmatpush1.msra.mxu0 0.0
        %5933 = vmatprep.subr.mxu0 0.0
        %5934 = vmatpush1.msra.mxu0 0.0
        %5935 = vmatprep.subr.mxu0 0.0
        %5936 = vmatpush1.msra.mxu0 0.0
        %5937 = vmatprep.subr.mxu0 0.0
        %5938 = vmatpush1.msra.mxu0 0.0
        %5939 = vmatprep.subr.mxu0 0.0
        %5940 = vmatpush1.msra.mxu0 0.0
        %5941 = vmatprep.subr.mxu0 0.0
        %5942 = vmatpush1.msra.mxu0 0.0
        %5943 = vmatprep.subr.mxu0 0.0
        %5944 = vmatpush1.msra.mxu0 0.0
        %5945 = vmatprep.subr.mxu0 0.0
        %5946 = vmatpush1.msra.mxu0 0.0
        %5947 = vmatprep.subr.mxu0 0.0
        %5948 = vmatpush1.msra.mxu0 0.0
        %5949 = vmatprep.subr.mxu0 0.0
        %5950 = vmatpush1.msra.mxu0 0.0
        %5951 = vmatprep.subr.mxu0 0.0
        %5952 = vmatpush1.msra.mxu0 0.0
        %5953 = vmatprep.subr.mxu0 0.0
        %5954 = vmatpush1.msra.mxu0 0.0
        %5955 = vmatprep.subr.mxu0 0.0
        %5956 = vmatpush1.msra.mxu0 0.0
        %5957 = vmatprep.subr.mxu0 0.0
        %5958 = vmatpush1.msra.mxu0 0.0
        %5959 = vmatprep.subr.mxu0 0.0
        %5960 = vmatpush1.msra.mxu0 0.0
        %5961 = vmatprep.subr.mxu0 0.0
        %5962 = vmatpush1.msra.mxu0 0.0
        %5963 = vmatprep.subr.mxu0 0.0
        %5964 = vmatpush1.msra.mxu0 0.0
        %5965 = vmatprep.subr.mxu0 0.0
        %5966 = vmatpush1.msra.mxu0 0.0
        %5967 = vmatprep.subr.mxu0 0.0
        %5968 = vmatpush1.msra.mxu0 0.0
        %5969 = vmatprep.subr.mxu0 0.0
        %5970 = vmatpush1.msra.mxu0 0.0
        %5971 = vmatprep.mubr.f32.mxu0 0.0
        %5972 = vmatmul.mubr.f32.gmra.mrb[0].mxu0 %v5834
        %v5973 = vpop.f32.mrb[0].mxu0
        %v5974 = vadd.f32 0.0, %v5973
        %v5975 = vpop.f32.mrb[0].mxu0
        %5976 = vdwg.mxu0
        %v5977 = vadd.f32 %v5819, %v5903
        %v5978 = vadd.f32 %v5820, %v5905
        %v5979 = vadd.f32 %v5821, %v5974
        %s5980 = scalar_lea.vmem %s2, 336
        %v5981 = vld [vmem:[%s5980] sm:$0xff]
        %5982 = vrot.lane.b32.xlu0 %v3314, 111
        %v5983 = vpop.permute.xlu0 %5982
        %5984 = vrot.lane.b32.xlu0 %v3315, 111
        %v5985 = vpop.permute.xlu0 %5984
        %5986 = vrot.lane.b32.xlu0 %v3316, 111
        %v5987 = vpop.permute.xlu0 %5986
        %v5988 = vsel %vm1371, %v5985, %v5987
        %v5989 = vsel %vm1371, %v5983, %v5985
        %v5990 = vsel %vm1371, %v5987, %v5983
        %v5992 = vsel %vm448, %v5981, 0
        %5994 = vmatprep.subr.mxu0 %v5988
        %5995 = vmatpush1.msra.mxu0 %v5989
        %5996 = vmatprep.subr.mxu0 0.0
        %5997 = vmatpush1.msra.mxu0 0.0
        %5998 = vmatprep.subr.mxu0 0.0
        %5999 = vmatpush1.msra.mxu0 0.0
        %6000 = vmatprep.subr.mxu0 0.0
        %6001 = vmatpush1.msra.mxu0 0.0
        %6002 = vmatprep.subr.mxu0 0.0
        %6003 = vmatpush1.msra.mxu0 0.0
        %6004 = vmatprep.subr.mxu0 0.0
        %6005 = vmatpush1.msra.mxu0 0.0
        %6006 = vmatprep.subr.mxu0 0.0
        %6007 = vmatpush1.msra.mxu0 0.0
        %6008 = vmatprep.subr.mxu0 0.0
        %6009 = vmatpush1.msra.mxu0 0.0
        %6010 = vmatprep.subr.mxu0 0.0
        %6011 = vmatpush1.msra.mxu0 0.0
        %6012 = vmatprep.subr.mxu0 0.0
        %6013 = vmatpush1.msra.mxu0 0.0
        %6014 = vmatprep.subr.mxu0 0.0
        %6015 = vmatpush1.msra.mxu0 0.0
        %6016 = vmatprep.subr.mxu0 0.0
        %6017 = vmatpush1.msra.mxu0 0.0
        %6018 = vmatprep.subr.mxu0 0.0
        %6019 = vmatpush1.msra.mxu0 0.0
        %6020 = vmatprep.subr.mxu0 0.0
        %6021 = vmatpush1.msra.mxu0 0.0
        %6022 = vmatprep.subr.mxu0 0.0
        %6023 = vmatpush1.msra.mxu0 0.0
        %6024 = vmatprep.subr.mxu0 0.0
        %6025 = vmatpush1.msra.mxu0 0.0
        %6026 = vmatprep.subr.mxu0 0.0
        %6027 = vmatpush1.msra.mxu0 0.0
        %6028 = vmatprep.subr.mxu0 0.0
        %6029 = vmatpush1.msra.mxu0 0.0
        %6030 = vmatprep.subr.mxu0 0.0
        %6031 = vmatpush1.msra.mxu0 0.0
        %6032 = vmatprep.subr.mxu0 0.0
        %6033 = vmatpush1.msra.mxu0 0.0
        %6034 = vmatprep.subr.mxu0 0.0
        %6035 = vmatpush1.msra.mxu0 0.0
        %6036 = vmatprep.subr.mxu0 0.0
        %6037 = vmatpush1.msra.mxu0 0.0
        %6038 = vmatprep.subr.mxu0 0.0
        %6039 = vmatpush1.msra.mxu0 0.0
        %6040 = vmatprep.subr.mxu0 0.0
        %6041 = vmatpush1.msra.mxu0 0.0
        %6042 = vmatprep.subr.mxu0 0.0
        %6043 = vmatpush1.msra.mxu0 0.0
        %6044 = vmatprep.subr.mxu0 0.0
        %6045 = vmatpush1.msra.mxu0 0.0
        %6046 = vmatprep.subr.mxu0 0.0
        %6047 = vmatpush1.msra.mxu0 0.0
        %6048 = vmatprep.subr.mxu0 0.0
        %6049 = vmatpush1.msra.mxu0 0.0
        %6050 = vmatprep.subr.mxu0 0.0
        %6051 = vmatpush1.msra.mxu0 0.0
        %6052 = vmatprep.subr.mxu0 0.0
        %6053 = vmatpush1.msra.mxu0 0.0
        %6054 = vmatprep.subr.mxu0 0.0
        %6055 = vmatpush1.msra.mxu0 0.0
        %6056 = vmatprep.subr.mxu0 0.0
        %6057 = vmatpush1.msra.mxu0 0.0
        %6058 = vmatprep.mubr.f32.mxu0 0.0
        %6059 = vmatmul.mubr.f32.gmra.mrb[0].mxu0 %v5992
        %v6060 = vpop.f32.mrb[0].mxu0
        %v6061 = vadd.f32 0.0, %v6060
        %v6062 = vpop.f32.mrb[0].mxu0
        %v6063 = vadd.f32 0.0, %v6062
        %6064 = vdwg.mxu0
        %6065 = vmatprep.subr.mxu0 0.0
        %6066 = vmatpush1.msra.mxu0 %v5990
        %6067 = vmatprep.subr.mxu0 0.0
        %6068 = vmatpush1.msra.mxu0 0.0
        %6069 = vmatprep.subr.mxu0 0.0
        %6070 = vmatpush1.msra.mxu0 0.0
        %6071 = vmatprep.subr.mxu0 0.0
        %6072 = vmatpush1.msra.mxu0 0.0
        %6073 = vmatprep.subr.mxu0 0.0
        %6074 = vmatpush1.msra.mxu0 0.0
        %6075 = vmatprep.subr.mxu0 0.0
        %6076 = vmatpush1.msra.mxu0 0.0
        %6077 = vmatprep.subr.mxu0 0.0
        %6078 = vmatpush1.msra.mxu0 0.0
        %6079 = vmatprep.subr.mxu0 0.0
        %6080 = vmatpush1.msra.mxu0 0.0
        %6081 = vmatprep.subr.mxu0 0.0
        %6082 = vmatpush1.msra.mxu0 0.0
        %6083 = vmatprep.subr.mxu0 0.0
        %6084 = vmatpush1.msra.mxu0 0.0
        %6085 = vmatprep.subr.mxu0 0.0
        %6086 = vmatpush1.msra.mxu0 0.0
        %6087 = vmatprep.subr.mxu0 0.0
        %6088 = vmatpush1.msra.mxu0 0.0
        %6089 = vmatprep.subr.mxu0 0.0
        %6090 = vmatpush1.msra.mxu0 0.0
        %6091 = vmatprep.subr.mxu0 0.0
        %6092 = vmatpush1.msra.mxu0 0.0
        %6093 = vmatprep.subr.mxu0 0.0
        %6094 = vmatpush1.msra.mxu0 0.0
        %6095 = vmatprep.subr.mxu0 0.0
        %6096 = vmatpush1.msra.mxu0 0.0
        %6097 = vmatprep.subr.mxu0 0.0
        %6098 = vmatpush1.msra.mxu0 0.0
        %6099 = vmatprep.subr.mxu0 0.0
        %6100 = vmatpush1.msra.mxu0 0.0
        %6101 = vmatprep.subr.mxu0 0.0
        %6102 = vmatpush1.msra.mxu0 0.0
        %6103 = vmatprep.subr.mxu0 0.0
        %6104 = vmatpush1.msra.mxu0 0.0
        %6105 = vmatprep.subr.mxu0 0.0
        %6106 = vmatpush1.msra.mxu0 0.0
        %6107 = vmatprep.subr.mxu0 0.0
        %6108 = vmatpush1.msra.mxu0 0.0
        %6109 = vmatprep.subr.mxu0 0.0
        %6110 = vmatpush1.msra.mxu0 0.0
        %6111 = vmatprep.subr.mxu0 0.0
        %6112 = vmatpush1.msra.mxu0 0.0
        %6113 = vmatprep.subr.mxu0 0.0
        %6114 = vmatpush1.msra.mxu0 0.0
        %6115 = vmatprep.subr.mxu0 0.0
        %6116 = vmatpush1.msra.mxu0 0.0
        %6117 = vmatprep.subr.mxu0 0.0
        %6118 = vmatpush1.msra.mxu0 0.0
        %6119 = vmatprep.subr.mxu0 0.0
        %6120 = vmatpush1.msra.mxu0 0.0
        %6121 = vmatprep.subr.mxu0 0.0
        %6122 = vmatpush1.msra.mxu0 0.0
        %6123 = vmatprep.subr.mxu0 0.0
        %6124 = vmatpush1.msra.mxu0 0.0
        %6125 = vmatprep.subr.mxu0 0.0
        %6126 = vmatpush1.msra.mxu0 0.0
        %6127 = vmatprep.subr.mxu0 0.0
        %6128 = vmatpush1.msra.mxu0 0.0
        %6129 = vmatprep.mubr.f32.mxu0 0.0
        %6130 = vmatmul.mubr.f32.gmra.mrb[0].mxu0 %v5992
        %v6131 = vpop.f32.mrb[0].mxu0
        %v6132 = vadd.f32 0.0, %v6131
        %v6133 = vpop.f32.mrb[0].mxu0
        %6134 = vdwg.mxu0
        %v6135 = vadd.f32 %v5977, %v6061
        %v6136 = vadd.f32 %v5978, %v6063
        %v6137 = vadd.f32 %v5979, %v6132
        %s6138 = scalar_lea.vmem %s2, 344
        %v6139 = vld [vmem:[%s6138] sm:$0xff]
        %6140 = vrot.lane.b32.xlu0 %v3314, 110
        %v6141 = vpop.permute.xlu0 %6140
        %6142 = vrot.lane.b32.xlu0 %v3315, 110
        %v6143 = vpop.permute.xlu0 %6142
        %6144 = vrot.lane.b32.xlu0 %v3316, 110
        %v6145 = vpop.permute.xlu0 %6144
        %v6146 = vsel %vm1530, %v6143, %v6145
        %v6147 = vsel %vm1530, %v6141, %v6143
        %v6148 = vsel %vm1530, %v6145, %v6141
        %v6150 = vsel %vm448, %v6139, 0
        %6152 = vmatprep.subr.mxu0 %v6146
        %6153 = vmatpush1.msra.mxu0 %v6147
        %6154 = vmatprep.subr.mxu0 0.0
        %6155 = vmatpush1.msra.mxu0 0.0
        %6156 = vmatprep.subr.mxu0 0.0
        %6157 = vmatpush1.msra.mxu0 0.0
        %6158 = vmatprep.subr.mxu0 0.0
        %6159 = vmatpush1.msra.mxu0 0.0
        %6160 = vmatprep.subr.mxu0 0.0
        %6161 = vmatpush1.msra.mxu0 0.0
        %6162 = vmatprep.subr.mxu0 0.0
        %6163 = vmatpush1.msra.mxu0 0.0
        %6164 = vmatprep.subr.mxu0 0.0
        %6165 = vmatpush1.msra.mxu0 0.0
        %6166 = vmatprep.subr.mxu0 0.0
        %6167 = vmatpush1.msra.mxu0 0.0
        %6168 = vmatprep.subr.mxu0 0.0
        %6169 = vmatpush1.msra.mxu0 0.0
        %6170 = vmatprep.subr.mxu0 0.0
        %6171 = vmatpush1.msra.mxu0 0.0
        %6172 = vmatprep.subr.mxu0 0.0
        %6173 = vmatpush1.msra.mxu0 0.0
        %6174 = vmatprep.subr.mxu0 0.0
        %6175 = vmatpush1.msra.mxu0 0.0
        %6176 = vmatprep.subr.mxu0 0.0
        %6177 = vmatpush1.msra.mxu0 0.0
        %6178 = vmatprep.subr.mxu0 0.0
        %6179 = vmatpush1.msra.mxu0 0.0
        %6180 = vmatprep.subr.mxu0 0.0
        %6181 = vmatpush1.msra.mxu0 0.0
        %6182 = vmatprep.subr.mxu0 0.0
        %6183 = vmatpush1.msra.mxu0 0.0
        %6184 = vmatprep.subr.mxu0 0.0
        %6185 = vmatpush1.msra.mxu0 0.0
        %6186 = vmatprep.subr.mxu0 0.0
        %6187 = vmatpush1.msra.mxu0 0.0
        %6188 = vmatprep.subr.mxu0 0.0
        %6189 = vmatpush1.msra.mxu0 0.0
        %6190 = vmatprep.subr.mxu0 0.0
        %6191 = vmatpush1.msra.mxu0 0.0
        %6192 = vmatprep.subr.mxu0 0.0
        %6193 = vmatpush1.msra.mxu0 0.0
        %6194 = vmatprep.subr.mxu0 0.0
        %6195 = vmatpush1.msra.mxu0 0.0
        %6196 = vmatprep.subr.mxu0 0.0
        %6197 = vmatpush1.msra.mxu0 0.0
        %6198 = vmatprep.subr.mxu0 0.0
        %6199 = vmatpush1.msra.mxu0 0.0
        %6200 = vmatprep.subr.mxu0 0.0
        %6201 = vmatpush1.msra.mxu0 0.0
        %6202 = vmatprep.subr.mxu0 0.0
        %6203 = vmatpush1.msra.mxu0 0.0
        %6204 = vmatprep.subr.mxu0 0.0
        %6205 = vmatpush1.msra.mxu0 0.0
        %6206 = vmatprep.subr.mxu0 0.0
        %6207 = vmatpush1.msra.mxu0 0.0
        %6208 = vmatprep.subr.mxu0 0.0
        %6209 = vmatpush1.msra.mxu0 0.0
        %6210 = vmatprep.subr.mxu0 0.0
        %6211 = vmatpush1.msra.mxu0 0.0
        %6212 = vmatprep.subr.mxu0 0.0
        %6213 = vmatpush1.msra.mxu0 0.0
        %6214 = vmatprep.subr.mxu0 0.0
        %6215 = vmatpush1.msra.mxu0 0.0
        %6216 = vmatprep.mubr.f32.mxu0 0.0
        %6217 = vmatmul.mubr.f32.gmra.mrb[0].mxu0 %v6150
        %v6218 = vpop.f32.mrb[0].mxu0
        %v6219 = vadd.f32 0.0, %v6218
        %v6220 = vpop.f32.mrb[0].mxu0
        %v6221 = vadd.f32 0.0, %v6220
        %6222 = vdwg.mxu0
        %6223 = vmatprep.subr.mxu0 0.0
        %6224 = vmatpush1.msra.mxu0 %v6148
        %6225 = vmatprep.subr.mxu0 0.0
        %6226 = vmatpush1.msra.mxu0 0.0
        %6227 = vmatprep.subr.mxu0 0.0
        %6228 = vmatpush1.msra.mxu0 0.0
        %6229 = vmatprep.subr.mxu0 0.0
        %6230 = vmatpush1.msra.mxu0 0.0
        %6231 = vmatprep.subr.mxu0 0.0
        %6232 = vmatpush1.msra.mxu0 0.0
        %6233 = vmatprep.subr.mxu0 0.0
        %6234 = vmatpush1.msra.mxu0 0.0
        %6235 = vmatprep.subr.mxu0 0.0
        %6236 = vmatpush1.msra.mxu0 0.0
        %6237 = vmatprep.subr.mxu0 0.0
        %6238 = vmatpush1.msra.mxu0 0.0
        %6239 = vmatprep.subr.mxu0 0.0
        %6240 = vmatpush1.msra.mxu0 0.0
        %6241 = vmatprep.subr.mxu0 0.0
        %6242 = vmatpush1.msra.mxu0 0.0
        %6243 = vmatprep.subr.mxu0 0.0
        %6244 = vmatpush1.msra.mxu0 0.0
        %6245 = vmatprep.subr.mxu0 0.0
        %6246 = vmatpush1.msra.mxu0 0.0
        %6247 = vmatprep.subr.mxu0 0.0
        %6248 = vmatpush1.msra.mxu0 0.0
        %6249 = vmatprep.subr.mxu0 0.0
        %6250 = vmatpush1.msra.mxu0 0.0
        %6251 = vmatprep.subr.mxu0 0.0
        %6252 = vmatpush1.msra.mxu0 0.0
        %6253 = vmatprep.subr.mxu0 0.0
        %6254 = vmatpush1.msra.mxu0 0.0
        %6255 = vmatprep.subr.mxu0 0.0
        %6256 = vmatpush1.msra.mxu0 0.0
        %6257 = vmatprep.subr.mxu0 0.0
        %6258 = vmatpush1.msra.mxu0 0.0
        %6259 = vmatprep.subr.mxu0 0.0
        %6260 = vmatpush1.msra.mxu0 0.0
        %6261 = vmatprep.subr.mxu0 0.0
        %6262 = vmatpush1.msra.mxu0 0.0
        %6263 = vmatprep.subr.mxu0 0.0
        %6264 = vmatpush1.msra.mxu0 0.0
        %6265 = vmatprep.subr.mxu0 0.0
        %6266 = vmatpush1.msra.mxu0 0.0
        %6267 = vmatprep.subr.mxu0 0.0
        %6268 = vmatpush1.msra.mxu0 0.0
        %6269 = vmatprep.subr.mxu0 0.0
        %6270 = vmatpush1.msra.mxu0 0.0
        %6271 = vmatprep.subr.mxu0 0.0
        %6272 = vmatpush1.msra.mxu0 0.0
        %6273 = vmatprep.subr.mxu0 0.0
        %6274 = vmatpush1.msra.mxu0 0.0
        %6275 = vmatprep.subr.mxu0 0.0
        %6276 = vmatpush1.msra.mxu0 0.0
        %6277 = vmatprep.subr.mxu0 0.0
        %6278 = vmatpush1.msra.mxu0 0.0
        %6279 = vmatprep.subr.mxu0 0.0
        %6280 = vmatpush1.msra.mxu0 0.0
        %6281 = vmatprep.subr.mxu0 0.0
        %6282 = vmatpush1.msra.mxu0 0.0
        %6283 = vmatprep.subr.mxu0 0.0
        %6284 = vmatpush1.msra.mxu0 0.0
        %6285 = vmatprep.subr.mxu0 0.0
        %6286 = vmatpush1.msra.mxu0 0.0
        %6287 = vmatprep.mubr.f32.mxu0 0.0
        %6288 = vmatmul.mubr.f32.gmra.mrb[0].mxu0 %v6150
        %v6289 = vpop.f32.mrb[0].mxu0
        %v6290 = vadd.f32 0.0, %v6289
        %v6291 = vpop.f32.mrb[0].mxu0
        %6292 = vdwg.mxu0
        %v6293 = vadd.f32 %v6135, %v6219
        %v6294 = vadd.f32 %v6136, %v6221
        %v6295 = vadd.f32 %v6137, %v6290
        %s6296 = scalar_lea.vmem %s2, 352
        %v6297 = vld [vmem:[%s6296] sm:$0xff]
        %6298 = vrot.lane.b32.xlu0 %v3314, 109
        %v6299 = vpop.permute.xlu0 %6298
        %6300 = vrot.lane.b32.xlu0 %v3315, 109
        %v6301 = vpop.permute.xlu0 %6300
        %6302 = vrot.lane.b32.xlu0 %v3316, 109
        %v6303 = vpop.permute.xlu0 %6302
        %v6304 = vsel %vm1689, %v6301, %v6303
        %v6305 = vsel %vm1689, %v6299, %v6301
        %v6306 = vsel %vm1689, %v6303, %v6299
        %v6308 = vsel %vm448, %v6297, 0
        %6310 = vmatprep.subr.mxu0 %v6304
        %6311 = vmatpush1.msra.mxu0 %v6305
        %6312 = vmatprep.subr.mxu0 0.0
        %6313 = vmatpush1.msra.mxu0 0.0
        %6314 = vmatprep.subr.mxu0 0.0
        %6315 = vmatpush1.msra.mxu0 0.0
        %6316 = vmatprep.subr.mxu0 0.0
        %6317 = vmatpush1.msra.mxu0 0.0
        %6318 = vmatprep.subr.mxu0 0.0
        %6319 = vmatpush1.msra.mxu0 0.0
        %6320 = vmatprep.subr.mxu0 0.0
        %6321 = vmatpush1.msra.mxu0 0.0
        %6322 = vmatprep.subr.mxu0 0.0
        %6323 = vmatpush1.msra.mxu0 0.0
        %6324 = vmatprep.subr.mxu0 0.0
        %6325 = vmatpush1.msra.mxu0 0.0
        %6326 = vmatprep.subr.mxu0 0.0
        %6327 = vmatpush1.msra.mxu0 0.0
        %6328 = vmatprep.subr.mxu0 0.0
        %6329 = vmatpush1.msra.mxu0 0.0
        %6330 = vmatprep.subr.mxu0 0.0
        %6331 = vmatpush1.msra.mxu0 0.0
        %6332 = vmatprep.subr.mxu0 0.0
        %6333 = vmatpush1.msra.mxu0 0.0
        %6334 = vmatprep.subr.mxu0 0.0
        %6335 = vmatpush1.msra.mxu0 0.0
        %6336 = vmatprep.subr.mxu0 0.0
        %6337 = vmatpush1.msra.mxu0 0.0
        %6338 = vmatprep.subr.mxu0 0.0
        %6339 = vmatpush1.msra.mxu0 0.0
        %6340 = vmatprep.subr.mxu0 0.0
        %6341 = vmatpush1.msra.mxu0 0.0
        %6342 = vmatprep.subr.mxu0 0.0
        %6343 = vmatpush1.msra.mxu0 0.0
        %6344 = vmatprep.subr.mxu0 0.0
        %6345 = vmatpush1.msra.mxu0 0.0
        %6346 = vmatprep.subr.mxu0 0.0
        %6347 = vmatpush1.msra.mxu0 0.0
        %6348 = vmatprep.subr.mxu0 0.0
        %6349 = vmatpush1.msra.mxu0 0.0
        %6350 = vmatprep.subr.mxu0 0.0
        %6351 = vmatpush1.msra.mxu0 0.0
        %6352 = vmatprep.subr.mxu0 0.0
        %6353 = vmatpush1.msra.mxu0 0.0
        %6354 = vmatprep.subr.mxu0 0.0
        %6355 = vmatpush1.msra.mxu0 0.0
        %6356 = vmatprep.subr.mxu0 0.0
        %6357 = vmatpush1.msra.mxu0 0.0
        %6358 = vmatprep.subr.mxu0 0.0
        %6359 = vmatpush1.msra.mxu0 0.0
        %6360 = vmatprep.subr.mxu0 0.0
        %6361 = vmatpush1.msra.mxu0 0.0
        %6362 = vmatprep.subr.mxu0 0.0
        %6363 = vmatpush1.msra.mxu0 0.0
        %6364 = vmatprep.subr.mxu0 0.0
        %6365 = vmatpush1.msra.mxu0 0.0
        %6366 = vmatprep.subr.mxu0 0.0
        %6367 = vmatpush1.msra.mxu0 0.0
        %6368 = vmatprep.subr.mxu0 0.0
        %6369 = vmatpush1.msra.mxu0 0.0
        %6370 = vmatprep.subr.mxu0 0.0
        %6371 = vmatpush1.msra.mxu0 0.0
        %6372 = vmatprep.subr.mxu0 0.0
        %6373 = vmatpush1.msra.mxu0 0.0
        %6374 = vmatprep.mubr.f32.mxu0 0.0
        %6375 = vmatmul.mubr.f32.gmra.mrb[0].mxu0 %v6308
        %v6376 = vpop.f32.mrb[0].mxu0
        %v6377 = vadd.f32 0.0, %v6376
        %v6378 = vpop.f32.mrb[0].mxu0
        %v6379 = vadd.f32 0.0, %v6378
        %6380 = vdwg.mxu0
        %6381 = vmatprep.subr.mxu0 0.0
        %6382 = vmatpush1.msra.mxu0 %v6306
        %6383 = vmatprep.subr.mxu0 0.0
        %6384 = vmatpush1.msra.mxu0 0.0
        %6385 = vmatprep.subr.mxu0 0.0
        %6386 = vmatpush1.msra.mxu0 0.0
        %6387 = vmatprep.subr.mxu0 0.0
        %6388 = vmatpush1.msra.mxu0 0.0
        %6389 = vmatprep.subr.mxu0 0.0
        %6390 = vmatpush1.msra.mxu0 0.0
        %6391 = vmatprep.subr.mxu0 0.0
        %6392 = vmatpush1.msra.mxu0 0.0
        %6393 = vmatprep.subr.mxu0 0.0
        %6394 = vmatpush1.msra.mxu0 0.0
        %6395 = vmatprep.subr.mxu0 0.0
        %6396 = vmatpush1.msra.mxu0 0.0
        %6397 = vmatprep.subr.mxu0 0.0
        %6398 = vmatpush1.msra.mxu0 0.0
        %6399 = vmatprep.subr.mxu0 0.0
        %6400 = vmatpush1.msra.mxu0 0.0
        %6401 = vmatprep.subr.mxu0 0.0
        %6402 = vmatpush1.msra.mxu0 0.0
        %6403 = vmatprep.subr.mxu0 0.0
        %6404 = vmatpush1.msra.mxu0 0.0
        %6405 = vmatprep.subr.mxu0 0.0
        %6406 = vmatpush1.msra.mxu0 0.0
        %6407 = vmatprep.subr.mxu0 0.0
        %6408 = vmatpush1.msra.mxu0 0.0
        %6409 = vmatprep.subr.mxu0 0.0
        %6410 = vmatpush1.msra.mxu0 0.0
        %6411 = vmatprep.subr.mxu0 0.0
        %6412 = vmatpush1.msra.mxu0 0.0
        %6413 = vmatprep.subr.mxu0 0.0
        %6414 = vmatpush1.msra.mxu0 0.0
        %6415 = vmatprep.subr.mxu0 0.0
        %6416 = vmatpush1.msra.mxu0 0.0
        %6417 = vmatprep.subr.mxu0 0.0
        %6418 = vmatpush1.msra.mxu0 0.0
        %6419 = vmatprep.subr.mxu0 0.0
        %6420 = vmatpush1.msra.mxu0 0.0
        %6421 = vmatprep.subr.mxu0 0.0
        %6422 = vmatpush1.msra.mxu0 0.0
        %6423 = vmatprep.subr.mxu0 0.0
        %6424 = vmatpush1.msra.mxu0 0.0
        %6425 = vmatprep.subr.mxu0 0.0
        %6426 = vmatpush1.msra.mxu0 0.0
        %6427 = vmatprep.subr.mxu0 0.0
        %6428 = vmatpush1.msra.mxu0 0.0
        %6429 = vmatprep.subr.mxu0 0.0
        %6430 = vmatpush1.msra.mxu0 0.0
        %6431 = vmatprep.subr.mxu0 0.0
        %6432 = vmatpush1.msra.mxu0 0.0
        %6433 = vmatprep.subr.mxu0 0.0
        %6434 = vmatpush1.msra.mxu0 0.0
        %6435 = vmatprep.subr.mxu0 0.0
        %6436 = vmatpush1.msra.mxu0 0.0
        %6437 = vmatprep.subr.mxu0 0.0
        %6438 = vmatpush1.msra.mxu0 0.0
        %6439 = vmatprep.subr.mxu0 0.0
        %6440 = vmatpush1.msra.mxu0 0.0
        %6441 = vmatprep.subr.mxu0 0.0
        %6442 = vmatpush1.msra.mxu0 0.0
        %6443 = vmatprep.subr.mxu0 0.0
        %6444 = vmatpush1.msra.mxu0 0.0
        %6445 = vmatprep.mubr.f32.mxu0 0.0
        %6446 = vmatmul.mubr.f32.gmra.mrb[0].mxu0 %v6308
        %v6447 = vpop.f32.mrb[0].mxu0
        %v6448 = vadd.f32 0.0, %v6447
        %v6449 = vpop.f32.mrb[0].mxu0
        %6450 = vdwg.mxu0
        %v6451 = vadd.f32 %v6293, %v6377
        %v6452 = vadd.f32 %v6294, %v6379
        %v6453 = vadd.f32 %v6295, %v6448
        %v6454 = vld [vmem:[%s6] sm:$0xff]
        %v6455 = vld [vmem:[%s6 + $0x8] sm:$0xff]
        %v6456 = vld [vmem:[%s6 + $0x10] sm:$0xff]
        %v6457 = vld [vmem:[%s6 + $0x18] sm:$0xff]
        %v6458 = vld [vmem:[%s6 + $0x20] sm:$0xff]
        %v6459 = vld [vmem:[%s6 + $0x28] sm:$0xff]
        %v6460 = vld [vmem:[%s6 + $0x30] sm:$0xff]
        %v6461 = vld [vmem:[%s6 + $0x38] sm:$0xff]
        %v6462 = vld [vmem:[%s6 + $0x40] sm:$0xff]
        %v6463 = vld [vmem:[%s6 + $0x48] sm:$0xff]
        %v6464 = vld [vmem:[%s6 + $0x50] sm:$0xff]
        %v6465 = vld [vmem:[%s6 + $0x58] sm:$0xff]
        %v6466 = vld [vmem:[%s6 + $0x60] sm:$0xff]
        %v6467 = vld [vmem:[%s6 + $0x68] sm:$0xff]
        %v6468 = vld [vmem:[%s6 + $0x70] sm:$0xff]
        %v6469 = vld [vmem:[%s6 + $0x78] sm:$0xff]
        %v6470 = vld [vmem:[%s6 + $0x80] sm:$0xff]
        %v6471 = vld [vmem:[%s6 + $0x88] sm:$0xff]
        %v6472 = vld [vmem:[%s6 + $0x90] sm:$0xff]
        %v6473 = vld [vmem:[%s6 + $0x98] sm:$0xff]
        %v6474 = vld [vmem:[%s6 + $0xa0] sm:$0xff]
        %v6475 = vld [vmem:[%s6 + $0xa8] sm:$0xff]
        %v6476 = vld [vmem:[%s6 + $0xb0] sm:$0xff]
        %v6477 = vld [vmem:[%s6 + $0xb8] sm:$0xff]
        %v6478 = vld [vmem:[%s6 + $0xc0] sm:$0xff]
        %v6479 = vld [vmem:[%s6 + $0xc8] sm:$0xff]
        %v6480 = vld [vmem:[%s6 + $0xd0] sm:$0xff]
        %v6481 = vld [vmem:[%s6 + $0xd8] sm:$0xff]
        %v6482 = vld [vmem:[%s6 + $0xe0] sm:$0xff]
        %v6483 = vld [vmem:[%s6 + $0xe8] sm:$0xff]
        %v6484 = vld [vmem:[%s6 + $0xf0] sm:$0xff]
        %v6485 = vld [vmem:[%s6 + $0xf8] sm:$0xff]
        %v6486 = vld [vmem:[%s6 + $0x100] sm:$0xff]
        %v6487 = vld [vmem:[%s6 + $0x108] sm:$0xff]
        %v6488 = vld [vmem:[%s6 + $0x110] sm:$0xff]
        %v6489 = vld [vmem:[%s6 + $0x118] sm:$0xff]
        %v6490 = vld [vmem:[%s6 + $0x120] sm:$0xff]
        %v6491 = vld [vmem:[%s6 + $0x128] sm:$0xff]
        %v6492 = vld [vmem:[%s6 + $0x130] sm:$0xff]
        %v6493 = vld [vmem:[%s6 + $0x138] sm:$0xff]
        %v6494 = vld [vmem:[%s6 + $0x140] sm:$0xff]
        %v6495 = vld [vmem:[%s6 + $0x148] sm:$0xff]
        %v6496 = vld [vmem:[%s6 + $0x150] sm:$0xff]
        %v6497 = vld [vmem:[%s6 + $0x158] sm:$0xff]
        %v6498 = vld [vmem:[%s6 + $0x160] sm:$0xff]
        %v6499 = vld [vmem:[%s6 + $0x168] sm:$0xff]
        %v6500 = vld [vmem:[%s6 + $0x170] sm:$0xff]
        %v6501 = vld [vmem:[%s6 + $0x178] sm:$0xff]
        %6502 = vmatprep.subr.mxu0 0.0
        %6503 = vmatpush1.msra.mxu0 %v6454
        %6504 = vmatprep.subr.mxu0 0.0
        %6505 = vmatpush1.msra.mxu0 %v6455
        %6506 = vmatprep.subr.mxu0 0.0
        %6507 = vmatpush1.msra.mxu0 %v6456
        %6508 = vmatprep.subr.mxu0 0.0
        %6509 = vmatpush1.msra.mxu0 %v6457
        %6510 = vmatprep.subr.mxu0 0.0
        %6511 = vmatpush1.msra.mxu0 %v6458
        %6512 = vmatprep.subr.mxu0 0.0
        %6513 = vmatpush1.msra.mxu0 %v6459
        %6514 = vmatprep.subr.mxu0 0.0
        %6515 = vmatpush1.msra.mxu0 %v6460
        %6516 = vmatprep.subr.mxu0 0.0
        %6517 = vmatpush1.msra.mxu0 %v6461
        %6518 = vmatprep.subr.mxu0 0.0
        %6519 = vmatpush1.msra.mxu0 %v6462
        %6520 = vmatprep.subr.mxu0 0.0
        %6521 = vmatpush1.msra.mxu0 %v6463
        %6522 = vmatprep.subr.mxu0 0.0
        %6523 = vmatpush1.msra.mxu0 %v6464
        %6524 = vmatprep.subr.mxu0 0.0
        %6525 = vmatpush1.msra.mxu0 %v6465
        %6526 = vmatprep.subr.mxu0 0.0
        %6527 = vmatpush1.msra.mxu0 %v6466
        %6528 = vmatprep.subr.mxu0 0.0
        %6529 = vmatpush1.msra.mxu0 %v6467
        %6530 = vmatprep.subr.mxu0 0.0
        %6531 = vmatpush1.msra.mxu0 %v6468
        %6532 = vmatprep.subr.mxu0 0.0
        %6533 = vmatpush1.msra.mxu0 %v6469
        %6534 = vmatprep.subr.mxu0 0.0
        %6535 = vmatpush1.msra.mxu0 %v6470
        %6536 = vmatprep.subr.mxu0 0.0
        %6537 = vmatpush1.msra.mxu0 %v6471
        %6538 = vmatprep.subr.mxu0 0.0
        %6539 = vmatpush1.msra.mxu0 %v6472
        %6540 = vmatprep.subr.mxu0 0.0
        %6541 = vmatpush1.msra.mxu0 %v6473
        %6542 = vmatprep.subr.mxu0 0.0
        %6543 = vmatpush1.msra.mxu0 %v6474
        %6544 = vmatprep.subr.mxu0 0.0
        %6545 = vmatpush1.msra.mxu0 %v6475
        %6546 = vmatprep.subr.mxu0 0.0
        %6547 = vmatpush1.msra.mxu0 %v6476
        %6548 = vmatprep.subr.mxu0 0.0
        %6549 = vmatpush1.msra.mxu0 %v6477
        %6550 = vmatprep.subr.mxu0 0.0
        %6551 = vmatpush1.msra.mxu0 %v6478
        %6552 = vmatprep.subr.mxu0 0.0
        %6553 = vmatpush1.msra.mxu0 %v6479
        %6554 = vmatprep.subr.mxu0 0.0
        %6555 = vmatpush1.msra.mxu0 %v6480
        %6556 = vmatprep.subr.mxu0 0.0
        %6557 = vmatpush1.msra.mxu0 %v6481
        %6558 = vmatprep.subr.mxu0 0.0
        %6559 = vmatpush1.msra.mxu0 %v6482
        %6560 = vmatprep.subr.mxu0 0.0
        %6561 = vmatpush1.msra.mxu0 %v6483
        %6562 = vmatprep.subr.mxu0 0.0
        %6563 = vmatpush1.msra.mxu0 %v6484
        %6564 = vmatprep.subr.mxu0 0.0
        %6565 = vmatpush1.msra.mxu0 %v6485
        %6566 = vmatprep.mubr.f32.mxu0 %v6452
        %6567 = vmatmul.mubr.f32.gmra.mrb[0].mxu0 %v6451
        %v6568 = vpop.f32.mrb[0].mxu0
        %v6569 = vadd.f32 0.0, %v6568
        %v6570 = vpop.f32.mrb[0].mxu0
        %6571 = vdwg.mxu0
        %6572 = vmatprep.subr.mxu0 0.0
        %6573 = vmatpush1.msra.mxu0 %v6486
        %6574 = vmatprep.subr.mxu0 0.0
        %6575 = vmatpush1.msra.mxu0 %v6487
        %6576 = vmatprep.subr.mxu0 0.0
        %6577 = vmatpush1.msra.mxu0 %v6488
        %6578 = vmatprep.subr.mxu0 0.0
        %6579 = vmatpush1.msra.mxu0 %v6489
        %6580 = vmatprep.subr.mxu0 0.0
        %6581 = vmatpush1.msra.mxu0 %v6490
        %6582 = vmatprep.subr.mxu0 0.0
        %6583 = vmatpush1.msra.mxu0 %v6491
        %6584 = vmatprep.subr.mxu0 0.0
        %6585 = vmatpush1.msra.mxu0 %v6492
        %6586 = vmatprep.subr.mxu0 0.0
        %6587 = vmatpush1.msra.mxu0 %v6493
        %6588 = vmatprep.subr.mxu0 0.0
        %6589 = vmatpush1.msra.mxu0 %v6494
        %6590 = vmatprep.subr.mxu0 0.0
        %6591 = vmatpush1.msra.mxu0 %v6495
        %6592 = vmatprep.subr.mxu0 0.0
        %6593 = vmatpush1.msra.mxu0 %v6496
        %6594 = vmatprep.subr.mxu0 0.0
        %6595 = vmatpush1.msra.mxu0 %v6497
        %6596 = vmatprep.subr.mxu0 0.0
        %6597 = vmatpush1.msra.mxu0 %v6498
        %6598 = vmatprep.subr.mxu0 0.0
        %6599 = vmatpush1.msra.mxu0 %v6499
        %6600 = vmatprep.subr.mxu0 0.0
        %6601 = vmatpush1.msra.mxu0 %v6500
        %6602 = vmatprep.subr.mxu0 0.0
        %6603 = vmatpush1.msra.mxu0 %v6501
        %6604 = vmatprep.subr.mxu0 0.0
        %6605 = vmatpush1.msra.mxu0 0.0
        %6606 = vmatprep.subr.mxu0 0.0
        %6607 = vmatpush1.msra.mxu0 0.0
        %6608 = vmatprep.subr.mxu0 0.0
        %6609 = vmatpush1.msra.mxu0 0.0
        %6610 = vmatprep.subr.mxu0 0.0
        %6611 = vmatpush1.msra.mxu0 0.0
        %6612 = vmatprep.subr.mxu0 0.0
        %6613 = vmatpush1.msra.mxu0 0.0
        %6614 = vmatprep.subr.mxu0 0.0
        %6615 = vmatpush1.msra.mxu0 0.0
        %6616 = vmatprep.subr.mxu0 0.0
        %6617 = vmatpush1.msra.mxu0 0.0
        %6618 = vmatprep.subr.mxu0 0.0
        %6619 = vmatpush1.msra.mxu0 0.0
        %6620 = vmatprep.subr.mxu0 0.0
        %6621 = vmatpush1.msra.mxu0 0.0
        %6622 = vmatprep.subr.mxu0 0.0
        %6623 = vmatpush1.msra.mxu0 0.0
        %6624 = vmatprep.subr.mxu0 0.0
        %6625 = vmatpush1.msra.mxu0 0.0
        %6626 = vmatprep.subr.mxu0 0.0
        %6627 = vmatpush1.msra.mxu0 0.0
        %6628 = vmatprep.subr.mxu0 0.0
        %6629 = vmatpush1.msra.mxu0 0.0
        %6630 = vmatprep.subr.mxu0 0.0
        %6631 = vmatpush1.msra.mxu0 0.0
        %6632 = vmatprep.subr.mxu0 0.0
        %6633 = vmatpush1.msra.mxu0 0.0
        %6634 = vmatprep.subr.mxu0 0.0
        %6635 = vmatpush1.msra.mxu0 0.0
        %6636 = vmatprep.mubr.f32.mxu0 0.0
        %6637 = vmatmul.mubr.f32.gmra.mrb[0].mxu0 %v6453
        %v6638 = vpop.f32.mrb[0].mxu0
        %v6639 = vadd.f32 %v6569, %v6638
        %v6640 = vpop.f32.mrb[0].mxu0
        %6641 = vdwg.mxu0
        %s6642 = scalar_lea.vmem %s4, 80
        %v6643 = vld [vmem:[%s6642] sm:$0xff]
        %6645 = vset.pattern.permute.xlu0 0
        %6646 = vperm.xlu0 %6645, %v6643
        %v6647 = vpop.permute.xlu0 %6646
        %v6649 = vmul.f32 %v6639, %v6647
        %s6650 = scalar_lea.vmem %s4, 88
        %v6651 = vld [vmem:[%s6650] sm:$0xff]
        %6653 = vset.pattern.permute.xlu0 0
        %6654 = vperm.xlu0 %6653, %v6651
        %v6655 = vpop.permute.xlu0 %6654
        %v6657 = vadd.f32 %v6649, %v6655
        %v6658 = vadd.f32 %v6657, %v4755
        %v6659 = vmax.f32 %v6658, 0.0
        %v6660 = vmul.f32 %v6659, %v4036
        %6661 = vst [vmem:[%s412] sm:$0xff] %v6660
        %s6662 = sand.u32 %s239, 1
        %s6663 = scalar_lea.sflag [#allocation4], %s6662
        %s6664 = sand.u32 %s239, 1
        %s6665 = smul.addr %s6664, 24
        %s6666 = scalar_lea.vmem [#allocation7], %s6665
        %s6667 = sand.u32 %s265, 1
        %s6668 = scalar_lea.sflag [#allocation9], %s6667
        %s6669 = sand.u32 %s265, 1
        %s6670 = smul.addr %s6669, 8
        %s6671 = scalar_lea.vmem [#allocation8], %s6670
        // Predicated region
        $region65: #{tpu_custom_call.1} parent=55 // pred_check
          %p6672 = pneg %p249
        $region66: #{tpu_custom_call.1} parent=55 // pred_check_branch
          %6674 = sbr.rel (%p6672) target = $region68
        $region67: #{tpu_custom_call.1} parent=55 // pred_region
          %s6676 = ssub.s32 384, 384
          %6677 = vsyncadd %s6663, %s6676
          %s6678 = smul.addr %s32, 3
          %s6679 = smul.addr %s6678, 128
          %s6680 = scalar_lea.hbm %s9, %s6679
          %s6682 = sshll.u32 %s6666, 4
          %s6683 = int_to_ptr.vmem [resolvable:$true] %s6682
          %6685 = dma.vmem_to_hbm [thread:$0]  %s6683, 384, %s6680, %s6663
        $region68: #{tpu_custom_call.1} parent=55 // pred_fallthru
          _
        // Predicated region
        $region69: #{tpu_custom_call.1} parent=55 // pred_check
          %p6686 = pneg %p275
        $region70: #{tpu_custom_call.1} parent=55 // pred_check_branch
          %6688 = sbr.rel (%p6686) target = $region72
        $region71: #{tpu_custom_call.1} parent=55 // pred_region
          %s6690 = ssub.s32 128, 128
          %6691 = vsyncadd %s6668, %s6690
          %s6692 = smul.addr %s32, 128
          %s6693 = scalar_lea.hbm %s10, %s6692
          %s6695 = sshll.u32 %s6671, 4
          %s6696 = int_to_ptr.vmem [resolvable:$true] %s6695
          %6698 = dma.vmem_to_hbm [thread:$0]  %s6696, 128, %s6693, %s6668
        $region72: #{tpu_custom_call.1} parent=55 // pred_fallthru
          _
      $region56: #{tpu_custom_call.1} parent=5 // pred_fallthru
        _
      %p6699 = scmp.le.s32.totalorder 2, %s27
      // Predicated region
      $region73: #{tpu_custom_call.1} parent=5 // pred_check
        %p6700 = pneg %p6699
      $region74: #{tpu_custom_call.1} parent=5 // pred_check_branch
        %6702 = sbr.rel (%p6700) target = $region76
      $region75: #{tpu_custom_call.1} parent=5 // pred_region
        %s6703 = ssub.s32 %s27, 2
        // Predicated region
        $region77: #{tpu_custom_call.1} parent=75 // pred_check
          %p6704 = pneg %p255
        $region78: #{tpu_custom_call.1} parent=75 // pred_check_branch
          %6706 = sbr.rel (%p6704) target = $region80
        $region79: #{tpu_custom_call.1} parent=75 // pred_region
          %s6707 = sand.u32 %s240, 1
          %s6708 = scalar_lea.sflag [#allocation4], %s6707
          %s6709 = sand.u32 %s240, 1
          %s6710 = smul.addr %s6709, 24
          %s6711 = scalar_lea.vmem [#allocation7], %s6710
          %6712 = dma.done %s6708, 384
        $region80: #{tpu_custom_call.1} parent=75 // pred_fallthru
          _
        // Predicated region
        $region81: #{tpu_custom_call.1} parent=75 // pred_check
          %p6713 = pneg %p281
        $region82: #{tpu_custom_call.1} parent=75 // pred_check_branch
          %6715 = sbr.rel (%p6713) target = $region84
        $region83: #{tpu_custom_call.1} parent=75 // pred_region
          %s6716 = sand.u32 %s266, 1
          %s6717 = scalar_lea.sflag [#allocation9], %s6716
          %s6718 = sand.u32 %s266, 1
          %s6719 = smul.addr %s6718, 8
          %s6720 = scalar_lea.vmem [#allocation8], %s6719
          %6721 = dma.done %s6717, 128
        $region84: #{tpu_custom_call.1} parent=75 // pred_fallthru
          _
      $region76: #{tpu_custom_call.1} parent=5 // pred_fallthru
        _
    $region6: #{tpu_custom_call.1} parent=1 // loop_footer
      %s31 = sadd.s32 1, %s27
    $region7: #{tpu_custom_call.1} parent=1 // loop_footer_branch
      %26 = sbr.rel target = $region3
    $region8: #{tpu_custom_call.1} parent=1 // loop_exit
      _
    %6722 = vsyncpa [#allocation3], 1
    %s6723 = scalar_lea.sflag [#allocation3], 1
    %6724 = vsyncpa %s6723, 1
    %6725 = vsyncpa [#allocation6], 1
    %6726 = vsyncpa [#allocation4], 1
    %s6727 = scalar_lea.sflag [#allocation4], 1
    %6728 = vsyncpa %s6727, 1
    %6729 = vsyncpa [#allocation9], 1
    %s6730 = scalar_lea.sflag [#allocation9], 1
    %6731 = vsyncpa %s6730, 1

</llo_original>
